<compile_context>
chip_gen: v7x
topology: tpu7x:2x2x1
jax: 0.10.0
libtpu: 0.0.40
codegen_flags: <defaults>
</compile_context>

<pallas_src>
import functools

import jax
import jax.numpy as jnp
from jax.experimental import pallas as pl
from jax.experimental.pallas import tpu as pltpu

# MXU input dtype for the conv / upsample matmuls (accumulation stays f32).
MXU_DTYPE = jnp.bfloat16


def _round_up(x, m):
    return (x + m - 1) // m * m


# ----------------------------------------------------------------------------
# conv1 (7x7, stride 2, pad 3) + folded BN + ReLU  --  im2col + M-tiled fused matmul
# ----------------------------------------------------------------------------
def _conv1_kernel(x_ref, w_ref, b_ref, o_ref):
    # x_ref: (TM, K) bf16 patches tile, w_ref: (K, OC) bf16 (BN scale folded),
    # b_ref: (1, OC) f32, o_ref: (TM, OC) f32
    y = jnp.dot(x_ref[...], w_ref[...], preferred_element_type=jnp.float32)
    o_ref[...] = jnp.maximum(y + b_ref[...], 0.0)


def conv1_bn_relu(x_nhwc, w, bn):
    """Conv2d(3->64, k=7, s=2, p=3, bias=False) + BatchNorm(eval) + ReLU."""
    N, H, W, Cin = x_nhwc.shape
    OC, IC, KH, KW = w.shape
    stride, pad = 2, 3
    ICp = _round_up(IC, 8)                 # K = 7*7*8 = 392, sublane aligned
    # cast to bf16 BEFORE the im2col so the expanded HBM intermediate is half-size
    x_p = jnp.pad(x_nhwc, ((0, 0), (0, 0), (0, 0), (0, ICp - Cin))).astype(MXU_DTYPE)
    w_p = jnp.pad(w, ((0, 0), (0, ICp - IC), (0, 0), (0, 0)))

    OH = (H + 2 * pad - KH) // stride + 1
    OW = (W + 2 * pad - KW) // stride + 1
    xp = jnp.pad(x_p, ((0, 0), (pad, pad), (pad, pad), (0, 0)))
    # TODO(synk): at large resolutions move this im2col inside the kernel (row-band DMA
    # + 49 shifted in-VMEM windows) to avoid the expanded HBM patch intermediate.
    cols = []
    for kh in range(KH):
        for kw in range(KW):
            cols.append(xp[:, kh:kh + stride * OH:stride, kw:kw + stride * OW:stride, :])
    K = KH * KW * ICp
    patches = jnp.concatenate(cols, axis=-1).reshape(N * OH * OW, K)

    # fold BN scale into the weight matrix; keep only the bias in the epilogue
    eps = 1e-5
    scale = bn["gamma"] / jnp.sqrt(bn["var"] + eps)
    bias = (bn["beta"] - bn["mean"] * scale).reshape(1, OC).astype(jnp.float32)
    w_mat = (jnp.transpose(w_p, (2, 3, 1, 0)).reshape(K, OC)
             * scale[None, :]).astype(MXU_DTYPE)

    M = N * OH * OW
    TM = min(1024, _round_up(M, 8))        # bigger tiles amortize per-step overhead
    Mp = _round_up(M, TM)
    patches = jnp.pad(patches, ((0, Mp - M), (0, 0)))

    out = pl.pallas_call(
        _conv1_kernel,
        grid=(Mp // TM,),
        in_specs=[pl.BlockSpec((TM, K), lambda i: (i, 0)),
                  pl.BlockSpec((K, OC), lambda i: (0, 0)),   # resident weights
                  pl.BlockSpec((1, OC), lambda i: (0, 0))],  # resident bias
        out_specs=pl.BlockSpec((TM, OC), lambda i: (i, 0)),
        out_shape=jax.ShapeDtypeStruct((Mp, OC), jnp.float32),
        compiler_params=pltpu.CompilerParams(dimension_semantics=("parallel",)),
    )(patches, w_mat, bias)
    return out[:M].reshape(N, OH, OW, OC)


# ----------------------------------------------------------------------------
# Fused MaxPool2d(3,2,1) + layer1 (3 BasicBlocks, 64->64) in ONE pallas_call / image.
# Each 3x3 conv = ONE (Q, 9C) @ (9C, C) matmul over an im2col staging scratch built
# from a zero-padded, row-major-flattened bf16 activation buffer held in VMEM.
# ----------------------------------------------------------------------------
def _layer1_kernel(xee_ref, xeo_ref, xoe_ref, xoo_ref, w_ref, b_ref, m_ref, o_ref,
                   pb_ref, im_ref, res_ref, *, H, W, C, n_blocks):
    Wp = W + 2            # padded width of the flat layout
    Q = H * Wp            # flat conv-output rows (includes 2 garbage cols per row)

    # ---- fused MaxPool2d(3, stride=2, pad=1): zero padding is exact because the
    # ---- input is post-ReLU (non-negative). Parity planes make every stride-2
    # ---- window read a plain static slice.
    ee = xee_ref[...]                     # (H+1, W+1, C) even rows / even cols
    eo = xeo_ref[...]                     # even rows / odd cols
    oe = xoe_ref[...]                     # odd rows  / even cols
    oo = xoo_ref[...]                     # odd rows  / odd cols
    p = ee[:H, :W, :]
    p = jnp.maximum(p, eo[:H, :W, :])
    p = jnp.maximum(p, ee[:H, 1:, :])
    p = jnp.maximum(p, oe[:H, :W, :])
    p = jnp.maximum(p, oo[:H, :W, :])
    p = jnp.maximum(p, oe[:H, 1:, :])
    p = jnp.maximum(p, ee[1:, :W, :])
    p = jnp.maximum(p, eo[1:, :W, :])
    p = jnp.maximum(p, ee[1:, 1:, :])     # (H, W, C) pooled, f32

    # ---- scatter pooled rows into the zero-padded flat activation buffers
    pb_ref[...] = jnp.zeros_like(pb_ref)      # bf16 padded flat activations
    res_ref[...] = jnp.zeros_like(res_ref)    # f32 block input (residual path)
    # TODO(synk): for large feature maps add a row-band grid axis (1-row halo) instead
    # of whole-image VMEM residency / per-row stores (v7x 64 MiB budget, 2-TC use).
    for h in range(H):
        row = p[h]                                              # (W, C) f32
        res_ref[pl.ds(h * Wp, W), :] = row
        pb_ref[pl.ds((h + 1) * Wp + 1, W), :] = row.astype(MXU_DTYPE)

    mask = m_ref[...]     # (Q, 1): 0.0 on the wrap/garbage columns of the Q layout

    # ---- 3 BasicBlocks, 2 convs each; one full-contraction MXU matmul per conv ----
    for blk in range(n_blocks):
        for cv in range(2):
            ci = blk * 2 + cv
            # pack the 9 shifted windows into the bf16 im2col scratch (Q, 9C)
            for k in range(9):
                kh, kw = divmod(k, 3)
                im_ref[:, k * C:(k + 1) * C] = pb_ref[pl.ds(kh * Wp + kw, Q), :]
            acc = jnp.dot(im_ref[...], w_ref[ci],
                          preferred_element_type=jnp.float32)
            acc = acc + b_ref[ci]                      # folded BN bias, (1, C)
            if cv == 1:
                acc = acc + res_ref[...]               # residual, read right before add
            y = jnp.maximum(acc, 0.0) * mask           # ReLU + zero garbage columns
            last = (blk == n_blocks - 1) and (cv == 1)
            if last:
                o_ref[...] = y                         # final block output, f32
            else:
                # write back into the padded flat layout (borders stay zero) so it
                # directly serves as the next conv's / next block's input
                pb_ref[pl.ds(Wp + 1, Q), :] = y.astype(MXU_DTYPE)
                if cv == 1:
                    res_ref[...] = y                   # next block's f32 residual


def maxpool_layer1(x1, blocks_params):
    """MaxPool2d(3,2,1) + resnet34 layer1 (3 BasicBlocks, 64->64), fused, NHWC."""
    N, H1, W1, C = x1.shape
    H = (H1 - 1) // 2 + 1
    W = (W1 - 1) // 2 + 1
    Wp = W + 2
    Q = H * Wp
    Ppad = (H + 2) * Wp + 2      # 2 extra zero rows so every shifted window is in-bounds
    eps = 1e-5

    # zero-pad for the pool (exact: post-ReLU input) and parity-split (space-to-depth)
    Hpad, Wpad = 2 * (H + 1), 2 * (W + 1)
    x1p = jnp.pad(x1, ((0, 0), (1, Hpad - 1 - H1), (1, Wpad - 1 - W1), (0, 0)))
    xee = x1p[:, 0::2, 0::2, :]          # (N, H+1, W+1, C)
    xeo = x1p[:, 0::2, 1::2, :]
    xoe = x1p[:, 1::2, 0::2, :]
    xoo = x1p[:, 1::2, 1::2, :]

    # fold BN scale into bf16 weight slabs; one (9C, C) slab per conv
    w_list, b_list = [], []
    for prm in blocks_params:
        for (wc, bn) in ((prm["w1"], prm["bn1"]), (prm["w2"], prm["bn2"])):
            scale = bn["gamma"] / jnp.sqrt(bn["var"] + eps)
            b_list.append((bn["beta"] - bn["mean"] * scale).reshape(1, C))
            taps = [wc[:, :, kh, kw].T * scale[None, :]     # (Cin, Cout) per tap
                    for kh in range(3) for kw in range(3)]
            w_list.append(jnp.concatenate(taps, axis=0))    # (9C, C)
    w_stack = jnp.stack(w_list, axis=0).astype(MXU_DTYPE)   # (n_convs, 9C, C)
    b_stack = jnp.stack(b_list, axis=0).astype(jnp.float32) # (n_convs, 1, C)

    # (Q, 1) mask: 1.0 on valid columns of the flat Q layout, 0.0 on the 2 wrap columns
    mask = (jnp.arange(Q, dtype=jnp.int32) % Wp < W).astype(jnp.float32).reshape(Q, 1)

    kernel = functools.partial(_layer1_kernel, H=H, W=W, C=C,
                               n_blocks=len(blocks_params))
    par_spec = pl.BlockSpec((None, H + 1, W + 1, C), lambda n: (n, 0, 0, 0))
    out = pl.pallas_call(
        kernel,
        grid=(N,),
        in_specs=[par_spec, par_spec, par_spec, par_spec,
                  pl.BlockSpec(w_stack.shape, lambda n: (0, 0, 0)),   # resident
                  pl.BlockSpec(b_stack.shape, lambda n: (0, 0, 0)),   # resident
                  pl.BlockSpec((Q, 1), lambda n: (0, 0))],            # resident
        out_specs=pl.BlockSpec((None, Q, C), lambda n: (n, 0, 0)),
        out_shape=jax.ShapeDtypeStruct((N, Q, C), jnp.float32),
        scratch_shapes=[pltpu.VMEM((Ppad, C), MXU_DTYPE),     # padded flat activations
                        pltpu.VMEM((Q, 9 * C), MXU_DTYPE),    # im2col staging
                        pltpu.VMEM((Q, C), jnp.float32)],     # f32 residual / block input
        compiler_params=pltpu.CompilerParams(
            dimension_semantics=("parallel",),
            vmem_limit_bytes=32 * 1024 * 1024),
    )(xee, xeo, xoe, xoo, w_stack, b_stack, mask)
    # strip the 2 wrap columns of the flat Q layout with a cheap XLA slice
    return out.reshape(N, H, Wp, C)[:, :, :W, :]


# ----------------------------------------------------------------------------
# Both bilinear upsamples (align_corners=True) + the channel concat as ONE kernel:
#   u_i = Ah_i @ X_i @ kron(Aw_i^T, I_C); per-image output is (2, Ho, Wo*C), which the
# wrapper rearranges straight into NCHW with channels [u1 0..31 | u2 0..31].
# ----------------------------------------------------------------------------
def _interp_matrix(out_size, in_size):
    """Bilinear (align_corners=True) 1-D interpolation matrix (out_size, in_size)."""
    if in_size == 1:
        return jnp.ones((out_size, 1), jnp.float32)
    src = jnp.arange(out_size, dtype=jnp.float32) * (in_size - 1) / (out_size - 1)
    i0 = jnp.clip(jnp.floor(src).astype(jnp.int32), 0, in_size - 2)
    frac = src - i0.astype(jnp.float32)
    A = jnp.zeros((out_size, in_size), jnp.float32)
    rows = jnp.arange(out_size)
    A = A.at[rows, i0].add(1.0 - frac)
    A = A.at[rows, i0 + 1].add(frac)
    return A


def _upsample_cat_kernel(x1_ref, x2_ref, ah1_ref, bw1_ref, ah2_ref, bw2_ref, o_ref):
    t1 = jnp.dot(ah1_ref[...], x1_ref[...], preferred_element_type=jnp.float32)
    o_ref[0] = jnp.dot(t1.astype(MXU_DTYPE), bw1_ref[...],
                       preferred_element_type=jnp.float32)
    t2 = jnp.dot(ah2_ref[...], x2_ref[...], preferred_element_type=jnp.float32)
    o_ref[1] = jnp.dot(t2.astype(MXU_DTYPE), bw2_ref[...],
                       preferred_element_type=jnp.float32)


def upsample_concat_nchw(x1s, x2s, f1, f2):
    """Upsample x1s by f1 and x2s by f2 (bilinear, align_corners=True), concat along
    channels, and return NCHW. One pallas_call; lane-dense (Wo*C) output per branch."""
    N, H1, W1, C = x1s.shape
    _, H2, W2, C2 = x2s.shape
    assert C == C2
    Ho, Wo = H1 * f1, W1 * f1
    assert H2 * f2 == Ho and W2 * f2 == Wo
    Hp1, Hp2 = _round_up(H1, 8), _round_up(H2, 8)   # sublane-align the K dims

    ah1 = jnp.pad(_interp_matrix(Ho, H1), ((0, 0), (0, Hp1 - H1))).astype(MXU_DTYPE)
    ah2 = jnp.pad(_interp_matrix(Ho, H2), ((0, 0), (0, Hp2 - H2))).astype(MXU_DTYPE)
    eye = jnp.eye(C, dtype=jnp.float32)
    # TODO(synk): at large resolutions replace the kron width matrices (mostly zeros,
    # O((W*C)*(Wo*C)) VMEM) with a banded / 2-tap formulation tiled over Wo (v7x VMEM).
    bw1 = jnp.kron(_interp_matrix(Wo, W1).T, eye).astype(MXU_DTYPE)   # (W1*C, Wo*C)
    bw2 = jnp.kron(_interp_matrix(Wo, W2).T, eye).astype(MXU_DTYPE)   # (W2*C, Wo*C)

    x1r = jnp.pad(x1s, ((0, 0), (0, Hp1 - H1), (0, 0), (0, 0))
                  ).reshape(N, Hp1, W1 * C).astype(MXU_DTYPE)
    x2r = jnp.pad(x2s, ((0, 0), (0, Hp2 - H2), (0, 0), (0, 0))
                  ).reshape(N, Hp2, W2 * C).astype(MXU_DTYPE)

    out = pl.pallas_call(
        _upsample_cat_kernel,
        grid=(N,),
        in_specs=[pl.BlockSpec((None, Hp1, W1 * C), lambda n: (n, 0, 0)),
                  pl.BlockSpec((None, Hp2, W2 * C), lambda n: (n, 0, 0)),
                  pl.BlockSpec((Ho, Hp1), lambda n: (0, 0)),           # resident
                  pl.BlockSpec((W1 * C, Wo * C), lambda n: (0, 0)),    # resident
                  pl.BlockSpec((Ho, Hp2), lambda n: (0, 0)),           # resident
                  pl.BlockSpec((W2 * C, Wo * C), lambda n: (0, 0))],   # resident
        out_specs=pl.BlockSpec((None, 2, Ho, Wo * C), lambda n: (n, 0, 0, 0)),
        out_shape=jax.ShapeDtypeStruct((N, 2, Ho, Wo * C), jnp.float32),
        compiler_params=pltpu.CompilerParams(dimension_semantics=("parallel",)),
    )(x1r, x2r, ah1, bw1, ah2, bw2)
    # (N, 2, Ho, Wo, C) -> NCHW with channel order [u1 ch 0..C-1 | u2 ch 0..C-1]
    out = out.reshape(N, 2, Ho, Wo, C).transpose(0, 1, 4, 2, 3).reshape(N, 2 * C, Ho, Wo)
    return out


# ----------------------------------------------------------------------------
# Full forward pass
# ----------------------------------------------------------------------------
def feature_extractor(x_nchw, params):
    x = jnp.transpose(x_nchw, (0, 2, 3, 1)).astype(jnp.float32)  # NCHW -> NHWC
    # conv1 + bn1 + relu (torchvision's inplace ReLU => upsample1 sees post-ReLU x1)
    x1 = conv1_bn_relu(x, params["conv1_w"], params["bn1"])
    # fused maxpool + layer1 (3 BasicBlocks)
    x2 = maxpool_layer1(x1, params["layer1"])
    # slice to 32 channels BEFORE upsampling (identical result, 2x less work);
    # both upsamples + concat fused; output already NCHW
    return upsample_concat_nchw(x1[..., :32], x2[..., :32], 2, 4)


# ----------------------------------------------------------------------------
# Deterministic synthetic parameters (shapes of resnet34 conv1/bn1/layer1)
# ----------------------------------------------------------------------------
def init_params(key):
    keys = iter(jax.random.split(key, 64))

    def bn_params(c):
        return dict(
            gamma=1.0 + 0.1 * jax.random.normal(next(keys), (c,), jnp.float32),
            beta=0.1 * jax.random.normal(next(keys), (c,), jnp.float32),
            mean=0.1 * jax.random.normal(next(keys), (c,), jnp.float32),
            var=1.0 + 0.1 * jnp.abs(jax.random.normal(next(keys), (c,), jnp.float32)),
        )

    params = dict(
        conv1_w=0.05 * jax.random.normal(next(keys), (64, 3, 7, 7), jnp.float32),
        bn1=bn_params(64),
        layer1=[],
    )
    for _ in range(3):  # resnet34 layer1 has 3 BasicBlocks, 64 -> 64, stride 1
        params["layer1"].append(dict(
            w1=0.05 * jax.random.normal(next(keys), (64, 64, 3, 3), jnp.float32),
            bn1=bn_params(64),
            w2=0.05 * jax.random.normal(next(keys), (64, 64, 3, 3), jnp.float32),
            bn2=bn_params(64),
        ))
    return params


if __name__ == "__main__":
    root = jax.random.PRNGKey(0)
    k_params, k_x = jax.random.split(root)
    params = init_params(k_params)

    # Small input consistent with the module: NCHW, 3 input channels (resnet conv1).
    x = jax.random.normal(k_x, (2, 3, 16, 16), jnp.float32)

    fn = jax.jit(lambda inp: feature_extractor(inp, params))
    out = fn(x)
    jax.block_until_ready(out)

    assert out.shape == (2, 64, 16, 16), out.shape
    assert out.dtype == jnp.float32
    assert bool(jnp.all(jnp.isfinite(out)))
    print("KERNEL_OK")
</pallas_src>

<mosaic_0001>
module attributes {stable_mosaic.version = 11 : i64} {
  func.func private @main(%arg0: i32) attributes {dimension_semantics = [#tpu.dimension_semantics<core_parallel>], iteration_bounds = array<i64: 2>, tpu.core_type = #tpu.core_type<sc_scalar_subcore>, window_params = []} {
    return
  }
}

module attributes {stable_mosaic.version = 11 : i64} {
  func.func private @main(%arg0: i32) attributes {dimension_semantics = [#tpu.dimension_semantics<core_parallel>], iteration_bounds = array<i64: 2>, tpu.core_type = #tpu.core_type<sc_scalar_subcore>, window_params = []} {
    return
  }
}

module attributes {stable_mosaic.version = 11 : i64} {
  func.func @_conv1_kernel(%arg0: i32, %arg1: memref<128x392xbf16, #tpu.memory_space<vmem>>, %arg2: memref<392x64xbf16, #tpu.memory_space<vmem>>, %arg3: memref<1x64xf32, #tpu.memory_space<vmem>>, %arg4: memref<128x64xf32, #tpu.memory_space<vmem>>) attributes {dimension_semantics = [#tpu.dimension_semantics<parallel>], iteration_bounds = array<i64: 1>, scalar_prefetch = 0 : i64, scratch_operands = 0 : i64, tpu.core_type = #tpu.core_type<tc>, window_params = [{transform_indices = @transform_0, window_bounds = array<i64: 128, 392>}, {pipeline_mode = #tpu.pipeline_mode<synchronous>, transform_indices = @transform_1, window_bounds = array<i64: 392, 64>}, {pipeline_mode = #tpu.pipeline_mode<synchronous>, transform_indices = @transform_2, window_bounds = array<i64: 1, 64>}, {transform_indices = @transform_3, window_bounds = array<i64: 128, 64>}]} {
    %c0 = arith.constant 0 : index
    %c0_0 = arith.constant 0 : index
    %0 = vector.load %arg1[%c0, %c0_0] : memref<128x392xbf16, #tpu.memory_space<vmem>>, vector<128x392xbf16>
    %c0_1 = arith.constant 0 : index
    %c0_2 = arith.constant 0 : index
    %1 = vector.load %arg2[%c0_1, %c0_2] : memref<392x64xbf16, #tpu.memory_space<vmem>>, vector<392x64xbf16>
    %cst = arith.constant dense<0.000000e+00> : vector<128x64xf32>
    %2 = tpu.matmul %0, %1, %cst {dimension_numbers = #tpu.dot_dimension_numbers<[1], [0], [0], [1], [0, 0, 1, 1], [], []>} : vector<128x392xbf16>, vector<392x64xbf16>, vector<128x64xf32> -> vector<128x64xf32>
    %c0_3 = arith.constant 0 : index
    %c0_4 = arith.constant 0 : index
    %3 = vector.load %arg3[%c0_3, %c0_4] : memref<1x64xf32, #tpu.memory_space<vmem>>, vector<1x64xf32>
    %4 = vector.broadcast %3 : vector<1x64xf32> to vector<128x64xf32>
    %5 = arith.addf %2, %4 : vector<128x64xf32>
    %cst_5 = arith.constant 0.000000e+00 : f32
    %6 = vector.broadcast %cst_5 : f32 to vector<128x64xf32>
    %7 = arith.maximumf %5, %6 : vector<128x64xf32>
    %c0_6 = arith.constant 0 : index
    %c0_7 = arith.constant 0 : index
    %8 = vector.load %arg4[%c0_6, %c0_7] : memref<128x64xf32, #tpu.memory_space<vmem>>, vector<128x64xf32>
    tpu.vector_store %arg4[%c0_6, %c0_7], %7 {strides = array<i32>} : memref<128x64xf32, #tpu.memory_space<vmem>>, vector<128x64xf32>,
    return
  }
  func.func @transform_0(%arg0: i32) -> (i32, i32) {
    %c0_i32 = arith.constant 0 : i32
    %c0_i32_0 = arith.constant 0 : i32
    return %arg0, %c0_i32 : i32, i32
  }
  func.func @transform_1(%arg0: i32) -> (i32, i32) {
    %c0_i32 = arith.constant 0 : i32
    %c0_i32_0 = arith.constant 0 : i32
    %c0_i32_1 = arith.constant 0 : i32
    return %c0_i32, %c0_i32_0 : i32, i32
  }
  func.func @transform_2(%arg0: i32) -> (i32, i32) {
    %c0_i32 = arith.constant 0 : i32
    %c0_i32_0 = arith.constant 0 : i32
    %c0_i32_1 = arith.constant 0 : i32
    return %c0_i32, %c0_i32_0 : i32, i32
  }
  func.func @transform_3(%arg0: i32) -> (i32, i32) {
    %c0_i32 = arith.constant 0 : i32
    %c0_i32_0 = arith.constant 0 : i32
    return %arg0, %c0_i32 : i32, i32
  }
}

module attributes {stable_mosaic.version = 11 : i64} {
  func.func @_layer1_kernel(%arg0: i32, %arg1: memref<1x5x5x64xf32, #tpu.memory_space<vmem>>, %arg2: memref<1x5x5x64xf32, #tpu.memory_space<vmem>>, %arg3: memref<1x5x5x64xf32, #tpu.memory_space<vmem>>, %arg4: memref<1x5x5x64xf32, #tpu.memory_space<vmem>>, %arg5: memref<6x576x64xbf16, #tpu.memory_space<vmem>>, %arg6: memref<6x1x64xf32, #tpu.memory_space<vmem>>, %arg7: memref<24x1xf32, #tpu.memory_space<vmem>>, %arg8: memref<1x24x64xf32, #tpu.memory_space<vmem>>, %arg9: memref<38x64xbf16, #tpu.memory_space<vmem>>, %arg10: memref<24x576xbf16, #tpu.memory_space<vmem>>, %arg11: memref<24x64xf32, #tpu.memory_space<vmem>>) attributes {dimension_semantics = [#tpu.dimension_semantics<parallel>], iteration_bounds = array<i64: 2>, scalar_prefetch = 0 : i64, scratch_operands = 3 : i64, tpu.core_type = #tpu.core_type<tc>, window_params = [{transform_indices = @transform_0, window_bounds = array<i64: 1, 5, 5, 64>}, {transform_indices = @transform_1, window_bounds = array<i64: 1, 5, 5, 64>}, {transform_indices = @transform_2, window_bounds = array<i64: 1, 5, 5, 64>}, {transform_indices = @transform_3, window_bounds = array<i64: 1, 5, 5, 64>}, {pipeline_mode = #tpu.pipeline_mode<synchronous>, transform_indices = @transform_4, window_bounds = array<i64: 6, 576, 64>}, {pipeline_mode = #tpu.pipeline_mode<synchronous>, transform_indices = @transform_5, window_bounds = array<i64: 6, 1, 64>}, {pipeline_mode = #tpu.pipeline_mode<synchronous>, transform_indices = @transform_6, window_bounds = array<i64: 24, 1>}, {transform_indices = @transform_7, window_bounds = array<i64: 1, 24, 64>}]} {
    %c0 = arith.constant 0 : index
    %c0_0 = arith.constant 0 : index
    %c0_1 = arith.constant 0 : index
    %c0_2 = arith.constant 0 : index
    %0 = vector.load %arg1[%c0, %c0_0, %c0_1, %c0_2] : memref<1x5x5x64xf32, #tpu.memory_space<vmem>>, vector<1x5x5x64xf32>
    %1 = vector.shape_cast %0 : vector<1x5x5x64xf32> to vector<5x5x64xf32>
    %c0_3 = arith.constant 0 : index
    %c0_4 = arith.constant 0 : index
    %c0_5 = arith.constant 0 : index
    %c0_6 = arith.constant 0 : index
    %2 = vector.load %arg2[%c0_3, %c0_4, %c0_5, %c0_6] : memref<1x5x5x64xf32, #tpu.memory_space<vmem>>, vector<1x5x5x64xf32>
    %3 = vector.shape_cast %2 : vector<1x5x5x64xf32> to vector<5x5x64xf32>
    %c0_7 = arith.constant 0 : index
    %c0_8 = arith.constant 0 : index
    %c0_9 = arith.constant 0 : index
    %c0_10 = arith.constant 0 : index
    %4 = vector.load %arg3[%c0_7, %c0_8, %c0_9, %c0_10] : memref<1x5x5x64xf32, #tpu.memory_space<vmem>>, vector<1x5x5x64xf32>
    %5 = vector.shape_cast %4 : vector<1x5x5x64xf32> to vector<5x5x64xf32>
    %c0_11 = arith.constant 0 : index
    %c0_12 = arith.constant 0 : index
    %c0_13 = arith.constant 0 : index
    %c0_14 = arith.constant 0 : index
    %6 = vector.load %arg4[%c0_11, %c0_12, %c0_13, %c0_14] : memref<1x5x5x64xf32, #tpu.memory_space<vmem>>, vector<1x5x5x64xf32>
    %7 = vector.shape_cast %6 : vector<1x5x5x64xf32> to vector<5x5x64xf32>
    %8 = vector.extract_strided_slice %1 {offsets = [0, 0, 0], sizes = [4, 4, 64], strides = [1, 1, 1]} : vector<5x5x64xf32> to vector<4x4x64xf32>
    %9 = vector.extract_strided_slice %3 {offsets = [0, 0, 0], sizes = [4, 4, 64], strides = [1, 1, 1]} : vector<5x5x64xf32> to vector<4x4x64xf32>
    %10 = arith.maximumf %8, %9 : vector<4x4x64xf32>
    %11 = vector.extract_strided_slice %1 {offsets = [0, 1, 0], sizes = [4, 4, 64], strides = [1, 1, 1]} : vector<5x5x64xf32> to vector<4x4x64xf32>
    %12 = arith.maximumf %10, %11 : vector<4x4x64xf32>
    %13 = vector.extract_strided_slice %5 {offsets = [0, 0, 0], sizes = [4, 4, 64], strides = [1, 1, 1]} : vector<5x5x64xf32> to vector<4x4x64xf32>
    %14 = arith.maximumf %12, %13 : vector<4x4x64xf32>
    %15 = vector.extract_strided_slice %7 {offsets = [0, 0, 0], sizes = [4, 4, 64], strides = [1, 1, 1]} : vector<5x5x64xf32> to vector<4x4x64xf32>
    %16 = arith.maximumf %14, %15 : vector<4x4x64xf32>
    %17 = vector.extract_strided_slice %5 {offsets = [0, 1, 0], sizes = [4, 4, 64], strides = [1, 1, 1]} : vector<5x5x64xf32> to vector<4x4x64xf32>
    %18 = arith.maximumf %16, %17 : vector<4x4x64xf32>
    %19 = vector.extract_strided_slice %1 {offsets = [1, 0, 0], sizes = [4, 4, 64], strides = [1, 1, 1]} : vector<5x5x64xf32> to vector<4x4x64xf32>
    %20 = arith.maximumf %18, %19 : vector<4x4x64xf32>
    %21 = vector.extract_strided_slice %3 {offsets = [1, 0, 0], sizes = [4, 4, 64], strides = [1, 1, 1]} : vector<5x5x64xf32> to vector<4x4x64xf32>
    %22 = arith.maximumf %20, %21 : vector<4x4x64xf32>
    %23 = vector.extract_strided_slice %1 {offsets = [1, 1, 0], sizes = [4, 4, 64], strides = [1, 1, 1]} : vector<5x5x64xf32> to vector<4x4x64xf32>
    %24 = arith.maximumf %22, %23 : vector<4x4x64xf32>
    %cst = arith.constant 0.000000e+00 : bf16
    %25 = vector.broadcast %cst : bf16 to vector<38x64xbf16>
    %c0_15 = arith.constant 0 : index
    %c0_16 = arith.constant 0 : index
    %26 = vector.load %arg9[%c0_15, %c0_16] : memref<38x64xbf16, #tpu.memory_space<vmem>>, vector<38x64xbf16>
    tpu.vector_store %arg9[%c0_15, %c0_16], %25 {strides = array<i32>} : memref<38x64xbf16, #tpu.memory_space<vmem>>, vector<38x64xbf16>,
    %cst_17 = arith.constant 0.000000e+00 : f32
    %27 = vector.broadcast %cst_17 : f32 to vector<24x64xf32>
    %c0_18 = arith.constant 0 : index
    %c0_19 = arith.constant 0 : index
    %28 = vector.load %arg11[%c0_18, %c0_19] : memref<24x64xf32, #tpu.memory_space<vmem>>, vector<24x64xf32>
    tpu.vector_store %arg11[%c0_18, %c0_19], %27 {strides = array<i32>} : memref<24x64xf32, #tpu.memory_space<vmem>>, vector<24x64xf32>,
    %29 = vector.extract_strided_slice %24 {offsets = [0, 0, 0], sizes = [1, 4, 64], strides = [1, 1, 1]} : vector<4x4x64xf32> to vector<1x4x64xf32>
    %30 = vector.shape_cast %29 : vector<1x4x64xf32> to vector<4x64xf32>
    %c0_20 = arith.constant 0 : index
    %c0_21 = arith.constant 0 : index
    %31 = vector.load %arg11[%c0_20, %c0_21] : memref<24x64xf32, #tpu.memory_space<vmem>>, vector<4x64xf32>
    tpu.vector_store %arg11[%c0_20, %c0_21], %30 {strides = array<i32>} : memref<24x64xf32, #tpu.memory_space<vmem>>, vector<4x64xf32>,
    %32 = arith.truncf %30 : vector<4x64xf32> to vector<4x64xbf16>
    %c7 = arith.constant 7 : index
    %c0_22 = arith.constant 0 : index
    %33 = vector.load %arg9[%c7, %c0_22] : memref<38x64xbf16, #tpu.memory_space<vmem>>, vector<4x64xbf16>
    tpu.vector_store %arg9[%c7, %c0_22], %32 {strides = array<i32>} : memref<38x64xbf16, #tpu.memory_space<vmem>>, vector<4x64xbf16>,
    %34 = vector.extract_strided_slice %24 {offsets = [1, 0, 0], sizes = [1, 4, 64], strides = [1, 1, 1]} : vector<4x4x64xf32> to vector<1x4x64xf32>
    %35 = vector.shape_cast %34 : vector<1x4x64xf32> to vector<4x64xf32>
    %c6 = arith.constant 6 : index
    %c0_23 = arith.constant 0 : index
    %36 = vector.load %arg11[%c6, %c0_23] : memref<24x64xf32, #tpu.memory_space<vmem>>, vector<4x64xf32>
    tpu.vector_store %arg11[%c6, %c0_23], %35 {strides = array<i32>} : memref<24x64xf32, #tpu.memory_space<vmem>>, vector<4x64xf32>,
    %37 = arith.truncf %35 : vector<4x64xf32> to vector<4x64xbf16>
    %c13 = arith.constant 13 : index
    %c0_24 = arith.constant 0 : index
    %38 = vector.load %arg9[%c13, %c0_24] : memref<38x64xbf16, #tpu.memory_space<vmem>>, vector<4x64xbf16>
    tpu.vector_store %arg9[%c13, %c0_24], %37 {strides = array<i32>} : memref<38x64xbf16, #tpu.memory_space<vmem>>, vector<4x64xbf16>,
    %39 = vector.extract_strided_slice %24 {offsets = [2, 0, 0], sizes = [1, 4, 64], strides = [1, 1, 1]} : vector<4x4x64xf32> to vector<1x4x64xf32>
    %40 = vector.shape_cast %39 : vector<1x4x64xf32> to vector<4x64xf32>
    %c12 = arith.constant 12 : index
    %c0_25 = arith.constant 0 : index
    %41 = vector.load %arg11[%c12, %c0_25] : memref<24x64xf32, #tpu.memory_space<vmem>>, vector<4x64xf32>
    tpu.vector_store %arg11[%c12, %c0_25], %40 {strides = array<i32>} : memref<24x64xf32, #tpu.memory_space<vmem>>, vector<4x64xf32>,
    %42 = arith.truncf %40 : vector<4x64xf32> to vector<4x64xbf16>
    %c19 = arith.constant 19 : index
    %c0_26 = arith.constant 0 : index
    %43 = vector.load %arg9[%c19, %c0_26] : memref<38x64xbf16, #tpu.memory_space<vmem>>, vector<4x64xbf16>
    tpu.vector_store %arg9[%c19, %c0_26], %42 {strides = array<i32>} : memref<38x64xbf16, #tpu.memory_space<vmem>>, vector<4x64xbf16>,
    %44 = vector.extract_strided_slice %24 {offsets = [3, 0, 0], sizes = [1, 4, 64], strides = [1, 1, 1]} : vector<4x4x64xf32> to vector<1x4x64xf32>
    %45 = vector.shape_cast %44 : vector<1x4x64xf32> to vector<4x64xf32>
    %c18 = arith.constant 18 : index
    %c0_27 = arith.constant 0 : index
    %46 = vector.load %arg11[%c18, %c0_27] : memref<24x64xf32, #tpu.memory_space<vmem>>, vector<4x64xf32>
    tpu.vector_store %arg11[%c18, %c0_27], %45 {strides = array<i32>} : memref<24x64xf32, #tpu.memory_space<vmem>>, vector<4x64xf32>,
    %47 = arith.truncf %45 : vector<4x64xf32> to vector<4x64xbf16>
    %c25 = arith.constant 25 : index
    %c0_28 = arith.constant 0 : index
    %48 = vector.load %arg9[%c25, %c0_28] : memref<38x64xbf16, #tpu.memory_space<vmem>>, vector<4x64xbf16>
    tpu.vector_store %arg9[%c25, %c0_28], %47 {strides = array<i32>} : memref<38x64xbf16, #tpu.memory_space<vmem>>, vector<4x64xbf16>,
    %c0_29 = arith.constant 0 : index
    %c0_30 = arith.constant 0 : index
    %49 = vector.load %arg7[%c0_29, %c0_30] : memref<24x1xf32, #tpu.memory_space<vmem>>, vector<24x1xf32>
    %c0_31 = arith.constant 0 : index
    %c0_32 = arith.constant 0 : index
    %50 = vector.load %arg9[%c0_31, %c0_32] : memref<38x64xbf16, #tpu.memory_space<vmem>>, vector<24x64xbf16>
    %c0_33 = arith.constant 0 : index
    %c0_34 = arith.constant 0 : index
    %51 = vector.load %arg10[%c0_33, %c0_34] : memref<24x576xbf16, #tpu.memory_space<vmem>>, vector<24x64xbf16>
    tpu.vector_store %arg10[%c0_33, %c0_34], %50 {strides = array<i32>} : memref<24x576xbf16, #tpu.memory_space<vmem>>, vector<24x64xbf16>,
    %c1 = arith.constant 1 : index
    %c0_35 = arith.constant 0 : index
    %52 = vector.load %arg9[%c1, %c0_35] : memref<38x64xbf16, #tpu.memory_space<vmem>>, vector<24x64xbf16>
    %c0_36 = arith.constant 0 : index
    %c64 = arith.constant 64 : index
    %53 = vector.load %arg10[%c0_36, %c64] : memref<24x576xbf16, #tpu.memory_space<vmem>>, vector<24x64xbf16>
    tpu.vector_store %arg10[%c0_36, %c64], %52 {strides = array<i32>} : memref<24x576xbf16, #tpu.memory_space<vmem>>, vector<24x64xbf16>,
    %c2 = arith.constant 2 : index
    %c0_37 = arith.constant 0 : index
    %54 = vector.load %arg9[%c2, %c0_37] : memref<38x64xbf16, #tpu.memory_space<vmem>>, vector<24x64xbf16>
    %c0_38 = arith.constant 0 : index
    %c128 = arith.constant 128 : index
    %55 = vector.load %arg10[%c0_38, %c128] : memref<24x576xbf16, #tpu.memory_space<vmem>>, vector<24x64xbf16>
    tpu.vector_store %arg10[%c0_38, %c128], %54 {strides = array<i32>} : memref<24x576xbf16, #tpu.memory_space<vmem>>, vector<24x64xbf16>,
    %c6_39 = arith.constant 6 : index
    %c0_40 = arith.constant 0 : index
    %56 = vector.load %arg9[%c6_39, %c0_40] : memref<38x64xbf16, #tpu.memory_space<vmem>>, vector<24x64xbf16>
    %c0_41 = arith.constant 0 : index
    %c192 = arith.constant 192 : index
    %57 = vector.load %arg10[%c0_41, %c192] : memref<24x576xbf16, #tpu.memory_space<vmem>>, vector<24x64xbf16>
    tpu.vector_store %arg10[%c0_41, %c192], %56 {strides = array<i32>} : memref<24x576xbf16, #tpu.memory_space<vmem>>, vector<24x64xbf16>,
    %c7_42 = arith.constant 7 : index
    %c0_43 = arith.constant 0 : index
    %58 = vector.load %arg9[%c7_42, %c0_43] : memref<38x64xbf16, #tpu.memory_space<vmem>>, vector<24x64xbf16>
    %c0_44 = arith.constant 0 : index
    %c256 = arith.constant 256 : index
    %59 = vector.load %arg10[%c0_44, %c256] : memref<24x576xbf16, #tpu.memory_space<vmem>>, vector<24x64xbf16>
    tpu.vector_store %arg10[%c0_44, %c256], %58 {strides = array<i32>} : memref<24x576xbf16, #tpu.memory_space<vmem>>, vector<24x64xbf16>,
    %c8 = arith.constant 8 : index
    %c0_45 = arith.constant 0 : index
    %60 = vector.load %arg9[%c8, %c0_45] : memref<38x64xbf16, #tpu.memory_space<vmem>>, vector<24x64xbf16>
    %c0_46 = arith.constant 0 : index
    %c320 = arith.constant 320 : index
    %61 = vector.load %arg10[%c0_46, %c320] : memref<24x576xbf16, #tpu.memory_space<vmem>>, vector<24x64xbf16>
    tpu.vector_store %arg10[%c0_46, %c320], %60 {strides = array<i32>} : memref<24x576xbf16, #tpu.memory_space<vmem>>, vector<24x64xbf16>,
    %c12_47 = arith.constant 12 : index
    %c0_48 = arith.constant 0 : index
    %62 = vector.load %arg9[%c12_47, %c0_48] : memref<38x64xbf16, #tpu.memory_space<vmem>>, vector<24x64xbf16>
    %c0_49 = arith.constant 0 : index
    %c384 = arith.constant 384 : index
    %63 = vector.load %arg10[%c0_49, %c384] : memref<24x576xbf16, #tpu.memory_space<vmem>>, vector<24x64xbf16>
    tpu.vector_store %arg10[%c0_49, %c384], %62 {strides = array<i32>} : memref<24x576xbf16, #tpu.memory_space<vmem>>, vector<24x64xbf16>,
    %c13_50 = arith.constant 13 : index
    %c0_51 = arith.constant 0 : index
    %64 = vector.load %arg9[%c13_50, %c0_51] : memref<38x64xbf16, #tpu.memory_space<vmem>>, vector<24x64xbf16>
    %c0_52 = arith.constant 0 : index
    %c448 = arith.constant 448 : index
    %65 = vector.load %arg10[%c0_52, %c448] : memref<24x576xbf16, #tpu.memory_space<vmem>>, vector<24x64xbf16>
    tpu.vector_store %arg10[%c0_52, %c448], %64 {strides = array<i32>} : memref<24x576xbf16, #tpu.memory_space<vmem>>, vector<24x64xbf16>,
    %c14 = arith.constant 14 : index
    %c0_53 = arith.constant 0 : index
    %66 = vector.load %arg9[%c14, %c0_53] : memref<38x64xbf16, #tpu.memory_space<vmem>>, vector<24x64xbf16>
    %c0_54 = arith.constant 0 : index
    %c512 = arith.constant 512 : index
    %67 = vector.load %arg10[%c0_54, %c512] : memref<24x576xbf16, #tpu.memory_space<vmem>>, vector<24x64xbf16>
    tpu.vector_store %arg10[%c0_54, %c512], %66 {strides = array<i32>} : memref<24x576xbf16, #tpu.memory_space<vmem>>, vector<24x64xbf16>,
    %c0_55 = arith.constant 0 : index
    %c0_56 = arith.constant 0 : index
    %68 = vector.load %arg10[%c0_55, %c0_56] : memref<24x576xbf16, #tpu.memory_space<vmem>>, vector<24x576xbf16>
    %c0_57 = arith.constant 0 : index
    %c0_58 = arith.constant 0 : index
    %c0_59 = arith.constant 0 : index
    %69 = vector.load %arg5[%c0_57, %c0_58, %c0_59] : memref<6x576x64xbf16, #tpu.memory_space<vmem>>, vector<1x576x64xbf16>
    %70 = vector.shape_cast %69 : vector<1x576x64xbf16> to vector<576x64xbf16>
    %cst_60 = arith.constant dense<0.000000e+00> : vector<24x64xf32>
    %71 = tpu.matmul %68, %70, %cst_60 {dimension_numbers = #tpu.dot_dimension_numbers<[1], [0], [0], [1], [0, 0, 1, 1], [], []>} : vector<24x576xbf16>, vector<576x64xbf16>, vector<24x64xf32> -> vector<24x64xf32>
    %c0_61 = arith.constant 0 : index
    %c0_62 = arith.constant 0 : index
    %c0_63 = arith.constant 0 : index
    %72 = vector.load %arg6[%c0_61, %c0_62, %c0_63] : memref<6x1x64xf32, #tpu.memory_space<vmem>>, vector<1x1x64xf32>
    %73 = vector.shape_cast %72 : vector<1x1x64xf32> to vector<1x64xf32>
    %74 = vector.broadcast %73 : vector<1x64xf32> to vector<24x64xf32>
    %75 = arith.addf %71, %74 : vector<24x64xf32>
    %cst_64 = arith.constant 0.000000e+00 : f32
    %76 = vector.broadcast %cst_64 : f32 to vector<24x64xf32>
    %77 = arith.maximumf %75, %76 : vector<24x64xf32>
    %78 = vector.broadcast %49 : vector<24x1xf32> to vector<24x64xf32>
    %79 = arith.mulf %77, %78 : vector<24x64xf32>
    %80 = arith.truncf %79 : vector<24x64xf32> to vector<24x64xbf16>
    %c7_65 = arith.constant 7 : index
    %c0_66 = arith.constant 0 : index
    %81 = vector.load %arg9[%c7_65, %c0_66] : memref<38x64xbf16, #tpu.memory_space<vmem>>, vector<24x64xbf16>
    tpu.vector_store %arg9[%c7_65, %c0_66], %80 {strides = array<i32>} : memref<38x64xbf16, #tpu.memory_space<vmem>>, vector<24x64xbf16>,
    %c0_67 = arith.constant 0 : index
    %c0_68 = arith.constant 0 : index
    %82 = vector.load %arg9[%c0_67, %c0_68] : memref<38x64xbf16, #tpu.memory_space<vmem>>, vector<24x64xbf16>
    %c0_69 = arith.constant 0 : index
    %c0_70 = arith.constant 0 : index
    %83 = vector.load %arg10[%c0_69, %c0_70] : memref<24x576xbf16, #tpu.memory_space<vmem>>, vector<24x64xbf16>
    tpu.vector_store %arg10[%c0_69, %c0_70], %82 {strides = array<i32>} : memref<24x576xbf16, #tpu.memory_space<vmem>>, vector<24x64xbf16>,
    %c1_71 = arith.constant 1 : index
    %c0_72 = arith.constant 0 : index
    %84 = vector.load %arg9[%c1_71, %c0_72] : memref<38x64xbf16, #tpu.memory_space<vmem>>, vector<24x64xbf16>
    %c0_73 = arith.constant 0 : index
    %c64_74 = arith.constant 64 : index
    %85 = vector.load %arg10[%c0_73, %c64_74] : memref<24x576xbf16, #tpu.memory_space<vmem>>, vector<24x64xbf16>
    tpu.vector_store %arg10[%c0_73, %c64_74], %84 {strides = array<i32>} : memref<24x576xbf16, #tpu.memory_space<vmem>>, vector<24x64xbf16>,
    %c2_75 = arith.constant 2 : index
    %c0_76 = arith.constant 0 : index
    %86 = vector.load %arg9[%c2_75, %c0_76] : memref<38x64xbf16, #tpu.memory_space<vmem>>, vector<24x64xbf16>
    %c0_77 = arith.constant 0 : index
    %c128_78 = arith.constant 128 : index
    %87 = vector.load %arg10[%c0_77, %c128_78] : memref<24x576xbf16, #tpu.memory_space<vmem>>, vector<24x64xbf16>
    tpu.vector_store %arg10[%c0_77, %c128_78], %86 {strides = array<i32>} : memref<24x576xbf16, #tpu.memory_space<vmem>>, vector<24x64xbf16>,
    %c6_79 = arith.constant 6 : index
    %c0_80 = arith.constant 0 : index
    %88 = vector.load %arg9[%c6_79, %c0_80] : memref<38x64xbf16, #tpu.memory_space<vmem>>, vector<24x64xbf16>
    %c0_81 = arith.constant 0 : index
    %c192_82 = arith.constant 192 : index
    %89 = vector.load %arg10[%c0_81, %c192_82] : memref<24x576xbf16, #tpu.memory_space<vmem>>, vector<24x64xbf16>
    tpu.vector_store %arg10[%c0_81, %c192_82], %88 {strides = array<i32>} : memref<24x576xbf16, #tpu.memory_space<vmem>>, vector<24x64xbf16>,
    %c7_83 = arith.constant 7 : index
    %c0_84 = arith.constant 0 : index
    %90 = vector.load %arg9[%c7_83, %c0_84] : memref<38x64xbf16, #tpu.memory_space<vmem>>, vector<24x64xbf16>
    %c0_85 = arith.constant 0 : index
    %c256_86 = arith.constant 256 : index
    %91 = vector.load %arg10[%c0_85, %c256_86] : memref<24x576xbf16, #tpu.memory_space<vmem>>, vector<24x64xbf16>
    tpu.vector_store %arg10[%c0_85, %c256_86], %90 {strides = array<i32>} : memref<24x576xbf16, #tpu.memory_space<vmem>>, vector<24x64xbf16>,
    %c8_87 = arith.constant 8 : index
    %c0_88 = arith.constant 0 : index
    %92 = vector.load %arg9[%c8_87, %c0_88] : memref<38x64xbf16, #tpu.memory_space<vmem>>, vector<24x64xbf16>
    %c0_89 = arith.constant 0 : index
    %c320_90 = arith.constant 320 : index
    %93 = vector.load %arg10[%c0_89, %c320_90] : memref<24x576xbf16, #tpu.memory_space<vmem>>, vector<24x64xbf16>
    tpu.vector_store %arg10[%c0_89, %c320_90], %92 {strides = array<i32>} : memref<24x576xbf16, #tpu.memory_space<vmem>>, vector<24x64xbf16>,
    %c12_91 = arith.constant 12 : index
    %c0_92 = arith.constant 0 : index
    %94 = vector.load %arg9[%c12_91, %c0_92] : memref<38x64xbf16, #tpu.memory_space<vmem>>, vector<24x64xbf16>
    %c0_93 = arith.constant 0 : index
    %c384_94 = arith.constant 384 : index
    %95 = vector.load %arg10[%c0_93, %c384_94] : memref<24x576xbf16, #tpu.memory_space<vmem>>, vector<24x64xbf16>
    tpu.vector_store %arg10[%c0_93, %c384_94], %94 {strides = array<i32>} : memref<24x576xbf16, #tpu.memory_space<vmem>>, vector<24x64xbf16>,
    %c13_95 = arith.constant 13 : index
    %c0_96 = arith.constant 0 : index
    %96 = vector.load %arg9[%c13_95, %c0_96] : memref<38x64xbf16, #tpu.memory_space<vmem>>, vector<24x64xbf16>
    %c0_97 = arith.constant 0 : index
    %c448_98 = arith.constant 448 : index
    %97 = vector.load %arg10[%c0_97, %c448_98] : memref<24x576xbf16, #tpu.memory_space<vmem>>, vector<24x64xbf16>
    tpu.vector_store %arg10[%c0_97, %c448_98], %96 {strides = array<i32>} : memref<24x576xbf16, #tpu.memory_space<vmem>>, vector<24x64xbf16>,
    %c14_99 = arith.constant 14 : index
    %c0_100 = arith.constant 0 : index
    %98 = vector.load %arg9[%c14_99, %c0_100] : memref<38x64xbf16, #tpu.memory_space<vmem>>, vector<24x64xbf16>
    %c0_101 = arith.constant 0 : index
    %c512_102 = arith.constant 512 : index
    %99 = vector.load %arg10[%c0_101, %c512_102] : memref<24x576xbf16, #tpu.memory_space<vmem>>, vector<24x64xbf16>
    tpu.vector_store %arg10[%c0_101, %c512_102], %98 {strides = array<i32>} : memref<24x576xbf16, #tpu.memory_space<vmem>>, vector<24x64xbf16>,
    %c0_103 = arith.constant 0 : index
    %c0_104 = arith.constant 0 : index
    %100 = vector.load %arg10[%c0_103, %c0_104] : memref<24x576xbf16, #tpu.memory_space<vmem>>, vector<24x576xbf16>
    %c1_105 = arith.constant 1 : index
    %c0_106 = arith.constant 0 : index
    %c0_107 = arith.constant 0 : index
    %101 = vector.load %arg5[%c1_105, %c0_106, %c0_107] : memref<6x576x64xbf16, #tpu.memory_space<vmem>>, vector<1x576x64xbf16>
    %102 = vector.shape_cast %101 : vector<1x576x64xbf16> to vector<576x64xbf16>
    %cst_108 = arith.constant dense<0.000000e+00> : vector<24x64xf32>
    %103 = tpu.matmul %100, %102, %cst_108 {dimension_numbers = #tpu.dot_dimension_numbers<[1], [0], [0], [1], [0, 0, 1, 1], [], []>} : vector<24x576xbf16>, vector<576x64xbf16>, vector<24x64xf32> -> vector<24x64xf32>
    %c1_109 = arith.constant 1 : index
    %c0_110 = arith.constant 0 : index
    %c0_111 = arith.constant 0 : index
    %104 = vector.load %arg6[%c1_109, %c0_110, %c0_111] : memref<6x1x64xf32, #tpu.memory_space<vmem>>, vector<1x1x64xf32>
    %105 = vector.shape_cast %104 : vector<1x1x64xf32> to vector<1x64xf32>
    %106 = vector.broadcast %105 : vector<1x64xf32> to vector<24x64xf32>
    %107 = arith.addf %103, %106 : vector<24x64xf32>
    %c0_112 = arith.constant 0 : index
    %c0_113 = arith.constant 0 : index
    %108 = vector.load %arg11[%c0_112, %c0_113] : memref<24x64xf32, #tpu.memory_space<vmem>>, vector<24x64xf32>
    %109 = arith.addf %107, %108 : vector<24x64xf32>
    %cst_114 = arith.constant 0.000000e+00 : f32
    %110 = vector.broadcast %cst_114 : f32 to vector<24x64xf32>
    %111 = arith.maximumf %109, %110 : vector<24x64xf32>
    %112 = vector.broadcast %49 : vector<24x1xf32> to vector<24x64xf32>
    %113 = arith.mulf %111, %112 : vector<24x64xf32>
    %114 = arith.truncf %113 : vector<24x64xf32> to vector<24x64xbf16>
    %c7_115 = arith.constant 7 : index
    %c0_116 = arith.constant 0 : index
    %115 = vector.load %arg9[%c7_115, %c0_116] : memref<38x64xbf16, #tpu.memory_space<vmem>>, vector<24x64xbf16>
    tpu.vector_store %arg9[%c7_115, %c0_116], %114 {strides = array<i32>} : memref<38x64xbf16, #tpu.memory_space<vmem>>, vector<24x64xbf16>,
    %c0_117 = arith.constant 0 : index
    %c0_118 = arith.constant 0 : index
    %116 = vector.load %arg11[%c0_117, %c0_118] : memref<24x64xf32, #tpu.memory_space<vmem>>, vector<24x64xf32>
    tpu.vector_store %arg11[%c0_117, %c0_118], %113 {strides = array<i32>} : memref<24x64xf32, #tpu.memory_space<vmem>>, vector<24x64xf32>,
    %c0_119 = arith.constant 0 : index
    %c0_120 = arith.constant 0 : index
    %117 = vector.load %arg9[%c0_119, %c0_120] : memref<38x64xbf16, #tpu.memory_space<vmem>>, vector<24x64xbf16>
    %c0_121 = arith.constant 0 : index
    %c0_122 = arith.constant 0 : index
    %118 = vector.load %arg10[%c0_121, %c0_122] : memref<24x576xbf16, #tpu.memory_space<vmem>>, vector<24x64xbf16>
    tpu.vector_store %arg10[%c0_121, %c0_122], %117 {strides = array<i32>} : memref<24x576xbf16, #tpu.memory_space<vmem>>, vector<24x64xbf16>,
    %c1_123 = arith.constant 1 : index
    %c0_124 = arith.constant 0 : index
    %119 = vector.load %arg9[%c1_123, %c0_124] : memref<38x64xbf16, #tpu.memory_space<vmem>>, vector<24x64xbf16>
    %c0_125 = arith.constant 0 : index
    %c64_126 = arith.constant 64 : index
    %120 = vector.load %arg10[%c0_125, %c64_126] : memref<24x576xbf16, #tpu.memory_space<vmem>>, vector<24x64xbf16>
    tpu.vector_store %arg10[%c0_125, %c64_126], %119 {strides = array<i32>} : memref<24x576xbf16, #tpu.memory_space<vmem>>, vector<24x64xbf16>,
    %c2_127 = arith.constant 2 : index
    %c0_128 = arith.constant 0 : index
    %121 = vector.load %arg9[%c2_127, %c0_128] : memref<38x64xbf16, #tpu.memory_space<vmem>>, vector<24x64xbf16>
    %c0_129 = arith.constant 0 : index
    %c128_130 = arith.constant 128 : index
    %122 = vector.load %arg10[%c0_129, %c128_130] : memref<24x576xbf16, #tpu.memory_space<vmem>>, vector<24x64xbf16>
    tpu.vector_store %arg10[%c0_129, %c128_130], %121 {strides = array<i32>} : memref<24x576xbf16, #tpu.memory_space<vmem>>, vector<24x64xbf16>,
    %c6_131 = arith.constant 6 : index
    %c0_132 = arith.constant 0 : index
    %123 = vector.load %arg9[%c6_131, %c0_132] : memref<38x64xbf16, #tpu.memory_space<vmem>>, vector<24x64xbf16>
    %c0_133 = arith.constant 0 : index
    %c192_134 = arith.constant 192 : index
    %124 = vector.load %arg10[%c0_133, %c192_134] : memref<24x576xbf16, #tpu.memory_space<vmem>>, vector<24x64xbf16>
    tpu.vector_store %arg10[%c0_133, %c192_134], %123 {strides = array<i32>} : memref<24x576xbf16, #tpu.memory_space<vmem>>, vector<24x64xbf16>,
    %c7_135 = arith.constant 7 : index
    %c0_136 = arith.constant 0 : index
    %125 = vector.load %arg9[%c7_135, %c0_136] : memref<38x64xbf16, #tpu.memory_space<vmem>>, vector<24x64xbf16>
    %c0_137 = arith.constant 0 : index
    %c256_138 = arith.constant 256 : index
    %126 = vector.load %arg10[%c0_137, %c256_138] : memref<24x576xbf16, #tpu.memory_space<vmem>>, vector<24x64xbf16>
    tpu.vector_store %arg10[%c0_137, %c256_138], %125 {strides = array<i32>} : memref<24x576xbf16, #tpu.memory_space<vmem>>, vector<24x64xbf16>,
    %c8_139 = arith.constant 8 : index
    %c0_140 = arith.constant 0 : index
    %127 = vector.load %arg9[%c8_139, %c0_140] : memref<38x64xbf16, #tpu.memory_space<vmem>>, vector<24x64xbf16>
    %c0_141 = arith.constant 0 : index
    %c320_142 = arith.constant 320 : index
    %128 = vector.load %arg10[%c0_141, %c320_142] : memref<24x576xbf16, #tpu.memory_space<vmem>>, vector<24x64xbf16>
    tpu.vector_store %arg10[%c0_141, %c320_142], %127 {strides = array<i32>} : memref<24x576xbf16, #tpu.memory_space<vmem>>, vector<24x64xbf16>,
    %c12_143 = arith.constant 12 : index
    %c0_144 = arith.constant 0 : index
    %129 = vector.load %arg9[%c12_143, %c0_144] : memref<38x64xbf16, #tpu.memory_space<vmem>>, vector<24x64xbf16>
    %c0_145 = arith.constant 0 : index
    %c384_146 = arith.constant 384 : index
    %130 = vector.load %arg10[%c0_145, %c384_146] : memref<24x576xbf16, #tpu.memory_space<vmem>>, vector<24x64xbf16>
    tpu.vector_store %arg10[%c0_145, %c384_146], %129 {strides = array<i32>} : memref<24x576xbf16, #tpu.memory_space<vmem>>, vector<24x64xbf16>,
    %c13_147 = arith.constant 13 : index
    %c0_148 = arith.constant 0 : index
    %131 = vector.load %arg9[%c13_147, %c0_148] : memref<38x64xbf16, #tpu.memory_space<vmem>>, vector<24x64xbf16>
    %c0_149 = arith.constant 0 : index
    %c448_150 = arith.constant 448 : index
    %132 = vector.load %arg10[%c0_149, %c448_150] : memref<24x576xbf16, #tpu.memory_space<vmem>>, vector<24x64xbf16>
    tpu.vector_store %arg10[%c0_149, %c448_150], %131 {strides = array<i32>} : memref<24x576xbf16, #tpu.memory_space<vmem>>, vector<24x64xbf16>,
    %c14_151 = arith.constant 14 : index
    %c0_152 = arith.constant 0 : index
    %133 = vector.load %arg9[%c14_151, %c0_152] : memref<38x64xbf16, #tpu.memory_space<vmem>>, vector<24x64xbf16>
    %c0_153 = arith.constant 0 : index
    %c512_154 = arith.constant 512 : index
    %134 = vector.load %arg10[%c0_153, %c512_154] : memref<24x576xbf16, #tpu.memory_space<vmem>>, vector<24x64xbf16>
    tpu.vector_store %arg10[%c0_153, %c512_154], %133 {strides = array<i32>} : memref<24x576xbf16, #tpu.memory_space<vmem>>, vector<24x64xbf16>,
    %c0_155 = arith.constant 0 : index
    %c0_156 = arith.constant 0 : index
    %135 = vector.load %arg10[%c0_155, %c0_156] : memref<24x576xbf16, #tpu.memory_space<vmem>>, vector<24x576xbf16>
    %c2_157 = arith.constant 2 : index
    %c0_158 = arith.constant 0 : index
    %c0_159 = arith.constant 0 : index
    %136 = vector.load %arg5[%c2_157, %c0_158, %c0_159] : memref<6x576x64xbf16, #tpu.memory_space<vmem>>, vector<1x576x64xbf16>
    %137 = vector.shape_cast %136 : vector<1x576x64xbf16> to vector<576x64xbf16>
    %cst_160 = arith.constant dense<0.000000e+00> : vector<24x64xf32>
    %138 = tpu.matmul %135, %137, %cst_160 {dimension_numbers = #tpu.dot_dimension_numbers<[1], [0], [0], [1], [0, 0, 1, 1], [], []>} : vector<24x576xbf16>, vector<576x64xbf16>, vector<24x64xf32> -> vector<24x64xf32>
    %c2_161 = arith.constant 2 : index
    %c0_162 = arith.constant 0 : index
    %c0_163 = arith.constant 0 : index
    %139 = vector.load %arg6[%c2_161, %c0_162, %c0_163] : memref<6x1x64xf32, #tpu.memory_space<vmem>>, vector<1x1x64xf32>
    %140 = vector.shape_cast %139 : vector<1x1x64xf32> to vector<1x64xf32>
    %141 = vector.broadcast %140 : vector<1x64xf32> to vector<24x64xf32>
    %142 = arith.addf %138, %141 : vector<24x64xf32>
    %cst_164 = arith.constant 0.000000e+00 : f32
    %143 = vector.broadcast %cst_164 : f32 to vector<24x64xf32>
    %144 = arith.maximumf %142, %143 : vector<24x64xf32>
    %145 = vector.broadcast %49 : vector<24x1xf32> to vector<24x64xf32>
    %146 = arith.mulf %144, %145 : vector<24x64xf32>
    %147 = arith.truncf %146 : vector<24x64xf32> to vector<24x64xbf16>
    %c7_165 = arith.constant 7 : index
    %c0_166 = arith.constant 0 : index
    %148 = vector.load %arg9[%c7_165, %c0_166] : memref<38x64xbf16, #tpu.memory_space<vmem>>, vector<24x64xbf16>
    tpu.vector_store %arg9[%c7_165, %c0_166], %147 {strides = array<i32>} : memref<38x64xbf16, #tpu.memory_space<vmem>>, vector<24x64xbf16>,
    %c0_167 = arith.constant 0 : index
    %c0_168 = arith.constant 0 : index
    %149 = vector.load %arg9[%c0_167, %c0_168] : memref<38x64xbf16, #tpu.memory_space<vmem>>, vector<24x64xbf16>
    %c0_169 = arith.constant 0 : index
    %c0_170 = arith.constant 0 : index
    %150 = vector.load %arg10[%c0_169, %c0_170] : memref<24x576xbf16, #tpu.memory_space<vmem>>, vector<24x64xbf16>
    tpu.vector_store %arg10[%c0_169, %c0_170], %149 {strides = array<i32>} : memref<24x576xbf16, #tpu.memory_space<vmem>>, vector<24x64xbf16>,
    %c1_171 = arith.constant 1 : index
    %c0_172 = arith.constant 0 : index
    %151 = vector.load %arg9[%c1_171, %c0_172] : memref<38x64xbf16, #tpu.memory_space<vmem>>, vector<24x64xbf16>
    %c0_173 = arith.constant 0 : index
    %c64_174 = arith.constant 64 : index
    %152 = vector.load %arg10[%c0_173, %c64_174] : memref<24x576xbf16, #tpu.memory_space<vmem>>, vector<24x64xbf16>
    tpu.vector_store %arg10[%c0_173, %c64_174], %151 {strides = array<i32>} : memref<24x576xbf16, #tpu.memory_space<vmem>>, vector<24x64xbf16>,
    %c2_175 = arith.constant 2 : index
    %c0_176 = arith.constant 0 : index
    %153 = vector.load %arg9[%c2_175, %c0_176] : memref<38x64xbf16, #tpu.memory_space<vmem>>, vector<24x64xbf16>
    %c0_177 = arith.constant 0 : index
    %c128_178 = arith.constant 128 : index
    %154 = vector.load %arg10[%c0_177, %c128_178] : memref<24x576xbf16, #tpu.memory_space<vmem>>, vector<24x64xbf16>
    tpu.vector_store %arg10[%c0_177, %c128_178], %153 {strides = array<i32>} : memref<24x576xbf16, #tpu.memory_space<vmem>>, vector<24x64xbf16>,
    %c6_179 = arith.constant 6 : index
    %c0_180 = arith.constant 0 : index
    %155 = vector.load %arg9[%c6_179, %c0_180] : memref<38x64xbf16, #tpu.memory_space<vmem>>, vector<24x64xbf16>
    %c0_181 = arith.constant 0 : index
    %c192_182 = arith.constant 192 : index
    %156 = vector.load %arg10[%c0_181, %c192_182] : memref<24x576xbf16, #tpu.memory_space<vmem>>, vector<24x64xbf16>
    tpu.vector_store %arg10[%c0_181, %c192_182], %155 {strides = array<i32>} : memref<24x576xbf16, #tpu.memory_space<vmem>>, vector<24x64xbf16>,
    %c7_183 = arith.constant 7 : index
    %c0_184 = arith.constant 0 : index
    %157 = vector.load %arg9[%c7_183, %c0_184] : memref<38x64xbf16, #tpu.memory_space<vmem>>, vector<24x64xbf16>
    %c0_185 = arith.constant 0 : index
    %c256_186 = arith.constant 256 : index
    %158 = vector.load %arg10[%c0_185, %c256_186] : memref<24x576xbf16, #tpu.memory_space<vmem>>, vector<24x64xbf16>
    tpu.vector_store %arg10[%c0_185, %c256_186], %157 {strides = array<i32>} : memref<24x576xbf16, #tpu.memory_space<vmem>>, vector<24x64xbf16>,
    %c8_187 = arith.constant 8 : index
    %c0_188 = arith.constant 0 : index
    %159 = vector.load %arg9[%c8_187, %c0_188] : memref<38x64xbf16, #tpu.memory_space<vmem>>, vector<24x64xbf16>
    %c0_189 = arith.constant 0 : index
    %c320_190 = arith.constant 320 : index
    %160 = vector.load %arg10[%c0_189, %c320_190] : memref<24x576xbf16, #tpu.memory_space<vmem>>, vector<24x64xbf16>
    tpu.vector_store %arg10[%c0_189, %c320_190], %159 {strides = array<i32>} : memref<24x576xbf16, #tpu.memory_space<vmem>>, vector<24x64xbf16>,
    %c12_191 = arith.constant 12 : index
    %c0_192 = arith.constant 0 : index
    %161 = vector.load %arg9[%c12_191, %c0_192] : memref<38x64xbf16, #tpu.memory_space<vmem>>, vector<24x64xbf16>
    %c0_193 = arith.constant 0 : index
    %c384_194 = arith.constant 384 : index
    %162 = vector.load %arg10[%c0_193, %c384_194] : memref<24x576xbf16, #tpu.memory_space<vmem>>, vector<24x64xbf16>
    tpu.vector_store %arg10[%c0_193, %c384_194], %161 {strides = array<i32>} : memref<24x576xbf16, #tpu.memory_space<vmem>>, vector<24x64xbf16>,
    %c13_195 = arith.constant 13 : index
    %c0_196 = arith.constant 0 : index
    %163 = vector.load %arg9[%c13_195, %c0_196] : memref<38x64xbf16, #tpu.memory_space<vmem>>, vector<24x64xbf16>
    %c0_197 = arith.constant 0 : index
    %c448_198 = arith.constant 448 : index
    %164 = vector.load %arg10[%c0_197, %c448_198] : memref<24x576xbf16, #tpu.memory_space<vmem>>, vector<24x64xbf16>
    tpu.vector_store %arg10[%c0_197, %c448_198], %163 {strides = array<i32>} : memref<24x576xbf16, #tpu.memory_space<vmem>>, vector<24x64xbf16>,
    %c14_199 = arith.constant 14 : index
    %c0_200 = arith.constant 0 : index
    %165 = vector.load %arg9[%c14_199, %c0_200] : memref<38x64xbf16, #tpu.memory_space<vmem>>, vector<24x64xbf16>
    %c0_201 = arith.constant 0 : index
    %c512_202 = arith.constant 512 : index
    %166 = vector.load %arg10[%c0_201, %c512_202] : memref<24x576xbf16, #tpu.memory_space<vmem>>, vector<24x64xbf16>
    tpu.vector_store %arg10[%c0_201, %c512_202], %165 {strides = array<i32>} : memref<24x576xbf16, #tpu.memory_space<vmem>>, vector<24x64xbf16>,
    %c0_203 = arith.constant 0 : index
    %c0_204 = arith.constant 0 : index
    %167 = vector.load %arg10[%c0_203, %c0_204] : memref<24x576xbf16, #tpu.memory_space<vmem>>, vector<24x576xbf16>
    %c3 = arith.constant 3 : index
    %c0_205 = arith.constant 0 : index
    %c0_206 = arith.constant 0 : index
    %168 = vector.load %arg5[%c3, %c0_205, %c0_206] : memref<6x576x64xbf16, #tpu.memory_space<vmem>>, vector<1x576x64xbf16>
    %169 = vector.shape_cast %168 : vector<1x576x64xbf16> to vector<576x64xbf16>
    %cst_207 = arith.constant dense<0.000000e+00> : vector<24x64xf32>
    %170 = tpu.matmul %167, %169, %cst_207 {dimension_numbers = #tpu.dot_dimension_numbers<[1], [0], [0], [1], [0, 0, 1, 1], [], []>} : vector<24x576xbf16>, vector<576x64xbf16>, vector<24x64xf32> -> vector<24x64xf32>
    %c3_208 = arith.constant 3 : index
    %c0_209 = arith.constant 0 : index
    %c0_210 = arith.constant 0 : index
    %171 = vector.load %arg6[%c3_208, %c0_209, %c0_210] : memref<6x1x64xf32, #tpu.memory_space<vmem>>, vector<1x1x64xf32>
    %172 = vector.shape_cast %171 : vector<1x1x64xf32> to vector<1x64xf32>
    %173 = vector.broadcast %172 : vector<1x64xf32> to vector<24x64xf32>
    %174 = arith.addf %170, %173 : vector<24x64xf32>
    %c0_211 = arith.constant 0 : index
    %c0_212 = arith.constant 0 : index
    %175 = vector.load %arg11[%c0_211, %c0_212] : memref<24x64xf32, #tpu.memory_space<vmem>>, vector<24x64xf32>
    %176 = arith.addf %174, %175 : vector<24x64xf32>
    %cst_213 = arith.constant 0.000000e+00 : f32
    %177 = vector.broadcast %cst_213 : f32 to vector<24x64xf32>
    %178 = arith.maximumf %176, %177 : vector<24x64xf32>
    %179 = vector.broadcast %49 : vector<24x1xf32> to vector<24x64xf32>
    %180 = arith.mulf %178, %179 : vector<24x64xf32>
    %181 = arith.truncf %180 : vector<24x64xf32> to vector<24x64xbf16>
    %c7_214 = arith.constant 7 : index
    %c0_215 = arith.constant 0 : index
    %182 = vector.load %arg9[%c7_214, %c0_215] : memref<38x64xbf16, #tpu.memory_space<vmem>>, vector<24x64xbf16>
    tpu.vector_store %arg9[%c7_214, %c0_215], %181 {strides = array<i32>} : memref<38x64xbf16, #tpu.memory_space<vmem>>, vector<24x64xbf16>,
    %c0_216 = arith.constant 0 : index
    %c0_217 = arith.constant 0 : index
    %183 = vector.load %arg11[%c0_216, %c0_217] : memref<24x64xf32, #tpu.memory_space<vmem>>, vector<24x64xf32>
    tpu.vector_store %arg11[%c0_216, %c0_217], %180 {strides = array<i32>} : memref<24x64xf32, #tpu.memory_space<vmem>>, vector<24x64xf32>,
    %c0_218 = arith.constant 0 : index
    %c0_219 = arith.constant 0 : index
    %184 = vector.load %arg9[%c0_218, %c0_219] : memref<38x64xbf16, #tpu.memory_space<vmem>>, vector<24x64xbf16>
    %c0_220 = arith.constant 0 : index
    %c0_221 = arith.constant 0 : index
    %185 = vector.load %arg10[%c0_220, %c0_221] : memref<24x576xbf16, #tpu.memory_space<vmem>>, vector<24x64xbf16>
    tpu.vector_store %arg10[%c0_220, %c0_221], %184 {strides = array<i32>} : memref<24x576xbf16, #tpu.memory_space<vmem>>, vector<24x64xbf16>,
    %c1_222 = arith.constant 1 : index
    %c0_223 = arith.constant 0 : index
    %186 = vector.load %arg9[%c1_222, %c0_223] : memref<38x64xbf16, #tpu.memory_space<vmem>>, vector<24x64xbf16>
    %c0_224 = arith.constant 0 : index
    %c64_225 = arith.constant 64 : index
    %187 = vector.load %arg10[%c0_224, %c64_225] : memref<24x576xbf16, #tpu.memory_space<vmem>>, vector<24x64xbf16>
    tpu.vector_store %arg10[%c0_224, %c64_225], %186 {strides = array<i32>} : memref<24x576xbf16, #tpu.memory_space<vmem>>, vector<24x64xbf16>,
    %c2_226 = arith.constant 2 : index
    %c0_227 = arith.constant 0 : index
    %188 = vector.load %arg9[%c2_226, %c0_227] : memref<38x64xbf16, #tpu.memory_space<vmem>>, vector<24x64xbf16>
    %c0_228 = arith.constant 0 : index
    %c128_229 = arith.constant 128 : index
    %189 = vector.load %arg10[%c0_228, %c128_229] : memref<24x576xbf16, #tpu.memory_space<vmem>>, vector<24x64xbf16>
    tpu.vector_store %arg10[%c0_228, %c128_229], %188 {strides = array<i32>} : memref<24x576xbf16, #tpu.memory_space<vmem>>, vector<24x64xbf16>,
    %c6_230 = arith.constant 6 : index
    %c0_231 = arith.constant 0 : index
    %190 = vector.load %arg9[%c6_230, %c0_231] : memref<38x64xbf16, #tpu.memory_space<vmem>>, vector<24x64xbf16>
    %c0_232 = arith.constant 0 : index
    %c192_233 = arith.constant 192 : index
    %191 = vector.load %arg10[%c0_232, %c192_233] : memref<24x576xbf16, #tpu.memory_space<vmem>>, vector<24x64xbf16>
    tpu.vector_store %arg10[%c0_232, %c192_233], %190 {strides = array<i32>} : memref<24x576xbf16, #tpu.memory_space<vmem>>, vector<24x64xbf16>,
    %c7_234 = arith.constant 7 : index
    %c0_235 = arith.constant 0 : index
    %192 = vector.load %arg9[%c7_234, %c0_235] : memref<38x64xbf16, #tpu.memory_space<vmem>>, vector<24x64xbf16>
    %c0_236 = arith.constant 0 : index
    %c256_237 = arith.constant 256 : index
    %193 = vector.load %arg10[%c0_236, %c256_237] : memref<24x576xbf16, #tpu.memory_space<vmem>>, vector<24x64xbf16>
    tpu.vector_store %arg10[%c0_236, %c256_237], %192 {strides = array<i32>} : memref<24x576xbf16, #tpu.memory_space<vmem>>, vector<24x64xbf16>,
    %c8_238 = arith.constant 8 : index
    %c0_239 = arith.constant 0 : index
    %194 = vector.load %arg9[%c8_238, %c0_239] : memref<38x64xbf16, #tpu.memory_space<vmem>>, vector<24x64xbf16>
    %c0_240 = arith.constant 0 : index
    %c320_241 = arith.constant 320 : index
    %195 = vector.load %arg10[%c0_240, %c320_241] : memref<24x576xbf16, #tpu.memory_space<vmem>>, vector<24x64xbf16>
    tpu.vector_store %arg10[%c0_240, %c320_241], %194 {strides = array<i32>} : memref<24x576xbf16, #tpu.memory_space<vmem>>, vector<24x64xbf16>,
    %c12_242 = arith.constant 12 : index
    %c0_243 = arith.constant 0 : index
    %196 = vector.load %arg9[%c12_242, %c0_243] : memref<38x64xbf16, #tpu.memory_space<vmem>>, vector<24x64xbf16>
    %c0_244 = arith.constant 0 : index
    %c384_245 = arith.constant 384 : index
    %197 = vector.load %arg10[%c0_244, %c384_245] : memref<24x576xbf16, #tpu.memory_space<vmem>>, vector<24x64xbf16>
    tpu.vector_store %arg10[%c0_244, %c384_245], %196 {strides = array<i32>} : memref<24x576xbf16, #tpu.memory_space<vmem>>, vector<24x64xbf16>,
    %c13_246 = arith.constant 13 : index
    %c0_247 = arith.constant 0 : index
    %198 = vector.load %arg9[%c13_246, %c0_247] : memref<38x64xbf16, #tpu.memory_space<vmem>>, vector<24x64xbf16>
    %c0_248 = arith.constant 0 : index
    %c448_249 = arith.constant 448 : index
    %199 = vector.load %arg10[%c0_248, %c448_249] : memref<24x576xbf16, #tpu.memory_space<vmem>>, vector<24x64xbf16>
    tpu.vector_store %arg10[%c0_248, %c448_249], %198 {strides = array<i32>} : memref<24x576xbf16, #tpu.memory_space<vmem>>, vector<24x64xbf16>,
    %c14_250 = arith.constant 14 : index
    %c0_251 = arith.constant 0 : index
    %200 = vector.load %arg9[%c14_250, %c0_251] : memref<38x64xbf16, #tpu.memory_space<vmem>>, vector<24x64xbf16>
    %c0_252 = arith.constant 0 : index
    %c512_253 = arith.constant 512 : index
    %201 = vector.load %arg10[%c0_252, %c512_253] : memref<24x576xbf16, #tpu.memory_space<vmem>>, vector<24x64xbf16>
    tpu.vector_store %arg10[%c0_252, %c512_253], %200 {strides = array<i32>} : memref<24x576xbf16, #tpu.memory_space<vmem>>, vector<24x64xbf16>,
    %c0_254 = arith.constant 0 : index
    %c0_255 = arith.constant 0 : index
    %202 = vector.load %arg10[%c0_254, %c0_255] : memref<24x576xbf16, #tpu.memory_space<vmem>>, vector<24x576xbf16>
    %c4 = arith.constant 4 : index
    %c0_256 = arith.constant 0 : index
    %c0_257 = arith.constant 0 : index
    %203 = vector.load %arg5[%c4, %c0_256, %c0_257] : memref<6x576x64xbf16, #tpu.memory_space<vmem>>, vector<1x576x64xbf16>
    %204 = vector.shape_cast %203 : vector<1x576x64xbf16> to vector<576x64xbf16>
    %cst_258 = arith.constant dense<0.000000e+00> : vector<24x64xf32>
    %205 = tpu.matmul %202, %204, %cst_258 {dimension_numbers = #tpu.dot_dimension_numbers<[1], [0], [0], [1], [0, 0, 1, 1], [], []>} : vector<24x576xbf16>, vector<576x64xbf16>, vector<24x64xf32> -> vector<24x64xf32>
    %c4_259 = arith.constant 4 : index
    %c0_260 = arith.constant 0 : index
    %c0_261 = arith.constant 0 : index
    %206 = vector.load %arg6[%c4_259, %c0_260, %c0_261] : memref<6x1x64xf32, #tpu.memory_space<vmem>>, vector<1x1x64xf32>
    %207 = vector.shape_cast %206 : vector<1x1x64xf32> to vector<1x64xf32>
    %208 = vector.broadcast %207 : vector<1x64xf32> to vector<24x64xf32>
    %209 = arith.addf %205, %208 : vector<24x64xf32>
    %cst_262 = arith.constant 0.000000e+00 : f32
    %210 = vector.broadcast %cst_262 : f32 to vector<24x64xf32>
    %211 = arith.maximumf %209, %210 : vector<24x64xf32>
    %212 = vector.broadcast %49 : vector<24x1xf32> to vector<24x64xf32>
    %213 = arith.mulf %211, %212 : vector<24x64xf32>
    %214 = arith.truncf %213 : vector<24x64xf32> to vector<24x64xbf16>
    %c7_263 = arith.constant 7 : index
    %c0_264 = arith.constant 0 : index
    %215 = vector.load %arg9[%c7_263, %c0_264] : memref<38x64xbf16, #tpu.memory_space<vmem>>, vector<24x64xbf16>
    tpu.vector_store %arg9[%c7_263, %c0_264], %214 {strides = array<i32>} : memref<38x64xbf16, #tpu.memory_space<vmem>>, vector<24x64xbf16>,
    %c0_265 = arith.constant 0 : index
    %c0_266 = arith.constant 0 : index
    %216 = vector.load %arg9[%c0_265, %c0_266] : memref<38x64xbf16, #tpu.memory_space<vmem>>, vector<24x64xbf16>
    %c0_267 = arith.constant 0 : index
    %c0_268 = arith.constant 0 : index
    %217 = vector.load %arg10[%c0_267, %c0_268] : memref<24x576xbf16, #tpu.memory_space<vmem>>, vector<24x64xbf16>
    tpu.vector_store %arg10[%c0_267, %c0_268], %216 {strides = array<i32>} : memref<24x576xbf16, #tpu.memory_space<vmem>>, vector<24x64xbf16>,
    %c1_269 = arith.constant 1 : index
    %c0_270 = arith.constant 0 : index
    %218 = vector.load %arg9[%c1_269, %c0_270] : memref<38x64xbf16, #tpu.memory_space<vmem>>, vector<24x64xbf16>
    %c0_271 = arith.constant 0 : index
    %c64_272 = arith.constant 64 : index
    %219 = vector.load %arg10[%c0_271, %c64_272] : memref<24x576xbf16, #tpu.memory_space<vmem>>, vector<24x64xbf16>
    tpu.vector_store %arg10[%c0_271, %c64_272], %218 {strides = array<i32>} : memref<24x576xbf16, #tpu.memory_space<vmem>>, vector<24x64xbf16>,
    %c2_273 = arith.constant 2 : index
    %c0_274 = arith.constant 0 : index
    %220 = vector.load %arg9[%c2_273, %c0_274] : memref<38x64xbf16, #tpu.memory_space<vmem>>, vector<24x64xbf16>
    %c0_275 = arith.constant 0 : index
    %c128_276 = arith.constant 128 : index
    %221 = vector.load %arg10[%c0_275, %c128_276] : memref<24x576xbf16, #tpu.memory_space<vmem>>, vector<24x64xbf16>
    tpu.vector_store %arg10[%c0_275, %c128_276], %220 {strides = array<i32>} : memref<24x576xbf16, #tpu.memory_space<vmem>>, vector<24x64xbf16>,
    %c6_277 = arith.constant 6 : index
    %c0_278 = arith.constant 0 : index
    %222 = vector.load %arg9[%c6_277, %c0_278] : memref<38x64xbf16, #tpu.memory_space<vmem>>, vector<24x64xbf16>
    %c0_279 = arith.constant 0 : index
    %c192_280 = arith.constant 192 : index
    %223 = vector.load %arg10[%c0_279, %c192_280] : memref<24x576xbf16, #tpu.memory_space<vmem>>, vector<24x64xbf16>
    tpu.vector_store %arg10[%c0_279, %c192_280], %222 {strides = array<i32>} : memref<24x576xbf16, #tpu.memory_space<vmem>>, vector<24x64xbf16>,
    %c7_281 = arith.constant 7 : index
    %c0_282 = arith.constant 0 : index
    %224 = vector.load %arg9[%c7_281, %c0_282] : memref<38x64xbf16, #tpu.memory_space<vmem>>, vector<24x64xbf16>
    %c0_283 = arith.constant 0 : index
    %c256_284 = arith.constant 256 : index
    %225 = vector.load %arg10[%c0_283, %c256_284] : memref<24x576xbf16, #tpu.memory_space<vmem>>, vector<24x64xbf16>
    tpu.vector_store %arg10[%c0_283, %c256_284], %224 {strides = array<i32>} : memref<24x576xbf16, #tpu.memory_space<vmem>>, vector<24x64xbf16>,
    %c8_285 = arith.constant 8 : index
    %c0_286 = arith.constant 0 : index
    %226 = vector.load %arg9[%c8_285, %c0_286] : memref<38x64xbf16, #tpu.memory_space<vmem>>, vector<24x64xbf16>
    %c0_287 = arith.constant 0 : index
    %c320_288 = arith.constant 320 : index
    %227 = vector.load %arg10[%c0_287, %c320_288] : memref<24x576xbf16, #tpu.memory_space<vmem>>, vector<24x64xbf16>
    tpu.vector_store %arg10[%c0_287, %c320_288], %226 {strides = array<i32>} : memref<24x576xbf16, #tpu.memory_space<vmem>>, vector<24x64xbf16>,
    %c12_289 = arith.constant 12 : index
    %c0_290 = arith.constant 0 : index
    %228 = vector.load %arg9[%c12_289, %c0_290] : memref<38x64xbf16, #tpu.memory_space<vmem>>, vector<24x64xbf16>
    %c0_291 = arith.constant 0 : index
    %c384_292 = arith.constant 384 : index
    %229 = vector.load %arg10[%c0_291, %c384_292] : memref<24x576xbf16, #tpu.memory_space<vmem>>, vector<24x64xbf16>
    tpu.vector_store %arg10[%c0_291, %c384_292], %228 {strides = array<i32>} : memref<24x576xbf16, #tpu.memory_space<vmem>>, vector<24x64xbf16>,
    %c13_293 = arith.constant 13 : index
    %c0_294 = arith.constant 0 : index
    %230 = vector.load %arg9[%c13_293, %c0_294] : memref<38x64xbf16, #tpu.memory_space<vmem>>, vector<24x64xbf16>
    %c0_295 = arith.constant 0 : index
    %c448_296 = arith.constant 448 : index
    %231 = vector.load %arg10[%c0_295, %c448_296] : memref<24x576xbf16, #tpu.memory_space<vmem>>, vector<24x64xbf16>
    tpu.vector_store %arg10[%c0_295, %c448_296], %230 {strides = array<i32>} : memref<24x576xbf16, #tpu.memory_space<vmem>>, vector<24x64xbf16>,
    %c14_297 = arith.constant 14 : index
    %c0_298 = arith.constant 0 : index
    %232 = vector.load %arg9[%c14_297, %c0_298] : memref<38x64xbf16, #tpu.memory_space<vmem>>, vector<24x64xbf16>
    %c0_299 = arith.constant 0 : index
    %c512_300 = arith.constant 512 : index
    %233 = vector.load %arg10[%c0_299, %c512_300] : memref<24x576xbf16, #tpu.memory_space<vmem>>, vector<24x64xbf16>
    tpu.vector_store %arg10[%c0_299, %c512_300], %232 {strides = array<i32>} : memref<24x576xbf16, #tpu.memory_space<vmem>>, vector<24x64xbf16>,
    %c0_301 = arith.constant 0 : index
    %c0_302 = arith.constant 0 : index
    %234 = vector.load %arg10[%c0_301, %c0_302] : memref<24x576xbf16, #tpu.memory_space<vmem>>, vector<24x576xbf16>
    %c5 = arith.constant 5 : index
    %c0_303 = arith.constant 0 : index
    %c0_304 = arith.constant 0 : index
    %235 = vector.load %arg5[%c5, %c0_303, %c0_304] : memref<6x576x64xbf16, #tpu.memory_space<vmem>>, vector<1x576x64xbf16>
    %236 = vector.shape_cast %235 : vector<1x576x64xbf16> to vector<576x64xbf16>
    %cst_305 = arith.constant dense<0.000000e+00> : vector<24x64xf32>
    %237 = tpu.matmul %234, %236, %cst_305 {dimension_numbers = #tpu.dot_dimension_numbers<[1], [0], [0], [1], [0, 0, 1, 1], [], []>} : vector<24x576xbf16>, vector<576x64xbf16>, vector<24x64xf32> -> vector<24x64xf32>
    %c5_306 = arith.constant 5 : index
    %c0_307 = arith.constant 0 : index
    %c0_308 = arith.constant 0 : index
    %238 = vector.load %arg6[%c5_306, %c0_307, %c0_308] : memref<6x1x64xf32, #tpu.memory_space<vmem>>, vector<1x1x64xf32>
    %239 = vector.shape_cast %238 : vector<1x1x64xf32> to vector<1x64xf32>
    %240 = vector.broadcast %239 : vector<1x64xf32> to vector<24x64xf32>
    %241 = arith.addf %237, %240 : vector<24x64xf32>
    %c0_309 = arith.constant 0 : index
    %c0_310 = arith.constant 0 : index
    %242 = vector.load %arg11[%c0_309, %c0_310] : memref<24x64xf32, #tpu.memory_space<vmem>>, vector<24x64xf32>
    %243 = arith.addf %241, %242 : vector<24x64xf32>
    %cst_311 = arith.constant 0.000000e+00 : f32
    %244 = vector.broadcast %cst_311 : f32 to vector<24x64xf32>
    %245 = arith.maximumf %243, %244 : vector<24x64xf32>
    %246 = vector.broadcast %49 : vector<24x1xf32> to vector<24x64xf32>
    %247 = arith.mulf %245, %246 : vector<24x64xf32>
    %c0_312 = arith.constant 0 : index
    %c0_313 = arith.constant 0 : index
    %c0_314 = arith.constant 0 : index
    %248 = vector.load %arg8[%c0_312, %c0_313, %c0_314] : memref<1x24x64xf32, #tpu.memory_space<vmem>>, vector<1x24x64xf32>
    %249 = vector.shape_cast %248 : vector<1x24x64xf32> to vector<24x64xf32>
    %250 = vector.shape_cast %247 : vector<24x64xf32> to vector<1x24x64xf32>
    tpu.vector_store %arg8[%c0_312, %c0_313, %c0_314], %250 {strides = array<i32>} : memref<1x24x64xf32, #tpu.memory_space<vmem>>, vector<1x24x64xf32>,
    return
  }
  func.func @transform_0(%arg0: i32) -> (i32, i32, i32, i32) {
    %c0_i32 = arith.constant 0 : i32
    %c0_i32_0 = arith.constant 0 : i32
    %c0_i32_1 = arith.constant 0 : i32
    %c0_i32_2 = arith.constant 0 : i32
    return %arg0, %c0_i32, %c0_i32_0, %c0_i32_1 : i32, i32, i32, i32
  }
  func.func @transform_1(%arg0: i32) -> (i32, i32, i32, i32) {
    %c0_i32 = arith.constant 0 : i32
    %c0_i32_0 = arith.constant 0 : i32
    %c0_i32_1 = arith.constant 0 : i32
    %c0_i32_2 = arith.constant 0 : i32
    return %arg0, %c0_i32, %c0_i32_0, %c0_i32_1 : i32, i32, i32, i32
  }
  func.func @transform_2(%arg0: i32) -> (i32, i32, i32, i32) {
    %c0_i32 = arith.constant 0 : i32
    %c0_i32_0 = arith.constant 0 : i32
    %c0_i32_1 = arith.constant 0 : i32
    %c0_i32_2 = arith.constant 0 : i32
    return %arg0, %c0_i32, %c0_i32_0, %c0_i32_1 : i32, i32, i32, i32
  }
  func.func @transform_3(%arg0: i32) -> (i32, i32, i32, i32) {
    %c0_i32 = arith.constant 0 : i32
    %c0_i32_0 = arith.constant 0 : i32
    %c0_i32_1 = arith.constant 0 : i32
    %c0_i32_2 = arith.constant 0 : i32
    return %arg0, %c0_i32, %c0_i32_0, %c0_i32_1 : i32, i32, i32, i32
  }
  func.func @transform_4(%arg0: i32) -> (i32, i32, i32) {
    %c0_i32 = arith.constant 0 : i32
    %c0_i32_0 = arith.constant 0 : i32
    %c0_i32_1 = arith.constant 0 : i32
    %c0_i32_2 = arith.constant 0 : i32
    return %c0_i32, %c0_i32_0, %c0_i32_1 : i32, i32, i32
  }
  func.func @transform_5(%arg0: i32) -> (i32, i32, i32) {
    %c0_i32 = arith.constant 0 : i32
    %c0_i32_0 = arith.constant 0 : i32
    %c0_i32_1 = arith.constant 0 : i32
    %c0_i32_2 = arith.constant 0 : i32
    return %c0_i32, %c0_i32_0, %c0_i32_1 : i32, i32, i32
  }
  func.func @transform_6(%arg0: i32) -> (i32, i32) {
    %c0_i32 = arith.constant 0 : i32
    %c0_i32_0 = arith.constant 0 : i32
    %c0_i32_1 = arith.constant 0 : i32
    return %c0_i32, %c0_i32_0 : i32, i32
  }
  func.func @transform_7(%arg0: i32) -> (i32, i32, i32) {
    %c0_i32 = arith.constant 0 : i32
    %c0_i32_0 = arith.constant 0 : i32
    %c0_i32_1 = arith.constant 0 : i32
    return %arg0, %c0_i32, %c0_i32_0 : i32, i32, i32
  }
}

module attributes {stable_mosaic.version = 11 : i64} {
  func.func @_upsample_cat_kernel(%arg0: i32, %arg1: memref<1x8x256xbf16, #tpu.memory_space<vmem>>, %arg2: memref<1x8x128xbf16, #tpu.memory_space<vmem>>, %arg3: memref<16x8xbf16, #tpu.memory_space<vmem>>, %arg4: memref<256x512xbf16, #tpu.memory_space<vmem>>, %arg5: memref<16x8xbf16, #tpu.memory_space<vmem>>, %arg6: memref<128x512xbf16, #tpu.memory_space<vmem>>, %arg7: memref<1x2x16x512xf32, #tpu.memory_space<vmem>>) attributes {dimension_semantics = [#tpu.dimension_semantics<parallel>], iteration_bounds = array<i64: 2>, scalar_prefetch = 0 : i64, scratch_operands = 0 : i64, tpu.core_type = #tpu.core_type<tc>, window_params = [{transform_indices = @transform_0, window_bounds = array<i64: 1, 8, 256>}, {transform_indices = @transform_1, window_bounds = array<i64: 1, 8, 128>}, {pipeline_mode = #tpu.pipeline_mode<synchronous>, transform_indices = @transform_2, window_bounds = array<i64: 16, 8>}, {pipeline_mode = #tpu.pipeline_mode<synchronous>, transform_indices = @transform_3, window_bounds = array<i64: 256, 512>}, {pipeline_mode = #tpu.pipeline_mode<synchronous>, transform_indices = @transform_4, window_bounds = array<i64: 16, 8>}, {pipeline_mode = #tpu.pipeline_mode<synchronous>, transform_indices = @transform_5, window_bounds = array<i64: 128, 512>}, {transform_indices = @transform_6, window_bounds = array<i64: 1, 2, 16, 512>}]} {
    %c0 = arith.constant 0 : index
    %c0_0 = arith.constant 0 : index
    %0 = vector.load %arg3[%c0, %c0_0] : memref<16x8xbf16, #tpu.memory_space<vmem>>, vector<16x8xbf16>
    %c0_1 = arith.constant 0 : index
    %c0_2 = arith.constant 0 : index
    %c0_3 = arith.constant 0 : index
    %1 = vector.load %arg1[%c0_1, %c0_2, %c0_3] : memref<1x8x256xbf16, #tpu.memory_space<vmem>>, vector<1x8x256xbf16>
    %2 = vector.shape_cast %1 : vector<1x8x256xbf16> to vector<8x256xbf16>
    %cst = arith.constant dense<0.000000e+00> : vector<16x256xf32>
    %3 = tpu.matmul %0, %2, %cst {dimension_numbers = #tpu.dot_dimension_numbers<[1], [0], [0], [1], [0, 0, 1, 1], [], []>} : vector<16x8xbf16>, vector<8x256xbf16>, vector<16x256xf32> -> vector<16x256xf32>
    %4 = arith.truncf %3 : vector<16x256xf32> to vector<16x256xbf16>
    %c0_4 = arith.constant 0 : index
    %c0_5 = arith.constant 0 : index
    %5 = vector.load %arg4[%c0_4, %c0_5] : memref<256x512xbf16, #tpu.memory_space<vmem>>, vector<256x512xbf16>
    %cst_6 = arith.constant dense<0.000000e+00> : vector<16x512xf32>
    %6 = tpu.matmul %4, %5, %cst_6 {dimension_numbers = #tpu.dot_dimension_numbers<[1], [0], [0], [1], [0, 0, 1, 1], [], []>} : vector<16x256xbf16>, vector<256x512xbf16>, vector<16x512xf32> -> vector<16x512xf32>
    %c0_7 = arith.constant 0 : index
    %c0_8 = arith.constant 0 : index
    %c0_9 = arith.constant 0 : index
    %c0_10 = arith.constant 0 : index
    %7 = vector.load %arg7[%c0_7, %c0_8, %c0_9, %c0_10] : memref<1x2x16x512xf32, #tpu.memory_space<vmem>>, vector<1x1x16x512xf32>
    %8 = vector.shape_cast %7 : vector<1x1x16x512xf32> to vector<16x512xf32>
    %9 = vector.shape_cast %6 : vector<16x512xf32> to vector<1x1x16x512xf32>
    tpu.vector_store %arg7[%c0_7, %c0_8, %c0_9, %c0_10], %9 {strides = array<i32>} : memref<1x2x16x512xf32, #tpu.memory_space<vmem>>, vector<1x1x16x512xf32>,
    %c0_11 = arith.constant 0 : index
    %c0_12 = arith.constant 0 : index
    %10 = vector.load %arg5[%c0_11, %c0_12] : memref<16x8xbf16, #tpu.memory_space<vmem>>, vector<16x8xbf16>
    %c0_13 = arith.constant 0 : index
    %c0_14 = arith.constant 0 : index
    %c0_15 = arith.constant 0 : index
    %11 = vector.load %arg2[%c0_13, %c0_14, %c0_15] : memref<1x8x128xbf16, #tpu.memory_space<vmem>>, vector<1x8x128xbf16>
    %12 = vector.shape_cast %11 : vector<1x8x128xbf16> to vector<8x128xbf16>
    %cst_16 = arith.constant dense<0.000000e+00> : vector<16x128xf32>
    %13 = tpu.matmul %10, %12, %cst_16 {dimension_numbers = #tpu.dot_dimension_numbers<[1], [0], [0], [1], [0, 0, 1, 1], [], []>} : vector<16x8xbf16>, vector<8x128xbf16>, vector<16x128xf32> -> vector<16x128xf32>
    %14 = arith.truncf %13 : vector<16x128xf32> to vector<16x128xbf16>
    %c0_17 = arith.constant 0 : index
    %c0_18 = arith.constant 0 : index
    %15 = vector.load %arg6[%c0_17, %c0_18] : memref<128x512xbf16, #tpu.memory_space<vmem>>, vector<128x512xbf16>
    %cst_19 = arith.constant dense<0.000000e+00> : vector<16x512xf32>
    %16 = tpu.matmul %14, %15, %cst_19 {dimension_numbers = #tpu.dot_dimension_numbers<[1], [0], [0], [1], [0, 0, 1, 1], [], []>} : vector<16x128xbf16>, vector<128x512xbf16>, vector<16x512xf32> -> vector<16x512xf32>
    %c0_20 = arith.constant 0 : index
    %c1 = arith.constant 1 : index
    %c0_21 = arith.constant 0 : index
    %c0_22 = arith.constant 0 : index
    %17 = vector.load %arg7[%c0_20, %c1, %c0_21, %c0_22] : memref<1x2x16x512xf32, #tpu.memory_space<vmem>>, vector<1x1x16x512xf32>
    %18 = vector.shape_cast %17 : vector<1x1x16x512xf32> to vector<16x512xf32>
    %19 = vector.shape_cast %16 : vector<16x512xf32> to vector<1x1x16x512xf32>
    tpu.vector_store %arg7[%c0_20, %c1, %c0_21, %c0_22], %19 {strides = array<i32>} : memref<1x2x16x512xf32, #tpu.memory_space<vmem>>, vector<1x1x16x512xf32>,
    return
  }
  func.func @transform_0(%arg0: i32) -> (i32, i32, i32) {
    %c0_i32 = arith.constant 0 : i32
    %c0_i32_0 = arith.constant 0 : i32
    %c0_i32_1 = arith.constant 0 : i32
    return %arg0, %c0_i32, %c0_i32_0 : i32, i32, i32
  }
  func.func @transform_1(%arg0: i32) -> (i32, i32, i32) {
    %c0_i32 = arith.constant 0 : i32
    %c0_i32_0 = arith.constant 0 : i32
    %c0_i32_1 = arith.constant 0 : i32
    return %arg0, %c0_i32, %c0_i32_0 : i32, i32, i32
  }
  func.func @transform_2(%arg0: i32) -> (i32, i32) {
    %c0_i32 = arith.constant 0 : i32
    %c0_i32_0 = arith.constant 0 : i32
    %c0_i32_1 = arith.constant 0 : i32
    return %c0_i32, %c0_i32_0 : i32, i32
  }
  func.func @transform_3(%arg0: i32) -> (i32, i32) {
    %c0_i32 = arith.constant 0 : i32
    %c0_i32_0 = arith.constant 0 : i32
    %c0_i32_1 = arith.constant 0 : i32
    return %c0_i32, %c0_i32_0 : i32, i32
  }
  func.func @transform_4(%arg0: i32) -> (i32, i32) {
    %c0_i32 = arith.constant 0 : i32
    %c0_i32_0 = arith.constant 0 : i32
    %c0_i32_1 = arith.constant 0 : i32
    return %c0_i32, %c0_i32_0 : i32, i32
  }
  func.func @transform_5(%arg0: i32) -> (i32, i32) {
    %c0_i32 = arith.constant 0 : i32
    %c0_i32_0 = arith.constant 0 : i32
    %c0_i32_1 = arith.constant 0 : i32
    return %c0_i32, %c0_i32_0 : i32, i32
  }
  func.func @transform_6(%arg0: i32) -> (i32, i32, i32, i32) {
    %c0_i32 = arith.constant 0 : i32
    %c0_i32_0 = arith.constant 0 : i32
    %c0_i32_1 = arith.constant 0 : i32
    %c0_i32_2 = arith.constant 0 : i32
    return %arg0, %c0_i32, %c0_i32_0, %c0_i32_1 : i32, i32, i32, i32
  }
}

</mosaic_0001>

<llo_original>
// kernel: _lambda_.3
$region0: #{_lambda_.3}
  #allocation0 [shape = 'u32[]', space=smem, size = 0x4, offset = 0x4, fixed_abs, tag = 'smem constant byte address 0x4 - core index']
  #allocation1 [shape = 'u32[144,128]{1,0:T(1,128)}', space=vmem, size = 0x12000, scoped, tag = 'internal scratch']
  %s0 = inlined_call_operand.vmem [shape: bf16[128,392], index: 0, kind: input, shape index: {}]
  %s1 = inlined_call_operand.vmem [shape: bf16[392,64], index: 1, kind: input, shape index: {}]
  %s2 = inlined_call_operand.vmem [shape: f32[1,64], index: 2, kind: input, shape index: {}]
  %s3 = inlined_call_operand.vmem [shape: f32[128,64], index: 3, kind: output, shape index: {}]
  %s4 = sld [smem:[#allocation0]]
  $region22: #{_lambda_.3} parent=0
    _
  %s6 = ssub.s32 1, %s4
  %s7 = scalar_select 0, %s6, %s4
  // Predicated region
  $region2: #{_lambda_.3} parent=0 // pred_check
    _
  $region3: #{_lambda_.3} parent=0 // pred_check_branch
    %9 = sbr.rel (0) target = $region5
  $region4: #{_lambda_.3} parent=0 // pred_region
    _
  $region5: #{_lambda_.3} parent=0 // pred_fallthru
    _
  // Predicated region
  $region6: #{_lambda_.3} parent=0 // pred_check
    _
  $region7: #{_lambda_.3} parent=0 // pred_check_branch
    %11 = sbr.rel (0) target = $region9
  $region8: #{_lambda_.3} parent=0 // pred_region
    _
  $region9: #{_lambda_.3} parent=0 // pred_fallthru
    _
  // Predicated region
  $region10: #{_lambda_.3} parent=0 // pred_check
    _
  $region11: #{_lambda_.3} parent=0 // pred_check_branch
    %13 = sbr.rel (0) target = $region13
  $region12: #{_lambda_.3} parent=0 // pred_region
    _
  $region13: #{_lambda_.3} parent=0 // pred_fallthru
    _
  %v15 = vld [vmem:[%s0] sm:$0xff]
  %v16 = vld [vmem:[%s0 + $0x8] sm:$0xff]
  %v17 = vld [vmem:[%s0 + $0x10] sm:$0xff]
  %v18 = vld [vmem:[%s0 + $0x18] sm:$0xff]
  %v19 = vld [vmem:[%s0 + $0x20] sm:$0xff]
  %v20 = vld [vmem:[%s0 + $0x28] sm:$0xff]
  %v21 = vld [vmem:[%s0 + $0x30] sm:$0xff]
  %v22 = vld [vmem:[%s0 + $0x38] sm:$0xff]
  %v23 = vld [vmem:[%s0 + $0x40] sm:$0xff]
  %v24 = vld [vmem:[%s0 + $0x48] sm:$0xff]
  %v25 = vld [vmem:[%s0 + $0x50] sm:$0xff]
  %v26 = vld [vmem:[%s0 + $0x58] sm:$0xff]
  %v27 = vld [vmem:[%s0 + $0x60] sm:$0xff]
  %v28 = vld [vmem:[%s0 + $0x68] sm:$0xff]
  %v29 = vld [vmem:[%s0 + $0x70] sm:$0xff]
  %v30 = vld [vmem:[%s0 + $0x78] sm:$0xff]
  %v31 = vld [vmem:[%s0 + $0x80] sm:$0xff]
  %v32 = vld [vmem:[%s0 + $0x88] sm:$0xff]
  %v33 = vld [vmem:[%s0 + $0x90] sm:$0xff]
  %v34 = vld [vmem:[%s0 + $0x98] sm:$0xff]
  %v35 = vld [vmem:[%s0 + $0xa0] sm:$0xff]
  %v36 = vld [vmem:[%s0 + $0xa8] sm:$0xff]
  %v37 = vld [vmem:[%s0 + $0xb0] sm:$0xff]
  %v38 = vld [vmem:[%s0 + $0xb8] sm:$0xff]
  %v39 = vld [vmem:[%s0 + $0xc0] sm:$0xff]
  %v40 = vld [vmem:[%s0 + $0xc8] sm:$0xff]
  %v41 = vld [vmem:[%s0 + $0xd0] sm:$0xff]
  %v42 = vld [vmem:[%s0 + $0xd8] sm:$0xff]
  %v43 = vld [vmem:[%s0 + $0xe0] sm:$0xff]
  %v44 = vld [vmem:[%s0 + $0xe8] sm:$0xff]
  %v45 = vld [vmem:[%s0 + $0xf0] sm:$0xff]
  %v46 = vld [vmem:[%s0 + $0xf8] sm:$0xff]
  %v47 = vld [vmem:[%s1] sm:$0xf]
  %v48 = vld [vmem:[%s1 + $0x4] sm:$0xf]
  %v49 = vld [vmem:[%s1 + $0x8] sm:$0xf]
  %v50 = vld [vmem:[%s1 + $0xc] sm:$0xf]
  %v51 = vld [vmem:[%s1 + $0x10] sm:$0xf]
  %v52 = vld [vmem:[%s1 + $0x14] sm:$0xf]
  %v53 = vld [vmem:[%s1 + $0x18] sm:$0xf]
  %v54 = vld [vmem:[%s1 + $0x1c] sm:$0xf]
  %v55 = vld [vmem:[%s1 + $0x20] sm:$0xf]
  %v56 = vld [vmem:[%s1 + $0x24] sm:$0xf]
  %v57 = vld [vmem:[%s1 + $0x28] sm:$0xf]
  %v58 = vld [vmem:[%s1 + $0x2c] sm:$0xf]
  %v59 = vld [vmem:[%s1 + $0x30] sm:$0xf]
  %v60 = vld [vmem:[%s1 + $0x34] sm:$0xf]
  %v61 = vld [vmem:[%s1 + $0x38] sm:$0xf]
  %v62 = vld [vmem:[%s1 + $0x3c] sm:$0xf]
  %v63 = vld [vmem:[%s1 + $0x40] sm:$0xf]
  %v64 = vld [vmem:[%s1 + $0x44] sm:$0xf]
  %v65 = vld [vmem:[%s1 + $0x48] sm:$0xf]
  %v66 = vld [vmem:[%s1 + $0x4c] sm:$0xf]
  %v67 = vld [vmem:[%s1 + $0x50] sm:$0xf]
  %v68 = vld [vmem:[%s1 + $0x54] sm:$0xf]
  %v69 = vld [vmem:[%s1 + $0x58] sm:$0xf]
  %v70 = vld [vmem:[%s1 + $0x5c] sm:$0xf]
  %v71 = vld [vmem:[%s1 + $0x60] sm:$0xf]
  %v72 = vld [vmem:[%s1 + $0x64] sm:$0xf]
  %v73 = vld [vmem:[%s1 + $0x68] sm:$0xf]
  %v74 = vld [vmem:[%s1 + $0x6c] sm:$0xf]
  %v75 = vld [vmem:[%s1 + $0x70] sm:$0xf]
  %v76 = vld [vmem:[%s1 + $0x74] sm:$0xf]
  %v77 = vld [vmem:[%s1 + $0x78] sm:$0xf]
  %v78 = vld [vmem:[%s1 + $0x7c] sm:$0xf]
  %v79 = vld [vmem:[%s1 + $0x80] sm:$0xf]
  %v80 = vld [vmem:[%s1 + $0x84] sm:$0xf]
  %v81 = vld [vmem:[%s1 + $0x88] sm:$0xf]
  %v82 = vld [vmem:[%s1 + $0x8c] sm:$0xf]
  %v83 = vld [vmem:[%s1 + $0x90] sm:$0xf]
  %v84 = vld [vmem:[%s1 + $0x94] sm:$0xf]
  %v85 = vld [vmem:[%s1 + $0x98] sm:$0xf]
  %v86 = vld [vmem:[%s1 + $0x9c] sm:$0xf]
  %v87 = vld [vmem:[%s1 + $0xa0] sm:$0xf]
  %v88 = vld [vmem:[%s1 + $0xa4] sm:$0xf]
  %v89 = vld [vmem:[%s1 + $0xa8] sm:$0xf]
  %v90 = vld [vmem:[%s1 + $0xac] sm:$0xf]
  %v91 = vld [vmem:[%s1 + $0xb0] sm:$0xf]
  %v92 = vld [vmem:[%s1 + $0xb4] sm:$0xf]
  %v93 = vld [vmem:[%s1 + $0xb8] sm:$0xf]
  %v94 = vld [vmem:[%s1 + $0xbc] sm:$0xf]
  %v95 = vld [vmem:[%s1 + $0xc0] sm:$0xf]
  %v96 = vld [vmem:[%s2] sm:$0x1]
  %v98 = vlaneseq
  %v99 = vshrl.u32 %v98, 7
  %v100 = vsub.s32 0, %v99
  %v101 = vrot.slane %v96, %v100
  %v135 = vunpack.c.l.b16 %v15
  %v136 = vunpack.c.h.b16 %v15
  %v137 = vunpack.c.l.b16 %v16
  %v138 = vunpack.c.h.b16 %v16
  %v139 = vunpack.c.l.b16 %v17
  %v140 = vunpack.c.h.b16 %v17
  %v141 = vunpack.c.l.b16 %v18
  %v142 = vunpack.c.h.b16 %v18
  %v143 = vunpack.c.l.b16 %v19
  %v144 = vunpack.c.h.b16 %v19
  %v145 = vunpack.c.l.b16 %v20
  %v146 = vunpack.c.h.b16 %v20
  %v147 = vunpack.c.l.b16 %v21
  %v148 = vunpack.c.h.b16 %v21
  %v149 = vunpack.c.l.b16 %v22
  %v150 = vunpack.c.h.b16 %v22
  %v151 = vunpack.c.l.b16 %v23
  %v152 = vunpack.c.h.b16 %v23
  %v153 = vunpack.c.l.b16 %v24
  %v154 = vunpack.c.h.b16 %v24
  %v155 = vunpack.c.l.b16 %v25
  %v156 = vunpack.c.h.b16 %v25
  %v157 = vunpack.c.l.b16 %v26
  %v158 = vunpack.c.h.b16 %v26
  %v159 = vunpack.c.l.b16 %v27
  %v160 = vunpack.c.h.b16 %v27
  %v161 = vunpack.c.l.b16 %v28
  %v162 = vunpack.c.h.b16 %v28
  %v163 = vunpack.c.l.b16 %v29
  %v164 = vunpack.c.h.b16 %v29
  %v165 = vunpack.c.l.b16 %v30
  %v166 = vunpack.c.h.b16 %v30
  %v167 = vunpack.c.l.b16 %v31
  %v168 = vunpack.c.h.b16 %v31
  %v169 = vunpack.c.l.b16 %v32
  %v170 = vunpack.c.h.b16 %v32
  %v171 = vunpack.c.l.b16 %v33
  %v172 = vunpack.c.h.b16 %v33
  %v173 = vunpack.c.l.b16 %v34
  %v174 = vunpack.c.h.b16 %v34
  %v175 = vunpack.c.l.b16 %v35
  %v176 = vunpack.c.h.b16 %v35
  %v177 = vunpack.c.l.b16 %v36
  %v178 = vunpack.c.h.b16 %v36
  %v179 = vunpack.c.l.b16 %v37
  %v180 = vunpack.c.h.b16 %v37
  %v181 = vunpack.c.l.b16 %v38
  %v182 = vunpack.c.h.b16 %v38
  %v183 = vunpack.c.l.b16 %v39
  %v184 = vunpack.c.h.b16 %v39
  %v185 = vunpack.c.l.b16 %v40
  %v186 = vunpack.c.h.b16 %v40
  %v187 = vunpack.c.l.b16 %v41
  %v188 = vunpack.c.h.b16 %v41
  %v189 = vunpack.c.l.b16 %v42
  %v190 = vunpack.c.h.b16 %v42
  %v191 = vunpack.c.l.b16 %v43
  %v192 = vunpack.c.h.b16 %v43
  %v193 = vunpack.c.l.b16 %v44
  %v194 = vunpack.c.h.b16 %v44
  %v195 = vunpack.c.l.b16 %v45
  %v196 = vunpack.c.h.b16 %v45
  %v197 = vunpack.c.l.b16 %v46
  %v198 = vunpack.c.h.b16 %v46
  %v199 = vpack.c.b16 %v139, %v135
  %v200 = vpack.c.b16 %v140, %v136
  %v201 = vpack.c.b16 %v141, %v137
  %v202 = vpack.c.b16 %v142, %v138
  %v203 = vpack.c.b16 %v147, %v143
  %v204 = vpack.c.b16 %v148, %v144
  %v205 = vpack.c.b16 %v149, %v145
  %v206 = vpack.c.b16 %v150, %v146
  %v207 = vpack.c.b16 %v155, %v151
  %v208 = vpack.c.b16 %v156, %v152
  %v209 = vpack.c.b16 %v157, %v153
  %v210 = vpack.c.b16 %v158, %v154
  %v211 = vpack.c.b16 %v163, %v159
  %v212 = vpack.c.b16 %v164, %v160
  %v213 = vpack.c.b16 %v165, %v161
  %v214 = vpack.c.b16 %v166, %v162
  %v215 = vpack.c.b16 %v171, %v167
  %v216 = vpack.c.b16 %v172, %v168
  %v217 = vpack.c.b16 %v173, %v169
  %v218 = vpack.c.b16 %v174, %v170
  %v219 = vpack.c.b16 %v179, %v175
  %v220 = vpack.c.b16 %v180, %v176
  %v221 = vpack.c.b16 %v181, %v177
  %v222 = vpack.c.b16 %v182, %v178
  %v223 = vpack.c.b16 %v187, %v183
  %v224 = vpack.c.b16 %v188, %v184
  %v225 = vpack.c.b16 %v189, %v185
  %v226 = vpack.c.b16 %v190, %v186
  %v227 = vpack.c.b16 %v195, %v191
  %v228 = vpack.c.b16 %v196, %v192
  %v229 = vpack.c.b16 %v197, %v193
  %v230 = vpack.c.b16 %v198, %v194
  %v304 = vunpack.c.l.b16 %v47
  %v305 = vunpack.c.l.b16 %v48
  %v306 = vunpack.c.l.b16 %v49
  %v307 = vunpack.c.l.b16 %v50
  %v308 = vunpack.c.l.b16 %v51
  %v309 = vunpack.c.l.b16 %v52
  %v310 = vunpack.c.l.b16 %v53
  %v311 = vunpack.c.l.b16 %v54
  %v312 = vunpack.c.l.b16 %v55
  %v313 = vunpack.c.l.b16 %v56
  %v314 = vunpack.c.l.b16 %v57
  %v315 = vunpack.c.l.b16 %v58
  %v316 = vunpack.c.l.b16 %v59
  %v317 = vunpack.c.l.b16 %v60
  %v318 = vunpack.c.l.b16 %v61
  %v319 = vunpack.c.l.b16 %v62
  %v320 = vunpack.c.l.b16 %v63
  %v321 = vunpack.c.l.b16 %v64
  %v322 = vunpack.c.l.b16 %v65
  %v323 = vunpack.c.l.b16 %v66
  %v324 = vunpack.c.l.b16 %v67
  %v325 = vunpack.c.l.b16 %v68
  %v326 = vunpack.c.l.b16 %v69
  %v327 = vunpack.c.l.b16 %v70
  %v328 = vunpack.c.l.b16 %v71
  %v329 = vunpack.c.l.b16 %v72
  %v330 = vunpack.c.l.b16 %v73
  %v331 = vunpack.c.l.b16 %v74
  %v332 = vunpack.c.l.b16 %v75
  %v333 = vunpack.c.l.b16 %v76
  %v334 = vunpack.c.l.b16 %v77
  %v335 = vunpack.c.l.b16 %v78
  %v336 = vunpack.c.l.b16 %v79
  %v337 = vunpack.c.l.b16 %v80
  %v338 = vunpack.c.l.b16 %v81
  %v339 = vunpack.c.l.b16 %v82
  %v340 = vunpack.c.l.b16 %v83
  %v341 = vunpack.c.l.b16 %v84
  %v342 = vunpack.c.l.b16 %v85
  %v343 = vunpack.c.l.b16 %v86
  %v344 = vunpack.c.l.b16 %v87
  %v345 = vunpack.c.l.b16 %v88
  %v346 = vunpack.c.l.b16 %v89
  %v347 = vunpack.c.l.b16 %v90
  %v348 = vunpack.c.l.b16 %v91
  %v349 = vunpack.c.l.b16 %v92
  %v350 = vunpack.c.l.b16 %v93
  %v351 = vunpack.c.l.b16 %v94
  %v352 = vunpack.c.l.b16 %v95
  %v353 = vpack.c.b16 %v305, %v304
  %v354 = vpack.c.b16 %v307, %v306
  %v355 = vpack.c.b16 %v309, %v308
  %v356 = vpack.c.b16 %v311, %v310
  %v357 = vpack.c.b16 %v313, %v312
  %v358 = vpack.c.b16 %v315, %v314
  %v359 = vpack.c.b16 %v317, %v316
  %v360 = vpack.c.b16 %v319, %v318
  %v361 = vpack.c.b16 %v321, %v320
  %v362 = vpack.c.b16 %v323, %v322
  %v363 = vpack.c.b16 %v325, %v324
  %v364 = vpack.c.b16 %v327, %v326
  %v365 = vpack.c.b16 %v329, %v328
  %v366 = vpack.c.b16 %v331, %v330
  %v367 = vpack.c.b16 %v333, %v332
  %v368 = vpack.c.b16 %v335, %v334
  %v369 = vpack.c.b16 %v337, %v336
  %v370 = vpack.c.b16 %v339, %v338
  %v371 = vpack.c.b16 %v341, %v340
  %v372 = vpack.c.b16 %v343, %v342
  %v373 = vpack.c.b16 %v345, %v344
  %v374 = vpack.c.b16 %v347, %v346
  %v375 = vpack.c.b16 %v349, %v348
  %v376 = vpack.c.b16 %v351, %v350
  %v377 = vpack.c.b16 %v352, %v352
  %vm402 = vcmask 64512
  %v404 = vsel %vm402, %v202, 0
  %v407 = vsel %vm402, %v206, 0
  %v410 = vsel %vm402, %v210, 0
  %v413 = vsel %vm402, %v214, 0
  %v416 = vsel %vm402, %v218, 0
  %v419 = vsel %vm402, %v222, 0
  %v422 = vsel %vm402, %v226, 0
  %v425 = vsel %vm402, %v230, 0
  %vm427 = vcmask 1043456
  %v429 = vsel %vm427, %v377, 0
  %431 = vmatprep.subr.bf16.mxu0 0
  %432 = vmatpush1.bf16.msra.mxu0 %v353
  %433 = vmatprep.subr.bf16.mxu0 0
  %434 = vmatpush1.bf16.msra.mxu0 %v354
  %435 = vmatprep.subr.bf16.mxu0 0
  %436 = vmatpush1.bf16.msra.mxu0 %v355
  %437 = vmatprep.subr.bf16.mxu0 0
  %438 = vmatpush1.bf16.msra.mxu0 %v356
  %439 = vmatprep.subr.bf16.mxu0 0
  %440 = vmatpush1.bf16.msra.mxu0 %v357
  %441 = vmatprep.subr.bf16.mxu0 0
  %442 = vmatpush1.bf16.msra.mxu0 %v358
  %443 = vmatprep.subr.bf16.mxu0 0
  %444 = vmatpush1.bf16.msra.mxu0 %v359
  %445 = vmatprep.subr.bf16.mxu0 0
  %446 = vmatpush1.bf16.msra.mxu0 %v360
  %447 = vmatprep.subr.bf16.mxu0 0
  %448 = vmatpush1.bf16.msra.mxu0 %v361
  %449 = vmatprep.subr.bf16.mxu0 0
  %450 = vmatpush1.bf16.msra.mxu0 %v362
  %451 = vmatprep.subr.bf16.mxu0 0
  %452 = vmatpush1.bf16.msra.mxu0 %v363
  %453 = vmatprep.subr.bf16.mxu0 0
  %454 = vmatpush1.bf16.msra.mxu0 %v364
  %455 = vmatprep.subr.bf16.mxu0 0
  %456 = vmatpush1.bf16.msra.mxu0 %v365
  %457 = vmatprep.subr.bf16.mxu0 0
  %458 = vmatpush1.bf16.msra.mxu0 %v366
  %459 = vmatprep.subr.bf16.mxu0 0
  %460 = vmatpush1.bf16.msra.mxu0 %v367
  %461 = vmatprep.subr.bf16.mxu0 0
  %462 = vmatpush1.bf16.msra.mxu0 %v368
  %463 = vmatprep.mubr.bf16.mxu0 %v200
  %464 = vmatmul.mubr.bf16.gmra.mrb[0].mxu0 %v199
  %v465 = vpop.f32.mrb[0].mxu0
  %v466 = vadd.f32 %v101, %v465
  %v467 = vpop.f32.mrb[0].mxu0
  %v468 = vpop.f32.mrb[0].mxu0
  %v469 = vadd.f32 %v101, %v468
  %v470 = vpop.f32.mrb[0].mxu0
  %471 = vmatprep.mubr.bf16.mxu0 %v204
  %472 = vmatmul.mubr.bf16.gmra.mrb[0].mxu0 %v203
  %v473 = vpop.f32.mrb[0].mxu0
  %v474 = vadd.f32 %v101, %v473
  %v475 = vpop.f32.mrb[0].mxu0
  %v476 = vpop.f32.mrb[0].mxu0
  %v477 = vadd.f32 %v101, %v476
  %v478 = vpop.f32.mrb[0].mxu0
  %479 = vmatprep.mubr.bf16.mxu0 %v208
  %480 = vmatmul.mubr.bf16.gmra.mrb[0].mxu0 %v207
  %v481 = vpop.f32.mrb[0].mxu0
  %v482 = vadd.f32 %v101, %v481
  %v483 = vpop.f32.mrb[0].mxu0
  %v484 = vpop.f32.mrb[0].mxu0
  %v485 = vadd.f32 %v101, %v484
  %v486 = vpop.f32.mrb[0].mxu0
  %487 = vmatprep.mubr.bf16.mxu0 %v212
  %488 = vmatmul.mubr.bf16.gmra.mrb[0].mxu0 %v211
  %v489 = vpop.f32.mrb[0].mxu0
  %v490 = vadd.f32 %v101, %v489
  %v491 = vpop.f32.mrb[0].mxu0
  %v492 = vpop.f32.mrb[0].mxu0
  %v493 = vadd.f32 %v101, %v492
  %v494 = vpop.f32.mrb[0].mxu0
  %495 = vmatprep.mubr.bf16.mxu0 %v216
  %496 = vmatmul.mubr.bf16.gmra.mrb[0].mxu0 %v215
  %v497 = vpop.f32.mrb[0].mxu0
  %v498 = vadd.f32 %v101, %v497
  %v499 = vpop.f32.mrb[0].mxu0
  %v500 = vpop.f32.mrb[0].mxu0
  %v501 = vadd.f32 %v101, %v500
  %v502 = vpop.f32.mrb[0].mxu0
  %503 = vmatprep.mubr.bf16.mxu0 %v220
  %504 = vmatmul.mubr.bf16.gmra.mrb[0].mxu0 %v219
  %v505 = vpop.f32.mrb[0].mxu0
  %v506 = vadd.f32 %v101, %v505
  %v507 = vpop.f32.mrb[0].mxu0
  %v508 = vpop.f32.mrb[0].mxu0
  %v509 = vadd.f32 %v101, %v508
  %v510 = vpop.f32.mrb[0].mxu0
  %511 = vmatprep.mubr.bf16.mxu0 %v224
  %512 = vmatmul.mubr.bf16.gmra.mrb[0].mxu0 %v223
  %v513 = vpop.f32.mrb[0].mxu0
  %v514 = vadd.f32 %v101, %v513
  %v515 = vpop.f32.mrb[0].mxu0
  %v516 = vpop.f32.mrb[0].mxu0
  %v517 = vadd.f32 %v101, %v516
  %v518 = vpop.f32.mrb[0].mxu0
  %519 = vmatprep.mubr.bf16.mxu0 %v228
  %520 = vmatmul.mubr.bf16.gmra.mrb[0].mxu0 %v227
  %v521 = vpop.f32.mrb[0].mxu0
  %v522 = vadd.f32 %v101, %v521
  %v523 = vpop.f32.mrb[0].mxu0
  %v524 = vpop.f32.mrb[0].mxu0
  %v525 = vadd.f32 %v101, %v524
  %v526 = vpop.f32.mrb[0].mxu0
  %527 = vdwg.mxu0
  %528 = vmatprep.subr.bf16.mxu0 0
  %529 = vmatpush1.bf16.msra.mxu0 %v369
  %530 = vmatprep.subr.bf16.mxu0 0
  %531 = vmatpush1.bf16.msra.mxu0 %v370
  %532 = vmatprep.subr.bf16.mxu0 0
  %533 = vmatpush1.bf16.msra.mxu0 %v371
  %534 = vmatprep.subr.bf16.mxu0 0
  %535 = vmatpush1.bf16.msra.mxu0 %v372
  %536 = vmatprep.subr.bf16.mxu0 0
  %537 = vmatpush1.bf16.msra.mxu0 %v373
  %538 = vmatprep.subr.bf16.mxu0 0
  %539 = vmatpush1.bf16.msra.mxu0 %v374
  %540 = vmatprep.subr.bf16.mxu0 0
  %541 = vmatpush1.bf16.msra.mxu0 %v375
  %542 = vmatprep.subr.bf16.mxu0 0
  %543 = vmatpush1.bf16.msra.mxu0 %v376
  %544 = vmatprep.subr.bf16.mxu0 0
  %545 = vmatpush1.bf16.msra.mxu0 %v429
  %546 = vmatprep.subr.bf16.mxu0 0
  %547 = vmatpush1.bf16.msra.mxu0 0
  %548 = vmatprep.subr.bf16.mxu0 0
  %549 = vmatpush1.bf16.msra.mxu0 0
  %550 = vmatprep.subr.bf16.mxu0 0
  %551 = vmatpush1.bf16.msra.mxu0 0
  %552 = vmatprep.subr.bf16.mxu0 0
  %553 = vmatpush1.bf16.msra.mxu0 0
  %554 = vmatprep.subr.bf16.mxu0 0
  %555 = vmatpush1.bf16.msra.mxu0 0
  %556 = vmatprep.subr.bf16.mxu0 0
  %557 = vmatpush1.bf16.msra.mxu0 0
  %558 = vmatprep.subr.bf16.mxu0 0
  %559 = vmatpush1.bf16.msra.mxu0 0
  %560 = vmatprep.mubr.bf16.mxu0 %v404
  %561 = vmatmul.mubr.bf16.gmra.mrb[0].mxu0 %v201
  %v562 = vpop.f32.mrb[0].mxu0
  %v563 = vadd.f32 %v466, %v562
  %v564 = vpop.f32.mrb[0].mxu0
  %v565 = vpop.f32.mrb[0].mxu0
  %v566 = vadd.f32 %v469, %v565
  %v567 = vpop.f32.mrb[0].mxu0
  %568 = vmatprep.mubr.bf16.mxu0 %v407
  %569 = vmatmul.mubr.bf16.gmra.mrb[0].mxu0 %v205
  %v570 = vpop.f32.mrb[0].mxu0
  %v571 = vadd.f32 %v474, %v570
  %v572 = vpop.f32.mrb[0].mxu0
  %v573 = vpop.f32.mrb[0].mxu0
  %v574 = vadd.f32 %v477, %v573
  %v575 = vpop.f32.mrb[0].mxu0
  %576 = vmatprep.mubr.bf16.mxu0 %v410
  %577 = vmatmul.mubr.bf16.gmra.mrb[0].mxu0 %v209
  %v578 = vpop.f32.mrb[0].mxu0
  %v579 = vadd.f32 %v482, %v578
  %v580 = vpop.f32.mrb[0].mxu0
  %v581 = vpop.f32.mrb[0].mxu0
  %v582 = vadd.f32 %v485, %v581
  %v583 = vpop.f32.mrb[0].mxu0
  %584 = vmatprep.mubr.bf16.mxu0 %v413
  %585 = vmatmul.mubr.bf16.gmra.mrb[0].mxu0 %v213
  %v586 = vpop.f32.mrb[0].mxu0
  %v587 = vadd.f32 %v490, %v586
  %v588 = vpop.f32.mrb[0].mxu0
  %v589 = vpop.f32.mrb[0].mxu0
  %v590 = vadd.f32 %v493, %v589
  %v591 = vpop.f32.mrb[0].mxu0
  %592 = vmatprep.mubr.bf16.mxu0 %v416
  %593 = vmatmul.mubr.bf16.gmra.mrb[0].mxu0 %v217
  %v594 = vpop.f32.mrb[0].mxu0
  %v595 = vadd.f32 %v498, %v594
  %v596 = vpop.f32.mrb[0].mxu0
  %v597 = vpop.f32.mrb[0].mxu0
  %v598 = vadd.f32 %v501, %v597
  %v599 = vpop.f32.mrb[0].mxu0
  %600 = vmatprep.mubr.bf16.mxu0 %v419
  %601 = vmatmul.mubr.bf16.gmra.mrb[0].mxu0 %v221
  %v602 = vpop.f32.mrb[0].mxu0
  %v603 = vadd.f32 %v506, %v602
  %v604 = vpop.f32.mrb[0].mxu0
  %v605 = vpop.f32.mrb[0].mxu0
  %v606 = vadd.f32 %v509, %v605
  %v607 = vpop.f32.mrb[0].mxu0
  %608 = vmatprep.mubr.bf16.mxu0 %v422
  %609 = vmatmul.mubr.bf16.gmra.mrb[0].mxu0 %v225
  %v610 = vpop.f32.mrb[0].mxu0
  %v611 = vadd.f32 %v514, %v610
  %v612 = vpop.f32.mrb[0].mxu0
  %v613 = vpop.f32.mrb[0].mxu0
  %v614 = vadd.f32 %v517, %v613
  %v615 = vpop.f32.mrb[0].mxu0
  %616 = vmatprep.mubr.bf16.mxu0 %v425
  %617 = vmatmul.mubr.bf16.gmra.mrb[0].mxu0 %v229
  %v618 = vpop.f32.mrb[0].mxu0
  %v619 = vadd.f32 %v522, %v618
  %v620 = vpop.f32.mrb[0].mxu0
  %v621 = vpop.f32.mrb[0].mxu0
  %v622 = vadd.f32 %v525, %v621
  %v623 = vpop.f32.mrb[0].mxu0
  %624 = vdwg.mxu0
  %v625 = vmax.f32 %v563, 0.0
  %v626 = vmax.f32 %v566, 0.0
  %v627 = vmax.f32 %v571, 0.0
  %v628 = vmax.f32 %v574, 0.0
  %v629 = vmax.f32 %v579, 0.0
  %v630 = vmax.f32 %v582, 0.0
  %v631 = vmax.f32 %v587, 0.0
  %v632 = vmax.f32 %v590, 0.0
  %v633 = vmax.f32 %v595, 0.0
  %v634 = vmax.f32 %v598, 0.0
  %v635 = vmax.f32 %v603, 0.0
  %v636 = vmax.f32 %v606, 0.0
  %v637 = vmax.f32 %v611, 0.0
  %v638 = vmax.f32 %v614, 0.0
  %v639 = vmax.f32 %v619, 0.0
  %v640 = vmax.f32 %v622, 0.0
  %vm641 = vcmask 523264
  %642 = vst.msk [vmem:[%s3] sm:$0xff] %vm641, %v625
  %643 = vst.msk [vmem:[%s3 + $0x8] sm:$0xff] %vm641, %v626
  %644 = vst.msk [vmem:[%s3 + $0x10] sm:$0xff] %vm641, %v627
  %645 = vst.msk [vmem:[%s3 + $0x18] sm:$0xff] %vm641, %v628
  %646 = vst.msk [vmem:[%s3 + $0x20] sm:$0xff] %vm641, %v629
  %647 = vst.msk [vmem:[%s3 + $0x28] sm:$0xff] %vm641, %v630
  %648 = vst.msk [vmem:[%s3 + $0x30] sm:$0xff] %vm641, %v631
  %649 = vst.msk [vmem:[%s3 + $0x38] sm:$0xff] %vm641, %v632
  %650 = vst.msk [vmem:[%s3 + $0x40] sm:$0xff] %vm641, %v633
  %651 = vst.msk [vmem:[%s3 + $0x48] sm:$0xff] %vm641, %v634
  %652 = vst.msk [vmem:[%s3 + $0x50] sm:$0xff] %vm641, %v635
  %653 = vst.msk [vmem:[%s3 + $0x58] sm:$0xff] %vm641, %v636
  %654 = vst.msk [vmem:[%s3 + $0x60] sm:$0xff] %vm641, %v637
  %655 = vst.msk [vmem:[%s3 + $0x68] sm:$0xff] %vm641, %v638
  %656 = vst.msk [vmem:[%s3 + $0x70] sm:$0xff] %vm641, %v639
  %657 = vst.msk [vmem:[%s3 + $0x78] sm:$0xff] %vm641, %v640
  // Predicated region
  $region14: #{_lambda_.3} parent=0 // pred_check
    _
  $region15: #{_lambda_.3} parent=0 // pred_check_branch
    %659 = sbr.rel (0) target = $region17
  $region16: #{_lambda_.3} parent=0 // pred_region
    _
  $region17: #{_lambda_.3} parent=0 // pred_fallthru
    _
  // Predicated region
  $region18: #{_lambda_.3} parent=0 // pred_check
    _
  $region19: #{_lambda_.3} parent=0 // pred_check_branch
    %661 = sbr.rel (0) target = $region21
  $region20: #{_lambda_.3} parent=0 // pred_region
    _
  $region21: #{_lambda_.3} parent=0 // pred_fallthru
    _

// kernel: _lambda_.5
$region0: #{_lambda_.5}
  #allocation0 [shape = 'u32[]', space=smem, size = 0x4, offset = 0x4, fixed_abs, tag = 'smem constant byte address 0x4 - core index']
  #allocation1 [shape = 'u32[144,128]{1,0:T(1,128)}', space=vmem, size = 0x12000, scoped, tag = 'internal scratch']
  %s0 = inlined_call_operand.vmem [shape: bf16[2,8,256], index: 0, kind: input, shape index: {}]
  %s1 = inlined_call_operand.vmem [shape: bf16[2,8,128], index: 1, kind: input, shape index: {}]
  %s2 = inlined_call_operand.vmem [shape: bf16[16,8], index: 2, kind: input, shape index: {}]
  %s3 = inlined_call_operand.vmem [shape: bf16[256,512], index: 3, kind: input, shape index: {}]
  %s4 = inlined_call_operand.vmem [shape: bf16[16,8], index: 4, kind: input, shape index: {}]
  %s5 = inlined_call_operand.vmem [shape: bf16[128,512], index: 5, kind: input, shape index: {}]
  %s6 = inlined_call_operand.vmem [shape: f32[2,2,16,512], index: 6, kind: output, shape index: {}]
  %s7 = sld [smem:[#allocation0]]
  $region57: #{_lambda_.5} parent=0
    _
  %s9 = ssub.s32 1, %s7
  %s10 = scalar_select 0, %s9, %s7
  loop: start=0, step=1, limit=4
  $region2: #{_lambda_.5} parent=0 // loop_pre_header
    _
  $region3: #{_lambda_.5} parent=0 // loop_header
    %s12 = sphi 0, %s16
    %p13 = scmp.ge.s32.totalorder %s12, 4
    %s22 = sphi 0, %s24
    %s25 = sphi 0, %s22
    %s26 = sphi 0, %s25
    %s42 = sphi 0, %s26
    %s48 = sphi 0, %s50
    %s51 = sphi 0, %s48
    %s52 = sphi 0, %s51
    %s68 = sphi 0, %s52
    %s72 = sphi 0, %s72
    %s74 = sphi 0, %s72
    %s75 = sphi 0, %s74
    %s89 = sphi 0, %s75
    %s93 = sphi 0, %s93
    %s95 = sphi 0, %s93
    %s96 = sphi 0, %s95
    %s110 = sphi 0, %s96
    %s114 = sphi 0, %s114
    %s116 = sphi 0, %s114
    %s117 = sphi 0, %s116
    %s131 = sphi 0, %s117
    %s135 = sphi 0, %s135
    %s137 = sphi 0, %s135
    %s138 = sphi 0, %s137
    %s152 = sphi 0, %s138
    %s158 = sphi 0, %s160
    %s161 = sphi 0, %s158
    %s162 = sphi 0, %s161
    %s178 = sphi 0, %s162
  $region4: #{_lambda_.5} parent=0 // loop_header_branch
    %15 = sbr.rel (%p13) target = $region8
  $region5: #{_lambda_.5} parent=0 // loop_body
    %s17 = ssub.s32 %s12, 1
    %s18 = ssub.s32 %s12, 2
    %s19 = sadd.s32 %s12, 1
    %s20 = ssub.s32 %s12, %s19
    %p21 = scmp.eq.s32.totalorder %s20, 0
    %s23 = sadd.s32 %s22, 1
    %s24 = scalar_select %p21, %s22, %s23
    %p27 = pneg %p21
    %p28 = scmp.eq.s32.totalorder %s12, 1
    %p29 = por %p27, %p28
    %p30 = scmp.ne.s32.totalorder %s22, %s25
    %p31 = scmp.eq.s32.totalorder %s12, 0
    %p32 = por %p30, %p31
    %p33 = scmp.ne.s32.totalorder %s22, %s25
    %p34 = scmp.eq.s32.totalorder %s17, 1
    %p35 = por %p33, %p34
    %p36 = scmp.ne.s32.totalorder %s25, %s26
    %p37 = scmp.eq.s32.totalorder %s17, 0
    %p38 = por %p36, %p37
    %p39 = scmp.ne.s32.totalorder %s25, %s26
    %p40 = scmp.eq.s32.totalorder %s18, 1
    %p41 = por %p39, %p40
    %p43 = scmp.ne.s32.totalorder %s26, %s42
    %p44 = scmp.eq.s32.totalorder %s18, 0
    %p45 = por %p43, %p44
    %s46 = ssub.s32 %s12, %s19
    %p47 = scmp.eq.s32.totalorder %s46, 0
    %s49 = sadd.s32 %s48, 1
    %s50 = scalar_select %p47, %s48, %s49
    %p53 = pneg %p47
    %p54 = scmp.eq.s32.totalorder %s12, 1
    %p55 = por %p53, %p54
    %p56 = scmp.ne.s32.totalorder %s48, %s51
    %p57 = scmp.eq.s32.totalorder %s12, 0
    %p58 = por %p56, %p57
    %p59 = scmp.ne.s32.totalorder %s48, %s51
    %p60 = scmp.eq.s32.totalorder %s17, 1
    %p61 = por %p59, %p60
    %p62 = scmp.ne.s32.totalorder %s51, %s52
    %p63 = scmp.eq.s32.totalorder %s17, 0
    %p64 = por %p62, %p63
    %p65 = scmp.ne.s32.totalorder %s51, %s52
    %p66 = scmp.eq.s32.totalorder %s18, 1
    %p67 = por %p65, %p66
    %p69 = scmp.ne.s32.totalorder %s52, %s68
    %p70 = scmp.eq.s32.totalorder %s18, 0
    %p71 = por %p69, %p70
    %s73 = sadd.s32 %s72, 1
    %p76 = scmp.eq.s32.totalorder %s12, 1
    %p77 = scmp.ne.s32.totalorder %s72, %s74
    %p78 = scmp.eq.s32.totalorder %s12, 0
    %p79 = por %p77, %p78
    %p80 = scmp.ne.s32.totalorder %s72, %s74
    %p81 = scmp.eq.s32.totalorder %s17, 1
    %p82 = por %p80, %p81
    %p83 = scmp.ne.s32.totalorder %s74, %s75
    %p84 = scmp.eq.s32.totalorder %s17, 0
    %p85 = por %p83, %p84
    %p86 = scmp.ne.s32.totalorder %s74, %s75
    %p87 = scmp.eq.s32.totalorder %s18, 1
    %p88 = por %p86, %p87
    %p90 = scmp.ne.s32.totalorder %s75, %s89
    %p91 = scmp.eq.s32.totalorder %s18, 0
    %p92 = por %p90, %p91
    %s94 = sadd.s32 %s93, 1
    %p97 = scmp.eq.s32.totalorder %s12, 1
    %p98 = scmp.ne.s32.totalorder %s93, %s95
    %p99 = scmp.eq.s32.totalorder %s12, 0
    %p100 = por %p98, %p99
    %p101 = scmp.ne.s32.totalorder %s93, %s95
    %p102 = scmp.eq.s32.totalorder %s17, 1
    %p103 = por %p101, %p102
    %p104 = scmp.ne.s32.totalorder %s95, %s96
    %p105 = scmp.eq.s32.totalorder %s17, 0
    %p106 = por %p104, %p105
    %p107 = scmp.ne.s32.totalorder %s95, %s96
    %p108 = scmp.eq.s32.totalorder %s18, 1
    %p109 = por %p107, %p108
    %p111 = scmp.ne.s32.totalorder %s96, %s110
    %p112 = scmp.eq.s32.totalorder %s18, 0
    %p113 = por %p111, %p112
    %s115 = sadd.s32 %s114, 1
    %p118 = scmp.eq.s32.totalorder %s12, 1
    %p119 = scmp.ne.s32.totalorder %s114, %s116
    %p120 = scmp.eq.s32.totalorder %s12, 0
    %p121 = por %p119, %p120
    %p122 = scmp.ne.s32.totalorder %s114, %s116
    %p123 = scmp.eq.s32.totalorder %s17, 1
    %p124 = por %p122, %p123
    %p125 = scmp.ne.s32.totalorder %s116, %s117
    %p126 = scmp.eq.s32.totalorder %s17, 0
    %p127 = por %p125, %p126
    %p128 = scmp.ne.s32.totalorder %s116, %s117
    %p129 = scmp.eq.s32.totalorder %s18, 1
    %p130 = por %p128, %p129
    %p132 = scmp.ne.s32.totalorder %s117, %s131
    %p133 = scmp.eq.s32.totalorder %s18, 0
    %p134 = por %p132, %p133
    %s136 = sadd.s32 %s135, 1
    %p139 = scmp.eq.s32.totalorder %s12, 1
    %p140 = scmp.ne.s32.totalorder %s135, %s137
    %p141 = scmp.eq.s32.totalorder %s12, 0
    %p142 = por %p140, %p141
    %p143 = scmp.ne.s32.totalorder %s135, %s137
    %p144 = scmp.eq.s32.totalorder %s17, 1
    %p145 = por %p143, %p144
    %p146 = scmp.ne.s32.totalorder %s137, %s138
    %p147 = scmp.eq.s32.totalorder %s17, 0
    %p148 = por %p146, %p147
    %p149 = scmp.ne.s32.totalorder %s137, %s138
    %p150 = scmp.eq.s32.totalorder %s18, 1
    %p151 = por %p149, %p150
    %p153 = scmp.ne.s32.totalorder %s138, %s152
    %p154 = scmp.eq.s32.totalorder %s18, 0
    %p155 = por %p153, %p154
    %s156 = ssub.s32 %s12, %s19
    %p157 = scmp.eq.s32.totalorder %s156, 0
    %s159 = sadd.s32 %s158, 1
    %s160 = scalar_select %p157, %s158, %s159
    %p163 = pneg %p157
    %p164 = scmp.eq.s32.totalorder %s12, 1
    %p165 = por %p163, %p164
    %p166 = scmp.ne.s32.totalorder %s158, %s161
    %p167 = scmp.eq.s32.totalorder %s12, 0
    %p168 = por %p166, %p167
    %p169 = scmp.ne.s32.totalorder %s158, %s161
    %p170 = scmp.eq.s32.totalorder %s17, 1
    %p171 = por %p169, %p170
    %p172 = scmp.ne.s32.totalorder %s161, %s162
    %p173 = scmp.eq.s32.totalorder %s17, 0
    %p174 = por %p172, %p173
    %p175 = scmp.ne.s32.totalorder %s161, %s162
    %p176 = scmp.eq.s32.totalorder %s18, 1
    %p177 = por %p175, %p176
    %p179 = scmp.ne.s32.totalorder %s162, %s178
    %p180 = scmp.eq.s32.totalorder %s18, 0
    %p181 = por %p179, %p180
    %p182 = scmp.le.s32.totalorder 1, %s12
    %p183 = scmp.lt.s32.totalorder %s12, 3
    %p184 = pnand %p182, %p183
    %p185 = pneg %p184
    // Predicated region
    $region9: #{_lambda_.5} parent=5 // pred_check
      _
    $region10: #{_lambda_.5} parent=5 // pred_check_branch
      %187 = sbr.rel (%p184) target = $region12
    $region11: #{_lambda_.5} parent=5 // pred_region
      %s188 = ssub.s32 %s12, 1
      // Predicated region
      $region13: #{_lambda_.5} parent=11 // pred_check
        %p189 = pneg %p85
      $region14: #{_lambda_.5} parent=11 // pred_check_branch
        %191 = sbr.rel (%p189) target = $region16
      $region15: #{_lambda_.5} parent=11 // pred_region
        _
      $region16: #{_lambda_.5} parent=11 // pred_fallthru
        _
      // Predicated region
      $region17: #{_lambda_.5} parent=11 // pred_check
        %p192 = pneg %p106
      $region18: #{_lambda_.5} parent=11 // pred_check_branch
        %194 = sbr.rel (%p192) target = $region20
      $region19: #{_lambda_.5} parent=11 // pred_region
        _
      $region20: #{_lambda_.5} parent=11 // pred_fallthru
        _
      // Predicated region
      $region21: #{_lambda_.5} parent=11 // pred_check
        %p195 = pneg %p127
      $region22: #{_lambda_.5} parent=11 // pred_check_branch
        %197 = sbr.rel (%p195) target = $region24
      $region23: #{_lambda_.5} parent=11 // pred_region
        _
      $region24: #{_lambda_.5} parent=11 // pred_fallthru
        _
      // Predicated region
      $region25: #{_lambda_.5} parent=11 // pred_check
        %p198 = pneg %p148
      $region26: #{_lambda_.5} parent=11 // pred_check_branch
        %200 = sbr.rel (%p198) target = $region28
      $region27: #{_lambda_.5} parent=11 // pred_region
        _
      $region28: #{_lambda_.5} parent=11 // pred_fallthru
        _
    $region12: #{_lambda_.5} parent=5 // pred_fallthru
      _
    %p201 = scmp.lt.s32.totalorder %s12, 2
    // Predicated region
    $region29: #{_lambda_.5} parent=5 // pred_check
      %p202 = pneg %p201
    $region30: #{_lambda_.5} parent=5 // pred_check_branch
      %204 = sbr.rel (%p202) target = $region32
    $region31: #{_lambda_.5} parent=5 // pred_region
      // Predicated region
      $region33: #{_lambda_.5} parent=31 // pred_check
        %p205 = pneg %p32
      $region34: #{_lambda_.5} parent=31 // pred_check_branch
        %207 = sbr.rel (%p205) target = $region36
      $region35: #{_lambda_.5} parent=31 // pred_region
        %p208 = scmp.lt.s32.totalorder %s12, 1
        %s209 = scalar_select %p208, %s12, 1
        %s210 = smul.addr %s209, 2
        %s211 = smul.addr %s210, 4
        %s212 = scalar_lea.vmem %s0, %s211
      $region36: #{_lambda_.5} parent=31 // pred_fallthru
        _
      // Predicated region
      $region37: #{_lambda_.5} parent=31 // pred_check
        %p213 = pneg %p58
      $region38: #{_lambda_.5} parent=31 // pred_check_branch
        %215 = sbr.rel (%p213) target = $region40
      $region39: #{_lambda_.5} parent=31 // pred_region
        %p216 = scmp.lt.s32.totalorder %s12, 1
        %s217 = scalar_select %p216, %s12, 1
        %s218 = smul.addr %s217, 4
        %s219 = scalar_lea.vmem %s1, %s218
      $region40: #{_lambda_.5} parent=31 // pred_fallthru
        _
    $region32: #{_lambda_.5} parent=5 // pred_fallthru
      _
    %p220 = scmp.le.s32.totalorder 1, %s12
    %p221 = scmp.lt.s32.totalorder %s12, 3
    %p222 = pnand %p220, %p221
    %p223 = pneg %p222
    // Predicated region
    $region41: #{_lambda_.5} parent=5 // pred_check
      _
    $region42: #{_lambda_.5} parent=5 // pred_check_branch
      %225 = sbr.rel (%p222) target = $region44
    $region43: #{_lambda_.5} parent=5 // pred_region
      %s226 = ssub.s32 %s12, 1
      %p227 = scmp.lt.s32.totalorder %s17, 1
      %s228 = scalar_select %p227, %s17, 1
      %s229 = smul.addr %s228, 2
      %s230 = smul.addr %s229, 4
      %s231 = scalar_lea.vmem %s0, %s230
      %p232 = pneg %p38
      %p233 = pneg %p35
      %p234 = scmp.lt.s32.totalorder %s17, 1
      %s235 = scalar_select %p234, %s17, 1
      %s236 = smul.addr %s235, 4
      %s237 = scalar_lea.vmem %s1, %s236
      %p238 = pneg %p64
      %p239 = pneg %p61
      %p240 = pneg %p85
      %p241 = pneg %p82
      %p242 = pneg %p106
      %p243 = pneg %p103
      %p244 = pneg %p127
      %p245 = pneg %p124
      %p246 = pneg %p148
      %p247 = pneg %p145
      %p248 = pneg %p174
      %p249 = pneg %p171
      %p250 = scmp.lt.s32.totalorder %s17, 1
      %s251 = scalar_select %p250, %s17, 1
      %s252 = smul.addr %s251, 16
      %s253 = smul.addr %s252, 8
      %s254 = scalar_lea.vmem %s6, %s253
      %p255 = scmp.lt.s32.totalorder %s17, 1
      %s256 = scalar_select %p255, %s17, 1
      %s257 = smul.addr %s256, 2
      %s258 = smul.addr %s257, 4
      %s259 = scalar_lea.vmem %s0, %s258
      %p260 = scmp.lt.s32.totalorder %s17, 1
      %s261 = scalar_select %p260, %s17, 1
      %s262 = smul.addr %s261, 4
      %s263 = scalar_lea.vmem %s1, %s262
      %p264 = scmp.lt.s32.totalorder %s17, 1
      %s265 = scalar_select %p264, %s17, 1
      %s266 = smul.addr %s265, 16
      %s267 = smul.addr %s266, 8
      %s268 = scalar_lea.vmem %s6, %s267
      %v270 = vld [vmem:[%s2] sm:$0xf]
      %v271 = vld [vmem:[%s2 + $0x4] sm:$0xf]
      %v272 = vld [vmem:[%s259] sm:$0xff]
      %v275 = vunpack.c.l.b16 %v270
      %v276 = vunpack.c.l.b16 %v271
      %v277 = vpack.c.b16 %v276, %v275
      %v279 = vunpack.c.l.b16 %v272
      %v280 = vunpack.c.h.b16 %v272
      %v281 = vpack.c.b16 %v279, %v279
      %v282 = vpack.c.b16 %v280, %v280
      %vm283 = vcmask 64512
      %v285 = vsel %vm283, %v277, 0
      %vm287 = vcmask 1043456
      %v289 = vsel %vm287, %v281, 0
      %v292 = vsel %vm287, %v282, 0
      %294 = vmatprep.subr.bf16.mxu0 %v292
      %295 = vmatpush1.bf16.msra.mxu0 %v289
      %296 = vmatprep.subr.bf16.mxu0 0
      %297 = vmatpush1.bf16.msra.mxu0 0
      %298 = vmatprep.subr.bf16.mxu0 0
      %299 = vmatpush1.bf16.msra.mxu0 0
      %300 = vmatprep.subr.bf16.mxu0 0
      %301 = vmatpush1.bf16.msra.mxu0 0
      %302 = vmatprep.subr.bf16.mxu0 0
      %303 = vmatpush1.bf16.msra.mxu0 0
      %304 = vmatprep.subr.bf16.mxu0 0
      %305 = vmatpush1.bf16.msra.mxu0 0
      %306 = vmatprep.subr.bf16.mxu0 0
      %307 = vmatpush1.bf16.msra.mxu0 0
      %308 = vmatprep.subr.bf16.mxu0 0
      %309 = vmatpush1.bf16.msra.mxu0 0
      %310 = vmatprep.subr.bf16.mxu0 0
      %311 = vmatpush1.bf16.msra.mxu0 0
      %312 = vmatprep.subr.bf16.mxu0 0
      %313 = vmatpush1.bf16.msra.mxu0 0
      %314 = vmatprep.subr.bf16.mxu0 0
      %315 = vmatpush1.bf16.msra.mxu0 0
      %316 = vmatprep.subr.bf16.mxu0 0
      %317 = vmatpush1.bf16.msra.mxu0 0
      %318 = vmatprep.subr.bf16.mxu0 0
      %319 = vmatpush1.bf16.msra.mxu0 0
      %320 = vmatprep.subr.bf16.mxu0 0
      %321 = vmatpush1.bf16.msra.mxu0 0
      %322 = vmatprep.subr.bf16.mxu0 0
      %323 = vmatpush1.bf16.msra.mxu0 0
      %324 = vmatprep.subr.bf16.mxu0 0
      %325 = vmatpush1.bf16.msra.mxu0 0
      %326 = vmatprep.mubr.bf16.mxu0 0
      %327 = vmatmul.mubr.bf16.gmra.mrb[0].mxu0 %v285
      %v328 = vpop.f32.mrb[0].mxu0
      %v329 = vadd.f32 0.0, %v328
      %v330 = vpop.f32.mrb[0].mxu0
      %v331 = vadd.f32 0.0, %v330
      %v332 = vpop.f32.mrb[0].mxu0
      %v333 = vadd.f32 0.0, %v332
      %v334 = vpop.f32.mrb[0].mxu0
      %v335 = vadd.f32 0.0, %v334
      %336 = vdwg.mxu0
      %v337 = vpack.c.bf16 %v333, %v329
      %v338 = vpack.c.bf16 %v335, %v331
      %v339 = vld [vmem:[%s3] sm:$0xff]
      %v340 = vld [vmem:[%s3 + $0x8] sm:$0xff]
      %v341 = vld [vmem:[%s3 + $0x10] sm:$0xff]
      %v342 = vld [vmem:[%s3 + $0x18] sm:$0xff]
      %v343 = vld [vmem:[%s3 + $0x20] sm:$0xff]
      %v344 = vld [vmem:[%s3 + $0x28] sm:$0xff]
      %v345 = vld [vmem:[%s3 + $0x30] sm:$0xff]
      %v346 = vld [vmem:[%s3 + $0x38] sm:$0xff]
      %v347 = vld [vmem:[%s3 + $0x40] sm:$0xff]
      %v348 = vld [vmem:[%s3 + $0x48] sm:$0xff]
      %v349 = vld [vmem:[%s3 + $0x50] sm:$0xff]
      %v350 = vld [vmem:[%s3 + $0x58] sm:$0xff]
      %v351 = vld [vmem:[%s3 + $0x60] sm:$0xff]
      %v352 = vld [vmem:[%s3 + $0x68] sm:$0xff]
      %v353 = vld [vmem:[%s3 + $0x70] sm:$0xff]
      %v354 = vld [vmem:[%s3 + $0x78] sm:$0xff]
      %v355 = vld [vmem:[%s3 + $0x80] sm:$0xff]
      %v356 = vld [vmem:[%s3 + $0x88] sm:$0xff]
      %v357 = vld [vmem:[%s3 + $0x90] sm:$0xff]
      %v358 = vld [vmem:[%s3 + $0x98] sm:$0xff]
      %v359 = vld [vmem:[%s3 + $0xa0] sm:$0xff]
      %v360 = vld [vmem:[%s3 + $0xa8] sm:$0xff]
      %v361 = vld [vmem:[%s3 + $0xb0] sm:$0xff]
      %v362 = vld [vmem:[%s3 + $0xb8] sm:$0xff]
      %v363 = vld [vmem:[%s3 + $0xc0] sm:$0xff]
      %v364 = vld [vmem:[%s3 + $0xc8] sm:$0xff]
      %v365 = vld [vmem:[%s3 + $0xd0] sm:$0xff]
      %v366 = vld [vmem:[%s3 + $0xd8] sm:$0xff]
      %v367 = vld [vmem:[%s3 + $0xe0] sm:$0xff]
      %v368 = vld [vmem:[%s3 + $0xe8] sm:$0xff]
      %v369 = vld [vmem:[%s3 + $0xf0] sm:$0xff]
      %v370 = vld [vmem:[%s3 + $0xf8] sm:$0xff]
      %v371 = vld [vmem:[%s3 + $0x100] sm:$0xff]
      %v372 = vld [vmem:[%s3 + $0x108] sm:$0xff]
      %v373 = vld [vmem:[%s3 + $0x110] sm:$0xff]
      %v374 = vld [vmem:[%s3 + $0x118] sm:$0xff]
      %v375 = vld [vmem:[%s3 + $0x120] sm:$0xff]
      %v376 = vld [vmem:[%s3 + $0x128] sm:$0xff]
      %v377 = vld [vmem:[%s3 + $0x130] sm:$0xff]
      %v378 = vld [vmem:[%s3 + $0x138] sm:$0xff]
      %v379 = vld [vmem:[%s3 + $0x140] sm:$0xff]
      %v380 = vld [vmem:[%s3 + $0x148] sm:$0xff]
      %v381 = vld [vmem:[%s3 + $0x150] sm:$0xff]
      %v382 = vld [vmem:[%s3 + $0x158] sm:$0xff]
      %v383 = vld [vmem:[%s3 + $0x160] sm:$0xff]
      %v384 = vld [vmem:[%s3 + $0x168] sm:$0xff]
      %v385 = vld [vmem:[%s3 + $0x170] sm:$0xff]
      %v386 = vld [vmem:[%s3 + $0x178] sm:$0xff]
      %v387 = vld [vmem:[%s3 + $0x180] sm:$0xff]
      %v388 = vld [vmem:[%s3 + $0x188] sm:$0xff]
      %v389 = vld [vmem:[%s3 + $0x190] sm:$0xff]
      %v390 = vld [vmem:[%s3 + $0x198] sm:$0xff]
      %v391 = vld [vmem:[%s3 + $0x1a0] sm:$0xff]
      %v392 = vld [vmem:[%s3 + $0x1a8] sm:$0xff]
      %v393 = vld [vmem:[%s3 + $0x1b0] sm:$0xff]
      %v394 = vld [vmem:[%s3 + $0x1b8] sm:$0xff]
      %v395 = vld [vmem:[%s3 + $0x1c0] sm:$0xff]
      %v396 = vld [vmem:[%s3 + $0x1c8] sm:$0xff]
      %v397 = vld [vmem:[%s3 + $0x1d0] sm:$0xff]
      %v398 = vld [vmem:[%s3 + $0x1d8] sm:$0xff]
      %v399 = vld [vmem:[%s3 + $0x1e0] sm:$0xff]
      %v400 = vld [vmem:[%s3 + $0x1e8] sm:$0xff]
      %v401 = vld [vmem:[%s3 + $0x1f0] sm:$0xff]
      %v402 = vld [vmem:[%s3 + $0x1f8] sm:$0xff]
      %v467 = vunpack.c.l.b16 %v339
      %v468 = vunpack.c.h.b16 %v339
      %v469 = vunpack.c.l.b16 %v340
      %v470 = vunpack.c.h.b16 %v340
      %v471 = vunpack.c.l.b16 %v341
      %v472 = vunpack.c.h.b16 %v341
      %v473 = vunpack.c.l.b16 %v342
      %v474 = vunpack.c.h.b16 %v342
      %v475 = vunpack.c.l.b16 %v343
      %v476 = vunpack.c.h.b16 %v343
      %v477 = vunpack.c.l.b16 %v344
      %v478 = vunpack.c.h.b16 %v344
      %v479 = vunpack.c.l.b16 %v345
      %v480 = vunpack.c.h.b16 %v345
      %v481 = vunpack.c.l.b16 %v346
      %v482 = vunpack.c.h.b16 %v346
      %v483 = vunpack.c.l.b16 %v347
      %v484 = vunpack.c.h.b16 %v347
      %v485 = vunpack.c.l.b16 %v348
      %v486 = vunpack.c.h.b16 %v348
      %v487 = vunpack.c.l.b16 %v349
      %v488 = vunpack.c.h.b16 %v349
      %v489 = vunpack.c.l.b16 %v350
      %v490 = vunpack.c.h.b16 %v350
      %v491 = vunpack.c.l.b16 %v351
      %v492 = vunpack.c.h.b16 %v351
      %v493 = vunpack.c.l.b16 %v352
      %v494 = vunpack.c.h.b16 %v352
      %v495 = vunpack.c.l.b16 %v353
      %v496 = vunpack.c.h.b16 %v353
      %v497 = vunpack.c.l.b16 %v354
      %v498 = vunpack.c.h.b16 %v354
      %v499 = vunpack.c.l.b16 %v355
      %v500 = vunpack.c.h.b16 %v355
      %v501 = vunpack.c.l.b16 %v356
      %v502 = vunpack.c.h.b16 %v356
      %v503 = vunpack.c.l.b16 %v357
      %v504 = vunpack.c.h.b16 %v357
      %v505 = vunpack.c.l.b16 %v358
      %v506 = vunpack.c.h.b16 %v358
      %v507 = vunpack.c.l.b16 %v359
      %v508 = vunpack.c.h.b16 %v359
      %v509 = vunpack.c.l.b16 %v360
      %v510 = vunpack.c.h.b16 %v360
      %v511 = vunpack.c.l.b16 %v361
      %v512 = vunpack.c.h.b16 %v361
      %v513 = vunpack.c.l.b16 %v362
      %v514 = vunpack.c.h.b16 %v362
      %v515 = vunpack.c.l.b16 %v363
      %v516 = vunpack.c.h.b16 %v363
      %v517 = vunpack.c.l.b16 %v364
      %v518 = vunpack.c.h.b16 %v364
      %v519 = vunpack.c.l.b16 %v365
      %v520 = vunpack.c.h.b16 %v365
      %v521 = vunpack.c.l.b16 %v366
      %v522 = vunpack.c.h.b16 %v366
      %v523 = vunpack.c.l.b16 %v367
      %v524 = vunpack.c.h.b16 %v367
      %v525 = vunpack.c.l.b16 %v368
      %v526 = vunpack.c.h.b16 %v368
      %v527 = vunpack.c.l.b16 %v369
      %v528 = vunpack.c.h.b16 %v369
      %v529 = vunpack.c.l.b16 %v370
      %v530 = vunpack.c.h.b16 %v370
      %v531 = vunpack.c.l.b16 %v371
      %v532 = vunpack.c.h.b16 %v371
      %v533 = vunpack.c.l.b16 %v372
      %v534 = vunpack.c.h.b16 %v372
      %v535 = vunpack.c.l.b16 %v373
      %v536 = vunpack.c.h.b16 %v373
      %v537 = vunpack.c.l.b16 %v374
      %v538 = vunpack.c.h.b16 %v374
      %v539 = vunpack.c.l.b16 %v375
      %v540 = vunpack.c.h.b16 %v375
      %v541 = vunpack.c.l.b16 %v376
      %v542 = vunpack.c.h.b16 %v376
      %v543 = vunpack.c.l.b16 %v377
      %v544 = vunpack.c.h.b16 %v377
      %v545 = vunpack.c.l.b16 %v378
      %v546 = vunpack.c.h.b16 %v378
      %v547 = vunpack.c.l.b16 %v379
      %v548 = vunpack.c.h.b16 %v379
      %v549 = vunpack.c.l.b16 %v380
      %v550 = vunpack.c.h.b16 %v380
      %v551 = vunpack.c.l.b16 %v381
      %v552 = vunpack.c.h.b16 %v381
      %v553 = vunpack.c.l.b16 %v382
      %v554 = vunpack.c.h.b16 %v382
      %v555 = vunpack.c.l.b16 %v383
      %v556 = vunpack.c.h.b16 %v383
      %v557 = vunpack.c.l.b16 %v384
      %v558 = vunpack.c.h.b16 %v384
      %v559 = vunpack.c.l.b16 %v385
      %v560 = vunpack.c.h.b16 %v385
      %v561 = vunpack.c.l.b16 %v386
      %v562 = vunpack.c.h.b16 %v386
      %v563 = vunpack.c.l.b16 %v387
      %v564 = vunpack.c.h.b16 %v387
      %v565 = vunpack.c.l.b16 %v388
      %v566 = vunpack.c.h.b16 %v388
      %v567 = vunpack.c.l.b16 %v389
      %v568 = vunpack.c.h.b16 %v389
      %v569 = vunpack.c.l.b16 %v390
      %v570 = vunpack.c.h.b16 %v390
      %v571 = vunpack.c.l.b16 %v391
      %v572 = vunpack.c.h.b16 %v391
      %v573 = vunpack.c.l.b16 %v392
      %v574 = vunpack.c.h.b16 %v392
      %v575 = vunpack.c.l.b16 %v393
      %v576 = vunpack.c.h.b16 %v393
      %v577 = vunpack.c.l.b16 %v394
      %v578 = vunpack.c.h.b16 %v394
      %v579 = vunpack.c.l.b16 %v395
      %v580 = vunpack.c.h.b16 %v395
      %v581 = vunpack.c.l.b16 %v396
      %v582 = vunpack.c.h.b16 %v396
      %v583 = vunpack.c.l.b16 %v397
      %v584 = vunpack.c.h.b16 %v397
      %v585 = vunpack.c.l.b16 %v398
      %v586 = vunpack.c.h.b16 %v398
      %v587 = vunpack.c.l.b16 %v399
      %v588 = vunpack.c.h.b16 %v399
      %v589 = vunpack.c.l.b16 %v400
      %v590 = vunpack.c.h.b16 %v400
      %v591 = vunpack.c.l.b16 %v401
      %v592 = vunpack.c.h.b16 %v401
      %v593 = vunpack.c.l.b16 %v402
      %v594 = vunpack.c.h.b16 %v402
      %v595 = vpack.c.b16 %v471, %v467
      %v596 = vpack.c.b16 %v472, %v468
      %v597 = vpack.c.b16 %v473, %v469
      %v598 = vpack.c.b16 %v474, %v470
      %v599 = vpack.c.b16 %v479, %v475
      %v600 = vpack.c.b16 %v480, %v476
      %v601 = vpack.c.b16 %v481, %v477
      %v602 = vpack.c.b16 %v482, %v478
      %v603 = vpack.c.b16 %v487, %v483
      %v604 = vpack.c.b16 %v488, %v484
      %v605 = vpack.c.b16 %v489, %v485
      %v606 = vpack.c.b16 %v490, %v486
      %v607 = vpack.c.b16 %v495, %v491
      %v608 = vpack.c.b16 %v496, %v492
      %v609 = vpack.c.b16 %v497, %v493
      %v610 = vpack.c.b16 %v498, %v494
      %v611 = vpack.c.b16 %v503, %v499
      %v612 = vpack.c.b16 %v504, %v500
      %v613 = vpack.c.b16 %v505, %v501
      %v614 = vpack.c.b16 %v506, %v502
      %v615 = vpack.c.b16 %v511, %v507
      %v616 = vpack.c.b16 %v512, %v508
      %v617 = vpack.c.b16 %v513, %v509
      %v618 = vpack.c.b16 %v514, %v510
      %v619 = vpack.c.b16 %v519, %v515
      %v620 = vpack.c.b16 %v520, %v516
      %v621 = vpack.c.b16 %v521, %v517
      %v622 = vpack.c.b16 %v522, %v518
      %v623 = vpack.c.b16 %v527, %v523
      %v624 = vpack.c.b16 %v528, %v524
      %v625 = vpack.c.b16 %v529, %v525
      %v626 = vpack.c.b16 %v530, %v526
      %v627 = vpack.c.b16 %v535, %v531
      %v628 = vpack.c.b16 %v536, %v532
      %v629 = vpack.c.b16 %v537, %v533
      %v630 = vpack.c.b16 %v538, %v534
      %v631 = vpack.c.b16 %v543, %v539
      %v632 = vpack.c.b16 %v544, %v540
      %v633 = vpack.c.b16 %v545, %v541
      %v634 = vpack.c.b16 %v546, %v542
      %v635 = vpack.c.b16 %v551, %v547
      %v636 = vpack.c.b16 %v552, %v548
      %v637 = vpack.c.b16 %v553, %v549
      %v638 = vpack.c.b16 %v554, %v550
      %v639 = vpack.c.b16 %v559, %v555
      %v640 = vpack.c.b16 %v560, %v556
      %v641 = vpack.c.b16 %v561, %v557
      %v642 = vpack.c.b16 %v562, %v558
      %v643 = vpack.c.b16 %v567, %v563
      %v644 = vpack.c.b16 %v568, %v564
      %v645 = vpack.c.b16 %v569, %v565
      %v646 = vpack.c.b16 %v570, %v566
      %v647 = vpack.c.b16 %v575, %v571
      %v648 = vpack.c.b16 %v576, %v572
      %v649 = vpack.c.b16 %v577, %v573
      %v650 = vpack.c.b16 %v578, %v574
      %v651 = vpack.c.b16 %v583, %v579
      %v652 = vpack.c.b16 %v584, %v580
      %v653 = vpack.c.b16 %v585, %v581
      %v654 = vpack.c.b16 %v586, %v582
      %v655 = vpack.c.b16 %v591, %v587
      %v656 = vpack.c.b16 %v592, %v588
      %v657 = vpack.c.b16 %v593, %v589
      %v658 = vpack.c.b16 %v594, %v590
      %723 = vmatprep.subr.bf16.mxu0 %v596
      %724 = vmatpush1.bf16.msra.mxu0 %v595
      %725 = vmatprep.subr.bf16.mxu0 %v600
      %726 = vmatpush1.bf16.msra.mxu0 %v599
      %727 = vmatprep.subr.bf16.mxu0 %v604
      %728 = vmatpush1.bf16.msra.mxu0 %v603
      %729 = vmatprep.subr.bf16.mxu0 %v608
      %730 = vmatpush1.bf16.msra.mxu0 %v607
      %731 = vmatprep.subr.bf16.mxu0 %v612
      %732 = vmatpush1.bf16.msra.mxu0 %v611
      %733 = vmatprep.subr.bf16.mxu0 %v616
      %734 = vmatpush1.bf16.msra.mxu0 %v615
      %735 = vmatprep.subr.bf16.mxu0 %v620
      %736 = vmatpush1.bf16.msra.mxu0 %v619
      %737 = vmatprep.subr.bf16.mxu0 %v624
      %738 = vmatpush1.bf16.msra.mxu0 %v623
      %739 = vmatprep.subr.bf16.mxu0 %v628
      %740 = vmatpush1.bf16.msra.mxu0 %v627
      %741 = vmatprep.subr.bf16.mxu0 %v632
      %742 = vmatpush1.bf16.msra.mxu0 %v631
      %743 = vmatprep.subr.bf16.mxu0 %v636
      %744 = vmatpush1.bf16.msra.mxu0 %v635
      %745 = vmatprep.subr.bf16.mxu0 %v640
      %746 = vmatpush1.bf16.msra.mxu0 %v639
      %747 = vmatprep.subr.bf16.mxu0 %v644
      %748 = vmatpush1.bf16.msra.mxu0 %v643
      %749 = vmatprep.subr.bf16.mxu0 %v648
      %750 = vmatpush1.bf16.msra.mxu0 %v647
      %751 = vmatprep.subr.bf16.mxu0 %v652
      %752 = vmatpush1.bf16.msra.mxu0 %v651
      %753 = vmatprep.subr.bf16.mxu0 %v656
      %754 = vmatpush1.bf16.msra.mxu0 %v655
      %755 = vmatprep.mubr.bf16.mxu0 %v338
      %756 = vmatmul.mubr.bf16.gmra.mrb[0].mxu0 %v337
      %v757 = vpop.f32.mrb[0].mxu0
      %v758 = vadd.f32 0.0, %v757
      %v759 = vpop.f32.mrb[0].mxu0
      %v760 = vadd.f32 0.0, %v759
      %v761 = vpop.f32.mrb[0].mxu0
      %v762 = vadd.f32 0.0, %v761
      %v763 = vpop.f32.mrb[0].mxu0
      %v764 = vadd.f32 0.0, %v763
      %765 = vdwg.mxu0
      %766 = vmatprep.subr.bf16.mxu0 %v598
      %767 = vmatpush1.bf16.msra.mxu0 %v597
      %768 = vmatprep.subr.bf16.mxu0 %v602
      %769 = vmatpush1.bf16.msra.mxu0 %v601
      %770 = vmatprep.subr.bf16.mxu0 %v606
      %771 = vmatpush1.bf16.msra.mxu0 %v605
      %772 = vmatprep.subr.bf16.mxu0 %v610
      %773 = vmatpush1.bf16.msra.mxu0 %v609
      %774 = vmatprep.subr.bf16.mxu0 %v614
      %775 = vmatpush1.bf16.msra.mxu0 %v613
      %776 = vmatprep.subr.bf16.mxu0 %v618
      %777 = vmatpush1.bf16.msra.mxu0 %v617
      %778 = vmatprep.subr.bf16.mxu0 %v622
      %779 = vmatpush1.bf16.msra.mxu0 %v621
      %780 = vmatprep.subr.bf16.mxu0 %v626
      %781 = vmatpush1.bf16.msra.mxu0 %v625
      %782 = vmatprep.subr.bf16.mxu0 %v630
      %783 = vmatpush1.bf16.msra.mxu0 %v629
      %784 = vmatprep.subr.bf16.mxu0 %v634
      %785 = vmatpush1.bf16.msra.mxu0 %v633
      %786 = vmatprep.subr.bf16.mxu0 %v638
      %787 = vmatpush1.bf16.msra.mxu0 %v637
      %788 = vmatprep.subr.bf16.mxu0 %v642
      %789 = vmatpush1.bf16.msra.mxu0 %v641
      %790 = vmatprep.subr.bf16.mxu0 %v646
      %791 = vmatpush1.bf16.msra.mxu0 %v645
      %792 = vmatprep.subr.bf16.mxu0 %v650
      %793 = vmatpush1.bf16.msra.mxu0 %v649
      %794 = vmatprep.subr.bf16.mxu0 %v654
      %795 = vmatpush1.bf16.msra.mxu0 %v653
      %796 = vmatprep.subr.bf16.mxu0 %v658
      %797 = vmatpush1.bf16.msra.mxu0 %v657
      %798 = vmatprep.mubr.bf16.mxu0 %v338
      %799 = vmatmul.mubr.bf16.gmra.mrb[0].mxu0 %v337
      %v800 = vpop.f32.mrb[0].mxu0
      %v801 = vadd.f32 0.0, %v800
      %v802 = vpop.f32.mrb[0].mxu0
      %v803 = vadd.f32 0.0, %v802
      %v804 = vpop.f32.mrb[0].mxu0
      %v805 = vadd.f32 0.0, %v804
      %v806 = vpop.f32.mrb[0].mxu0
      %v807 = vadd.f32 0.0, %v806
      %808 = vdwg.mxu0
      %809 = vst [vmem:[%s268] sm:$0xff] %v758
      %810 = vst [vmem:[%s268 + $0x8] sm:$0xff] %v760
      %811 = vst [vmem:[%s268 + $0x10] sm:$0xff] %v801
      %812 = vst [vmem:[%s268 + $0x18] sm:$0xff] %v803
      %813 = vst [vmem:[%s268 + $0x20] sm:$0xff] %v762
      %814 = vst [vmem:[%s268 + $0x28] sm:$0xff] %v764
      %815 = vst [vmem:[%s268 + $0x30] sm:$0xff] %v805
      %816 = vst [vmem:[%s268 + $0x38] sm:$0xff] %v807
      %v817 = vld [vmem:[%s4] sm:$0xf]
      %v818 = vld [vmem:[%s4 + $0x4] sm:$0xf]
      %v819 = vld [vmem:[%s263] sm:$0xf]
      %v822 = vunpack.c.l.b16 %v817
      %v823 = vunpack.c.l.b16 %v818
      %v824 = vpack.c.b16 %v823, %v822
      %v826 = vsel %vm283, %v824, 0
      %v829 = vsel %vm287, %v819, 0
      %831 = vmatprep.subr.bf16.mxu0 0
      %832 = vmatpush1.bf16.msra.mxu0 %v829
      %833 = vmatprep.subr.bf16.mxu0 0
      %834 = vmatpush1.bf16.msra.mxu0 0
      %835 = vmatprep.subr.bf16.mxu0 0
      %836 = vmatpush1.bf16.msra.mxu0 0
      %837 = vmatprep.subr.bf16.mxu0 0
      %838 = vmatpush1.bf16.msra.mxu0 0
      %839 = vmatprep.subr.bf16.mxu0 0
      %840 = vmatpush1.bf16.msra.mxu0 0
      %841 = vmatprep.subr.bf16.mxu0 0
      %842 = vmatpush1.bf16.msra.mxu0 0
      %843 = vmatprep.subr.bf16.mxu0 0
      %844 = vmatpush1.bf16.msra.mxu0 0
      %845 = vmatprep.subr.bf16.mxu0 0
      %846 = vmatpush1.bf16.msra.mxu0 0
      %847 = vmatprep.subr.bf16.mxu0 0
      %848 = vmatpush1.bf16.msra.mxu0 0
      %849 = vmatprep.subr.bf16.mxu0 0
      %850 = vmatpush1.bf16.msra.mxu0 0
      %851 = vmatprep.subr.bf16.mxu0 0
      %852 = vmatpush1.bf16.msra.mxu0 0
      %853 = vmatprep.subr.bf16.mxu0 0
      %854 = vmatpush1.bf16.msra.mxu0 0
      %855 = vmatprep.subr.bf16.mxu0 0
      %856 = vmatpush1.bf16.msra.mxu0 0
      %857 = vmatprep.subr.bf16.mxu0 0
      %858 = vmatpush1.bf16.msra.mxu0 0
      %859 = vmatprep.subr.bf16.mxu0 0
      %860 = vmatpush1.bf16.msra.mxu0 0
      %861 = vmatprep.subr.bf16.mxu0 0
      %862 = vmatpush1.bf16.msra.mxu0 0
      %863 = vmatprep.mubr.bf16.mxu0 0
      %864 = vmatmul.mubr.bf16.gmra.mrb[0].mxu0 %v826
      %v865 = vpop.f32.mrb[0].mxu0
      %v866 = vadd.f32 0.0, %v865
      %v867 = vpop.f32.mrb[0].mxu0
      %v868 = vpop.f32.mrb[0].mxu0
      %v869 = vadd.f32 0.0, %v868
      %v870 = vpop.f32.mrb[0].mxu0
      %871 = vdwg.mxu0
      %v872 = vpack.c.bf16 %v869, %v866
      %v873 = vld [vmem:[%s5] sm:$0xff]
      %v874 = vld [vmem:[%s5 + $0x8] sm:$0xff]
      %v875 = vld [vmem:[%s5 + $0x10] sm:$0xff]
      %v876 = vld [vmem:[%s5 + $0x18] sm:$0xff]
      %v877 = vld [vmem:[%s5 + $0x20] sm:$0xff]
      %v878 = vld [vmem:[%s5 + $0x28] sm:$0xff]
      %v879 = vld [vmem:[%s5 + $0x30] sm:$0xff]
      %v880 = vld [vmem:[%s5 + $0x38] sm:$0xff]
      %v881 = vld [vmem:[%s5 + $0x40] sm:$0xff]
      %v882 = vld [vmem:[%s5 + $0x48] sm:$0xff]
      %v883 = vld [vmem:[%s5 + $0x50] sm:$0xff]
      %v884 = vld [vmem:[%s5 + $0x58] sm:$0xff]
      %v885 = vld [vmem:[%s5 + $0x60] sm:$0xff]
      %v886 = vld [vmem:[%s5 + $0x68] sm:$0xff]
      %v887 = vld [vmem:[%s5 + $0x70] sm:$0xff]
      %v888 = vld [vmem:[%s5 + $0x78] sm:$0xff]
      %v889 = vld [vmem:[%s5 + $0x80] sm:$0xff]
      %v890 = vld [vmem:[%s5 + $0x88] sm:$0xff]
      %v891 = vld [vmem:[%s5 + $0x90] sm:$0xff]
      %v892 = vld [vmem:[%s5 + $0x98] sm:$0xff]
      %v893 = vld [vmem:[%s5 + $0xa0] sm:$0xff]
      %v894 = vld [vmem:[%s5 + $0xa8] sm:$0xff]
      %v895 = vld [vmem:[%s5 + $0xb0] sm:$0xff]
      %v896 = vld [vmem:[%s5 + $0xb8] sm:$0xff]
      %v897 = vld [vmem:[%s5 + $0xc0] sm:$0xff]
      %v898 = vld [vmem:[%s5 + $0xc8] sm:$0xff]
      %v899 = vld [vmem:[%s5 + $0xd0] sm:$0xff]
      %v900 = vld [vmem:[%s5 + $0xd8] sm:$0xff]
      %v901 = vld [vmem:[%s5 + $0xe0] sm:$0xff]
      %v902 = vld [vmem:[%s5 + $0xe8] sm:$0xff]
      %v903 = vld [vmem:[%s5 + $0xf0] sm:$0xff]
      %v904 = vld [vmem:[%s5 + $0xf8] sm:$0xff]
      %v937 = vunpack.c.l.b16 %v873
      %v938 = vunpack.c.h.b16 %v873
      %v939 = vunpack.c.l.b16 %v874
      %v940 = vunpack.c.h.b16 %v874
      %v941 = vunpack.c.l.b16 %v875
      %v942 = vunpack.c.h.b16 %v875
      %v943 = vunpack.c.l.b16 %v876
      %v944 = vunpack.c.h.b16 %v876
      %v945 = vunpack.c.l.b16 %v877
      %v946 = vunpack.c.h.b16 %v877
      %v947 = vunpack.c.l.b16 %v878
      %v948 = vunpack.c.h.b16 %v878
      %v949 = vunpack.c.l.b16 %v879
      %v950 = vunpack.c.h.b16 %v879
      %v951 = vunpack.c.l.b16 %v880
      %v952 = vunpack.c.h.b16 %v880
      %v953 = vunpack.c.l.b16 %v881
      %v954 = vunpack.c.h.b16 %v881
      %v955 = vunpack.c.l.b16 %v882
      %v956 = vunpack.c.h.b16 %v882
      %v957 = vunpack.c.l.b16 %v883
      %v958 = vunpack.c.h.b16 %v883
      %v959 = vunpack.c.l.b16 %v884
      %v960 = vunpack.c.h.b16 %v884
      %v961 = vunpack.c.l.b16 %v885
      %v962 = vunpack.c.h.b16 %v885
      %v963 = vunpack.c.l.b16 %v886
      %v964 = vunpack.c.h.b16 %v886
      %v965 = vunpack.c.l.b16 %v887
      %v966 = vunpack.c.h.b16 %v887
      %v967 = vunpack.c.l.b16 %v888
      %v968 = vunpack.c.h.b16 %v888
      %v969 = vunpack.c.l.b16 %v889
      %v970 = vunpack.c.h.b16 %v889
      %v971 = vunpack.c.l.b16 %v890
      %v972 = vunpack.c.h.b16 %v890
      %v973 = vunpack.c.l.b16 %v891
      %v974 = vunpack.c.h.b16 %v891
      %v975 = vunpack.c.l.b16 %v892
      %v976 = vunpack.c.h.b16 %v892
      %v977 = vunpack.c.l.b16 %v893
      %v978 = vunpack.c.h.b16 %v893
      %v979 = vunpack.c.l.b16 %v894
      %v980 = vunpack.c.h.b16 %v894
      %v981 = vunpack.c.l.b16 %v895
      %v982 = vunpack.c.h.b16 %v895
      %v983 = vunpack.c.l.b16 %v896
      %v984 = vunpack.c.h.b16 %v896
      %v985 = vunpack.c.l.b16 %v897
      %v986 = vunpack.c.h.b16 %v897
      %v987 = vunpack.c.l.b16 %v898
      %v988 = vunpack.c.h.b16 %v898
      %v989 = vunpack.c.l.b16 %v899
      %v990 = vunpack.c.h.b16 %v899
      %v991 = vunpack.c.l.b16 %v900
      %v992 = vunpack.c.h.b16 %v900
      %v993 = vunpack.c.l.b16 %v901
      %v994 = vunpack.c.h.b16 %v901
      %v995 = vunpack.c.l.b16 %v902
      %v996 = vunpack.c.h.b16 %v902
      %v997 = vunpack.c.l.b16 %v903
      %v998 = vunpack.c.h.b16 %v903
      %v999 = vunpack.c.l.b16 %v904
      %v1000 = vunpack.c.h.b16 %v904
      %v1001 = vpack.c.b16 %v941, %v937
      %v1002 = vpack.c.b16 %v942, %v938
      %v1003 = vpack.c.b16 %v943, %v939
      %v1004 = vpack.c.b16 %v944, %v940
      %v1005 = vpack.c.b16 %v949, %v945
      %v1006 = vpack.c.b16 %v950, %v946
      %v1007 = vpack.c.b16 %v951, %v947
      %v1008 = vpack.c.b16 %v952, %v948
      %v1009 = vpack.c.b16 %v957, %v953
      %v1010 = vpack.c.b16 %v958, %v954
      %v1011 = vpack.c.b16 %v959, %v955
      %v1012 = vpack.c.b16 %v960, %v956
      %v1013 = vpack.c.b16 %v965, %v961
      %v1014 = vpack.c.b16 %v966, %v962
      %v1015 = vpack.c.b16 %v967, %v963
      %v1016 = vpack.c.b16 %v968, %v964
      %v1017 = vpack.c.b16 %v973, %v969
      %v1018 = vpack.c.b16 %v974, %v970
      %v1019 = vpack.c.b16 %v975, %v971
      %v1020 = vpack.c.b16 %v976, %v972
      %v1021 = vpack.c.b16 %v981, %v977
      %v1022 = vpack.c.b16 %v982, %v978
      %v1023 = vpack.c.b16 %v983, %v979
      %v1024 = vpack.c.b16 %v984, %v980
      %v1025 = vpack.c.b16 %v989, %v985
      %v1026 = vpack.c.b16 %v990, %v986
      %v1027 = vpack.c.b16 %v991, %v987
      %v1028 = vpack.c.b16 %v992, %v988
      %v1029 = vpack.c.b16 %v997, %v993
      %v1030 = vpack.c.b16 %v998, %v994
      %v1031 = vpack.c.b16 %v999, %v995
      %v1032 = vpack.c.b16 %v1000, %v996
      %1065 = vmatprep.subr.bf16.mxu0 %v1002
      %1066 = vmatpush1.bf16.msra.mxu0 %v1001
      %1067 = vmatprep.subr.bf16.mxu0 %v1006
      %1068 = vmatpush1.bf16.msra.mxu0 %v1005
      %1069 = vmatprep.subr.bf16.mxu0 %v1010
      %1070 = vmatpush1.bf16.msra.mxu0 %v1009
      %1071 = vmatprep.subr.bf16.mxu0 %v1014
      %1072 = vmatpush1.bf16.msra.mxu0 %v1013
      %1073 = vmatprep.subr.bf16.mxu0 %v1018
      %1074 = vmatpush1.bf16.msra.mxu0 %v1017
      %1075 = vmatprep.subr.bf16.mxu0 %v1022
      %1076 = vmatpush1.bf16.msra.mxu0 %v1021
      %1077 = vmatprep.subr.bf16.mxu0 %v1026
      %1078 = vmatpush1.bf16.msra.mxu0 %v1025
      %1079 = vmatprep.subr.bf16.mxu0 %v1030
      %1080 = vmatpush1.bf16.msra.mxu0 %v1029
      %1081 = vmatprep.subr.bf16.mxu0 0
      %1082 = vmatpush1.bf16.msra.mxu0 0
      %1083 = vmatprep.subr.bf16.mxu0 0
      %1084 = vmatpush1.bf16.msra.mxu0 0
      %1085 = vmatprep.subr.bf16.mxu0 0
      %1086 = vmatpush1.bf16.msra.mxu0 0
      %1087 = vmatprep.subr.bf16.mxu0 0
      %1088 = vmatpush1.bf16.msra.mxu0 0
      %1089 = vmatprep.subr.bf16.mxu0 0
      %1090 = vmatpush1.bf16.msra.mxu0 0
      %1091 = vmatprep.subr.bf16.mxu0 0
      %1092 = vmatpush1.bf16.msra.mxu0 0
      %1093 = vmatprep.subr.bf16.mxu0 0
      %1094 = vmatpush1.bf16.msra.mxu0 0
      %1095 = vmatprep.subr.bf16.mxu0 0
      %1096 = vmatpush1.bf16.msra.mxu0 0
      %1097 = vmatprep.mubr.bf16.mxu0 0
      %1098 = vmatmul.mubr.bf16.gmra.mrb[0].mxu0 %v872
      %v1099 = vpop.f32.mrb[0].mxu0
      %v1100 = vadd.f32 0.0, %v1099
      %v1101 = vpop.f32.mrb[0].mxu0
      %v1102 = vadd.f32 0.0, %v1101
      %v1103 = vpop.f32.mrb[0].mxu0
      %v1104 = vadd.f32 0.0, %v1103
      %v1105 = vpop.f32.mrb[0].mxu0
      %v1106 = vadd.f32 0.0, %v1105
      %1107 = vdwg.mxu0
      %1108 = vmatprep.subr.bf16.mxu0 %v1004
      %1109 = vmatpush1.bf16.msra.mxu0 %v1003
      %1110 = vmatprep.subr.bf16.mxu0 %v1008
      %1111 = vmatpush1.bf16.msra.mxu0 %v1007
      %1112 = vmatprep.subr.bf16.mxu0 %v1012
      %1113 = vmatpush1.bf16.msra.mxu0 %v1011
      %1114 = vmatprep.subr.bf16.mxu0 %v1016
      %1115 = vmatpush1.bf16.msra.mxu0 %v1015
      %1116 = vmatprep.subr.bf16.mxu0 %v1020
      %1117 = vmatpush1.bf16.msra.mxu0 %v1019
      %1118 = vmatprep.subr.bf16.mxu0 %v1024
      %1119 = vmatpush1.bf16.msra.mxu0 %v1023
      %1120 = vmatprep.subr.bf16.mxu0 %v1028
      %1121 = vmatpush1.bf16.msra.mxu0 %v1027
      %1122 = vmatprep.subr.bf16.mxu0 %v1032
      %1123 = vmatpush1.bf16.msra.mxu0 %v1031
      %1124 = vmatprep.subr.bf16.mxu0 0
      %1125 = vmatpush1.bf16.msra.mxu0 0
      %1126 = vmatprep.subr.bf16.mxu0 0
      %1127 = vmatpush1.bf16.msra.mxu0 0
      %1128 = vmatprep.subr.bf16.mxu0 0
      %1129 = vmatpush1.bf16.msra.mxu0 0
      %1130 = vmatprep.subr.bf16.mxu0 0
      %1131 = vmatpush1.bf16.msra.mxu0 0
      %1132 = vmatprep.subr.bf16.mxu0 0
      %1133 = vmatpush1.bf16.msra.mxu0 0
      %1134 = vmatprep.subr.bf16.mxu0 0
      %1135 = vmatpush1.bf16.msra.mxu0 0
      %1136 = vmatprep.subr.bf16.mxu0 0
      %1137 = vmatpush1.bf16.msra.mxu0 0
      %1138 = vmatprep.subr.bf16.mxu0 0
      %1139 = vmatpush1.bf16.msra.mxu0 0
      %1140 = vmatprep.mubr.bf16.mxu0 0
      %1141 = vmatmul.mubr.bf16.gmra.mrb[0].mxu0 %v872
      %v1142 = vpop.f32.mrb[0].mxu0
      %v1143 = vadd.f32 0.0, %v1142
      %v1144 = vpop.f32.mrb[0].mxu0
      %v1145 = vadd.f32 0.0, %v1144
      %v1146 = vpop.f32.mrb[0].mxu0
      %v1147 = vadd.f32 0.0, %v1146
      %v1148 = vpop.f32.mrb[0].mxu0
      %v1149 = vadd.f32 0.0, %v1148
      %1150 = vdwg.mxu0
      %s1151 = scalar_lea.vmem %s268, 64
      %1152 = vst [vmem:[%s1151] sm:$0xff] %v1100
      %1153 = vst [vmem:[%s1151 + $0x8] sm:$0xff] %v1102
      %1154 = vst [vmem:[%s1151 + $0x10] sm:$0xff] %v1143
      %1155 = vst [vmem:[%s1151 + $0x18] sm:$0xff] %v1145
      %1156 = vst [vmem:[%s1151 + $0x20] sm:$0xff] %v1104
      %1157 = vst [vmem:[%s1151 + $0x28] sm:$0xff] %v1106
      %1158 = vst [vmem:[%s1151 + $0x30] sm:$0xff] %v1147
      %1159 = vst [vmem:[%s1151 + $0x38] sm:$0xff] %v1149
      %p1160 = scmp.lt.s32.totalorder %s17, 1
      %s1161 = scalar_select %p1160, %s17, 1
      %s1162 = smul.addr %s1161, 16
      %s1163 = smul.addr %s1162, 8
      %s1164 = scalar_lea.vmem %s6, %s1163
      // Predicated region
      $region45: #{_lambda_.5} parent=43 // pred_check
        %p1165 = pneg %p171
      $region46: #{_lambda_.5} parent=43 // pred_check_branch
        %1167 = sbr.rel (%p1165) target = $region48
      $region47: #{_lambda_.5} parent=43 // pred_region
        _
      $region48: #{_lambda_.5} parent=43 // pred_fallthru
        _
    $region44: #{_lambda_.5} parent=5 // pred_fallthru
      _
    %p1168 = scmp.le.s32.totalorder 2, %s12
    // Predicated region
    $region49: #{_lambda_.5} parent=5 // pred_check
      %p1169 = pneg %p1168
    $region50: #{_lambda_.5} parent=5 // pred_check_branch
      %1171 = sbr.rel (%p1169) target = $region52
    $region51: #{_lambda_.5} parent=5 // pred_region
      %s1172 = ssub.s32 %s12, 2
      // Predicated region
      $region53: #{_lambda_.5} parent=51 // pred_check
        %p1173 = pneg %p177
      $region54: #{_lambda_.5} parent=51 // pred_check_branch
        %1175 = sbr.rel (%p1173) target = $region56
      $region55: #{_lambda_.5} parent=51 // pred_region
        %p1176 = scmp.lt.s32.totalorder %s18, 1
        %s1177 = scalar_select %p1176, %s18, 1
        %s1178 = smul.addr %s1177, 16
        %s1179 = smul.addr %s1178, 8
        %s1180 = scalar_lea.vmem %s6, %s1179
      $region56: #{_lambda_.5} parent=51 // pred_fallthru
        _
    $region52: #{_lambda_.5} parent=5 // pred_fallthru
      _
  $region6: #{_lambda_.5} parent=0 // loop_footer
    %s16 = sadd.s32 1, %s12
  $region7: #{_lambda_.5} parent=0 // loop_footer_branch
    %11 = sbr.rel target = $region3
  $region8: #{_lambda_.5} parent=0 // loop_exit
    _

// kernel: _lambda_.4
$region0: #{_lambda_.4}
  #allocation0 [shape = 'u32[]', space=smem, size = 0x4, offset = 0x4, fixed_abs, tag = 'smem constant byte address 0x4 - core index']
  #allocation1 [shape = 'u32[144,128]{1,0:T(1,128)}', space=vmem, size = 0x12000, scoped, tag = 'internal scratch']
  #allocation2 [shape = 'bf16[38,64]{1,0:T(8,128)(2,1)}', space=vmem, size = 0x2800, scoped, tag = 'scratch operand']
  #allocation3 [shape = 'bf16[24,576]{1,0:T(8,128)(2,1)}', space=vmem, size = 0x7800, scoped, tag = 'scratch operand']
  #allocation4 [shape = 'f32[24,64]{1,0:T(8,128)}', space=vmem, size = 0x3000, scoped, tag = 'scratch operand']
  %s0 = inlined_call_operand.vmem [shape: f32[2,5,5,64], index: 0, kind: input, shape index: {}]
  %s1 = inlined_call_operand.vmem [shape: f32[2,5,5,64], index: 1, kind: input, shape index: {}]
  %s2 = inlined_call_operand.vmem [shape: f32[2,5,5,64], index: 2, kind: input, shape index: {}]
  %s3 = inlined_call_operand.vmem [shape: f32[2,5,5,64], index: 3, kind: input, shape index: {}]
  %s4 = inlined_call_operand.vmem [shape: bf16[6,576,64], index: 4, kind: input, shape index: {}]
  %s5 = inlined_call_operand.vmem [shape: f32[6,1,64], index: 5, kind: input, shape index: {}]
  %s6 = inlined_call_operand.vmem [shape: f32[24,1], index: 6, kind: input, shape index: {}]
  %s7 = inlined_call_operand.vmem [shape: f32[2,24,64], index: 7, kind: output, shape index: {}]
  %s8 = sld [smem:[#allocation0]]
  $region61: #{_lambda_.4} parent=0
    _
  %s10 = ssub.s32 1, %s8
  %s11 = scalar_select 0, %s10, %s8
  loop: start=0, step=1, limit=4
  $region2: #{_lambda_.4} parent=0 // loop_pre_header
    _
  $region3: #{_lambda_.4} parent=0 // loop_header
    %s13 = sphi 0, %s17
    %p14 = scmp.ge.s32.totalorder %s13, 4
    %s23 = sphi 0, %s25
    %s26 = sphi 0, %s23
    %s27 = sphi 0, %s26
    %s43 = sphi 0, %s27
    %s49 = sphi 0, %s51
    %s52 = sphi 0, %s49
    %s53 = sphi 0, %s52
    %s69 = sphi 0, %s53
    %s75 = sphi 0, %s77
    %s78 = sphi 0, %s75
    %s79 = sphi 0, %s78
    %s95 = sphi 0, %s79
    %s101 = sphi 0, %s103
    %s104 = sphi 0, %s101
    %s105 = sphi 0, %s104
    %s121 = sphi 0, %s105
    %s125 = sphi 0, %s125
    %s127 = sphi 0, %s125
    %s128 = sphi 0, %s127
    %s142 = sphi 0, %s128
    %s146 = sphi 0, %s146
    %s148 = sphi 0, %s146
    %s149 = sphi 0, %s148
    %s163 = sphi 0, %s149
    %s167 = sphi 0, %s167
    %s169 = sphi 0, %s167
    %s170 = sphi 0, %s169
    %s184 = sphi 0, %s170
    %s190 = sphi 0, %s192
    %s193 = sphi 0, %s190
    %s194 = sphi 0, %s193
    %s210 = sphi 0, %s194
  $region4: #{_lambda_.4} parent=0 // loop_header_branch
    %16 = sbr.rel (%p14) target = $region8
  $region5: #{_lambda_.4} parent=0 // loop_body
    %s18 = ssub.s32 %s13, 1
    %s19 = ssub.s32 %s13, 2
    %s20 = sadd.s32 %s13, 1
    %s21 = ssub.s32 %s13, %s20
    %p22 = scmp.eq.s32.totalorder %s21, 0
    %s24 = sadd.s32 %s23, 1
    %s25 = scalar_select %p22, %s23, %s24
    %p28 = pneg %p22
    %p29 = scmp.eq.s32.totalorder %s13, 1
    %p30 = por %p28, %p29
    %p31 = scmp.ne.s32.totalorder %s23, %s26
    %p32 = scmp.eq.s32.totalorder %s13, 0
    %p33 = por %p31, %p32
    %p34 = scmp.ne.s32.totalorder %s23, %s26
    %p35 = scmp.eq.s32.totalorder %s18, 1
    %p36 = por %p34, %p35
    %p37 = scmp.ne.s32.totalorder %s26, %s27
    %p38 = scmp.eq.s32.totalorder %s18, 0
    %p39 = por %p37, %p38
    %p40 = scmp.ne.s32.totalorder %s26, %s27
    %p41 = scmp.eq.s32.totalorder %s19, 1
    %p42 = por %p40, %p41
    %p44 = scmp.ne.s32.totalorder %s27, %s43
    %p45 = scmp.eq.s32.totalorder %s19, 0
    %p46 = por %p44, %p45
    %s47 = ssub.s32 %s13, %s20
    %p48 = scmp.eq.s32.totalorder %s47, 0
    %s50 = sadd.s32 %s49, 1
    %s51 = scalar_select %p48, %s49, %s50
    %p54 = pneg %p48
    %p55 = scmp.eq.s32.totalorder %s13, 1
    %p56 = por %p54, %p55
    %p57 = scmp.ne.s32.totalorder %s49, %s52
    %p58 = scmp.eq.s32.totalorder %s13, 0
    %p59 = por %p57, %p58
    %p60 = scmp.ne.s32.totalorder %s49, %s52
    %p61 = scmp.eq.s32.totalorder %s18, 1
    %p62 = por %p60, %p61
    %p63 = scmp.ne.s32.totalorder %s52, %s53
    %p64 = scmp.eq.s32.totalorder %s18, 0
    %p65 = por %p63, %p64
    %p66 = scmp.ne.s32.totalorder %s52, %s53
    %p67 = scmp.eq.s32.totalorder %s19, 1
    %p68 = por %p66, %p67
    %p70 = scmp.ne.s32.totalorder %s53, %s69
    %p71 = scmp.eq.s32.totalorder %s19, 0
    %p72 = por %p70, %p71
    %s73 = ssub.s32 %s13, %s20
    %p74 = scmp.eq.s32.totalorder %s73, 0
    %s76 = sadd.s32 %s75, 1
    %s77 = scalar_select %p74, %s75, %s76
    %p80 = pneg %p74
    %p81 = scmp.eq.s32.totalorder %s13, 1
    %p82 = por %p80, %p81
    %p83 = scmp.ne.s32.totalorder %s75, %s78
    %p84 = scmp.eq.s32.totalorder %s13, 0
    %p85 = por %p83, %p84
    %p86 = scmp.ne.s32.totalorder %s75, %s78
    %p87 = scmp.eq.s32.totalorder %s18, 1
    %p88 = por %p86, %p87
    %p89 = scmp.ne.s32.totalorder %s78, %s79
    %p90 = scmp.eq.s32.totalorder %s18, 0
    %p91 = por %p89, %p90
    %p92 = scmp.ne.s32.totalorder %s78, %s79
    %p93 = scmp.eq.s32.totalorder %s19, 1
    %p94 = por %p92, %p93
    %p96 = scmp.ne.s32.totalorder %s79, %s95
    %p97 = scmp.eq.s32.totalorder %s19, 0
    %p98 = por %p96, %p97
    %s99 = ssub.s32 %s13, %s20
    %p100 = scmp.eq.s32.totalorder %s99, 0
    %s102 = sadd.s32 %s101, 1
    %s103 = scalar_select %p100, %s101, %s102
    %p106 = pneg %p100
    %p107 = scmp.eq.s32.totalorder %s13, 1
    %p108 = por %p106, %p107
    %p109 = scmp.ne.s32.totalorder %s101, %s104
    %p110 = scmp.eq.s32.totalorder %s13, 0
    %p111 = por %p109, %p110
    %p112 = scmp.ne.s32.totalorder %s101, %s104
    %p113 = scmp.eq.s32.totalorder %s18, 1
    %p114 = por %p112, %p113
    %p115 = scmp.ne.s32.totalorder %s104, %s105
    %p116 = scmp.eq.s32.totalorder %s18, 0
    %p117 = por %p115, %p116
    %p118 = scmp.ne.s32.totalorder %s104, %s105
    %p119 = scmp.eq.s32.totalorder %s19, 1
    %p120 = por %p118, %p119
    %p122 = scmp.ne.s32.totalorder %s105, %s121
    %p123 = scmp.eq.s32.totalorder %s19, 0
    %p124 = por %p122, %p123
    %s126 = sadd.s32 %s125, 1
    %p129 = scmp.eq.s32.totalorder %s13, 1
    %p130 = scmp.ne.s32.totalorder %s125, %s127
    %p131 = scmp.eq.s32.totalorder %s13, 0
    %p132 = por %p130, %p131
    %p133 = scmp.ne.s32.totalorder %s125, %s127
    %p134 = scmp.eq.s32.totalorder %s18, 1
    %p135 = por %p133, %p134
    %p136 = scmp.ne.s32.totalorder %s127, %s128
    %p137 = scmp.eq.s32.totalorder %s18, 0
    %p138 = por %p136, %p137
    %p139 = scmp.ne.s32.totalorder %s127, %s128
    %p140 = scmp.eq.s32.totalorder %s19, 1
    %p141 = por %p139, %p140
    %p143 = scmp.ne.s32.totalorder %s128, %s142
    %p144 = scmp.eq.s32.totalorder %s19, 0
    %p145 = por %p143, %p144
    %s147 = sadd.s32 %s146, 1
    %p150 = scmp.eq.s32.totalorder %s13, 1
    %p151 = scmp.ne.s32.totalorder %s146, %s148
    %p152 = scmp.eq.s32.totalorder %s13, 0
    %p153 = por %p151, %p152
    %p154 = scmp.ne.s32.totalorder %s146, %s148
    %p155 = scmp.eq.s32.totalorder %s18, 1
    %p156 = por %p154, %p155
    %p157 = scmp.ne.s32.totalorder %s148, %s149
    %p158 = scmp.eq.s32.totalorder %s18, 0
    %p159 = por %p157, %p158
    %p160 = scmp.ne.s32.totalorder %s148, %s149
    %p161 = scmp.eq.s32.totalorder %s19, 1
    %p162 = por %p160, %p161
    %p164 = scmp.ne.s32.totalorder %s149, %s163
    %p165 = scmp.eq.s32.totalorder %s19, 0
    %p166 = por %p164, %p165
    %s168 = sadd.s32 %s167, 1
    %p171 = scmp.eq.s32.totalorder %s13, 1
    %p172 = scmp.ne.s32.totalorder %s167, %s169
    %p173 = scmp.eq.s32.totalorder %s13, 0
    %p174 = por %p172, %p173
    %p175 = scmp.ne.s32.totalorder %s167, %s169
    %p176 = scmp.eq.s32.totalorder %s18, 1
    %p177 = por %p175, %p176
    %p178 = scmp.ne.s32.totalorder %s169, %s170
    %p179 = scmp.eq.s32.totalorder %s18, 0
    %p180 = por %p178, %p179
    %p181 = scmp.ne.s32.totalorder %s169, %s170
    %p182 = scmp.eq.s32.totalorder %s19, 1
    %p183 = por %p181, %p182
    %p185 = scmp.ne.s32.totalorder %s170, %s184
    %p186 = scmp.eq.s32.totalorder %s19, 0
    %p187 = por %p185, %p186
    %s188 = ssub.s32 %s13, %s20
    %p189 = scmp.eq.s32.totalorder %s188, 0
    %s191 = sadd.s32 %s190, 1
    %s192 = scalar_select %p189, %s190, %s191
    %p195 = pneg %p189
    %p196 = scmp.eq.s32.totalorder %s13, 1
    %p197 = por %p195, %p196
    %p198 = scmp.ne.s32.totalorder %s190, %s193
    %p199 = scmp.eq.s32.totalorder %s13, 0
    %p200 = por %p198, %p199
    %p201 = scmp.ne.s32.totalorder %s190, %s193
    %p202 = scmp.eq.s32.totalorder %s18, 1
    %p203 = por %p201, %p202
    %p204 = scmp.ne.s32.totalorder %s193, %s194
    %p205 = scmp.eq.s32.totalorder %s18, 0
    %p206 = por %p204, %p205
    %p207 = scmp.ne.s32.totalorder %s193, %s194
    %p208 = scmp.eq.s32.totalorder %s19, 1
    %p209 = por %p207, %p208
    %p211 = scmp.ne.s32.totalorder %s194, %s210
    %p212 = scmp.eq.s32.totalorder %s19, 0
    %p213 = por %p211, %p212
    %p214 = scmp.le.s32.totalorder 1, %s13
    %p215 = scmp.lt.s32.totalorder %s13, 3
    %p216 = pnand %p214, %p215
    %p217 = pneg %p216
    // Predicated region
    $region9: #{_lambda_.4} parent=5 // pred_check
      _
    $region10: #{_lambda_.4} parent=5 // pred_check_branch
      %219 = sbr.rel (%p216) target = $region12
    $region11: #{_lambda_.4} parent=5 // pred_region
      %s220 = ssub.s32 %s13, 1
      // Predicated region
      $region13: #{_lambda_.4} parent=11 // pred_check
        %p221 = pneg %p138
      $region14: #{_lambda_.4} parent=11 // pred_check_branch
        %223 = sbr.rel (%p221) target = $region16
      $region15: #{_lambda_.4} parent=11 // pred_region
        _
      $region16: #{_lambda_.4} parent=11 // pred_fallthru
        _
      // Predicated region
      $region17: #{_lambda_.4} parent=11 // pred_check
        %p224 = pneg %p159
      $region18: #{_lambda_.4} parent=11 // pred_check_branch
        %226 = sbr.rel (%p224) target = $region20
      $region19: #{_lambda_.4} parent=11 // pred_region
        _
      $region20: #{_lambda_.4} parent=11 // pred_fallthru
        _
      // Predicated region
      $region21: #{_lambda_.4} parent=11 // pred_check
        %p227 = pneg %p180
      $region22: #{_lambda_.4} parent=11 // pred_check_branch
        %229 = sbr.rel (%p227) target = $region24
      $region23: #{_lambda_.4} parent=11 // pred_region
        _
      $region24: #{_lambda_.4} parent=11 // pred_fallthru
        _
    $region12: #{_lambda_.4} parent=5 // pred_fallthru
      _
    %p230 = scmp.lt.s32.totalorder %s13, 2
    // Predicated region
    $region25: #{_lambda_.4} parent=5 // pred_check
      %p231 = pneg %p230
    $region26: #{_lambda_.4} parent=5 // pred_check_branch
      %233 = sbr.rel (%p231) target = $region28
    $region27: #{_lambda_.4} parent=5 // pred_region
      // Predicated region
      $region29: #{_lambda_.4} parent=27 // pred_check
        %p234 = pneg %p33
      $region30: #{_lambda_.4} parent=27 // pred_check_branch
        %236 = sbr.rel (%p234) target = $region32
      $region31: #{_lambda_.4} parent=27 // pred_region
        %p237 = scmp.lt.s32.totalorder %s13, 1
        %s238 = scalar_select %p237, %s13, 1
        %s239 = smul.addr %s238, 5
        %s240 = smul.addr %s239, 8
        %s241 = scalar_lea.vmem %s0, %s240
      $region32: #{_lambda_.4} parent=27 // pred_fallthru
        _
      // Predicated region
      $region33: #{_lambda_.4} parent=27 // pred_check
        %p242 = pneg %p59
      $region34: #{_lambda_.4} parent=27 // pred_check_branch
        %244 = sbr.rel (%p242) target = $region36
      $region35: #{_lambda_.4} parent=27 // pred_region
        %p245 = scmp.lt.s32.totalorder %s13, 1
        %s246 = scalar_select %p245, %s13, 1
        %s247 = smul.addr %s246, 5
        %s248 = smul.addr %s247, 8
        %s249 = scalar_lea.vmem %s1, %s248
      $region36: #{_lambda_.4} parent=27 // pred_fallthru
        _
      // Predicated region
      $region37: #{_lambda_.4} parent=27 // pred_check
        %p250 = pneg %p85
      $region38: #{_lambda_.4} parent=27 // pred_check_branch
        %252 = sbr.rel (%p250) target = $region40
      $region39: #{_lambda_.4} parent=27 // pred_region
        %p253 = scmp.lt.s32.totalorder %s13, 1
        %s254 = scalar_select %p253, %s13, 1
        %s255 = smul.addr %s254, 5
        %s256 = smul.addr %s255, 8
        %s257 = scalar_lea.vmem %s2, %s256
      $region40: #{_lambda_.4} parent=27 // pred_fallthru
        _
      // Predicated region
      $region41: #{_lambda_.4} parent=27 // pred_check
        %p258 = pneg %p111
      $region42: #{_lambda_.4} parent=27 // pred_check_branch
        %260 = sbr.rel (%p258) target = $region44
      $region43: #{_lambda_.4} parent=27 // pred_region
        %p261 = scmp.lt.s32.totalorder %s13, 1
        %s262 = scalar_select %p261, %s13, 1
        %s263 = smul.addr %s262, 5
        %s264 = smul.addr %s263, 8
        %s265 = scalar_lea.vmem %s3, %s264
      $region44: #{_lambda_.4} parent=27 // pred_fallthru
        _
    $region28: #{_lambda_.4} parent=5 // pred_fallthru
      _
    %p266 = scmp.le.s32.totalorder 1, %s13
    %p267 = scmp.lt.s32.totalorder %s13, 3
    %p268 = pnand %p266, %p267
    %p269 = pneg %p268
    // Predicated region
    $region45: #{_lambda_.4} parent=5 // pred_check
      _
    $region46: #{_lambda_.4} parent=5 // pred_check_branch
      %271 = sbr.rel (%p268) target = $region48
    $region47: #{_lambda_.4} parent=5 // pred_region
      %s272 = ssub.s32 %s13, 1
      %p273 = scmp.lt.s32.totalorder %s18, 1
      %s274 = scalar_select %p273, %s18, 1
      %s275 = smul.addr %s274, 5
      %s276 = smul.addr %s275, 8
      %s277 = scalar_lea.vmem %s0, %s276
      %p278 = pneg %p39
      %p279 = pneg %p36
      %p280 = scmp.lt.s32.totalorder %s18, 1
      %s281 = scalar_select %p280, %s18, 1
      %s282 = smul.addr %s281, 5
      %s283 = smul.addr %s282, 8
      %s284 = scalar_lea.vmem %s1, %s283
      %p285 = pneg %p65
      %p286 = pneg %p62
      %p287 = scmp.lt.s32.totalorder %s18, 1
      %s288 = scalar_select %p287, %s18, 1
      %s289 = smul.addr %s288, 5
      %s290 = smul.addr %s289, 8
      %s291 = scalar_lea.vmem %s2, %s290
      %p292 = pneg %p91
      %p293 = pneg %p88
      %p294 = scmp.lt.s32.totalorder %s18, 1
      %s295 = scalar_select %p294, %s18, 1
      %s296 = smul.addr %s295, 5
      %s297 = smul.addr %s296, 8
      %s298 = scalar_lea.vmem %s3, %s297
      %p299 = pneg %p117
      %p300 = pneg %p114
      %p301 = pneg %p138
      %p302 = pneg %p135
      %p303 = pneg %p159
      %p304 = pneg %p156
      %p305 = pneg %p180
      %p306 = pneg %p177
      %p307 = pneg %p206
      %p308 = pneg %p203
      %p309 = scmp.lt.s32.totalorder %s18, 1
      %s310 = scalar_select %p309, %s18, 1
      %s311 = smul.addr %s310, 3
      %s312 = smul.addr %s311, 8
      %s313 = scalar_lea.vmem %s7, %s312
      %p314 = scmp.lt.s32.totalorder %s18, 1
      %s315 = scalar_select %p314, %s18, 1
      %s316 = smul.addr %s315, 5
      %s317 = smul.addr %s316, 8
      %s318 = scalar_lea.vmem %s0, %s317
      %p319 = scmp.lt.s32.totalorder %s18, 1
      %s320 = scalar_select %p319, %s18, 1
      %s321 = smul.addr %s320, 5
      %s322 = smul.addr %s321, 8
      %s323 = scalar_lea.vmem %s1, %s322
      %p324 = scmp.lt.s32.totalorder %s18, 1
      %s325 = scalar_select %p324, %s18, 1
      %s326 = smul.addr %s325, 5
      %s327 = smul.addr %s326, 8
      %s328 = scalar_lea.vmem %s2, %s327
      %p329 = scmp.lt.s32.totalorder %s18, 1
      %s330 = scalar_select %p329, %s18, 1
      %s331 = smul.addr %s330, 5
      %s332 = smul.addr %s331, 8
      %s333 = scalar_lea.vmem %s3, %s332
      %p334 = scmp.lt.s32.totalorder %s18, 1
      %s335 = scalar_select %p334, %s18, 1
      %s336 = smul.addr %s335, 3
      %s337 = smul.addr %s336, 8
      %s338 = scalar_lea.vmem %s7, %s337
      %v340 = vld [vmem:[%s318] sm:$0x1f]
      %v341 = vld [vmem:[%s318 + $0x8] sm:$0x1f]
      %v342 = vld [vmem:[%s318 + $0x10] sm:$0x1f]
      %v343 = vld [vmem:[%s318 + $0x18] sm:$0x1f]
      %v344 = vld [vmem:[%s318 + $0x20] sm:$0x1f]
      %v345 = vld [vmem:[%s323] sm:$0x1f]
      %v346 = vld [vmem:[%s323 + $0x8] sm:$0x1f]
      %v347 = vld [vmem:[%s323 + $0x10] sm:$0x1f]
      %v348 = vld [vmem:[%s323 + $0x18] sm:$0x1f]
      %v349 = vld [vmem:[%s323 + $0x20] sm:$0x1f]
      %v350 = vld [vmem:[%s328] sm:$0x1f]
      %v351 = vld [vmem:[%s328 + $0x8] sm:$0x1f]
      %v352 = vld [vmem:[%s328 + $0x10] sm:$0x1f]
      %v353 = vld [vmem:[%s328 + $0x18] sm:$0x1f]
      %v354 = vld [vmem:[%s333] sm:$0x1f]
      %v355 = vld [vmem:[%s333 + $0x8] sm:$0x1f]
      %v356 = vld [vmem:[%s333 + $0x10] sm:$0x1f]
      %v357 = vld [vmem:[%s333 + $0x18] sm:$0x1f]
      %v358 = vmax.f32 %v340, %v345
      %v359 = vmax.f32 %v341, %v346
      %v360 = vmax.f32 %v342, %v347
      %v361 = vmax.f32 %v343, %v348
      %v366 = vrot.slane %v340, 1
      %v367 = vrot.slane %v341, 1
      %v368 = vrot.slane %v342, 1
      %v369 = vrot.slane %v343, 1
      %v374 = vmax.f32 %v358, %v366
      %v375 = vmax.f32 %v359, %v367
      %v376 = vmax.f32 %v360, %v368
      %v377 = vmax.f32 %v361, %v369
      %v378 = vmax.f32 %v374, %v350
      %v379 = vmax.f32 %v375, %v351
      %v380 = vmax.f32 %v376, %v352
      %v381 = vmax.f32 %v377, %v353
      %v382 = vmax.f32 %v378, %v354
      %v383 = vmax.f32 %v379, %v355
      %v384 = vmax.f32 %v380, %v356
      %v385 = vmax.f32 %v381, %v357
      %v390 = vrot.slane %v350, 1
      %v391 = vrot.slane %v351, 1
      %v392 = vrot.slane %v352, 1
      %v393 = vrot.slane %v353, 1
      %v398 = vmax.f32 %v382, %v390
      %v399 = vmax.f32 %v383, %v391
      %v400 = vmax.f32 %v384, %v392
      %v401 = vmax.f32 %v385, %v393
      %v402 = vmax.f32 %v398, %v341
      %v403 = vmax.f32 %v399, %v342
      %v404 = vmax.f32 %v400, %v343
      %v405 = vmax.f32 %v401, %v344
      %v406 = vmax.f32 %v402, %v346
      %v407 = vmax.f32 %v403, %v347
      %v408 = vmax.f32 %v404, %v348
      %v409 = vmax.f32 %v405, %v349
      %v411 = vrot.slane %v344, 1
      %v413 = vmax.f32 %v406, %v367
      %v414 = vmax.f32 %v407, %v368
      %v415 = vmax.f32 %v408, %v369
      %v416 = vmax.f32 %v409, %v411
      %vm417 = vcmask 519168
      %418 = vst.msk [vmem:[#allocation2] sm:$0xf] %vm417, 0
      %419 = vst.msk [vmem:[#allocation2 + $0x4] sm:$0xf] %vm417, 0
      %420 = vst.msk [vmem:[#allocation2 + $0x8] sm:$0xf] %vm417, 0
      %421 = vst.msk [vmem:[#allocation2 + $0xc] sm:$0xf] %vm417, 0
      %vm422 = vcmask 518144
      %423 = vst.msk [vmem:[#allocation2 + $0x10] sm:$0x7] %vm422, 0
      %vm424 = vcmask 523264
      %425 = vst.msk [vmem:[#allocation4] sm:$0xff] %vm424, 0.0
      %426 = vst.msk [vmem:[#allocation4 + $0x8] sm:$0xff] %vm424, 0.0
      %427 = vst.msk [vmem:[#allocation4 + $0x10] sm:$0xff] %vm424, 0.0
      %428 = vst.msk [vmem:[#allocation4] sm:$0xf] %vm417, %v413
      %v429 = vpack.c.bf16 %v413, %v413
      %v431 = vunpack.c.l.b16 %v429
      %v432 = vpack.c.b16 %v431, %v431
      %v434 = vshll.u32 %v432, 16
      %v436 = vrot.slane %v434, 5
      %v437 = vshrl.u32 %v432, 16
      %v439 = vrot.slane %v437, 4
      %v440 = vor.u32 %v439, %v436
      %v441 = vrot.slane %v440, 4
      %vm444 = vcmask 519171
      %vm445 = vsmask.f32 7950
      %vm446 = vmand %vm444, %vm445
      %v447 = vld [vmem:[#allocation2] sm:$0x8]
      %v448 = vsel %vm446, %v436, %v447
      %449 = vst [vmem:[#allocation2] sm:$0x8] %v448
      %vm450 = vcmask 517120
      %vm451 = vsmask.f32 1280
      %vm452 = vmand %vm450, %vm451
      %v453 = vld [vmem:[#allocation2 + $0x4] sm:$0x3]
      %v454 = vsel %vm452, %v441, %v453
      %455 = vst [vmem:[#allocation2 + $0x4] sm:$0x3] %v454
      %456 = vst.msk [vmem:[#allocation4 + $0x6] sm:$0xf] %vm417, %v414
      %v457 = vpack.c.bf16 %v414, %v414
      %v459 = vunpack.c.l.b16 %v457
      %v460 = vpack.c.b16 %v459, %v459
      %v462 = vshrl.u32 %v460, 16
      %v464 = vrot.slane %v462, 5
      %v465 = vshll.u32 %v460, 16
      %v467 = vrot.slane %v465, 6
      %v468 = vor.u32 %v464, %v467
      %v469 = vrot.slane %v464, 4
      %vm472 = vcmask 519170
      %vm473 = vsmask.f32 7946
      %vm474 = vmand %vm472, %vm473
      %v475 = vld [vmem:[#allocation2 + $0x4] sm:$0xc]
      %v476 = vsel %vm474, %v468, %v475
      %477 = vst [vmem:[#allocation2 + $0x4] sm:$0xc] %v476
      %vm478 = vcmask 516096
      %vm479 = vsmask.f32 256
      %vm480 = vmand %vm478, %vm479
      %v481 = vld [vmem:[#allocation2 + $0x8] sm:$0x1]
      %v482 = vsel %vm480, %v469, %v481
      %483 = vst [vmem:[#allocation2 + $0x8] sm:$0x1] %v482
      %484 = vst.msk [vmem:[#allocation4 + $0xc] sm:$0xf] %vm417, %v415
      %v485 = vpack.c.bf16 %v415, %v415
      %v487 = vunpack.c.l.b16 %v485
      %v488 = vpack.c.b16 %v487, %v487
      %v490 = vshrl.u32 %v488, 16
      %v492 = vrot.slane %v490, 6
      %v493 = vshll.u32 %v488, 16
      %v495 = vrot.slane %v493, 7
      %v496 = vor.u32 %v492, %v495
      %vm498 = vcmask 519169
      %vm499 = vsmask.f32 3334
      %vm500 = vmand %vm498, %vm499
      %v501 = vld [vmem:[#allocation2 + $0x8] sm:$0xe]
      %v502 = vsel %vm500, %v496, %v501
      %503 = vst [vmem:[#allocation2 + $0x8] sm:$0xe] %v502
      %504 = vst.msk [vmem:[#allocation4 + $0x12] sm:$0xf] %vm417, %v416
      %v505 = vpack.c.bf16 %v416, %v416
      %v507 = vunpack.c.l.b16 %v505
      %v508 = vpack.c.b16 %v507, %v507
      %v510 = vshrl.u32 %v508, 16
      %v512 = vrot.slane %v510, 7
      %v513 = vshll.u32 %v508, 16
      %v515 = vor.u32 %v512, %v513
      %vm517 = vcmask 518144
      %vm518 = vsmask.f32 2306
      %vm519 = vmand %vm517, %vm518
      %v520 = vld [vmem:[#allocation2 + $0xc] sm:$0x7]
      %v521 = vsel %vm519, %v515, %v520
      %522 = vst [vmem:[#allocation2 + $0xc] sm:$0x7] %v521
      %v523 = vld [vmem:[%s6] sm:$0xff]
      %v524 = vld [vmem:[%s6 + $0x8] sm:$0xff]
      %v525 = vld [vmem:[%s6 + $0x10] sm:$0xff]
      %v526 = vld [vmem:[#allocation2] sm:$0xf]
      %v527 = vld [vmem:[#allocation2 + $0x4] sm:$0xf]
      %v528 = vld [vmem:[#allocation2 + $0x8] sm:$0xf]
      %529 = vst.msk [vmem:[#allocation3] sm:$0xf] %vm417, %v526
      %530 = vst.msk [vmem:[#allocation3 + $0x14] sm:$0xf] %vm417, %v527
      %531 = vst.msk [vmem:[#allocation3 + $0x28] sm:$0xf] %vm417, %v528
      %v532 = vld [vmem:[#allocation2] sm:$0xf]
      %v533 = vld [vmem:[#allocation2 + $0x4] sm:$0xf]
      %v534 = vld [vmem:[#allocation2 + $0x8] sm:$0xf]
      %v535 = vld [vmem:[#allocation2 + $0xc] sm:$0x1]
      %vm536 = vsmask.f32 3328
      %vm537 = vsmask.f32 7440
      %vm538 = vmor %vm536, %vm537
      %v540 = vshrl.u32 %v532, 16
      %v542 = vrot.slane %v540, 4
      %v543 = vshll.u32 %v532, 16
      %v545 = vrot.slane %v543, 5
      %v546 = vor.u32 %v542, %v545
      %v547 = vrot.slane %v546, 4
      %v549 = vshll.u32 %v533, 16
      %v551 = vrot.slane %v549, 5
      %v552 = vsel %vm538, %v547, %v551
      %v553 = vshrl.u32 %v533, 16
      %v555 = vrot.slane %v553, 4
      %v556 = vor.u32 %v555, %v551
      %v557 = vrot.slane %v556, 4
      %v559 = vshll.u32 %v534, 16
      %v561 = vrot.slane %v559, 5
      %v562 = vsel %vm538, %v557, %v561
      %v563 = vshrl.u32 %v534, 16
      %v565 = vrot.slane %v563, 4
      %v566 = vor.u32 %v565, %v561
      %v567 = vrot.slane %v566, 4
      %v569 = vshll.u32 %v535, 16
      %v571 = vrot.slane %v569, 5
      %v572 = vsel %vm538, %v567, %v571
      %573 = vrot.lane.b32.xlu0 %v552, 64
      %v574 = vpop.permute.xlu0 %573
      %575 = vrot.lane.b32.xlu0 %v562, 64
      %v576 = vpop.permute.xlu0 %575
      %577 = vrot.lane.b32.xlu0 %v572, 64
      %v578 = vpop.permute.xlu0 %577
      %vm582 = vcmask 1043968
      %583 = vst.msk [vmem:[#allocation3] sm:$0xf] %vm582, %v574
      %584 = vst.msk [vmem:[#allocation3 + $0x14] sm:$0xf] %vm582, %v576
      %585 = vst.msk [vmem:[#allocation3 + $0x28] sm:$0xf] %vm582, %v578
      %v586 = vld [vmem:[#allocation2] sm:$0xe]
      %v587 = vld [vmem:[#allocation2 + $0x4] sm:$0xf]
      %v588 = vld [vmem:[#allocation2 + $0x8] sm:$0xf]
      %v589 = vld [vmem:[#allocation2 + $0xc] sm:$0x1]
      %vm594 = vcmask 1042432
      %vm595 = vcmask 1046532
      %vm596 = vmor %vm594, %vm595
      %v597 = vrot.slane %v586, 5
      %v598 = vrot.slane %v597, 4
      %v599 = vrot.slane %v587, 5
      %v600 = vsel %vm596, %v598, %v599
      %v601 = vrot.slane %v599, 4
      %v602 = vrot.slane %v588, 5
      %v603 = vsel %vm596, %v601, %v602
      %v604 = vrot.slane %v602, 4
      %v605 = vrot.slane %v589, 5
      %v606 = vsel %vm596, %v604, %v605
      %610 = vst.msk [vmem:[#allocation3 + $0x4] sm:$0xf] %vm417, %v600
      %611 = vst.msk [vmem:[#allocation3 + $0x18] sm:$0xf] %vm417, %v603
      %612 = vst.msk [vmem:[#allocation3 + $0x2c] sm:$0xf] %vm417, %v606
      %v613 = vld [vmem:[#allocation2] sm:$0x8]
      %v614 = vld [vmem:[#allocation2 + $0x4] sm:$0xf]
      %v615 = vld [vmem:[#allocation2 + $0x8] sm:$0xf]
      %v616 = vld [vmem:[#allocation2 + $0xc] sm:$0x7]
      %vm621 = vcmask 1040384
      %vm622 = vcmask 1044484
      %vm623 = vmor %vm621, %vm622
      %v624 = vrot.slane %v613, 7
      %v625 = vrot.slane %v624, 4
      %v626 = vrot.slane %v614, 7
      %v627 = vsel %vm623, %v625, %v626
      %v628 = vrot.slane %v626, 4
      %v629 = vrot.slane %v615, 7
      %v630 = vsel %vm623, %v628, %v629
      %v631 = vrot.slane %v629, 4
      %v632 = vrot.slane %v616, 7
      %v633 = vsel %vm623, %v631, %v632
      %634 = vrot.lane.b32.xlu0 %v627, 64
      %v635 = vpop.permute.xlu0 %634
      %636 = vrot.lane.b32.xlu0 %v630, 64
      %v637 = vpop.permute.xlu0 %636
      %638 = vrot.lane.b32.xlu0 %v633, 64
      %v639 = vpop.permute.xlu0 %638
      %643 = vst.msk [vmem:[#allocation3 + $0x4] sm:$0xf] %vm582, %v635
      %644 = vst.msk [vmem:[#allocation3 + $0x18] sm:$0xf] %vm582, %v637
      %645 = vst.msk [vmem:[#allocation3 + $0x2c] sm:$0xf] %vm582, %v639
      %v646 = vld [vmem:[#allocation2] sm:$0x8]
      %v647 = vld [vmem:[#allocation2 + $0x4] sm:$0xf]
      %v648 = vld [vmem:[#allocation2 + $0x8] sm:$0xf]
      %v649 = vld [vmem:[#allocation2 + $0xc] sm:$0xf]
      %vm650 = vsmask.f32 4368
      %vm651 = vmor %vm479, %vm650
      %v653 = vshrl.u32 %v646, 16
      %v655 = vrot.slane %v653, 7
      %v656 = vrot.slane %v655, 4
      %v658 = vshrl.u32 %v647, 16
      %v660 = vrot.slane %v658, 7
      %v661 = vshll.u32 %v647, 16
      %v663 = vor.u32 %v660, %v661
      %v664 = vsel %vm651, %v656, %v663
      %v665 = vrot.slane %v660, 4
      %v667 = vshrl.u32 %v648, 16
      %v669 = vrot.slane %v667, 7
      %v670 = vshll.u32 %v648, 16
      %v672 = vor.u32 %v669, %v670
      %v673 = vsel %vm651, %v665, %v672
      %v674 = vrot.slane %v669, 4
      %v676 = vshrl.u32 %v649, 16
      %v678 = vrot.slane %v676, 7
      %v679 = vshll.u32 %v649, 16
      %v681 = vor.u32 %v678, %v679
      %v682 = vsel %vm651, %v674, %v681
      %686 = vst.msk [vmem:[#allocation3 + $0x8] sm:$0xf] %vm417, %v664
      %687 = vst.msk [vmem:[#allocation3 + $0x1c] sm:$0xf] %vm417, %v673
      %688 = vst.msk [vmem:[#allocation3 + $0x30] sm:$0xf] %vm417, %v682
      %v689 = vld [vmem:[#allocation2 + $0x4] sm:$0xf]
      %v690 = vld [vmem:[#allocation2 + $0x8] sm:$0xf]
      %v691 = vld [vmem:[#allocation2 + $0xc] sm:$0xf]
      %695 = vrot.lane.b32.xlu0 %v689, 64
      %v696 = vpop.permute.xlu0 %695
      %697 = vrot.lane.b32.xlu0 %v690, 64
      %v698 = vpop.permute.xlu0 %697
      %699 = vrot.lane.b32.xlu0 %v691, 64
      %v700 = vpop.permute.xlu0 %699
      %704 = vst.msk [vmem:[#allocation3 + $0x8] sm:$0xf] %vm582, %v696
      %705 = vst.msk [vmem:[#allocation3 + $0x1c] sm:$0xf] %vm582, %v698
      %706 = vst.msk [vmem:[#allocation3 + $0x30] sm:$0xf] %vm582, %v700
      %v707 = vld [vmem:[#allocation2 + $0x4] sm:$0xc]
      %v708 = vld [vmem:[#allocation2 + $0x8] sm:$0xf]
      %v709 = vld [vmem:[#allocation2 + $0xc] sm:$0xf]
      %v710 = vld [vmem:[#allocation2 + $0x10] sm:$0x3]
      %vm715 = vcmask 1041408
      %vm716 = vcmask 1045508
      %vm717 = vmor %vm715, %vm716
      %v718 = vrot.slane %v707, 6
      %v719 = vrot.slane %v718, 4
      %v720 = vrot.slane %v708, 6
      %v721 = vsel %vm717, %v719, %v720
      %v722 = vrot.slane %v720, 4
      %v723 = vrot.slane %v709, 6
      %v724 = vsel %vm717, %v722, %v723
      %v725 = vrot.slane %v723, 4
      %v726 = vrot.slane %v710, 6
      %v727 = vsel %vm717, %v725, %v726
      %731 = vst.msk [vmem:[#allocation3 + $0xc] sm:$0xf] %vm417, %v721
      %732 = vst.msk [vmem:[#allocation3 + $0x20] sm:$0xf] %vm417, %v724
      %733 = vst.msk [vmem:[#allocation3 + $0x34] sm:$0xf] %vm417, %v727
      %v734 = vld [vmem:[#allocation2 + $0x4] sm:$0xc]
      %v735 = vld [vmem:[#allocation2 + $0x8] sm:$0xf]
      %v736 = vld [vmem:[#allocation2 + $0xc] sm:$0xf]
      %v737 = vld [vmem:[#allocation2 + $0x10] sm:$0x7]
      %vm738 = vsmask.f32 5392
      %vm739 = vmor %vm451, %vm738
      %v741 = vshrl.u32 %v734, 16
      %v743 = vrot.slane %v741, 6
      %v744 = vshll.u32 %v734, 16
      %v746 = vrot.slane %v744, 7
      %v747 = vor.u32 %v743, %v746
      %v748 = vrot.slane %v747, 4
      %v750 = vshrl.u32 %v735, 16
      %v752 = vrot.slane %v750, 6
      %v753 = vshll.u32 %v735, 16
      %v755 = vrot.slane %v753, 7
      %v756 = vor.u32 %v752, %v755
      %v757 = vsel %vm739, %v748, %v756
      %v758 = vrot.slane %v756, 4
      %v760 = vshrl.u32 %v736, 16
      %v762 = vrot.slane %v760, 6
      %v763 = vshll.u32 %v736, 16
      %v765 = vrot.slane %v763, 7
      %v766 = vor.u32 %v762, %v765
      %v767 = vsel %vm739, %v758, %v766
      %v768 = vrot.slane %v766, 4
      %v770 = vshrl.u32 %v737, 16
      %v772 = vrot.slane %v770, 6
      %v773 = vshll.u32 %v737, 16
      %v775 = vrot.slane %v773, 7
      %v776 = vor.u32 %v772, %v775
      %v777 = vsel %vm739, %v768, %v776
      %778 = vrot.lane.b32.xlu0 %v757, 64
      %v779 = vpop.permute.xlu0 %778
      %780 = vrot.lane.b32.xlu0 %v767, 64
      %v781 = vpop.permute.xlu0 %780
      %782 = vrot.lane.b32.xlu0 %v777, 64
      %v783 = vpop.permute.xlu0 %782
      %787 = vst.msk [vmem:[#allocation3 + $0xc] sm:$0xf] %vm582, %v779
      %788 = vst.msk [vmem:[#allocation3 + $0x20] sm:$0xf] %vm582, %v781
      %789 = vst.msk [vmem:[#allocation3 + $0x34] sm:$0xf] %vm582, %v783
      %v790 = vld [vmem:[#allocation2 + $0x4] sm:$0x8]
      %v791 = vld [vmem:[#allocation2 + $0x8] sm:$0xf]
      %v792 = vld [vmem:[#allocation2 + $0xc] sm:$0xf]
      %v793 = vld [vmem:[#allocation2 + $0x10] sm:$0x7]
      %v798 = vrot.slane %v790, 7
      %v799 = vrot.slane %v798, 4
      %v800 = vrot.slane %v791, 7
      %v801 = vsel %vm623, %v799, %v800
      %v802 = vrot.slane %v800, 4
      %v803 = vrot.slane %v792, 7
      %v804 = vsel %vm623, %v802, %v803
      %v805 = vrot.slane %v803, 4
      %v806 = vrot.slane %v793, 7
      %v807 = vsel %vm623, %v805, %v806
      %811 = vst.msk [vmem:[#allocation3 + $0x10] sm:$0xf] %vm417, %v801
      %812 = vst.msk [vmem:[#allocation3 + $0x24] sm:$0xf] %vm417, %v804
      %813 = vst.msk [vmem:[#allocation3 + $0x38] sm:$0xf] %vm417, %v807
      %v814 = vld [vmem:[#allocation3] sm:$0xff]
      %v815 = vld [vmem:[#allocation3 + $0x8] sm:$0xff]
      %v816 = vld [vmem:[#allocation3 + $0x10] sm:$0xf]
      %v817 = vld [vmem:[#allocation3 + $0x14] sm:$0xff]
      %v818 = vld [vmem:[#allocation3 + $0x1c] sm:$0xff]
      %v819 = vld [vmem:[#allocation3 + $0x24] sm:$0xf]
      %v820 = vld [vmem:[#allocation3 + $0x28] sm:$0xff]
      %v821 = vld [vmem:[#allocation3 + $0x30] sm:$0xff]
      %v822 = vld [vmem:[#allocation3 + $0x38] sm:$0xf]
      %v823 = vld [vmem:[%s4] sm:$0xf]
      %v824 = vld [vmem:[%s4 + $0x4] sm:$0xf]
      %v825 = vld [vmem:[%s4 + $0x8] sm:$0xf]
      %v826 = vld [vmem:[%s4 + $0xc] sm:$0xf]
      %v827 = vld [vmem:[%s4 + $0x10] sm:$0xf]
      %v828 = vld [vmem:[%s4 + $0x14] sm:$0xf]
      %v829 = vld [vmem:[%s4 + $0x18] sm:$0xf]
      %v830 = vld [vmem:[%s4 + $0x1c] sm:$0xf]
      %v831 = vld [vmem:[%s4 + $0x20] sm:$0xf]
      %v832 = vld [vmem:[%s4 + $0x24] sm:$0xf]
      %v833 = vld [vmem:[%s4 + $0x28] sm:$0xf]
      %v834 = vld [vmem:[%s4 + $0x2c] sm:$0xf]
      %v835 = vld [vmem:[%s4 + $0x30] sm:$0xf]
      %v836 = vld [vmem:[%s4 + $0x34] sm:$0xf]
      %v837 = vld [vmem:[%s4 + $0x38] sm:$0xf]
      %v838 = vld [vmem:[%s4 + $0x3c] sm:$0xf]
      %v839 = vld [vmem:[%s4 + $0x40] sm:$0xf]
      %v840 = vld [vmem:[%s4 + $0x44] sm:$0xf]
      %v841 = vld [vmem:[%s4 + $0x48] sm:$0xf]
      %v842 = vld [vmem:[%s4 + $0x4c] sm:$0xf]
      %v843 = vld [vmem:[%s4 + $0x50] sm:$0xf]
      %v844 = vld [vmem:[%s4 + $0x54] sm:$0xf]
      %v845 = vld [vmem:[%s4 + $0x58] sm:$0xf]
      %v846 = vld [vmem:[%s4 + $0x5c] sm:$0xf]
      %v847 = vld [vmem:[%s4 + $0x60] sm:$0xf]
      %v848 = vld [vmem:[%s4 + $0x64] sm:$0xf]
      %v849 = vld [vmem:[%s4 + $0x68] sm:$0xf]
      %v850 = vld [vmem:[%s4 + $0x6c] sm:$0xf]
      %v851 = vld [vmem:[%s4 + $0x70] sm:$0xf]
      %v852 = vld [vmem:[%s4 + $0x74] sm:$0xf]
      %v853 = vld [vmem:[%s4 + $0x78] sm:$0xf]
      %v854 = vld [vmem:[%s4 + $0x7c] sm:$0xf]
      %v855 = vld [vmem:[%s4 + $0x80] sm:$0xf]
      %v856 = vld [vmem:[%s4 + $0x84] sm:$0xf]
      %v857 = vld [vmem:[%s4 + $0x88] sm:$0xf]
      %v858 = vld [vmem:[%s4 + $0x8c] sm:$0xf]
      %v859 = vld [vmem:[%s4 + $0x90] sm:$0xf]
      %v860 = vld [vmem:[%s4 + $0x94] sm:$0xf]
      %v861 = vld [vmem:[%s4 + $0x98] sm:$0xf]
      %v862 = vld [vmem:[%s4 + $0x9c] sm:$0xf]
      %v863 = vld [vmem:[%s4 + $0xa0] sm:$0xf]
      %v864 = vld [vmem:[%s4 + $0xa4] sm:$0xf]
      %v865 = vld [vmem:[%s4 + $0xa8] sm:$0xf]
      %v866 = vld [vmem:[%s4 + $0xac] sm:$0xf]
      %v867 = vld [vmem:[%s4 + $0xb0] sm:$0xf]
      %v868 = vld [vmem:[%s4 + $0xb4] sm:$0xf]
      %v869 = vld [vmem:[%s4 + $0xb8] sm:$0xf]
      %v870 = vld [vmem:[%s4 + $0xbc] sm:$0xf]
      %v871 = vld [vmem:[%s4 + $0xc0] sm:$0xf]
      %v872 = vld [vmem:[%s4 + $0xc4] sm:$0xf]
      %v873 = vld [vmem:[%s4 + $0xc8] sm:$0xf]
      %v874 = vld [vmem:[%s4 + $0xcc] sm:$0xf]
      %v875 = vld [vmem:[%s4 + $0xd0] sm:$0xf]
      %v876 = vld [vmem:[%s4 + $0xd4] sm:$0xf]
      %v877 = vld [vmem:[%s4 + $0xd8] sm:$0xf]
      %v878 = vld [vmem:[%s4 + $0xdc] sm:$0xf]
      %v879 = vld [vmem:[%s4 + $0xe0] sm:$0xf]
      %v880 = vld [vmem:[%s4 + $0xe4] sm:$0xf]
      %v881 = vld [vmem:[%s4 + $0xe8] sm:$0xf]
      %v882 = vld [vmem:[%s4 + $0xec] sm:$0xf]
      %v883 = vld [vmem:[%s4 + $0xf0] sm:$0xf]
      %v884 = vld [vmem:[%s4 + $0xf4] sm:$0xf]
      %v885 = vld [vmem:[%s4 + $0xf8] sm:$0xf]
      %v886 = vld [vmem:[%s4 + $0xfc] sm:$0xf]
      %v887 = vld [vmem:[%s4 + $0x100] sm:$0xf]
      %v888 = vld [vmem:[%s4 + $0x104] sm:$0xf]
      %v889 = vld [vmem:[%s4 + $0x108] sm:$0xf]
      %v890 = vld [vmem:[%s4 + $0x10c] sm:$0xf]
      %v891 = vld [vmem:[%s4 + $0x110] sm:$0xf]
      %v892 = vld [vmem:[%s4 + $0x114] sm:$0xf]
      %v893 = vld [vmem:[%s4 + $0x118] sm:$0xf]
      %v894 = vld [vmem:[%s4 + $0x11c] sm:$0xf]
      %v895 = vld [vmem:[%s5] sm:$0x1]
      %v897 = vlaneseq
      %v898 = vshrl.u32 %v897, 7
      %v899 = vsub.s32 0, %v898
      %v900 = vrot.slane %v895, %v899
      %v911 = vunpack.c.l.b16 %v814
      %v912 = vunpack.c.h.b16 %v814
      %v913 = vunpack.c.l.b16 %v815
      %v914 = vunpack.c.h.b16 %v815
      %v915 = vunpack.c.l.b16 %v816
      %v916 = vunpack.c.l.b16 %v817
      %v917 = vunpack.c.h.b16 %v817
      %v918 = vunpack.c.l.b16 %v818
      %v919 = vunpack.c.h.b16 %v818
      %v920 = vunpack.c.l.b16 %v819
      %v921 = vunpack.c.l.b16 %v820
      %v922 = vunpack.c.h.b16 %v820
      %v923 = vunpack.c.l.b16 %v821
      %v924 = vunpack.c.h.b16 %v821
      %v925 = vunpack.c.l.b16 %v822
      %v926 = vpack.c.b16 %v916, %v911
      %v927 = vpack.c.b16 %v917, %v912
      %v928 = vpack.c.b16 %v918, %v913
      %v929 = vpack.c.b16 %v919, %v914
      %v930 = vpack.c.b16 %v920, %v915
      %v931 = vpack.c.b16 %v921, %v921
      %v932 = vpack.c.b16 %v922, %v922
      %v933 = vpack.c.b16 %v923, %v923
      %v934 = vpack.c.b16 %v924, %v924
      %v935 = vpack.c.b16 %v925, %v925
      %v1016 = vunpack.c.l.b16 %v823
      %v1017 = vunpack.c.l.b16 %v824
      %v1018 = vunpack.c.l.b16 %v825
      %v1019 = vunpack.c.l.b16 %v826
      %v1020 = vunpack.c.l.b16 %v827
      %v1021 = vunpack.c.l.b16 %v828
      %v1022 = vunpack.c.l.b16 %v829
      %v1023 = vunpack.c.l.b16 %v830
      %v1024 = vunpack.c.l.b16 %v831
      %v1025 = vunpack.c.l.b16 %v832
      %v1026 = vunpack.c.l.b16 %v833
      %v1027 = vunpack.c.l.b16 %v834
      %v1028 = vunpack.c.l.b16 %v835
      %v1029 = vunpack.c.l.b16 %v836
      %v1030 = vunpack.c.l.b16 %v837
      %v1031 = vunpack.c.l.b16 %v838
      %v1032 = vunpack.c.l.b16 %v839
      %v1033 = vunpack.c.l.b16 %v840
      %v1034 = vunpack.c.l.b16 %v841
      %v1035 = vunpack.c.l.b16 %v842
      %v1036 = vunpack.c.l.b16 %v843
      %v1037 = vunpack.c.l.b16 %v844
      %v1038 = vunpack.c.l.b16 %v845
      %v1039 = vunpack.c.l.b16 %v846
      %v1040 = vunpack.c.l.b16 %v847
      %v1041 = vunpack.c.l.b16 %v848
      %v1042 = vunpack.c.l.b16 %v849
      %v1043 = vunpack.c.l.b16 %v850
      %v1044 = vunpack.c.l.b16 %v851
      %v1045 = vunpack.c.l.b16 %v852
      %v1046 = vunpack.c.l.b16 %v853
      %v1047 = vunpack.c.l.b16 %v854
      %v1048 = vunpack.c.l.b16 %v855
      %v1049 = vunpack.c.l.b16 %v856
      %v1050 = vunpack.c.l.b16 %v857
      %v1051 = vunpack.c.l.b16 %v858
      %v1052 = vunpack.c.l.b16 %v859
      %v1053 = vunpack.c.l.b16 %v860
      %v1054 = vunpack.c.l.b16 %v861
      %v1055 = vunpack.c.l.b16 %v862
      %v1056 = vunpack.c.l.b16 %v863
      %v1057 = vunpack.c.l.b16 %v864
      %v1058 = vunpack.c.l.b16 %v865
      %v1059 = vunpack.c.l.b16 %v866
      %v1060 = vunpack.c.l.b16 %v867
      %v1061 = vunpack.c.l.b16 %v868
      %v1062 = vunpack.c.l.b16 %v869
      %v1063 = vunpack.c.l.b16 %v870
      %v1064 = vunpack.c.l.b16 %v871
      %v1065 = vunpack.c.l.b16 %v872
      %v1066 = vunpack.c.l.b16 %v873
      %v1067 = vunpack.c.l.b16 %v874
      %v1068 = vunpack.c.l.b16 %v875
      %v1069 = vunpack.c.l.b16 %v876
      %v1070 = vunpack.c.l.b16 %v877
      %v1071 = vunpack.c.l.b16 %v878
      %v1072 = vunpack.c.l.b16 %v879
      %v1073 = vunpack.c.l.b16 %v880
      %v1074 = vunpack.c.l.b16 %v881
      %v1075 = vunpack.c.l.b16 %v882
      %v1076 = vunpack.c.l.b16 %v883
      %v1077 = vunpack.c.l.b16 %v884
      %v1078 = vunpack.c.l.b16 %v885
      %v1079 = vunpack.c.l.b16 %v886
      %v1080 = vunpack.c.l.b16 %v887
      %v1081 = vunpack.c.l.b16 %v888
      %v1082 = vunpack.c.l.b16 %v889
      %v1083 = vunpack.c.l.b16 %v890
      %v1084 = vunpack.c.l.b16 %v891
      %v1085 = vunpack.c.l.b16 %v892
      %v1086 = vunpack.c.l.b16 %v893
      %v1087 = vunpack.c.l.b16 %v894
      %v1088 = vpack.c.b16 %v1017, %v1016
      %v1089 = vpack.c.b16 %v1019, %v1018
      %v1090 = vpack.c.b16 %v1021, %v1020
      %v1091 = vpack.c.b16 %v1023, %v1022
      %v1092 = vpack.c.b16 %v1025, %v1024
      %v1093 = vpack.c.b16 %v1027, %v1026
      %v1094 = vpack.c.b16 %v1029, %v1028
      %v1095 = vpack.c.b16 %v1031, %v1030
      %v1096 = vpack.c.b16 %v1033, %v1032
      %v1097 = vpack.c.b16 %v1035, %v1034
      %v1098 = vpack.c.b16 %v1037, %v1036
      %v1099 = vpack.c.b16 %v1039, %v1038
      %v1100 = vpack.c.b16 %v1041, %v1040
      %v1101 = vpack.c.b16 %v1043, %v1042
      %v1102 = vpack.c.b16 %v1045, %v1044
      %v1103 = vpack.c.b16 %v1047, %v1046
      %v1104 = vpack.c.b16 %v1049, %v1048
      %v1105 = vpack.c.b16 %v1051, %v1050
      %v1106 = vpack.c.b16 %v1053, %v1052
      %v1107 = vpack.c.b16 %v1055, %v1054
      %v1108 = vpack.c.b16 %v1057, %v1056
      %v1109 = vpack.c.b16 %v1059, %v1058
      %v1110 = vpack.c.b16 %v1061, %v1060
      %v1111 = vpack.c.b16 %v1063, %v1062
      %v1112 = vpack.c.b16 %v1065, %v1064
      %v1113 = vpack.c.b16 %v1067, %v1066
      %v1114 = vpack.c.b16 %v1069, %v1068
      %v1115 = vpack.c.b16 %v1071, %v1070
      %v1116 = vpack.c.b16 %v1073, %v1072
      %v1117 = vpack.c.b16 %v1075, %v1074
      %v1118 = vpack.c.b16 %v1077, %v1076
      %v1119 = vpack.c.b16 %v1079, %v1078
      %v1120 = vpack.c.b16 %v1081, %v1080
      %v1121 = vpack.c.b16 %v1083, %v1082
      %v1122 = vpack.c.b16 %v1085, %v1084
      %v1123 = vpack.c.b16 %v1087, %v1086
      %v1161 = vsel %vm424, %v930, 0
      %v1164 = vsel %vm424, %v935, 0
      %1166 = vmatprep.subr.bf16.mxu0 0
      %1167 = vmatpush1.bf16.msra.mxu0 %v1088
      %1168 = vmatprep.subr.bf16.mxu0 0
      %1169 = vmatpush1.bf16.msra.mxu0 %v1089
      %1170 = vmatprep.subr.bf16.mxu0 0
      %1171 = vmatpush1.bf16.msra.mxu0 %v1090
      %1172 = vmatprep.subr.bf16.mxu0 0
      %1173 = vmatpush1.bf16.msra.mxu0 %v1091
      %1174 = vmatprep.subr.bf16.mxu0 0
      %1175 = vmatpush1.bf16.msra.mxu0 %v1092
      %1176 = vmatprep.subr.bf16.mxu0 0
      %1177 = vmatpush1.bf16.msra.mxu0 %v1093
      %1178 = vmatprep.subr.bf16.mxu0 0
      %1179 = vmatpush1.bf16.msra.mxu0 %v1094
      %1180 = vmatprep.subr.bf16.mxu0 0
      %1181 = vmatpush1.bf16.msra.mxu0 %v1095
      %1182 = vmatprep.subr.bf16.mxu0 0
      %1183 = vmatpush1.bf16.msra.mxu0 %v1096
      %1184 = vmatprep.subr.bf16.mxu0 0
      %1185 = vmatpush1.bf16.msra.mxu0 %v1097
      %1186 = vmatprep.subr.bf16.mxu0 0
      %1187 = vmatpush1.bf16.msra.mxu0 %v1098
      %1188 = vmatprep.subr.bf16.mxu0 0
      %1189 = vmatpush1.bf16.msra.mxu0 %v1099
      %1190 = vmatprep.subr.bf16.mxu0 0
      %1191 = vmatpush1.bf16.msra.mxu0 %v1100
      %1192 = vmatprep.subr.bf16.mxu0 0
      %1193 = vmatpush1.bf16.msra.mxu0 %v1101
      %1194 = vmatprep.subr.bf16.mxu0 0
      %1195 = vmatpush1.bf16.msra.mxu0 %v1102
      %1196 = vmatprep.subr.bf16.mxu0 0
      %1197 = vmatpush1.bf16.msra.mxu0 %v1103
      %1198 = vmatprep.mubr.bf16.mxu0 %v927
      %1199 = vmatmul.mubr.bf16.gmra.mrb[0].mxu0 %v926
      %v1200 = vpop.f32.mrb[0].mxu0
      %v1201 = vadd.f32 %v900, %v1200
      %v1202 = vpop.f32.mrb[0].mxu0
      %v1203 = vpop.f32.mrb[0].mxu0
      %v1204 = vadd.f32 %v900, %v1203
      %v1205 = vpop.f32.mrb[0].mxu0
      %1206 = vmatprep.mubr.bf16.mxu0 %v932
      %1207 = vmatmul.mubr.bf16.gmra.mrb[0].mxu0 %v931
      %v1208 = vpop.f32.mrb[0].mxu0
      %v1209 = vadd.f32 %v900, %v1208
      %v1210 = vpop.f32.mrb[0].mxu0
      %v1211 = vpop.f32.mrb[0].mxu0
      %v1212 = vpop.f32.mrb[0].mxu0
      %1213 = vdwg.mxu0
      %1214 = vmatprep.subr.bf16.mxu0 0
      %1215 = vmatpush1.bf16.msra.mxu0 %v1104
      %1216 = vmatprep.subr.bf16.mxu0 0
      %1217 = vmatpush1.bf16.msra.mxu0 %v1105
      %1218 = vmatprep.subr.bf16.mxu0 0
      %1219 = vmatpush1.bf16.msra.mxu0 %v1106
      %1220 = vmatprep.subr.bf16.mxu0 0
      %1221 = vmatpush1.bf16.msra.mxu0 %v1107
      %1222 = vmatprep.subr.bf16.mxu0 0
      %1223 = vmatpush1.bf16.msra.mxu0 %v1108
      %1224 = vmatprep.subr.bf16.mxu0 0
      %1225 = vmatpush1.bf16.msra.mxu0 %v1109
      %1226 = vmatprep.subr.bf16.mxu0 0
      %1227 = vmatpush1.bf16.msra.mxu0 %v1110
      %1228 = vmatprep.subr.bf16.mxu0 0
      %1229 = vmatpush1.bf16.msra.mxu0 %v1111
      %1230 = vmatprep.subr.bf16.mxu0 0
      %1231 = vmatpush1.bf16.msra.mxu0 %v1112
      %1232 = vmatprep.subr.bf16.mxu0 0
      %1233 = vmatpush1.bf16.msra.mxu0 %v1113
      %1234 = vmatprep.subr.bf16.mxu0 0
      %1235 = vmatpush1.bf16.msra.mxu0 %v1114
      %1236 = vmatprep.subr.bf16.mxu0 0
      %1237 = vmatpush1.bf16.msra.mxu0 %v1115
      %1238 = vmatprep.subr.bf16.mxu0 0
      %1239 = vmatpush1.bf16.msra.mxu0 %v1116
      %1240 = vmatprep.subr.bf16.mxu0 0
      %1241 = vmatpush1.bf16.msra.mxu0 %v1117
      %1242 = vmatprep.subr.bf16.mxu0 0
      %1243 = vmatpush1.bf16.msra.mxu0 %v1118
      %1244 = vmatprep.subr.bf16.mxu0 0
      %1245 = vmatpush1.bf16.msra.mxu0 %v1119
      %1246 = vmatprep.mubr.bf16.mxu0 %v929
      %1247 = vmatmul.mubr.bf16.gmra.mrb[0].mxu0 %v928
      %v1248 = vpop.f32.mrb[0].mxu0
      %v1249 = vadd.f32 %v1201, %v1248
      %v1250 = vpop.f32.mrb[0].mxu0
      %v1251 = vpop.f32.mrb[0].mxu0
      %v1252 = vadd.f32 %v1204, %v1251
      %v1253 = vpop.f32.mrb[0].mxu0
      %1254 = vmatprep.mubr.bf16.mxu0 %v934
      %1255 = vmatmul.mubr.bf16.gmra.mrb[0].mxu0 %v933
      %v1256 = vpop.f32.mrb[0].mxu0
      %v1257 = vadd.f32 %v1209, %v1256
      %v1258 = vpop.f32.mrb[0].mxu0
      %v1259 = vpop.f32.mrb[0].mxu0
      %v1260 = vpop.f32.mrb[0].mxu0
      %1261 = vdwg.mxu0
      %1262 = vmatprep.subr.bf16.mxu0 0
      %1263 = vmatpush1.bf16.msra.mxu0 %v1120
      %1264 = vmatprep.subr.bf16.mxu0 0
      %1265 = vmatpush1.bf16.msra.mxu0 %v1121
      %1266 = vmatprep.subr.bf16.mxu0 0
      %1267 = vmatpush1.bf16.msra.mxu0 %v1122
      %1268 = vmatprep.subr.bf16.mxu0 0
      %1269 = vmatpush1.bf16.msra.mxu0 %v1123
      %1270 = vmatprep.subr.bf16.mxu0 0
      %1271 = vmatpush1.bf16.msra.mxu0 0
      %1272 = vmatprep.subr.bf16.mxu0 0
      %1273 = vmatpush1.bf16.msra.mxu0 0
      %1274 = vmatprep.subr.bf16.mxu0 0
      %1275 = vmatpush1.bf16.msra.mxu0 0
      %1276 = vmatprep.subr.bf16.mxu0 0
      %1277 = vmatpush1.bf16.msra.mxu0 0
      %1278 = vmatprep.subr.bf16.mxu0 0
      %1279 = vmatpush1.bf16.msra.mxu0 0
      %1280 = vmatprep.subr.bf16.mxu0 0
      %1281 = vmatpush1.bf16.msra.mxu0 0
      %1282 = vmatprep.subr.bf16.mxu0 0
      %1283 = vmatpush1.bf16.msra.mxu0 0
      %1284 = vmatprep.subr.bf16.mxu0 0
      %1285 = vmatpush1.bf16.msra.mxu0 0
      %1286 = vmatprep.subr.bf16.mxu0 0
      %1287 = vmatpush1.bf16.msra.mxu0 0
      %1288 = vmatprep.subr.bf16.mxu0 0
      %1289 = vmatpush1.bf16.msra.mxu0 0
      %1290 = vmatprep.subr.bf16.mxu0 0
      %1291 = vmatpush1.bf16.msra.mxu0 0
      %1292 = vmatprep.subr.bf16.mxu0 0
      %1293 = vmatpush1.bf16.msra.mxu0 0
      %1294 = vmatprep.mubr.bf16.mxu0 0
      %1295 = vmatmul.mubr.bf16.gmra.mrb[0].mxu0 %v1161
      %v1296 = vpop.f32.mrb[0].mxu0
      %v1297 = vadd.f32 %v1249, %v1296
      %v1298 = vpop.f32.mrb[0].mxu0
      %v1299 = vpop.f32.mrb[0].mxu0
      %v1300 = vadd.f32 %v1252, %v1299
      %v1301 = vpop.f32.mrb[0].mxu0
      %1302 = vmatprep.mubr.bf16.mxu0 0
      %1303 = vmatmul.mubr.bf16.gmra.mrb[0].mxu0 %v1164
      %v1304 = vpop.f32.mrb[0].mxu0
      %v1305 = vadd.f32 %v1257, %v1304
      %v1306 = vpop.f32.mrb[0].mxu0
      %v1307 = vpop.f32.mrb[0].mxu0
      %v1308 = vpop.f32.mrb[0].mxu0
      %1309 = vdwg.mxu0
      %v1310 = vmax.f32 %v1297, 0.0
      %v1311 = vmax.f32 %v1300, 0.0
      %v1312 = vmax.f32 %v1305, 0.0
      %1314 = vset.pattern.permute.xlu0 0
      %1315 = vperm.xlu0 %1314, %v523
      %v1316 = vpop.permute.xlu0 %1315
      %1319 = vset.pattern.permute.xlu0 0
      %1320 = vperm.xlu0 %1319, %v524
      %v1321 = vpop.permute.xlu0 %1320
      %1324 = vset.pattern.permute.xlu0 0
      %1325 = vperm.xlu0 %1324, %v525
      %v1326 = vpop.permute.xlu0 %1325
      %v1328 = vmul.f32 %v1310, %v1316
      %v1329 = vmul.f32 %v1311, %v1321
      %v1330 = vmul.f32 %v1312, %v1326
      %v1331 = vpack.c.bf16 %v1329, %v1328
      %v1332 = vpack.c.bf16 %v1330, %v1330
      %v1335 = vunpack.c.l.b16 %v1331
      %v1336 = vunpack.c.h.b16 %v1331
      %v1337 = vunpack.c.l.b16 %v1332
      %v1338 = vpack.c.b16 %v1335, %v1335
      %v1339 = vpack.c.b16 %v1336, %v1336
      %v1340 = vpack.c.b16 %v1337, %v1337
      %v1342 = vshll.u32 %v1338, 16
      %v1344 = vrot.slane %v1342, 5
      %v1345 = vshrl.u32 %v1338, 16
      %v1347 = vrot.slane %v1345, 4
      %v1348 = vor.u32 %v1347, %v1344
      %v1349 = vrot.slane %v1348, 4
      %v1351 = vshll.u32 %v1339, 16
      %v1353 = vrot.slane %v1351, 5
      %v1354 = vsel %vm538, %v1349, %v1353
      %v1355 = vshrl.u32 %v1339, 16
      %v1357 = vrot.slane %v1355, 4
      %v1358 = vor.u32 %v1357, %v1353
      %v1359 = vrot.slane %v1358, 4
      %v1361 = vshll.u32 %v1340, 16
      %v1363 = vrot.slane %v1361, 5
      %v1364 = vsel %vm538, %v1359, %v1363
      %v1365 = vshrl.u32 %v1340, 16
      %v1367 = vrot.slane %v1365, 4
      %v1368 = vor.u32 %v1367, %v1363
      %v1369 = vrot.slane %v1368, 4
      %v1374 = vld [vmem:[#allocation2] sm:$0x8]
      %v1375 = vsel %vm446, %v1344, %v1374
      %1376 = vst [vmem:[#allocation2] sm:$0x8] %v1375
      %1377 = vst.msk [vmem:[#allocation2 + $0x4] sm:$0xf] %vm417, %v1354
      %1378 = vst.msk [vmem:[#allocation2 + $0x8] sm:$0xf] %vm417, %v1364
      %vm1379 = vcmask 519168
      %vm1380 = vmand %vm1379, %vm536
      %v1381 = vld [vmem:[#allocation2 + $0xc] sm:$0xf]
      %v1382 = vsel %vm1380, %v1369, %v1381
      %1383 = vst [vmem:[#allocation2 + $0xc] sm:$0xf] %v1382
      %v1384 = vld [vmem:[#allocation2] sm:$0xf]
      %v1385 = vld [vmem:[#allocation2 + $0x4] sm:$0xf]
      %v1386 = vld [vmem:[#allocation2 + $0x8] sm:$0xf]
      %1387 = vst.msk [vmem:[#allocation3] sm:$0xf] %vm417, %v1384
      %1388 = vst.msk [vmem:[#allocation3 + $0x14] sm:$0xf] %vm417, %v1385
      %1389 = vst.msk [vmem:[#allocation3 + $0x28] sm:$0xf] %vm417, %v1386
      %v1390 = vld [vmem:[#allocation2] sm:$0xf]
      %v1391 = vld [vmem:[#allocation2 + $0x4] sm:$0xf]
      %v1392 = vld [vmem:[#allocation2 + $0x8] sm:$0xf]
      %v1393 = vld [vmem:[#allocation2 + $0xc] sm:$0x1]
      %v1395 = vshrl.u32 %v1390, 16
      %v1397 = vrot.slane %v1395, 4
      %v1398 = vshll.u32 %v1390, 16
      %v1400 = vrot.slane %v1398, 5
      %v1401 = vor.u32 %v1397, %v1400
      %v1402 = vrot.slane %v1401, 4
      %v1404 = vshll.u32 %v1391, 16
      %v1406 = vrot.slane %v1404, 5
      %v1407 = vsel %vm538, %v1402, %v1406
      %v1408 = vshrl.u32 %v1391, 16
      %v1410 = vrot.slane %v1408, 4
      %v1411 = vor.u32 %v1410, %v1406
      %v1412 = vrot.slane %v1411, 4
      %v1414 = vshll.u32 %v1392, 16
      %v1416 = vrot.slane %v1414, 5
      %v1417 = vsel %vm538, %v1412, %v1416
      %v1418 = vshrl.u32 %v1392, 16
      %v1420 = vrot.slane %v1418, 4
      %v1421 = vor.u32 %v1420, %v1416
      %v1422 = vrot.slane %v1421, 4
      %v1424 = vshll.u32 %v1393, 16
      %v1426 = vrot.slane %v1424, 5
      %v1427 = vsel %vm538, %v1422, %v1426
      %1428 = vrot.lane.b32.xlu0 %v1407, 64
      %v1429 = vpop.permute.xlu0 %1428
      %1430 = vrot.lane.b32.xlu0 %v1417, 64
      %v1431 = vpop.permute.xlu0 %1430
      %1432 = vrot.lane.b32.xlu0 %v1427, 64
      %v1433 = vpop.permute.xlu0 %1432
      %1437 = vst.msk [vmem:[#allocation3] sm:$0xf] %vm582, %v1429
      %1438 = vst.msk [vmem:[#allocation3 + $0x14] sm:$0xf] %vm582, %v1431
      %1439 = vst.msk [vmem:[#allocation3 + $0x28] sm:$0xf] %vm582, %v1433
      %v1440 = vld [vmem:[#allocation2] sm:$0xe]
      %v1441 = vld [vmem:[#allocation2 + $0x4] sm:$0xf]
      %v1442 = vld [vmem:[#allocation2 + $0x8] sm:$0xf]
      %v1443 = vld [vmem:[#allocation2 + $0xc] sm:$0x1]
      %v1448 = vrot.slane %v1440, 5
      %v1449 = vrot.slane %v1448, 4
      %v1450 = vrot.slane %v1441, 5
      %v1451 = vsel %vm596, %v1449, %v1450
      %v1452 = vrot.slane %v1450, 4
      %v1453 = vrot.slane %v1442, 5
      %v1454 = vsel %vm596, %v1452, %v1453
      %v1455 = vrot.slane %v1453, 4
      %v1456 = vrot.slane %v1443, 5
      %v1457 = vsel %vm596, %v1455, %v1456
      %1461 = vst.msk [vmem:[#allocation3 + $0x4] sm:$0xf] %vm417, %v1451
      %1462 = vst.msk [vmem:[#allocation3 + $0x18] sm:$0xf] %vm417, %v1454
      %1463 = vst.msk [vmem:[#allocation3 + $0x2c] sm:$0xf] %vm417, %v1457
      %v1464 = vld [vmem:[#allocation2] sm:$0x8]
      %v1465 = vld [vmem:[#allocation2 + $0x4] sm:$0xf]
      %v1466 = vld [vmem:[#allocation2 + $0x8] sm:$0xf]
      %v1467 = vld [vmem:[#allocation2 + $0xc] sm:$0x7]
      %v1472 = vrot.slane %v1464, 7
      %v1473 = vrot.slane %v1472, 4
      %v1474 = vrot.slane %v1465, 7
      %v1475 = vsel %vm623, %v1473, %v1474
      %v1476 = vrot.slane %v1474, 4
      %v1477 = vrot.slane %v1466, 7
      %v1478 = vsel %vm623, %v1476, %v1477
      %v1479 = vrot.slane %v1477, 4
      %v1480 = vrot.slane %v1467, 7
      %v1481 = vsel %vm623, %v1479, %v1480
      %1482 = vrot.lane.b32.xlu0 %v1475, 64
      %v1483 = vpop.permute.xlu0 %1482
      %1484 = vrot.lane.b32.xlu0 %v1478, 64
      %v1485 = vpop.permute.xlu0 %1484
      %1486 = vrot.lane.b32.xlu0 %v1481, 64
      %v1487 = vpop.permute.xlu0 %1486
      %1491 = vst.msk [vmem:[#allocation3 + $0x4] sm:$0xf] %vm582, %v1483
      %1492 = vst.msk [vmem:[#allocation3 + $0x18] sm:$0xf] %vm582, %v1485
      %1493 = vst.msk [vmem:[#allocation3 + $0x2c] sm:$0xf] %vm582, %v1487
      %v1494 = vld [vmem:[#allocation2] sm:$0x8]
      %v1495 = vld [vmem:[#allocation2 + $0x4] sm:$0xf]
      %v1496 = vld [vmem:[#allocation2 + $0x8] sm:$0xf]
      %v1497 = vld [vmem:[#allocation2 + $0xc] sm:$0xf]
      %v1499 = vshrl.u32 %v1494, 16
      %v1501 = vrot.slane %v1499, 7
      %v1502 = vrot.slane %v1501, 4
      %v1504 = vshrl.u32 %v1495, 16
      %v1506 = vrot.slane %v1504, 7
      %v1507 = vshll.u32 %v1495, 16
      %v1509 = vor.u32 %v1506, %v1507
      %v1510 = vsel %vm651, %v1502, %v1509
      %v1511 = vrot.slane %v1506, 4
      %v1513 = vshrl.u32 %v1496, 16
      %v1515 = vrot.slane %v1513, 7
      %v1516 = vshll.u32 %v1496, 16
      %v1518 = vor.u32 %v1515, %v1516
      %v1519 = vsel %vm651, %v1511, %v1518
      %v1520 = vrot.slane %v1515, 4
      %v1522 = vshrl.u32 %v1497, 16
      %v1524 = vrot.slane %v1522, 7
      %v1525 = vshll.u32 %v1497, 16
      %v1527 = vor.u32 %v1524, %v1525
      %v1528 = vsel %vm651, %v1520, %v1527
      %1532 = vst.msk [vmem:[#allocation3 + $0x8] sm:$0xf] %vm417, %v1510
      %1533 = vst.msk [vmem:[#allocation3 + $0x1c] sm:$0xf] %vm417, %v1519
      %1534 = vst.msk [vmem:[#allocation3 + $0x30] sm:$0xf] %vm417, %v1528
      %v1535 = vld [vmem:[#allocation2 + $0x4] sm:$0xf]
      %v1536 = vld [vmem:[#allocation2 + $0x8] sm:$0xf]
      %v1537 = vld [vmem:[#allocation2 + $0xc] sm:$0xf]
      %1541 = vrot.lane.b32.xlu0 %v1535, 64
      %v1542 = vpop.permute.xlu0 %1541
      %1543 = vrot.lane.b32.xlu0 %v1536, 64
      %v1544 = vpop.permute.xlu0 %1543
      %1545 = vrot.lane.b32.xlu0 %v1537, 64
      %v1546 = vpop.permute.xlu0 %1545
      %1550 = vst.msk [vmem:[#allocation3 + $0x8] sm:$0xf] %vm582, %v1542
      %1551 = vst.msk [vmem:[#allocation3 + $0x1c] sm:$0xf] %vm582, %v1544
      %1552 = vst.msk [vmem:[#allocation3 + $0x30] sm:$0xf] %vm582, %v1546
      %v1553 = vld [vmem:[#allocation2 + $0x4] sm:$0xc]
      %v1554 = vld [vmem:[#allocation2 + $0x8] sm:$0xf]
      %v1555 = vld [vmem:[#allocation2 + $0xc] sm:$0xf]
      %v1556 = vld [vmem:[#allocation2 + $0x10] sm:$0x3]
      %v1561 = vrot.slane %v1553, 6
      %v1562 = vrot.slane %v1561, 4
      %v1563 = vrot.slane %v1554, 6
      %v1564 = vsel %vm717, %v1562, %v1563
      %v1565 = vrot.slane %v1563, 4
      %v1566 = vrot.slane %v1555, 6
      %v1567 = vsel %vm717, %v1565, %v1566
      %v1568 = vrot.slane %v1566, 4
      %v1569 = vrot.slane %v1556, 6
      %v1570 = vsel %vm717, %v1568, %v1569
      %1574 = vst.msk [vmem:[#allocation3 + $0xc] sm:$0xf] %vm417, %v1564
      %1575 = vst.msk [vmem:[#allocation3 + $0x20] sm:$0xf] %vm417, %v1567
      %1576 = vst.msk [vmem:[#allocation3 + $0x34] sm:$0xf] %vm417, %v1570
      %v1577 = vld [vmem:[#allocation2 + $0x4] sm:$0xc]
      %v1578 = vld [vmem:[#allocation2 + $0x8] sm:$0xf]
      %v1579 = vld [vmem:[#allocation2 + $0xc] sm:$0xf]
      %v1580 = vld [vmem:[#allocation2 + $0x10] sm:$0x7]
      %v1582 = vshrl.u32 %v1577, 16
      %v1584 = vrot.slane %v1582, 6
      %v1585 = vshll.u32 %v1577, 16
      %v1587 = vrot.slane %v1585, 7
      %v1588 = vor.u32 %v1584, %v1587
      %v1589 = vrot.slane %v1588, 4
      %v1591 = vshrl.u32 %v1578, 16
      %v1593 = vrot.slane %v1591, 6
      %v1594 = vshll.u32 %v1578, 16
      %v1596 = vrot.slane %v1594, 7
      %v1597 = vor.u32 %v1593, %v1596
      %v1598 = vsel %vm739, %v1589, %v1597
      %v1599 = vrot.slane %v1597, 4
      %v1601 = vshrl.u32 %v1579, 16
      %v1603 = vrot.slane %v1601, 6
      %v1604 = vshll.u32 %v1579, 16
      %v1606 = vrot.slane %v1604, 7
      %v1607 = vor.u32 %v1603, %v1606
      %v1608 = vsel %vm739, %v1599, %v1607
      %v1609 = vrot.slane %v1607, 4
      %v1611 = vshrl.u32 %v1580, 16
      %v1613 = vrot.slane %v1611, 6
      %v1614 = vshll.u32 %v1580, 16
      %v1616 = vrot.slane %v1614, 7
      %v1617 = vor.u32 %v1613, %v1616
      %v1618 = vsel %vm739, %v1609, %v1617
      %1619 = vrot.lane.b32.xlu0 %v1598, 64
      %v1620 = vpop.permute.xlu0 %1619
      %1621 = vrot.lane.b32.xlu0 %v1608, 64
      %v1622 = vpop.permute.xlu0 %1621
      %1623 = vrot.lane.b32.xlu0 %v1618, 64
      %v1624 = vpop.permute.xlu0 %1623
      %1628 = vst.msk [vmem:[#allocation3 + $0xc] sm:$0xf] %vm582, %v1620
      %1629 = vst.msk [vmem:[#allocation3 + $0x20] sm:$0xf] %vm582, %v1622
      %1630 = vst.msk [vmem:[#allocation3 + $0x34] sm:$0xf] %vm582, %v1624
      %v1631 = vld [vmem:[#allocation2 + $0x4] sm:$0x8]
      %v1632 = vld [vmem:[#allocation2 + $0x8] sm:$0xf]
      %v1633 = vld [vmem:[#allocation2 + $0xc] sm:$0xf]
      %v1634 = vld [vmem:[#allocation2 + $0x10] sm:$0x7]
      %v1639 = vrot.slane %v1631, 7
      %v1640 = vrot.slane %v1639, 4
      %v1641 = vrot.slane %v1632, 7
      %v1642 = vsel %vm623, %v1640, %v1641
      %v1643 = vrot.slane %v1641, 4
      %v1644 = vrot.slane %v1633, 7
      %v1645 = vsel %vm623, %v1643, %v1644
      %v1646 = vrot.slane %v1644, 4
      %v1647 = vrot.slane %v1634, 7
      %v1648 = vsel %vm623, %v1646, %v1647
      %1652 = vst.msk [vmem:[#allocation3 + $0x10] sm:$0xf] %vm417, %v1642
      %1653 = vst.msk [vmem:[#allocation3 + $0x24] sm:$0xf] %vm417, %v1645
      %1654 = vst.msk [vmem:[#allocation3 + $0x38] sm:$0xf] %vm417, %v1648
      %v1655 = vld [vmem:[#allocation3] sm:$0xff]
      %v1656 = vld [vmem:[#allocation3 + $0x8] sm:$0xff]
      %v1657 = vld [vmem:[#allocation3 + $0x10] sm:$0xf]
      %v1658 = vld [vmem:[#allocation3 + $0x14] sm:$0xff]
      %v1659 = vld [vmem:[#allocation3 + $0x1c] sm:$0xff]
      %v1660 = vld [vmem:[#allocation3 + $0x24] sm:$0xf]
      %v1661 = vld [vmem:[#allocation3 + $0x28] sm:$0xff]
      %v1662 = vld [vmem:[#allocation3 + $0x30] sm:$0xff]
      %v1663 = vld [vmem:[#allocation3 + $0x38] sm:$0xf]
      %s1664 = scalar_lea.vmem %s4, 288
      %v1665 = vld [vmem:[%s1664] sm:$0xf]
      %v1666 = vld [vmem:[%s1664 + $0x4] sm:$0xf]
      %v1667 = vld [vmem:[%s1664 + $0x8] sm:$0xf]
      %v1668 = vld [vmem:[%s1664 + $0xc] sm:$0xf]
      %v1669 = vld [vmem:[%s1664 + $0x10] sm:$0xf]
      %v1670 = vld [vmem:[%s1664 + $0x14] sm:$0xf]
      %v1671 = vld [vmem:[%s1664 + $0x18] sm:$0xf]
      %v1672 = vld [vmem:[%s1664 + $0x1c] sm:$0xf]
      %v1673 = vld [vmem:[%s1664 + $0x20] sm:$0xf]
      %v1674 = vld [vmem:[%s1664 + $0x24] sm:$0xf]
      %v1675 = vld [vmem:[%s1664 + $0x28] sm:$0xf]
      %v1676 = vld [vmem:[%s1664 + $0x2c] sm:$0xf]
      %v1677 = vld [vmem:[%s1664 + $0x30] sm:$0xf]
      %v1678 = vld [vmem:[%s1664 + $0x34] sm:$0xf]
      %v1679 = vld [vmem:[%s1664 + $0x38] sm:$0xf]
      %v1680 = vld [vmem:[%s1664 + $0x3c] sm:$0xf]
      %v1681 = vld [vmem:[%s1664 + $0x40] sm:$0xf]
      %v1682 = vld [vmem:[%s1664 + $0x44] sm:$0xf]
      %v1683 = vld [vmem:[%s1664 + $0x48] sm:$0xf]
      %v1684 = vld [vmem:[%s1664 + $0x4c] sm:$0xf]
      %v1685 = vld [vmem:[%s1664 + $0x50] sm:$0xf]
      %v1686 = vld [vmem:[%s1664 + $0x54] sm:$0xf]
      %v1687 = vld [vmem:[%s1664 + $0x58] sm:$0xf]
      %v1688 = vld [vmem:[%s1664 + $0x5c] sm:$0xf]
      %v1689 = vld [vmem:[%s1664 + $0x60] sm:$0xf]
      %v1690 = vld [vmem:[%s1664 + $0x64] sm:$0xf]
      %v1691 = vld [vmem:[%s1664 + $0x68] sm:$0xf]
      %v1692 = vld [vmem:[%s1664 + $0x6c] sm:$0xf]
      %v1693 = vld [vmem:[%s1664 + $0x70] sm:$0xf]
      %v1694 = vld [vmem:[%s1664 + $0x74] sm:$0xf]
      %v1695 = vld [vmem:[%s1664 + $0x78] sm:$0xf]
      %v1696 = vld [vmem:[%s1664 + $0x7c] sm:$0xf]
      %v1697 = vld [vmem:[%s1664 + $0x80] sm:$0xf]
      %v1698 = vld [vmem:[%s1664 + $0x84] sm:$0xf]
      %v1699 = vld [vmem:[%s1664 + $0x88] sm:$0xf]
      %v1700 = vld [vmem:[%s1664 + $0x8c] sm:$0xf]
      %v1701 = vld [vmem:[%s1664 + $0x90] sm:$0xf]
      %v1702 = vld [vmem:[%s1664 + $0x94] sm:$0xf]
      %v1703 = vld [vmem:[%s1664 + $0x98] sm:$0xf]
      %v1704 = vld [vmem:[%s1664 + $0x9c] sm:$0xf]
      %v1705 = vld [vmem:[%s1664 + $0xa0] sm:$0xf]
      %v1706 = vld [vmem:[%s1664 + $0xa4] sm:$0xf]
      %v1707 = vld [vmem:[%s1664 + $0xa8] sm:$0xf]
      %v1708 = vld [vmem:[%s1664 + $0xac] sm:$0xf]
      %v1709 = vld [vmem:[%s1664 + $0xb0] sm:$0xf]
      %v1710 = vld [vmem:[%s1664 + $0xb4] sm:$0xf]
      %v1711 = vld [vmem:[%s1664 + $0xb8] sm:$0xf]
      %v1712 = vld [vmem:[%s1664 + $0xbc] sm:$0xf]
      %v1713 = vld [vmem:[%s1664 + $0xc0] sm:$0xf]
      %v1714 = vld [vmem:[%s1664 + $0xc4] sm:$0xf]
      %v1715 = vld [vmem:[%s1664 + $0xc8] sm:$0xf]
      %v1716 = vld [vmem:[%s1664 + $0xcc] sm:$0xf]
      %v1717 = vld [vmem:[%s1664 + $0xd0] sm:$0xf]
      %v1718 = vld [vmem:[%s1664 + $0xd4] sm:$0xf]
      %v1719 = vld [vmem:[%s1664 + $0xd8] sm:$0xf]
      %v1720 = vld [vmem:[%s1664 + $0xdc] sm:$0xf]
      %v1721 = vld [vmem:[%s1664 + $0xe0] sm:$0xf]
      %v1722 = vld [vmem:[%s1664 + $0xe4] sm:$0xf]
      %v1723 = vld [vmem:[%s1664 + $0xe8] sm:$0xf]
      %v1724 = vld [vmem:[%s1664 + $0xec] sm:$0xf]
      %v1725 = vld [vmem:[%s1664 + $0xf0] sm:$0xf]
      %v1726 = vld [vmem:[%s1664 + $0xf4] sm:$0xf]
      %v1727 = vld [vmem:[%s1664 + $0xf8] sm:$0xf]
      %v1728 = vld [vmem:[%s1664 + $0xfc] sm:$0xf]
      %v1729 = vld [vmem:[%s1664 + $0x100] sm:$0xf]
      %v1730 = vld [vmem:[%s1664 + $0x104] sm:$0xf]
      %v1731 = vld [vmem:[%s1664 + $0x108] sm:$0xf]
      %v1732 = vld [vmem:[%s1664 + $0x10c] sm:$0xf]
      %v1733 = vld [vmem:[%s1664 + $0x110] sm:$0xf]
      %v1734 = vld [vmem:[%s1664 + $0x114] sm:$0xf]
      %v1735 = vld [vmem:[%s1664 + $0x118] sm:$0xf]
      %v1736 = vld [vmem:[%s1664 + $0x11c] sm:$0xf]
      %s1737 = scalar_lea.vmem %s5, 1
      %v1738 = vld [vmem:[%s1737] sm:$0x1]
      %v1740 = vlaneseq
      %v1741 = vshrl.u32 %v1740, 7
      %v1742 = vsub.s32 0, %v1741
      %v1743 = vrot.slane %v1738, %v1742
      %v1754 = vunpack.c.l.b16 %v1655
      %v1755 = vunpack.c.h.b16 %v1655
      %v1756 = vunpack.c.l.b16 %v1656
      %v1757 = vunpack.c.h.b16 %v1656
      %v1758 = vunpack.c.l.b16 %v1657
      %v1759 = vunpack.c.l.b16 %v1658
      %v1760 = vunpack.c.h.b16 %v1658
      %v1761 = vunpack.c.l.b16 %v1659
      %v1762 = vunpack.c.h.b16 %v1659
      %v1763 = vunpack.c.l.b16 %v1660
      %v1764 = vunpack.c.l.b16 %v1661
      %v1765 = vunpack.c.h.b16 %v1661
      %v1766 = vunpack.c.l.b16 %v1662
      %v1767 = vunpack.c.h.b16 %v1662
      %v1768 = vunpack.c.l.b16 %v1663
      %v1769 = vpack.c.b16 %v1759, %v1754
      %v1770 = vpack.c.b16 %v1760, %v1755
      %v1771 = vpack.c.b16 %v1761, %v1756
      %v1772 = vpack.c.b16 %v1762, %v1757
      %v1773 = vpack.c.b16 %v1763, %v1758
      %v1774 = vpack.c.b16 %v1764, %v1764
      %v1775 = vpack.c.b16 %v1765, %v1765
      %v1776 = vpack.c.b16 %v1766, %v1766
      %v1777 = vpack.c.b16 %v1767, %v1767
      %v1778 = vpack.c.b16 %v1768, %v1768
      %v1859 = vunpack.c.l.b16 %v1665
      %v1860 = vunpack.c.l.b16 %v1666
      %v1861 = vunpack.c.l.b16 %v1667
      %v1862 = vunpack.c.l.b16 %v1668
      %v1863 = vunpack.c.l.b16 %v1669
      %v1864 = vunpack.c.l.b16 %v1670
      %v1865 = vunpack.c.l.b16 %v1671
      %v1866 = vunpack.c.l.b16 %v1672
      %v1867 = vunpack.c.l.b16 %v1673
      %v1868 = vunpack.c.l.b16 %v1674
      %v1869 = vunpack.c.l.b16 %v1675
      %v1870 = vunpack.c.l.b16 %v1676
      %v1871 = vunpack.c.l.b16 %v1677
      %v1872 = vunpack.c.l.b16 %v1678
      %v1873 = vunpack.c.l.b16 %v1679
      %v1874 = vunpack.c.l.b16 %v1680
      %v1875 = vunpack.c.l.b16 %v1681
      %v1876 = vunpack.c.l.b16 %v1682
      %v1877 = vunpack.c.l.b16 %v1683
      %v1878 = vunpack.c.l.b16 %v1684
      %v1879 = vunpack.c.l.b16 %v1685
      %v1880 = vunpack.c.l.b16 %v1686
      %v1881 = vunpack.c.l.b16 %v1687
      %v1882 = vunpack.c.l.b16 %v1688
      %v1883 = vunpack.c.l.b16 %v1689
      %v1884 = vunpack.c.l.b16 %v1690
      %v1885 = vunpack.c.l.b16 %v1691
      %v1886 = vunpack.c.l.b16 %v1692
      %v1887 = vunpack.c.l.b16 %v1693
      %v1888 = vunpack.c.l.b16 %v1694
      %v1889 = vunpack.c.l.b16 %v1695
      %v1890 = vunpack.c.l.b16 %v1696
      %v1891 = vunpack.c.l.b16 %v1697
      %v1892 = vunpack.c.l.b16 %v1698
      %v1893 = vunpack.c.l.b16 %v1699
      %v1894 = vunpack.c.l.b16 %v1700
      %v1895 = vunpack.c.l.b16 %v1701
      %v1896 = vunpack.c.l.b16 %v1702
      %v1897 = vunpack.c.l.b16 %v1703
      %v1898 = vunpack.c.l.b16 %v1704
      %v1899 = vunpack.c.l.b16 %v1705
      %v1900 = vunpack.c.l.b16 %v1706
      %v1901 = vunpack.c.l.b16 %v1707
      %v1902 = vunpack.c.l.b16 %v1708
      %v1903 = vunpack.c.l.b16 %v1709
      %v1904 = vunpack.c.l.b16 %v1710
      %v1905 = vunpack.c.l.b16 %v1711
      %v1906 = vunpack.c.l.b16 %v1712
      %v1907 = vunpack.c.l.b16 %v1713
      %v1908 = vunpack.c.l.b16 %v1714
      %v1909 = vunpack.c.l.b16 %v1715
      %v1910 = vunpack.c.l.b16 %v1716
      %v1911 = vunpack.c.l.b16 %v1717
      %v1912 = vunpack.c.l.b16 %v1718
      %v1913 = vunpack.c.l.b16 %v1719
      %v1914 = vunpack.c.l.b16 %v1720
      %v1915 = vunpack.c.l.b16 %v1721
      %v1916 = vunpack.c.l.b16 %v1722
      %v1917 = vunpack.c.l.b16 %v1723
      %v1918 = vunpack.c.l.b16 %v1724
      %v1919 = vunpack.c.l.b16 %v1725
      %v1920 = vunpack.c.l.b16 %v1726
      %v1921 = vunpack.c.l.b16 %v1727
      %v1922 = vunpack.c.l.b16 %v1728
      %v1923 = vunpack.c.l.b16 %v1729
      %v1924 = vunpack.c.l.b16 %v1730
      %v1925 = vunpack.c.l.b16 %v1731
      %v1926 = vunpack.c.l.b16 %v1732
      %v1927 = vunpack.c.l.b16 %v1733
      %v1928 = vunpack.c.l.b16 %v1734
      %v1929 = vunpack.c.l.b16 %v1735
      %v1930 = vunpack.c.l.b16 %v1736
      %v1931 = vpack.c.b16 %v1860, %v1859
      %v1932 = vpack.c.b16 %v1862, %v1861
      %v1933 = vpack.c.b16 %v1864, %v1863
      %v1934 = vpack.c.b16 %v1866, %v1865
      %v1935 = vpack.c.b16 %v1868, %v1867
      %v1936 = vpack.c.b16 %v1870, %v1869
      %v1937 = vpack.c.b16 %v1872, %v1871
      %v1938 = vpack.c.b16 %v1874, %v1873
      %v1939 = vpack.c.b16 %v1876, %v1875
      %v1940 = vpack.c.b16 %v1878, %v1877
      %v1941 = vpack.c.b16 %v1880, %v1879
      %v1942 = vpack.c.b16 %v1882, %v1881
      %v1943 = vpack.c.b16 %v1884, %v1883
      %v1944 = vpack.c.b16 %v1886, %v1885
      %v1945 = vpack.c.b16 %v1888, %v1887
      %v1946 = vpack.c.b16 %v1890, %v1889
      %v1947 = vpack.c.b16 %v1892, %v1891
      %v1948 = vpack.c.b16 %v1894, %v1893
      %v1949 = vpack.c.b16 %v1896, %v1895
      %v1950 = vpack.c.b16 %v1898, %v1897
      %v1951 = vpack.c.b16 %v1900, %v1899
      %v1952 = vpack.c.b16 %v1902, %v1901
      %v1953 = vpack.c.b16 %v1904, %v1903
      %v1954 = vpack.c.b16 %v1906, %v1905
      %v1955 = vpack.c.b16 %v1908, %v1907
      %v1956 = vpack.c.b16 %v1910, %v1909
      %v1957 = vpack.c.b16 %v1912, %v1911
      %v1958 = vpack.c.b16 %v1914, %v1913
      %v1959 = vpack.c.b16 %v1916, %v1915
      %v1960 = vpack.c.b16 %v1918, %v1917
      %v1961 = vpack.c.b16 %v1920, %v1919
      %v1962 = vpack.c.b16 %v1922, %v1921
      %v1963 = vpack.c.b16 %v1924, %v1923
      %v1964 = vpack.c.b16 %v1926, %v1925
      %v1965 = vpack.c.b16 %v1928, %v1927
      %v1966 = vpack.c.b16 %v1930, %v1929
      %v2004 = vsel %vm424, %v1773, 0
      %v2007 = vsel %vm424, %v1778, 0
      %2009 = vmatprep.subr.bf16.mxu0 0
      %2010 = vmatpush1.bf16.msra.mxu0 %v1931
      %2011 = vmatprep.subr.bf16.mxu0 0
      %2012 = vmatpush1.bf16.msra.mxu0 %v1932
      %2013 = vmatprep.subr.bf16.mxu0 0
      %2014 = vmatpush1.bf16.msra.mxu0 %v1933
      %2015 = vmatprep.subr.bf16.mxu0 0
      %2016 = vmatpush1.bf16.msra.mxu0 %v1934
      %2017 = vmatprep.subr.bf16.mxu0 0
      %2018 = vmatpush1.bf16.msra.mxu0 %v1935
      %2019 = vmatprep.subr.bf16.mxu0 0
      %2020 = vmatpush1.bf16.msra.mxu0 %v1936
      %2021 = vmatprep.subr.bf16.mxu0 0
      %2022 = vmatpush1.bf16.msra.mxu0 %v1937
      %2023 = vmatprep.subr.bf16.mxu0 0
      %2024 = vmatpush1.bf16.msra.mxu0 %v1938
      %2025 = vmatprep.subr.bf16.mxu0 0
      %2026 = vmatpush1.bf16.msra.mxu0 %v1939
      %2027 = vmatprep.subr.bf16.mxu0 0
      %2028 = vmatpush1.bf16.msra.mxu0 %v1940
      %2029 = vmatprep.subr.bf16.mxu0 0
      %2030 = vmatpush1.bf16.msra.mxu0 %v1941
      %2031 = vmatprep.subr.bf16.mxu0 0
      %2032 = vmatpush1.bf16.msra.mxu0 %v1942
      %2033 = vmatprep.subr.bf16.mxu0 0
      %2034 = vmatpush1.bf16.msra.mxu0 %v1943
      %2035 = vmatprep.subr.bf16.mxu0 0
      %2036 = vmatpush1.bf16.msra.mxu0 %v1944
      %2037 = vmatprep.subr.bf16.mxu0 0
      %2038 = vmatpush1.bf16.msra.mxu0 %v1945
      %2039 = vmatprep.subr.bf16.mxu0 0
      %2040 = vmatpush1.bf16.msra.mxu0 %v1946
      %2041 = vmatprep.mubr.bf16.mxu0 %v1770
      %2042 = vmatmul.mubr.bf16.gmra.mrb[0].mxu0 %v1769
      %v2043 = vpop.f32.mrb[0].mxu0
      %v2044 = vadd.f32 %v1743, %v2043
      %v2045 = vpop.f32.mrb[0].mxu0
      %v2046 = vpop.f32.mrb[0].mxu0
      %v2047 = vadd.f32 %v1743, %v2046
      %v2048 = vpop.f32.mrb[0].mxu0
      %2049 = vmatprep.mubr.bf16.mxu0 %v1775
      %2050 = vmatmul.mubr.bf16.gmra.mrb[0].mxu0 %v1774
      %v2051 = vpop.f32.mrb[0].mxu0
      %v2052 = vadd.f32 %v1743, %v2051
      %v2053 = vpop.f32.mrb[0].mxu0
      %v2054 = vpop.f32.mrb[0].mxu0
      %v2055 = vpop.f32.mrb[0].mxu0
      %2056 = vdwg.mxu0
      %2057 = vmatprep.subr.bf16.mxu0 0
      %2058 = vmatpush1.bf16.msra.mxu0 %v1947
      %2059 = vmatprep.subr.bf16.mxu0 0
      %2060 = vmatpush1.bf16.msra.mxu0 %v1948
      %2061 = vmatprep.subr.bf16.mxu0 0
      %2062 = vmatpush1.bf16.msra.mxu0 %v1949
      %2063 = vmatprep.subr.bf16.mxu0 0
      %2064 = vmatpush1.bf16.msra.mxu0 %v1950
      %2065 = vmatprep.subr.bf16.mxu0 0
      %2066 = vmatpush1.bf16.msra.mxu0 %v1951
      %2067 = vmatprep.subr.bf16.mxu0 0
      %2068 = vmatpush1.bf16.msra.mxu0 %v1952
      %2069 = vmatprep.subr.bf16.mxu0 0
      %2070 = vmatpush1.bf16.msra.mxu0 %v1953
      %2071 = vmatprep.subr.bf16.mxu0 0
      %2072 = vmatpush1.bf16.msra.mxu0 %v1954
      %2073 = vmatprep.subr.bf16.mxu0 0
      %2074 = vmatpush1.bf16.msra.mxu0 %v1955
      %2075 = vmatprep.subr.bf16.mxu0 0
      %2076 = vmatpush1.bf16.msra.mxu0 %v1956
      %2077 = vmatprep.subr.bf16.mxu0 0
      %2078 = vmatpush1.bf16.msra.mxu0 %v1957
      %2079 = vmatprep.subr.bf16.mxu0 0
      %2080 = vmatpush1.bf16.msra.mxu0 %v1958
      %2081 = vmatprep.subr.bf16.mxu0 0
      %2082 = vmatpush1.bf16.msra.mxu0 %v1959
      %2083 = vmatprep.subr.bf16.mxu0 0
      %2084 = vmatpush1.bf16.msra.mxu0 %v1960
      %2085 = vmatprep.subr.bf16.mxu0 0
      %2086 = vmatpush1.bf16.msra.mxu0 %v1961
      %2087 = vmatprep.subr.bf16.mxu0 0
      %2088 = vmatpush1.bf16.msra.mxu0 %v1962
      %2089 = vmatprep.mubr.bf16.mxu0 %v1772
      %2090 = vmatmul.mubr.bf16.gmra.mrb[0].mxu0 %v1771
      %v2091 = vpop.f32.mrb[0].mxu0
      %v2092 = vadd.f32 %v2044, %v2091
      %v2093 = vpop.f32.mrb[0].mxu0
      %v2094 = vpop.f32.mrb[0].mxu0
      %v2095 = vadd.f32 %v2047, %v2094
      %v2096 = vpop.f32.mrb[0].mxu0
      %2097 = vmatprep.mubr.bf16.mxu0 %v1777
      %2098 = vmatmul.mubr.bf16.gmra.mrb[0].mxu0 %v1776
      %v2099 = vpop.f32.mrb[0].mxu0
      %v2100 = vadd.f32 %v2052, %v2099
      %v2101 = vpop.f32.mrb[0].mxu0
      %v2102 = vpop.f32.mrb[0].mxu0
      %v2103 = vpop.f32.mrb[0].mxu0
      %2104 = vdwg.mxu0
      %2105 = vmatprep.subr.bf16.mxu0 0
      %2106 = vmatpush1.bf16.msra.mxu0 %v1963
      %2107 = vmatprep.subr.bf16.mxu0 0
      %2108 = vmatpush1.bf16.msra.mxu0 %v1964
      %2109 = vmatprep.subr.bf16.mxu0 0
      %2110 = vmatpush1.bf16.msra.mxu0 %v1965
      %2111 = vmatprep.subr.bf16.mxu0 0
      %2112 = vmatpush1.bf16.msra.mxu0 %v1966
      %2113 = vmatprep.subr.bf16.mxu0 0
      %2114 = vmatpush1.bf16.msra.mxu0 0
      %2115 = vmatprep.subr.bf16.mxu0 0
      %2116 = vmatpush1.bf16.msra.mxu0 0
      %2117 = vmatprep.subr.bf16.mxu0 0
      %2118 = vmatpush1.bf16.msra.mxu0 0
      %2119 = vmatprep.subr.bf16.mxu0 0
      %2120 = vmatpush1.bf16.msra.mxu0 0
      %2121 = vmatprep.subr.bf16.mxu0 0
      %2122 = vmatpush1.bf16.msra.mxu0 0
      %2123 = vmatprep.subr.bf16.mxu0 0
      %2124 = vmatpush1.bf16.msra.mxu0 0
      %2125 = vmatprep.subr.bf16.mxu0 0
      %2126 = vmatpush1.bf16.msra.mxu0 0
      %2127 = vmatprep.subr.bf16.mxu0 0
      %2128 = vmatpush1.bf16.msra.mxu0 0
      %2129 = vmatprep.subr.bf16.mxu0 0
      %2130 = vmatpush1.bf16.msra.mxu0 0
      %2131 = vmatprep.subr.bf16.mxu0 0
      %2132 = vmatpush1.bf16.msra.mxu0 0
      %2133 = vmatprep.subr.bf16.mxu0 0
      %2134 = vmatpush1.bf16.msra.mxu0 0
      %2135 = vmatprep.subr.bf16.mxu0 0
      %2136 = vmatpush1.bf16.msra.mxu0 0
      %2137 = vmatprep.mubr.bf16.mxu0 0
      %2138 = vmatmul.mubr.bf16.gmra.mrb[0].mxu0 %v2004
      %v2139 = vpop.f32.mrb[0].mxu0
      %v2140 = vadd.f32 %v2092, %v2139
      %v2141 = vpop.f32.mrb[0].mxu0
      %v2142 = vpop.f32.mrb[0].mxu0
      %v2143 = vadd.f32 %v2095, %v2142
      %v2144 = vpop.f32.mrb[0].mxu0
      %2145 = vmatprep.mubr.bf16.mxu0 0
      %2146 = vmatmul.mubr.bf16.gmra.mrb[0].mxu0 %v2007
      %v2147 = vpop.f32.mrb[0].mxu0
      %v2148 = vadd.f32 %v2100, %v2147
      %v2149 = vpop.f32.mrb[0].mxu0
      %v2150 = vpop.f32.mrb[0].mxu0
      %v2151 = vpop.f32.mrb[0].mxu0
      %2152 = vdwg.mxu0
      %v2153 = vld [vmem:[#allocation4] sm:$0xff]
      %v2154 = vld [vmem:[#allocation4 + $0x8] sm:$0xff]
      %v2155 = vld [vmem:[#allocation4 + $0x10] sm:$0xff]
      %v2156 = vadd.f32 %v2140, %v2153
      %v2157 = vadd.f32 %v2143, %v2154
      %v2158 = vadd.f32 %v2148, %v2155
      %v2159 = vmax.f32 %v2156, 0.0
      %v2160 = vmax.f32 %v2157, 0.0
      %v2161 = vmax.f32 %v2158, 0.0
      %v2162 = vmul.f32 %v2159, %v1316
      %v2163 = vmul.f32 %v2160, %v1321
      %v2164 = vmul.f32 %v2161, %v1326
      %v2165 = vpack.c.bf16 %v2163, %v2162
      %v2166 = vpack.c.bf16 %v2164, %v2164
      %v2169 = vunpack.c.l.b16 %v2165
      %v2170 = vunpack.c.h.b16 %v2165
      %v2171 = vunpack.c.l.b16 %v2166
      %v2172 = vpack.c.b16 %v2169, %v2169
      %v2173 = vpack.c.b16 %v2170, %v2170
      %v2174 = vpack.c.b16 %v2171, %v2171
      %v2176 = vshll.u32 %v2172, 16
      %v2178 = vrot.slane %v2176, 5
      %v2179 = vshrl.u32 %v2172, 16
      %v2181 = vrot.slane %v2179, 4
      %v2182 = vor.u32 %v2181, %v2178
      %v2183 = vrot.slane %v2182, 4
      %v2185 = vshll.u32 %v2173, 16
      %v2187 = vrot.slane %v2185, 5
      %v2188 = vsel %vm538, %v2183, %v2187
      %v2189 = vshrl.u32 %v2173, 16
      %v2191 = vrot.slane %v2189, 4
      %v2192 = vor.u32 %v2191, %v2187
      %v2193 = vrot.slane %v2192, 4
      %v2195 = vshll.u32 %v2174, 16
      %v2197 = vrot.slane %v2195, 5
      %v2198 = vsel %vm538, %v2193, %v2197
      %v2199 = vshrl.u32 %v2174, 16
      %v2201 = vrot.slane %v2199, 4
      %v2202 = vor.u32 %v2201, %v2197
      %v2203 = vrot.slane %v2202, 4
      %v2208 = vld [vmem:[#allocation2] sm:$0x8]
      %v2209 = vsel %vm446, %v2178, %v2208
      %2210 = vst [vmem:[#allocation2] sm:$0x8] %v2209
      %2211 = vst.msk [vmem:[#allocation2 + $0x4] sm:$0xf] %vm417, %v2188
      %2212 = vst.msk [vmem:[#allocation2 + $0x8] sm:$0xf] %vm417, %v2198
      %v2213 = vld [vmem:[#allocation2 + $0xc] sm:$0xf]
      %v2214 = vsel %vm1380, %v2203, %v2213
      %2215 = vst [vmem:[#allocation2 + $0xc] sm:$0xf] %v2214
      %2216 = vst.msk [vmem:[#allocation4] sm:$0xff] %vm424, %v2162
      %2217 = vst.msk [vmem:[#allocation4 + $0x8] sm:$0xff] %vm424, %v2163
      %2218 = vst.msk [vmem:[#allocation4 + $0x10] sm:$0xff] %vm424, %v2164
      %v2219 = vld [vmem:[#allocation2] sm:$0xf]
      %v2220 = vld [vmem:[#allocation2 + $0x4] sm:$0xf]
      %v2221 = vld [vmem:[#allocation2 + $0x8] sm:$0xf]
      %2222 = vst.msk [vmem:[#allocation3] sm:$0xf] %vm417, %v2219
      %2223 = vst.msk [vmem:[#allocation3 + $0x14] sm:$0xf] %vm417, %v2220
      %2224 = vst.msk [vmem:[#allocation3 + $0x28] sm:$0xf] %vm417, %v2221
      %v2225 = vld [vmem:[#allocation2] sm:$0xf]
      %v2226 = vld [vmem:[#allocation2 + $0x4] sm:$0xf]
      %v2227 = vld [vmem:[#allocation2 + $0x8] sm:$0xf]
      %v2228 = vld [vmem:[#allocation2 + $0xc] sm:$0x1]
      %v2230 = vshrl.u32 %v2225, 16
      %v2232 = vrot.slane %v2230, 4
      %v2233 = vshll.u32 %v2225, 16
      %v2235 = vrot.slane %v2233, 5
      %v2236 = vor.u32 %v2232, %v2235
      %v2237 = vrot.slane %v2236, 4
      %v2239 = vshll.u32 %v2226, 16
      %v2241 = vrot.slane %v2239, 5
      %v2242 = vsel %vm538, %v2237, %v2241
      %v2243 = vshrl.u32 %v2226, 16
      %v2245 = vrot.slane %v2243, 4
      %v2246 = vor.u32 %v2245, %v2241
      %v2247 = vrot.slane %v2246, 4
      %v2249 = vshll.u32 %v2227, 16
      %v2251 = vrot.slane %v2249, 5
      %v2252 = vsel %vm538, %v2247, %v2251
      %v2253 = vshrl.u32 %v2227, 16
      %v2255 = vrot.slane %v2253, 4
      %v2256 = vor.u32 %v2255, %v2251
      %v2257 = vrot.slane %v2256, 4
      %v2259 = vshll.u32 %v2228, 16
      %v2261 = vrot.slane %v2259, 5
      %v2262 = vsel %vm538, %v2257, %v2261
      %2263 = vrot.lane.b32.xlu0 %v2242, 64
      %v2264 = vpop.permute.xlu0 %2263
      %2265 = vrot.lane.b32.xlu0 %v2252, 64
      %v2266 = vpop.permute.xlu0 %2265
      %2267 = vrot.lane.b32.xlu0 %v2262, 64
      %v2268 = vpop.permute.xlu0 %2267
      %2272 = vst.msk [vmem:[#allocation3] sm:$0xf] %vm582, %v2264
      %2273 = vst.msk [vmem:[#allocation3 + $0x14] sm:$0xf] %vm582, %v2266
      %2274 = vst.msk [vmem:[#allocation3 + $0x28] sm:$0xf] %vm582, %v2268
      %v2275 = vld [vmem:[#allocation2] sm:$0xe]
      %v2276 = vld [vmem:[#allocation2 + $0x4] sm:$0xf]
      %v2277 = vld [vmem:[#allocation2 + $0x8] sm:$0xf]
      %v2278 = vld [vmem:[#allocation2 + $0xc] sm:$0x1]
      %v2283 = vrot.slane %v2275, 5
      %v2284 = vrot.slane %v2283, 4
      %v2285 = vrot.slane %v2276, 5
      %v2286 = vsel %vm596, %v2284, %v2285
      %v2287 = vrot.slane %v2285, 4
      %v2288 = vrot.slane %v2277, 5
      %v2289 = vsel %vm596, %v2287, %v2288
      %v2290 = vrot.slane %v2288, 4
      %v2291 = vrot.slane %v2278, 5
      %v2292 = vsel %vm596, %v2290, %v2291
      %2296 = vst.msk [vmem:[#allocation3 + $0x4] sm:$0xf] %vm417, %v2286
      %2297 = vst.msk [vmem:[#allocation3 + $0x18] sm:$0xf] %vm417, %v2289
      %2298 = vst.msk [vmem:[#allocation3 + $0x2c] sm:$0xf] %vm417, %v2292
      %v2299 = vld [vmem:[#allocation2] sm:$0x8]
      %v2300 = vld [vmem:[#allocation2 + $0x4] sm:$0xf]
      %v2301 = vld [vmem:[#allocation2 + $0x8] sm:$0xf]
      %v2302 = vld [vmem:[#allocation2 + $0xc] sm:$0x7]
      %v2307 = vrot.slane %v2299, 7
      %v2308 = vrot.slane %v2307, 4
      %v2309 = vrot.slane %v2300, 7
      %v2310 = vsel %vm623, %v2308, %v2309
      %v2311 = vrot.slane %v2309, 4
      %v2312 = vrot.slane %v2301, 7
      %v2313 = vsel %vm623, %v2311, %v2312
      %v2314 = vrot.slane %v2312, 4
      %v2315 = vrot.slane %v2302, 7
      %v2316 = vsel %vm623, %v2314, %v2315
      %2317 = vrot.lane.b32.xlu0 %v2310, 64
      %v2318 = vpop.permute.xlu0 %2317
      %2319 = vrot.lane.b32.xlu0 %v2313, 64
      %v2320 = vpop.permute.xlu0 %2319
      %2321 = vrot.lane.b32.xlu0 %v2316, 64
      %v2322 = vpop.permute.xlu0 %2321
      %2326 = vst.msk [vmem:[#allocation3 + $0x4] sm:$0xf] %vm582, %v2318
      %2327 = vst.msk [vmem:[#allocation3 + $0x18] sm:$0xf] %vm582, %v2320
      %2328 = vst.msk [vmem:[#allocation3 + $0x2c] sm:$0xf] %vm582, %v2322
      %v2329 = vld [vmem:[#allocation2] sm:$0x8]
      %v2330 = vld [vmem:[#allocation2 + $0x4] sm:$0xf]
      %v2331 = vld [vmem:[#allocation2 + $0x8] sm:$0xf]
      %v2332 = vld [vmem:[#allocation2 + $0xc] sm:$0xf]
      %v2334 = vshrl.u32 %v2329, 16
      %v2336 = vrot.slane %v2334, 7
      %v2337 = vrot.slane %v2336, 4
      %v2339 = vshrl.u32 %v2330, 16
      %v2341 = vrot.slane %v2339, 7
      %v2342 = vshll.u32 %v2330, 16
      %v2344 = vor.u32 %v2341, %v2342
      %v2345 = vsel %vm651, %v2337, %v2344
      %v2346 = vrot.slane %v2341, 4
      %v2348 = vshrl.u32 %v2331, 16
      %v2350 = vrot.slane %v2348, 7
      %v2351 = vshll.u32 %v2331, 16
      %v2353 = vor.u32 %v2350, %v2351
      %v2354 = vsel %vm651, %v2346, %v2353
      %v2355 = vrot.slane %v2350, 4
      %v2357 = vshrl.u32 %v2332, 16
      %v2359 = vrot.slane %v2357, 7
      %v2360 = vshll.u32 %v2332, 16
      %v2362 = vor.u32 %v2359, %v2360
      %v2363 = vsel %vm651, %v2355, %v2362
      %2367 = vst.msk [vmem:[#allocation3 + $0x8] sm:$0xf] %vm417, %v2345
      %2368 = vst.msk [vmem:[#allocation3 + $0x1c] sm:$0xf] %vm417, %v2354
      %2369 = vst.msk [vmem:[#allocation3 + $0x30] sm:$0xf] %vm417, %v2363
      %v2370 = vld [vmem:[#allocation2 + $0x4] sm:$0xf]
      %v2371 = vld [vmem:[#allocation2 + $0x8] sm:$0xf]
      %v2372 = vld [vmem:[#allocation2 + $0xc] sm:$0xf]
      %2376 = vrot.lane.b32.xlu0 %v2370, 64
      %v2377 = vpop.permute.xlu0 %2376
      %2378 = vrot.lane.b32.xlu0 %v2371, 64
      %v2379 = vpop.permute.xlu0 %2378
      %2380 = vrot.lane.b32.xlu0 %v2372, 64
      %v2381 = vpop.permute.xlu0 %2380
      %2385 = vst.msk [vmem:[#allocation3 + $0x8] sm:$0xf] %vm582, %v2377
      %2386 = vst.msk [vmem:[#allocation3 + $0x1c] sm:$0xf] %vm582, %v2379
      %2387 = vst.msk [vmem:[#allocation3 + $0x30] sm:$0xf] %vm582, %v2381
      %v2388 = vld [vmem:[#allocation2 + $0x4] sm:$0xc]
      %v2389 = vld [vmem:[#allocation2 + $0x8] sm:$0xf]
      %v2390 = vld [vmem:[#allocation2 + $0xc] sm:$0xf]
      %v2391 = vld [vmem:[#allocation2 + $0x10] sm:$0x3]
      %v2396 = vrot.slane %v2388, 6
      %v2397 = vrot.slane %v2396, 4
      %v2398 = vrot.slane %v2389, 6
      %v2399 = vsel %vm717, %v2397, %v2398
      %v2400 = vrot.slane %v2398, 4
      %v2401 = vrot.slane %v2390, 6
      %v2402 = vsel %vm717, %v2400, %v2401
      %v2403 = vrot.slane %v2401, 4
      %v2404 = vrot.slane %v2391, 6
      %v2405 = vsel %vm717, %v2403, %v2404
      %2409 = vst.msk [vmem:[#allocation3 + $0xc] sm:$0xf] %vm417, %v2399
      %2410 = vst.msk [vmem:[#allocation3 + $0x20] sm:$0xf] %vm417, %v2402
      %2411 = vst.msk [vmem:[#allocation3 + $0x34] sm:$0xf] %vm417, %v2405
      %v2412 = vld [vmem:[#allocation2 + $0x4] sm:$0xc]
      %v2413 = vld [vmem:[#allocation2 + $0x8] sm:$0xf]
      %v2414 = vld [vmem:[#allocation2 + $0xc] sm:$0xf]
      %v2415 = vld [vmem:[#allocation2 + $0x10] sm:$0x7]
      %v2417 = vshrl.u32 %v2412, 16
      %v2419 = vrot.slane %v2417, 6
      %v2420 = vshll.u32 %v2412, 16
      %v2422 = vrot.slane %v2420, 7
      %v2423 = vor.u32 %v2419, %v2422
      %v2424 = vrot.slane %v2423, 4
      %v2426 = vshrl.u32 %v2413, 16
      %v2428 = vrot.slane %v2426, 6
      %v2429 = vshll.u32 %v2413, 16
      %v2431 = vrot.slane %v2429, 7
      %v2432 = vor.u32 %v2428, %v2431
      %v2433 = vsel %vm739, %v2424, %v2432
      %v2434 = vrot.slane %v2432, 4
      %v2436 = vshrl.u32 %v2414, 16
      %v2438 = vrot.slane %v2436, 6
      %v2439 = vshll.u32 %v2414, 16
      %v2441 = vrot.slane %v2439, 7
      %v2442 = vor.u32 %v2438, %v2441
      %v2443 = vsel %vm739, %v2434, %v2442
      %v2444 = vrot.slane %v2442, 4
      %v2446 = vshrl.u32 %v2415, 16
      %v2448 = vrot.slane %v2446, 6
      %v2449 = vshll.u32 %v2415, 16
      %v2451 = vrot.slane %v2449, 7
      %v2452 = vor.u32 %v2448, %v2451
      %v2453 = vsel %vm739, %v2444, %v2452
      %2454 = vrot.lane.b32.xlu0 %v2433, 64
      %v2455 = vpop.permute.xlu0 %2454
      %2456 = vrot.lane.b32.xlu0 %v2443, 64
      %v2457 = vpop.permute.xlu0 %2456
      %2458 = vrot.lane.b32.xlu0 %v2453, 64
      %v2459 = vpop.permute.xlu0 %2458
      %2463 = vst.msk [vmem:[#allocation3 + $0xc] sm:$0xf] %vm582, %v2455
      %2464 = vst.msk [vmem:[#allocation3 + $0x20] sm:$0xf] %vm582, %v2457
      %2465 = vst.msk [vmem:[#allocation3 + $0x34] sm:$0xf] %vm582, %v2459
      %v2466 = vld [vmem:[#allocation2 + $0x4] sm:$0x8]
      %v2467 = vld [vmem:[#allocation2 + $0x8] sm:$0xf]
      %v2468 = vld [vmem:[#allocation2 + $0xc] sm:$0xf]
      %v2469 = vld [vmem:[#allocation2 + $0x10] sm:$0x7]
      %v2474 = vrot.slane %v2466, 7
      %v2475 = vrot.slane %v2474, 4
      %v2476 = vrot.slane %v2467, 7
      %v2477 = vsel %vm623, %v2475, %v2476
      %v2478 = vrot.slane %v2476, 4
      %v2479 = vrot.slane %v2468, 7
      %v2480 = vsel %vm623, %v2478, %v2479
      %v2481 = vrot.slane %v2479, 4
      %v2482 = vrot.slane %v2469, 7
      %v2483 = vsel %vm623, %v2481, %v2482
      %2487 = vst.msk [vmem:[#allocation3 + $0x10] sm:$0xf] %vm417, %v2477
      %2488 = vst.msk [vmem:[#allocation3 + $0x24] sm:$0xf] %vm417, %v2480
      %2489 = vst.msk [vmem:[#allocation3 + $0x38] sm:$0xf] %vm417, %v2483
      %v2490 = vld [vmem:[#allocation3] sm:$0xff]
      %v2491 = vld [vmem:[#allocation3 + $0x8] sm:$0xff]
      %v2492 = vld [vmem:[#allocation3 + $0x10] sm:$0xf]
      %v2493 = vld [vmem:[#allocation3 + $0x14] sm:$0xff]
      %v2494 = vld [vmem:[#allocation3 + $0x1c] sm:$0xff]
      %v2495 = vld [vmem:[#allocation3 + $0x24] sm:$0xf]
      %v2496 = vld [vmem:[#allocation3 + $0x28] sm:$0xff]
      %v2497 = vld [vmem:[#allocation3 + $0x30] sm:$0xff]
      %v2498 = vld [vmem:[#allocation3 + $0x38] sm:$0xf]
      %s2499 = scalar_lea.vmem %s4, 576
      %v2500 = vld [vmem:[%s2499] sm:$0xf]
      %v2501 = vld [vmem:[%s2499 + $0x4] sm:$0xf]
      %v2502 = vld [vmem:[%s2499 + $0x8] sm:$0xf]
      %v2503 = vld [vmem:[%s2499 + $0xc] sm:$0xf]
      %v2504 = vld [vmem:[%s2499 + $0x10] sm:$0xf]
      %v2505 = vld [vmem:[%s2499 + $0x14] sm:$0xf]
      %v2506 = vld [vmem:[%s2499 + $0x18] sm:$0xf]
      %v2507 = vld [vmem:[%s2499 + $0x1c] sm:$0xf]
      %v2508 = vld [vmem:[%s2499 + $0x20] sm:$0xf]
      %v2509 = vld [vmem:[%s2499 + $0x24] sm:$0xf]
      %v2510 = vld [vmem:[%s2499 + $0x28] sm:$0xf]
      %v2511 = vld [vmem:[%s2499 + $0x2c] sm:$0xf]
      %v2512 = vld [vmem:[%s2499 + $0x30] sm:$0xf]
      %v2513 = vld [vmem:[%s2499 + $0x34] sm:$0xf]
      %v2514 = vld [vmem:[%s2499 + $0x38] sm:$0xf]
      %v2515 = vld [vmem:[%s2499 + $0x3c] sm:$0xf]
      %v2516 = vld [vmem:[%s2499 + $0x40] sm:$0xf]
      %v2517 = vld [vmem:[%s2499 + $0x44] sm:$0xf]
      %v2518 = vld [vmem:[%s2499 + $0x48] sm:$0xf]
      %v2519 = vld [vmem:[%s2499 + $0x4c] sm:$0xf]
      %v2520 = vld [vmem:[%s2499 + $0x50] sm:$0xf]
      %v2521 = vld [vmem:[%s2499 + $0x54] sm:$0xf]
      %v2522 = vld [vmem:[%s2499 + $0x58] sm:$0xf]
      %v2523 = vld [vmem:[%s2499 + $0x5c] sm:$0xf]
      %v2524 = vld [vmem:[%s2499 + $0x60] sm:$0xf]
      %v2525 = vld [vmem:[%s2499 + $0x64] sm:$0xf]
      %v2526 = vld [vmem:[%s2499 + $0x68] sm:$0xf]
      %v2527 = vld [vmem:[%s2499 + $0x6c] sm:$0xf]
      %v2528 = vld [vmem:[%s2499 + $0x70] sm:$0xf]
      %v2529 = vld [vmem:[%s2499 + $0x74] sm:$0xf]
      %v2530 = vld [vmem:[%s2499 + $0x78] sm:$0xf]
      %v2531 = vld [vmem:[%s2499 + $0x7c] sm:$0xf]
      %v2532 = vld [vmem:[%s2499 + $0x80] sm:$0xf]
      %v2533 = vld [vmem:[%s2499 + $0x84] sm:$0xf]
      %v2534 = vld [vmem:[%s2499 + $0x88] sm:$0xf]
      %v2535 = vld [vmem:[%s2499 + $0x8c] sm:$0xf]
      %v2536 = vld [vmem:[%s2499 + $0x90] sm:$0xf]
      %v2537 = vld [vmem:[%s2499 + $0x94] sm:$0xf]
      %v2538 = vld [vmem:[%s2499 + $0x98] sm:$0xf]
      %v2539 = vld [vmem:[%s2499 + $0x9c] sm:$0xf]
      %v2540 = vld [vmem:[%s2499 + $0xa0] sm:$0xf]
      %v2541 = vld [vmem:[%s2499 + $0xa4] sm:$0xf]
      %v2542 = vld [vmem:[%s2499 + $0xa8] sm:$0xf]
      %v2543 = vld [vmem:[%s2499 + $0xac] sm:$0xf]
      %v2544 = vld [vmem:[%s2499 + $0xb0] sm:$0xf]
      %v2545 = vld [vmem:[%s2499 + $0xb4] sm:$0xf]
      %v2546 = vld [vmem:[%s2499 + $0xb8] sm:$0xf]
      %v2547 = vld [vmem:[%s2499 + $0xbc] sm:$0xf]
      %v2548 = vld [vmem:[%s2499 + $0xc0] sm:$0xf]
      %v2549 = vld [vmem:[%s2499 + $0xc4] sm:$0xf]
      %v2550 = vld [vmem:[%s2499 + $0xc8] sm:$0xf]
      %v2551 = vld [vmem:[%s2499 + $0xcc] sm:$0xf]
      %v2552 = vld [vmem:[%s2499 + $0xd0] sm:$0xf]
      %v2553 = vld [vmem:[%s2499 + $0xd4] sm:$0xf]
      %v2554 = vld [vmem:[%s2499 + $0xd8] sm:$0xf]
      %v2555 = vld [vmem:[%s2499 + $0xdc] sm:$0xf]
      %v2556 = vld [vmem:[%s2499 + $0xe0] sm:$0xf]
      %v2557 = vld [vmem:[%s2499 + $0xe4] sm:$0xf]
      %v2558 = vld [vmem:[%s2499 + $0xe8] sm:$0xf]
      %v2559 = vld [vmem:[%s2499 + $0xec] sm:$0xf]
      %v2560 = vld [vmem:[%s2499 + $0xf0] sm:$0xf]
      %v2561 = vld [vmem:[%s2499 + $0xf4] sm:$0xf]
      %v2562 = vld [vmem:[%s2499 + $0xf8] sm:$0xf]
      %v2563 = vld [vmem:[%s2499 + $0xfc] sm:$0xf]
      %v2564 = vld [vmem:[%s2499 + $0x100] sm:$0xf]
      %v2565 = vld [vmem:[%s2499 + $0x104] sm:$0xf]
      %v2566 = vld [vmem:[%s2499 + $0x108] sm:$0xf]
      %v2567 = vld [vmem:[%s2499 + $0x10c] sm:$0xf]
      %v2568 = vld [vmem:[%s2499 + $0x110] sm:$0xf]
      %v2569 = vld [vmem:[%s2499 + $0x114] sm:$0xf]
      %v2570 = vld [vmem:[%s2499 + $0x118] sm:$0xf]
      %v2571 = vld [vmem:[%s2499 + $0x11c] sm:$0xf]
      %s2572 = scalar_lea.vmem %s5, 2
      %v2573 = vld [vmem:[%s2572] sm:$0x1]
      %v2575 = vlaneseq
      %v2576 = vshrl.u32 %v2575, 7
      %v2577 = vsub.s32 0, %v2576
      %v2578 = vrot.slane %v2573, %v2577
      %v2589 = vunpack.c.l.b16 %v2490
      %v2590 = vunpack.c.h.b16 %v2490
      %v2591 = vunpack.c.l.b16 %v2491
      %v2592 = vunpack.c.h.b16 %v2491
      %v2593 = vunpack.c.l.b16 %v2492
      %v2594 = vunpack.c.l.b16 %v2493
      %v2595 = vunpack.c.h.b16 %v2493
      %v2596 = vunpack.c.l.b16 %v2494
      %v2597 = vunpack.c.h.b16 %v2494
      %v2598 = vunpack.c.l.b16 %v2495
      %v2599 = vunpack.c.l.b16 %v2496
      %v2600 = vunpack.c.h.b16 %v2496
      %v2601 = vunpack.c.l.b16 %v2497
      %v2602 = vunpack.c.h.b16 %v2497
      %v2603 = vunpack.c.l.b16 %v2498
      %v2604 = vpack.c.b16 %v2594, %v2589
      %v2605 = vpack.c.b16 %v2595, %v2590
      %v2606 = vpack.c.b16 %v2596, %v2591
      %v2607 = vpack.c.b16 %v2597, %v2592
      %v2608 = vpack.c.b16 %v2598, %v2593
      %v2609 = vpack.c.b16 %v2599, %v2599
      %v2610 = vpack.c.b16 %v2600, %v2600
      %v2611 = vpack.c.b16 %v2601, %v2601
      %v2612 = vpack.c.b16 %v2602, %v2602
      %v2613 = vpack.c.b16 %v2603, %v2603
      %v2694 = vunpack.c.l.b16 %v2500
      %v2695 = vunpack.c.l.b16 %v2501
      %v2696 = vunpack.c.l.b16 %v2502
      %v2697 = vunpack.c.l.b16 %v2503
      %v2698 = vunpack.c.l.b16 %v2504
      %v2699 = vunpack.c.l.b16 %v2505
      %v2700 = vunpack.c.l.b16 %v2506
      %v2701 = vunpack.c.l.b16 %v2507
      %v2702 = vunpack.c.l.b16 %v2508
      %v2703 = vunpack.c.l.b16 %v2509
      %v2704 = vunpack.c.l.b16 %v2510
      %v2705 = vunpack.c.l.b16 %v2511
      %v2706 = vunpack.c.l.b16 %v2512
      %v2707 = vunpack.c.l.b16 %v2513
      %v2708 = vunpack.c.l.b16 %v2514
      %v2709 = vunpack.c.l.b16 %v2515
      %v2710 = vunpack.c.l.b16 %v2516
      %v2711 = vunpack.c.l.b16 %v2517
      %v2712 = vunpack.c.l.b16 %v2518
      %v2713 = vunpack.c.l.b16 %v2519
      %v2714 = vunpack.c.l.b16 %v2520
      %v2715 = vunpack.c.l.b16 %v2521
      %v2716 = vunpack.c.l.b16 %v2522
      %v2717 = vunpack.c.l.b16 %v2523
      %v2718 = vunpack.c.l.b16 %v2524
      %v2719 = vunpack.c.l.b16 %v2525
      %v2720 = vunpack.c.l.b16 %v2526
      %v2721 = vunpack.c.l.b16 %v2527
      %v2722 = vunpack.c.l.b16 %v2528
      %v2723 = vunpack.c.l.b16 %v2529
      %v2724 = vunpack.c.l.b16 %v2530
      %v2725 = vunpack.c.l.b16 %v2531
      %v2726 = vunpack.c.l.b16 %v2532
      %v2727 = vunpack.c.l.b16 %v2533
      %v2728 = vunpack.c.l.b16 %v2534
      %v2729 = vunpack.c.l.b16 %v2535
      %v2730 = vunpack.c.l.b16 %v2536
      %v2731 = vunpack.c.l.b16 %v2537
      %v2732 = vunpack.c.l.b16 %v2538
      %v2733 = vunpack.c.l.b16 %v2539
      %v2734 = vunpack.c.l.b16 %v2540
      %v2735 = vunpack.c.l.b16 %v2541
      %v2736 = vunpack.c.l.b16 %v2542
      %v2737 = vunpack.c.l.b16 %v2543
      %v2738 = vunpack.c.l.b16 %v2544
      %v2739 = vunpack.c.l.b16 %v2545
      %v2740 = vunpack.c.l.b16 %v2546
      %v2741 = vunpack.c.l.b16 %v2547
      %v2742 = vunpack.c.l.b16 %v2548
      %v2743 = vunpack.c.l.b16 %v2549
      %v2744 = vunpack.c.l.b16 %v2550
      %v2745 = vunpack.c.l.b16 %v2551
      %v2746 = vunpack.c.l.b16 %v2552
      %v2747 = vunpack.c.l.b16 %v2553
      %v2748 = vunpack.c.l.b16 %v2554
      %v2749 = vunpack.c.l.b16 %v2555
      %v2750 = vunpack.c.l.b16 %v2556
      %v2751 = vunpack.c.l.b16 %v2557
      %v2752 = vunpack.c.l.b16 %v2558
      %v2753 = vunpack.c.l.b16 %v2559
      %v2754 = vunpack.c.l.b16 %v2560
      %v2755 = vunpack.c.l.b16 %v2561
      %v2756 = vunpack.c.l.b16 %v2562
      %v2757 = vunpack.c.l.b16 %v2563
      %v2758 = vunpack.c.l.b16 %v2564
      %v2759 = vunpack.c.l.b16 %v2565
      %v2760 = vunpack.c.l.b16 %v2566
      %v2761 = vunpack.c.l.b16 %v2567
      %v2762 = vunpack.c.l.b16 %v2568
      %v2763 = vunpack.c.l.b16 %v2569
      %v2764 = vunpack.c.l.b16 %v2570
      %v2765 = vunpack.c.l.b16 %v2571
      %v2766 = vpack.c.b16 %v2695, %v2694
      %v2767 = vpack.c.b16 %v2697, %v2696
      %v2768 = vpack.c.b16 %v2699, %v2698
      %v2769 = vpack.c.b16 %v2701, %v2700
      %v2770 = vpack.c.b16 %v2703, %v2702
      %v2771 = vpack.c.b16 %v2705, %v2704
      %v2772 = vpack.c.b16 %v2707, %v2706
      %v2773 = vpack.c.b16 %v2709, %v2708
      %v2774 = vpack.c.b16 %v2711, %v2710
      %v2775 = vpack.c.b16 %v2713, %v2712
      %v2776 = vpack.c.b16 %v2715, %v2714
      %v2777 = vpack.c.b16 %v2717, %v2716
      %v2778 = vpack.c.b16 %v2719, %v2718
      %v2779 = vpack.c.b16 %v2721, %v2720
      %v2780 = vpack.c.b16 %v2723, %v2722
      %v2781 = vpack.c.b16 %v2725, %v2724
      %v2782 = vpack.c.b16 %v2727, %v2726
      %v2783 = vpack.c.b16 %v2729, %v2728
      %v2784 = vpack.c.b16 %v2731, %v2730
      %v2785 = vpack.c.b16 %v2733, %v2732
      %v2786 = vpack.c.b16 %v2735, %v2734
      %v2787 = vpack.c.b16 %v2737, %v2736
      %v2788 = vpack.c.b16 %v2739, %v2738
      %v2789 = vpack.c.b16 %v2741, %v2740
      %v2790 = vpack.c.b16 %v2743, %v2742
      %v2791 = vpack.c.b16 %v2745, %v2744
      %v2792 = vpack.c.b16 %v2747, %v2746
      %v2793 = vpack.c.b16 %v2749, %v2748
      %v2794 = vpack.c.b16 %v2751, %v2750
      %v2795 = vpack.c.b16 %v2753, %v2752
      %v2796 = vpack.c.b16 %v2755, %v2754
      %v2797 = vpack.c.b16 %v2757, %v2756
      %v2798 = vpack.c.b16 %v2759, %v2758
      %v2799 = vpack.c.b16 %v2761, %v2760
      %v2800 = vpack.c.b16 %v2763, %v2762
      %v2801 = vpack.c.b16 %v2765, %v2764
      %v2839 = vsel %vm424, %v2608, 0
      %v2842 = vsel %vm424, %v2613, 0
      %2844 = vmatprep.subr.bf16.mxu0 0
      %2845 = vmatpush1.bf16.msra.mxu0 %v2766
      %2846 = vmatprep.subr.bf16.mxu0 0
      %2847 = vmatpush1.bf16.msra.mxu0 %v2767
      %2848 = vmatprep.subr.bf16.mxu0 0
      %2849 = vmatpush1.bf16.msra.mxu0 %v2768
      %2850 = vmatprep.subr.bf16.mxu0 0
      %2851 = vmatpush1.bf16.msra.mxu0 %v2769
      %2852 = vmatprep.subr.bf16.mxu0 0
      %2853 = vmatpush1.bf16.msra.mxu0 %v2770
      %2854 = vmatprep.subr.bf16.mxu0 0
      %2855 = vmatpush1.bf16.msra.mxu0 %v2771
      %2856 = vmatprep.subr.bf16.mxu0 0
      %2857 = vmatpush1.bf16.msra.mxu0 %v2772
      %2858 = vmatprep.subr.bf16.mxu0 0
      %2859 = vmatpush1.bf16.msra.mxu0 %v2773
      %2860 = vmatprep.subr.bf16.mxu0 0
      %2861 = vmatpush1.bf16.msra.mxu0 %v2774
      %2862 = vmatprep.subr.bf16.mxu0 0
      %2863 = vmatpush1.bf16.msra.mxu0 %v2775
      %2864 = vmatprep.subr.bf16.mxu0 0
      %2865 = vmatpush1.bf16.msra.mxu0 %v2776
      %2866 = vmatprep.subr.bf16.mxu0 0
      %2867 = vmatpush1.bf16.msra.mxu0 %v2777
      %2868 = vmatprep.subr.bf16.mxu0 0
      %2869 = vmatpush1.bf16.msra.mxu0 %v2778
      %2870 = vmatprep.subr.bf16.mxu0 0
      %2871 = vmatpush1.bf16.msra.mxu0 %v2779
      %2872 = vmatprep.subr.bf16.mxu0 0
      %2873 = vmatpush1.bf16.msra.mxu0 %v2780
      %2874 = vmatprep.subr.bf16.mxu0 0
      %2875 = vmatpush1.bf16.msra.mxu0 %v2781
      %2876 = vmatprep.mubr.bf16.mxu0 %v2605
      %2877 = vmatmul.mubr.bf16.gmra.mrb[0].mxu0 %v2604
      %v2878 = vpop.f32.mrb[0].mxu0
      %v2879 = vadd.f32 %v2578, %v2878
      %v2880 = vpop.f32.mrb[0].mxu0
      %v2881 = vpop.f32.mrb[0].mxu0
      %v2882 = vadd.f32 %v2578, %v2881
      %v2883 = vpop.f32.mrb[0].mxu0
      %2884 = vmatprep.mubr.bf16.mxu0 %v2610
      %2885 = vmatmul.mubr.bf16.gmra.mrb[0].mxu0 %v2609
      %v2886 = vpop.f32.mrb[0].mxu0
      %v2887 = vadd.f32 %v2578, %v2886
      %v2888 = vpop.f32.mrb[0].mxu0
      %v2889 = vpop.f32.mrb[0].mxu0
      %v2890 = vpop.f32.mrb[0].mxu0
      %2891 = vdwg.mxu0
      %2892 = vmatprep.subr.bf16.mxu0 0
      %2893 = vmatpush1.bf16.msra.mxu0 %v2782
      %2894 = vmatprep.subr.bf16.mxu0 0
      %2895 = vmatpush1.bf16.msra.mxu0 %v2783
      %2896 = vmatprep.subr.bf16.mxu0 0
      %2897 = vmatpush1.bf16.msra.mxu0 %v2784
      %2898 = vmatprep.subr.bf16.mxu0 0
      %2899 = vmatpush1.bf16.msra.mxu0 %v2785
      %2900 = vmatprep.subr.bf16.mxu0 0
      %2901 = vmatpush1.bf16.msra.mxu0 %v2786
      %2902 = vmatprep.subr.bf16.mxu0 0
      %2903 = vmatpush1.bf16.msra.mxu0 %v2787
      %2904 = vmatprep.subr.bf16.mxu0 0
      %2905 = vmatpush1.bf16.msra.mxu0 %v2788
      %2906 = vmatprep.subr.bf16.mxu0 0
      %2907 = vmatpush1.bf16.msra.mxu0 %v2789
      %2908 = vmatprep.subr.bf16.mxu0 0
      %2909 = vmatpush1.bf16.msra.mxu0 %v2790
      %2910 = vmatprep.subr.bf16.mxu0 0
      %2911 = vmatpush1.bf16.msra.mxu0 %v2791
      %2912 = vmatprep.subr.bf16.mxu0 0
      %2913 = vmatpush1.bf16.msra.mxu0 %v2792
      %2914 = vmatprep.subr.bf16.mxu0 0
      %2915 = vmatpush1.bf16.msra.mxu0 %v2793
      %2916 = vmatprep.subr.bf16.mxu0 0
      %2917 = vmatpush1.bf16.msra.mxu0 %v2794
      %2918 = vmatprep.subr.bf16.mxu0 0
      %2919 = vmatpush1.bf16.msra.mxu0 %v2795
      %2920 = vmatprep.subr.bf16.mxu0 0
      %2921 = vmatpush1.bf16.msra.mxu0 %v2796
      %2922 = vmatprep.subr.bf16.mxu0 0
      %2923 = vmatpush1.bf16.msra.mxu0 %v2797
      %2924 = vmatprep.mubr.bf16.mxu0 %v2607
      %2925 = vmatmul.mubr.bf16.gmra.mrb[0].mxu0 %v2606
      %v2926 = vpop.f32.mrb[0].mxu0
      %v2927 = vadd.f32 %v2879, %v2926
      %v2928 = vpop.f32.mrb[0].mxu0
      %v2929 = vpop.f32.mrb[0].mxu0
      %v2930 = vadd.f32 %v2882, %v2929
      %v2931 = vpop.f32.mrb[0].mxu0
      %2932 = vmatprep.mubr.bf16.mxu0 %v2612
      %2933 = vmatmul.mubr.bf16.gmra.mrb[0].mxu0 %v2611
      %v2934 = vpop.f32.mrb[0].mxu0
      %v2935 = vadd.f32 %v2887, %v2934
      %v2936 = vpop.f32.mrb[0].mxu0
      %v2937 = vpop.f32.mrb[0].mxu0
      %v2938 = vpop.f32.mrb[0].mxu0
      %2939 = vdwg.mxu0
      %2940 = vmatprep.subr.bf16.mxu0 0
      %2941 = vmatpush1.bf16.msra.mxu0 %v2798
      %2942 = vmatprep.subr.bf16.mxu0 0
      %2943 = vmatpush1.bf16.msra.mxu0 %v2799
      %2944 = vmatprep.subr.bf16.mxu0 0
      %2945 = vmatpush1.bf16.msra.mxu0 %v2800
      %2946 = vmatprep.subr.bf16.mxu0 0
      %2947 = vmatpush1.bf16.msra.mxu0 %v2801
      %2948 = vmatprep.subr.bf16.mxu0 0
      %2949 = vmatpush1.bf16.msra.mxu0 0
      %2950 = vmatprep.subr.bf16.mxu0 0
      %2951 = vmatpush1.bf16.msra.mxu0 0
      %2952 = vmatprep.subr.bf16.mxu0 0
      %2953 = vmatpush1.bf16.msra.mxu0 0
      %2954 = vmatprep.subr.bf16.mxu0 0
      %2955 = vmatpush1.bf16.msra.mxu0 0
      %2956 = vmatprep.subr.bf16.mxu0 0
      %2957 = vmatpush1.bf16.msra.mxu0 0
      %2958 = vmatprep.subr.bf16.mxu0 0
      %2959 = vmatpush1.bf16.msra.mxu0 0
      %2960 = vmatprep.subr.bf16.mxu0 0
      %2961 = vmatpush1.bf16.msra.mxu0 0
      %2962 = vmatprep.subr.bf16.mxu0 0
      %2963 = vmatpush1.bf16.msra.mxu0 0
      %2964 = vmatprep.subr.bf16.mxu0 0
      %2965 = vmatpush1.bf16.msra.mxu0 0
      %2966 = vmatprep.subr.bf16.mxu0 0
      %2967 = vmatpush1.bf16.msra.mxu0 0
      %2968 = vmatprep.subr.bf16.mxu0 0
      %2969 = vmatpush1.bf16.msra.mxu0 0
      %2970 = vmatprep.subr.bf16.mxu0 0
      %2971 = vmatpush1.bf16.msra.mxu0 0
      %2972 = vmatprep.mubr.bf16.mxu0 0
      %2973 = vmatmul.mubr.bf16.gmra.mrb[0].mxu0 %v2839
      %v2974 = vpop.f32.mrb[0].mxu0
      %v2975 = vadd.f32 %v2927, %v2974
      %v2976 = vpop.f32.mrb[0].mxu0
      %v2977 = vpop.f32.mrb[0].mxu0
      %v2978 = vadd.f32 %v2930, %v2977
      %v2979 = vpop.f32.mrb[0].mxu0
      %2980 = vmatprep.mubr.bf16.mxu0 0
      %2981 = vmatmul.mubr.bf16.gmra.mrb[0].mxu0 %v2842
      %v2982 = vpop.f32.mrb[0].mxu0
      %v2983 = vadd.f32 %v2935, %v2982
      %v2984 = vpop.f32.mrb[0].mxu0
      %v2985 = vpop.f32.mrb[0].mxu0
      %v2986 = vpop.f32.mrb[0].mxu0
      %2987 = vdwg.mxu0
      %v2988 = vmax.f32 %v2975, 0.0
      %v2989 = vmax.f32 %v2978, 0.0
      %v2990 = vmax.f32 %v2983, 0.0
      %v2991 = vmul.f32 %v2988, %v1316
      %v2992 = vmul.f32 %v2989, %v1321
      %v2993 = vmul.f32 %v2990, %v1326
      %v2994 = vpack.c.bf16 %v2992, %v2991
      %v2995 = vpack.c.bf16 %v2993, %v2993
      %v2998 = vunpack.c.l.b16 %v2994
      %v2999 = vunpack.c.h.b16 %v2994
      %v3000 = vunpack.c.l.b16 %v2995
      %v3001 = vpack.c.b16 %v2998, %v2998
      %v3002 = vpack.c.b16 %v2999, %v2999
      %v3003 = vpack.c.b16 %v3000, %v3000
      %v3005 = vshll.u32 %v3001, 16
      %v3007 = vrot.slane %v3005, 5
      %v3008 = vshrl.u32 %v3001, 16
      %v3010 = vrot.slane %v3008, 4
      %v3011 = vor.u32 %v3010, %v3007
      %v3012 = vrot.slane %v3011, 4
      %v3014 = vshll.u32 %v3002, 16
      %v3016 = vrot.slane %v3014, 5
      %v3017 = vsel %vm538, %v3012, %v3016
      %v3018 = vshrl.u32 %v3002, 16
      %v3020 = vrot.slane %v3018, 4
      %v3021 = vor.u32 %v3020, %v3016
      %v3022 = vrot.slane %v3021, 4
      %v3024 = vshll.u32 %v3003, 16
      %v3026 = vrot.slane %v3024, 5
      %v3027 = vsel %vm538, %v3022, %v3026
      %v3028 = vshrl.u32 %v3003, 16
      %v3030 = vrot.slane %v3028, 4
      %v3031 = vor.u32 %v3030, %v3026
      %v3032 = vrot.slane %v3031, 4
      %v3037 = vld [vmem:[#allocation2] sm:$0x8]
      %v3038 = vsel %vm446, %v3007, %v3037
      %3039 = vst [vmem:[#allocation2] sm:$0x8] %v3038
      %3040 = vst.msk [vmem:[#allocation2 + $0x4] sm:$0xf] %vm417, %v3017
      %3041 = vst.msk [vmem:[#allocation2 + $0x8] sm:$0xf] %vm417, %v3027
      %v3042 = vld [vmem:[#allocation2 + $0xc] sm:$0xf]
      %v3043 = vsel %vm1380, %v3032, %v3042
      %3044 = vst [vmem:[#allocation2 + $0xc] sm:$0xf] %v3043
      %v3045 = vld [vmem:[#allocation2] sm:$0xf]
      %v3046 = vld [vmem:[#allocation2 + $0x4] sm:$0xf]
      %v3047 = vld [vmem:[#allocation2 + $0x8] sm:$0xf]
      %3048 = vst.msk [vmem:[#allocation3] sm:$0xf] %vm417, %v3045
      %3049 = vst.msk [vmem:[#allocation3 + $0x14] sm:$0xf] %vm417, %v3046
      %3050 = vst.msk [vmem:[#allocation3 + $0x28] sm:$0xf] %vm417, %v3047
      %v3051 = vld [vmem:[#allocation2] sm:$0xf]
      %v3052 = vld [vmem:[#allocation2 + $0x4] sm:$0xf]
      %v3053 = vld [vmem:[#allocation2 + $0x8] sm:$0xf]
      %v3054 = vld [vmem:[#allocation2 + $0xc] sm:$0x1]
      %v3056 = vshrl.u32 %v3051, 16
      %v3058 = vrot.slane %v3056, 4
      %v3059 = vshll.u32 %v3051, 16
      %v3061 = vrot.slane %v3059, 5
      %v3062 = vor.u32 %v3058, %v3061
      %v3063 = vrot.slane %v3062, 4
      %v3065 = vshll.u32 %v3052, 16
      %v3067 = vrot.slane %v3065, 5
      %v3068 = vsel %vm538, %v3063, %v3067
      %v3069 = vshrl.u32 %v3052, 16
      %v3071 = vrot.slane %v3069, 4
      %v3072 = vor.u32 %v3071, %v3067
      %v3073 = vrot.slane %v3072, 4
      %v3075 = vshll.u32 %v3053, 16
      %v3077 = vrot.slane %v3075, 5
      %v3078 = vsel %vm538, %v3073, %v3077
      %v3079 = vshrl.u32 %v3053, 16
      %v3081 = vrot.slane %v3079, 4
      %v3082 = vor.u32 %v3081, %v3077
      %v3083 = vrot.slane %v3082, 4
      %v3085 = vshll.u32 %v3054, 16
      %v3087 = vrot.slane %v3085, 5
      %v3088 = vsel %vm538, %v3083, %v3087
      %3089 = vrot.lane.b32.xlu0 %v3068, 64
      %v3090 = vpop.permute.xlu0 %3089
      %3091 = vrot.lane.b32.xlu0 %v3078, 64
      %v3092 = vpop.permute.xlu0 %3091
      %3093 = vrot.lane.b32.xlu0 %v3088, 64
      %v3094 = vpop.permute.xlu0 %3093
      %3098 = vst.msk [vmem:[#allocation3] sm:$0xf] %vm582, %v3090
      %3099 = vst.msk [vmem:[#allocation3 + $0x14] sm:$0xf] %vm582, %v3092
      %3100 = vst.msk [vmem:[#allocation3 + $0x28] sm:$0xf] %vm582, %v3094
      %v3101 = vld [vmem:[#allocation2] sm:$0xe]
      %v3102 = vld [vmem:[#allocation2 + $0x4] sm:$0xf]
      %v3103 = vld [vmem:[#allocation2 + $0x8] sm:$0xf]
      %v3104 = vld [vmem:[#allocation2 + $0xc] sm:$0x1]
      %v3109 = vrot.slane %v3101, 5
      %v3110 = vrot.slane %v3109, 4
      %v3111 = vrot.slane %v3102, 5
      %v3112 = vsel %vm596, %v3110, %v3111
      %v3113 = vrot.slane %v3111, 4
      %v3114 = vrot.slane %v3103, 5
      %v3115 = vsel %vm596, %v3113, %v3114
      %v3116 = vrot.slane %v3114, 4
      %v3117 = vrot.slane %v3104, 5
      %v3118 = vsel %vm596, %v3116, %v3117
      %3122 = vst.msk [vmem:[#allocation3 + $0x4] sm:$0xf] %vm417, %v3112
      %3123 = vst.msk [vmem:[#allocation3 + $0x18] sm:$0xf] %vm417, %v3115
      %3124 = vst.msk [vmem:[#allocation3 + $0x2c] sm:$0xf] %vm417, %v3118
      %v3125 = vld [vmem:[#allocation2] sm:$0x8]
      %v3126 = vld [vmem:[#allocation2 + $0x4] sm:$0xf]
      %v3127 = vld [vmem:[#allocation2 + $0x8] sm:$0xf]
      %v3128 = vld [vmem:[#allocation2 + $0xc] sm:$0x7]
      %v3133 = vrot.slane %v3125, 7
      %v3134 = vrot.slane %v3133, 4
      %v3135 = vrot.slane %v3126, 7
      %v3136 = vsel %vm623, %v3134, %v3135
      %v3137 = vrot.slane %v3135, 4
      %v3138 = vrot.slane %v3127, 7
      %v3139 = vsel %vm623, %v3137, %v3138
      %v3140 = vrot.slane %v3138, 4
      %v3141 = vrot.slane %v3128, 7
      %v3142 = vsel %vm623, %v3140, %v3141
      %3143 = vrot.lane.b32.xlu0 %v3136, 64
      %v3144 = vpop.permute.xlu0 %3143
      %3145 = vrot.lane.b32.xlu0 %v3139, 64
      %v3146 = vpop.permute.xlu0 %3145
      %3147 = vrot.lane.b32.xlu0 %v3142, 64
      %v3148 = vpop.permute.xlu0 %3147
      %3152 = vst.msk [vmem:[#allocation3 + $0x4] sm:$0xf] %vm582, %v3144
      %3153 = vst.msk [vmem:[#allocation3 + $0x18] sm:$0xf] %vm582, %v3146
      %3154 = vst.msk [vmem:[#allocation3 + $0x2c] sm:$0xf] %vm582, %v3148
      %v3155 = vld [vmem:[#allocation2] sm:$0x8]
      %v3156 = vld [vmem:[#allocation2 + $0x4] sm:$0xf]
      %v3157 = vld [vmem:[#allocation2 + $0x8] sm:$0xf]
      %v3158 = vld [vmem:[#allocation2 + $0xc] sm:$0xf]
      %v3160 = vshrl.u32 %v3155, 16
      %v3162 = vrot.slane %v3160, 7
      %v3163 = vrot.slane %v3162, 4
      %v3165 = vshrl.u32 %v3156, 16
      %v3167 = vrot.slane %v3165, 7
      %v3168 = vshll.u32 %v3156, 16
      %v3170 = vor.u32 %v3167, %v3168
      %v3171 = vsel %vm651, %v3163, %v3170
      %v3172 = vrot.slane %v3167, 4
      %v3174 = vshrl.u32 %v3157, 16
      %v3176 = vrot.slane %v3174, 7
      %v3177 = vshll.u32 %v3157, 16
      %v3179 = vor.u32 %v3176, %v3177
      %v3180 = vsel %vm651, %v3172, %v3179
      %v3181 = vrot.slane %v3176, 4
      %v3183 = vshrl.u32 %v3158, 16
      %v3185 = vrot.slane %v3183, 7
      %v3186 = vshll.u32 %v3158, 16
      %v3188 = vor.u32 %v3185, %v3186
      %v3189 = vsel %vm651, %v3181, %v3188
      %3193 = vst.msk [vmem:[#allocation3 + $0x8] sm:$0xf] %vm417, %v3171
      %3194 = vst.msk [vmem:[#allocation3 + $0x1c] sm:$0xf] %vm417, %v3180
      %3195 = vst.msk [vmem:[#allocation3 + $0x30] sm:$0xf] %vm417, %v3189
      %v3196 = vld [vmem:[#allocation2 + $0x4] sm:$0xf]
      %v3197 = vld [vmem:[#allocation2 + $0x8] sm:$0xf]
      %v3198 = vld [vmem:[#allocation2 + $0xc] sm:$0xf]
      %3202 = vrot.lane.b32.xlu0 %v3196, 64
      %v3203 = vpop.permute.xlu0 %3202
      %3204 = vrot.lane.b32.xlu0 %v3197, 64
      %v3205 = vpop.permute.xlu0 %3204
      %3206 = vrot.lane.b32.xlu0 %v3198, 64
      %v3207 = vpop.permute.xlu0 %3206
      %3211 = vst.msk [vmem:[#allocation3 + $0x8] sm:$0xf] %vm582, %v3203
      %3212 = vst.msk [vmem:[#allocation3 + $0x1c] sm:$0xf] %vm582, %v3205
      %3213 = vst.msk [vmem:[#allocation3 + $0x30] sm:$0xf] %vm582, %v3207
      %v3214 = vld [vmem:[#allocation2 + $0x4] sm:$0xc]
      %v3215 = vld [vmem:[#allocation2 + $0x8] sm:$0xf]
      %v3216 = vld [vmem:[#allocation2 + $0xc] sm:$0xf]
      %v3217 = vld [vmem:[#allocation2 + $0x10] sm:$0x3]
      %v3222 = vrot.slane %v3214, 6
      %v3223 = vrot.slane %v3222, 4
      %v3224 = vrot.slane %v3215, 6
      %v3225 = vsel %vm717, %v3223, %v3224
      %v3226 = vrot.slane %v3224, 4
      %v3227 = vrot.slane %v3216, 6
      %v3228 = vsel %vm717, %v3226, %v3227
      %v3229 = vrot.slane %v3227, 4
      %v3230 = vrot.slane %v3217, 6
      %v3231 = vsel %vm717, %v3229, %v3230
      %3235 = vst.msk [vmem:[#allocation3 + $0xc] sm:$0xf] %vm417, %v3225
      %3236 = vst.msk [vmem:[#allocation3 + $0x20] sm:$0xf] %vm417, %v3228
      %3237 = vst.msk [vmem:[#allocation3 + $0x34] sm:$0xf] %vm417, %v3231
      %v3238 = vld [vmem:[#allocation2 + $0x4] sm:$0xc]
      %v3239 = vld [vmem:[#allocation2 + $0x8] sm:$0xf]
      %v3240 = vld [vmem:[#allocation2 + $0xc] sm:$0xf]
      %v3241 = vld [vmem:[#allocation2 + $0x10] sm:$0x7]
      %v3243 = vshrl.u32 %v3238, 16
      %v3245 = vrot.slane %v3243, 6
      %v3246 = vshll.u32 %v3238, 16
      %v3248 = vrot.slane %v3246, 7
      %v3249 = vor.u32 %v3245, %v3248
      %v3250 = vrot.slane %v3249, 4
      %v3252 = vshrl.u32 %v3239, 16
      %v3254 = vrot.slane %v3252, 6
      %v3255 = vshll.u32 %v3239, 16
      %v3257 = vrot.slane %v3255, 7
      %v3258 = vor.u32 %v3254, %v3257
      %v3259 = vsel %vm739, %v3250, %v3258
      %v3260 = vrot.slane %v3258, 4
      %v3262 = vshrl.u32 %v3240, 16
      %v3264 = vrot.slane %v3262, 6
      %v3265 = vshll.u32 %v3240, 16
      %v3267 = vrot.slane %v3265, 7
      %v3268 = vor.u32 %v3264, %v3267
      %v3269 = vsel %vm739, %v3260, %v3268
      %v3270 = vrot.slane %v3268, 4
      %v3272 = vshrl.u32 %v3241, 16
      %v3274 = vrot.slane %v3272, 6
      %v3275 = vshll.u32 %v3241, 16
      %v3277 = vrot.slane %v3275, 7
      %v3278 = vor.u32 %v3274, %v3277
      %v3279 = vsel %vm739, %v3270, %v3278
      %3280 = vrot.lane.b32.xlu0 %v3259, 64
      %v3281 = vpop.permute.xlu0 %3280
      %3282 = vrot.lane.b32.xlu0 %v3269, 64
      %v3283 = vpop.permute.xlu0 %3282
      %3284 = vrot.lane.b32.xlu0 %v3279, 64
      %v3285 = vpop.permute.xlu0 %3284
      %3289 = vst.msk [vmem:[#allocation3 + $0xc] sm:$0xf] %vm582, %v3281
      %3290 = vst.msk [vmem:[#allocation3 + $0x20] sm:$0xf] %vm582, %v3283
      %3291 = vst.msk [vmem:[#allocation3 + $0x34] sm:$0xf] %vm582, %v3285
      %v3292 = vld [vmem:[#allocation2 + $0x4] sm:$0x8]
      %v3293 = vld [vmem:[#allocation2 + $0x8] sm:$0xf]
      %v3294 = vld [vmem:[#allocation2 + $0xc] sm:$0xf]
      %v3295 = vld [vmem:[#allocation2 + $0x10] sm:$0x7]
      %v3300 = vrot.slane %v3292, 7
      %v3301 = vrot.slane %v3300, 4
      %v3302 = vrot.slane %v3293, 7
      %v3303 = vsel %vm623, %v3301, %v3302
      %v3304 = vrot.slane %v3302, 4
      %v3305 = vrot.slane %v3294, 7
      %v3306 = vsel %vm623, %v3304, %v3305
      %v3307 = vrot.slane %v3305, 4
      %v3308 = vrot.slane %v3295, 7
      %v3309 = vsel %vm623, %v3307, %v3308
      %3313 = vst.msk [vmem:[#allocation3 + $0x10] sm:$0xf] %vm417, %v3303
      %3314 = vst.msk [vmem:[#allocation3 + $0x24] sm:$0xf] %vm417, %v3306
      %3315 = vst.msk [vmem:[#allocation3 + $0x38] sm:$0xf] %vm417, %v3309
      %v3316 = vld [vmem:[#allocation3] sm:$0xff]
      %v3317 = vld [vmem:[#allocation3 + $0x8] sm:$0xff]
      %v3318 = vld [vmem:[#allocation3 + $0x10] sm:$0xf]
      %v3319 = vld [vmem:[#allocation3 + $0x14] sm:$0xff]
      %v3320 = vld [vmem:[#allocation3 + $0x1c] sm:$0xff]
      %v3321 = vld [vmem:[#allocation3 + $0x24] sm:$0xf]
      %v3322 = vld [vmem:[#allocation3 + $0x28] sm:$0xff]
      %v3323 = vld [vmem:[#allocation3 + $0x30] sm:$0xff]
      %v3324 = vld [vmem:[#allocation3 + $0x38] sm:$0xf]
      %s3325 = scalar_lea.vmem %s4, 864
      %v3326 = vld [vmem:[%s3325] sm:$0xf]
      %v3327 = vld [vmem:[%s3325 + $0x4] sm:$0xf]
      %v3328 = vld [vmem:[%s3325 + $0x8] sm:$0xf]
      %v3329 = vld [vmem:[%s3325 + $0xc] sm:$0xf]
      %v3330 = vld [vmem:[%s3325 + $0x10] sm:$0xf]
      %v3331 = vld [vmem:[%s3325 + $0x14] sm:$0xf]
      %v3332 = vld [vmem:[%s3325 + $0x18] sm:$0xf]
      %v3333 = vld [vmem:[%s3325 + $0x1c] sm:$0xf]
      %v3334 = vld [vmem:[%s3325 + $0x20] sm:$0xf]
      %v3335 = vld [vmem:[%s3325 + $0x24] sm:$0xf]
      %v3336 = vld [vmem:[%s3325 + $0x28] sm:$0xf]
      %v3337 = vld [vmem:[%s3325 + $0x2c] sm:$0xf]
      %v3338 = vld [vmem:[%s3325 + $0x30] sm:$0xf]
      %v3339 = vld [vmem:[%s3325 + $0x34] sm:$0xf]
      %v3340 = vld [vmem:[%s3325 + $0x38] sm:$0xf]
      %v3341 = vld [vmem:[%s3325 + $0x3c] sm:$0xf]
      %v3342 = vld [vmem:[%s3325 + $0x40] sm:$0xf]
      %v3343 = vld [vmem:[%s3325 + $0x44] sm:$0xf]
      %v3344 = vld [vmem:[%s3325 + $0x48] sm:$0xf]
      %v3345 = vld [vmem:[%s3325 + $0x4c] sm:$0xf]
      %v3346 = vld [vmem:[%s3325 + $0x50] sm:$0xf]
      %v3347 = vld [vmem:[%s3325 + $0x54] sm:$0xf]
      %v3348 = vld [vmem:[%s3325 + $0x58] sm:$0xf]
      %v3349 = vld [vmem:[%s3325 + $0x5c] sm:$0xf]
      %v3350 = vld [vmem:[%s3325 + $0x60] sm:$0xf]
      %v3351 = vld [vmem:[%s3325 + $0x64] sm:$0xf]
      %v3352 = vld [vmem:[%s3325 + $0x68] sm:$0xf]
      %v3353 = vld [vmem:[%s3325 + $0x6c] sm:$0xf]
      %v3354 = vld [vmem:[%s3325 + $0x70] sm:$0xf]
      %v3355 = vld [vmem:[%s3325 + $0x74] sm:$0xf]
      %v3356 = vld [vmem:[%s3325 + $0x78] sm:$0xf]
      %v3357 = vld [vmem:[%s3325 + $0x7c] sm:$0xf]
      %v3358 = vld [vmem:[%s3325 + $0x80] sm:$0xf]
      %v3359 = vld [vmem:[%s3325 + $0x84] sm:$0xf]
      %v3360 = vld [vmem:[%s3325 + $0x88] sm:$0xf]
      %v3361 = vld [vmem:[%s3325 + $0x8c] sm:$0xf]
      %v3362 = vld [vmem:[%s3325 + $0x90] sm:$0xf]
      %v3363 = vld [vmem:[%s3325 + $0x94] sm:$0xf]
      %v3364 = vld [vmem:[%s3325 + $0x98] sm:$0xf]
      %v3365 = vld [vmem:[%s3325 + $0x9c] sm:$0xf]
      %v3366 = vld [vmem:[%s3325 + $0xa0] sm:$0xf]
      %v3367 = vld [vmem:[%s3325 + $0xa4] sm:$0xf]
      %v3368 = vld [vmem:[%s3325 + $0xa8] sm:$0xf]
      %v3369 = vld [vmem:[%s3325 + $0xac] sm:$0xf]
      %v3370 = vld [vmem:[%s3325 + $0xb0] sm:$0xf]
      %v3371 = vld [vmem:[%s3325 + $0xb4] sm:$0xf]
      %v3372 = vld [vmem:[%s3325 + $0xb8] sm:$0xf]
      %v3373 = vld [vmem:[%s3325 + $0xbc] sm:$0xf]
      %v3374 = vld [vmem:[%s3325 + $0xc0] sm:$0xf]
      %v3375 = vld [vmem:[%s3325 + $0xc4] sm:$0xf]
      %v3376 = vld [vmem:[%s3325 + $0xc8] sm:$0xf]
      %v3377 = vld [vmem:[%s3325 + $0xcc] sm:$0xf]
      %v3378 = vld [vmem:[%s3325 + $0xd0] sm:$0xf]
      %v3379 = vld [vmem:[%s3325 + $0xd4] sm:$0xf]
      %v3380 = vld [vmem:[%s3325 + $0xd8] sm:$0xf]
      %v3381 = vld [vmem:[%s3325 + $0xdc] sm:$0xf]
      %v3382 = vld [vmem:[%s3325 + $0xe0] sm:$0xf]
      %v3383 = vld [vmem:[%s3325 + $0xe4] sm:$0xf]
      %v3384 = vld [vmem:[%s3325 + $0xe8] sm:$0xf]
      %v3385 = vld [vmem:[%s3325 + $0xec] sm:$0xf]
      %v3386 = vld [vmem:[%s3325 + $0xf0] sm:$0xf]
      %v3387 = vld [vmem:[%s3325 + $0xf4] sm:$0xf]
      %v3388 = vld [vmem:[%s3325 + $0xf8] sm:$0xf]
      %v3389 = vld [vmem:[%s3325 + $0xfc] sm:$0xf]
      %v3390 = vld [vmem:[%s3325 + $0x100] sm:$0xf]
      %v3391 = vld [vmem:[%s3325 + $0x104] sm:$0xf]
      %v3392 = vld [vmem:[%s3325 + $0x108] sm:$0xf]
      %v3393 = vld [vmem:[%s3325 + $0x10c] sm:$0xf]
      %v3394 = vld [vmem:[%s3325 + $0x110] sm:$0xf]
      %v3395 = vld [vmem:[%s3325 + $0x114] sm:$0xf]
      %v3396 = vld [vmem:[%s3325 + $0x118] sm:$0xf]
      %v3397 = vld [vmem:[%s3325 + $0x11c] sm:$0xf]
      %s3398 = scalar_lea.vmem %s5, 3
      %v3399 = vld [vmem:[%s3398] sm:$0x1]
      %v3401 = vlaneseq
      %v3402 = vshrl.u32 %v3401, 7
      %v3403 = vsub.s32 0, %v3402
      %v3404 = vrot.slane %v3399, %v3403
      %v3415 = vunpack.c.l.b16 %v3316
      %v3416 = vunpack.c.h.b16 %v3316
      %v3417 = vunpack.c.l.b16 %v3317
      %v3418 = vunpack.c.h.b16 %v3317
      %v3419 = vunpack.c.l.b16 %v3318
      %v3420 = vunpack.c.l.b16 %v3319
      %v3421 = vunpack.c.h.b16 %v3319
      %v3422 = vunpack.c.l.b16 %v3320
      %v3423 = vunpack.c.h.b16 %v3320
      %v3424 = vunpack.c.l.b16 %v3321
      %v3425 = vunpack.c.l.b16 %v3322
      %v3426 = vunpack.c.h.b16 %v3322
      %v3427 = vunpack.c.l.b16 %v3323
      %v3428 = vunpack.c.h.b16 %v3323
      %v3429 = vunpack.c.l.b16 %v3324
      %v3430 = vpack.c.b16 %v3420, %v3415
      %v3431 = vpack.c.b16 %v3421, %v3416
      %v3432 = vpack.c.b16 %v3422, %v3417
      %v3433 = vpack.c.b16 %v3423, %v3418
      %v3434 = vpack.c.b16 %v3424, %v3419
      %v3435 = vpack.c.b16 %v3425, %v3425
      %v3436 = vpack.c.b16 %v3426, %v3426
      %v3437 = vpack.c.b16 %v3427, %v3427
      %v3438 = vpack.c.b16 %v3428, %v3428
      %v3439 = vpack.c.b16 %v3429, %v3429
      %v3520 = vunpack.c.l.b16 %v3326
      %v3521 = vunpack.c.l.b16 %v3327
      %v3522 = vunpack.c.l.b16 %v3328
      %v3523 = vunpack.c.l.b16 %v3329
      %v3524 = vunpack.c.l.b16 %v3330
      %v3525 = vunpack.c.l.b16 %v3331
      %v3526 = vunpack.c.l.b16 %v3332
      %v3527 = vunpack.c.l.b16 %v3333
      %v3528 = vunpack.c.l.b16 %v3334
      %v3529 = vunpack.c.l.b16 %v3335
      %v3530 = vunpack.c.l.b16 %v3336
      %v3531 = vunpack.c.l.b16 %v3337
      %v3532 = vunpack.c.l.b16 %v3338
      %v3533 = vunpack.c.l.b16 %v3339
      %v3534 = vunpack.c.l.b16 %v3340
      %v3535 = vunpack.c.l.b16 %v3341
      %v3536 = vunpack.c.l.b16 %v3342
      %v3537 = vunpack.c.l.b16 %v3343
      %v3538 = vunpack.c.l.b16 %v3344
      %v3539 = vunpack.c.l.b16 %v3345
      %v3540 = vunpack.c.l.b16 %v3346
      %v3541 = vunpack.c.l.b16 %v3347
      %v3542 = vunpack.c.l.b16 %v3348
      %v3543 = vunpack.c.l.b16 %v3349
      %v3544 = vunpack.c.l.b16 %v3350
      %v3545 = vunpack.c.l.b16 %v3351
      %v3546 = vunpack.c.l.b16 %v3352
      %v3547 = vunpack.c.l.b16 %v3353
      %v3548 = vunpack.c.l.b16 %v3354
      %v3549 = vunpack.c.l.b16 %v3355
      %v3550 = vunpack.c.l.b16 %v3356
      %v3551 = vunpack.c.l.b16 %v3357
      %v3552 = vunpack.c.l.b16 %v3358
      %v3553 = vunpack.c.l.b16 %v3359
      %v3554 = vunpack.c.l.b16 %v3360
      %v3555 = vunpack.c.l.b16 %v3361
      %v3556 = vunpack.c.l.b16 %v3362
      %v3557 = vunpack.c.l.b16 %v3363
      %v3558 = vunpack.c.l.b16 %v3364
      %v3559 = vunpack.c.l.b16 %v3365
      %v3560 = vunpack.c.l.b16 %v3366
      %v3561 = vunpack.c.l.b16 %v3367
      %v3562 = vunpack.c.l.b16 %v3368
      %v3563 = vunpack.c.l.b16 %v3369
      %v3564 = vunpack.c.l.b16 %v3370
      %v3565 = vunpack.c.l.b16 %v3371
      %v3566 = vunpack.c.l.b16 %v3372
      %v3567 = vunpack.c.l.b16 %v3373
      %v3568 = vunpack.c.l.b16 %v3374
      %v3569 = vunpack.c.l.b16 %v3375
      %v3570 = vunpack.c.l.b16 %v3376
      %v3571 = vunpack.c.l.b16 %v3377
      %v3572 = vunpack.c.l.b16 %v3378
      %v3573 = vunpack.c.l.b16 %v3379
      %v3574 = vunpack.c.l.b16 %v3380
      %v3575 = vunpack.c.l.b16 %v3381
      %v3576 = vunpack.c.l.b16 %v3382
      %v3577 = vunpack.c.l.b16 %v3383
      %v3578 = vunpack.c.l.b16 %v3384
      %v3579 = vunpack.c.l.b16 %v3385
      %v3580 = vunpack.c.l.b16 %v3386
      %v3581 = vunpack.c.l.b16 %v3387
      %v3582 = vunpack.c.l.b16 %v3388
      %v3583 = vunpack.c.l.b16 %v3389
      %v3584 = vunpack.c.l.b16 %v3390
      %v3585 = vunpack.c.l.b16 %v3391
      %v3586 = vunpack.c.l.b16 %v3392
      %v3587 = vunpack.c.l.b16 %v3393
      %v3588 = vunpack.c.l.b16 %v3394
      %v3589 = vunpack.c.l.b16 %v3395
      %v3590 = vunpack.c.l.b16 %v3396
      %v3591 = vunpack.c.l.b16 %v3397
      %v3592 = vpack.c.b16 %v3521, %v3520
      %v3593 = vpack.c.b16 %v3523, %v3522
      %v3594 = vpack.c.b16 %v3525, %v3524
      %v3595 = vpack.c.b16 %v3527, %v3526
      %v3596 = vpack.c.b16 %v3529, %v3528
      %v3597 = vpack.c.b16 %v3531, %v3530
      %v3598 = vpack.c.b16 %v3533, %v3532
      %v3599 = vpack.c.b16 %v3535, %v3534
      %v3600 = vpack.c.b16 %v3537, %v3536
      %v3601 = vpack.c.b16 %v3539, %v3538
      %v3602 = vpack.c.b16 %v3541, %v3540
      %v3603 = vpack.c.b16 %v3543, %v3542
      %v3604 = vpack.c.b16 %v3545, %v3544
      %v3605 = vpack.c.b16 %v3547, %v3546
      %v3606 = vpack.c.b16 %v3549, %v3548
      %v3607 = vpack.c.b16 %v3551, %v3550
      %v3608 = vpack.c.b16 %v3553, %v3552
      %v3609 = vpack.c.b16 %v3555, %v3554
      %v3610 = vpack.c.b16 %v3557, %v3556
      %v3611 = vpack.c.b16 %v3559, %v3558
      %v3612 = vpack.c.b16 %v3561, %v3560
      %v3613 = vpack.c.b16 %v3563, %v3562
      %v3614 = vpack.c.b16 %v3565, %v3564
      %v3615 = vpack.c.b16 %v3567, %v3566
      %v3616 = vpack.c.b16 %v3569, %v3568
      %v3617 = vpack.c.b16 %v3571, %v3570
      %v3618 = vpack.c.b16 %v3573, %v3572
      %v3619 = vpack.c.b16 %v3575, %v3574
      %v3620 = vpack.c.b16 %v3577, %v3576
      %v3621 = vpack.c.b16 %v3579, %v3578
      %v3622 = vpack.c.b16 %v3581, %v3580
      %v3623 = vpack.c.b16 %v3583, %v3582
      %v3624 = vpack.c.b16 %v3585, %v3584
      %v3625 = vpack.c.b16 %v3587, %v3586
      %v3626 = vpack.c.b16 %v3589, %v3588
      %v3627 = vpack.c.b16 %v3591, %v3590
      %v3665 = vsel %vm424, %v3434, 0
      %v3668 = vsel %vm424, %v3439, 0
      %3670 = vmatprep.subr.bf16.mxu0 0
      %3671 = vmatpush1.bf16.msra.mxu0 %v3592
      %3672 = vmatprep.subr.bf16.mxu0 0
      %3673 = vmatpush1.bf16.msra.mxu0 %v3593
      %3674 = vmatprep.subr.bf16.mxu0 0
      %3675 = vmatpush1.bf16.msra.mxu0 %v3594
      %3676 = vmatprep.subr.bf16.mxu0 0
      %3677 = vmatpush1.bf16.msra.mxu0 %v3595
      %3678 = vmatprep.subr.bf16.mxu0 0
      %3679 = vmatpush1.bf16.msra.mxu0 %v3596
      %3680 = vmatprep.subr.bf16.mxu0 0
      %3681 = vmatpush1.bf16.msra.mxu0 %v3597
      %3682 = vmatprep.subr.bf16.mxu0 0
      %3683 = vmatpush1.bf16.msra.mxu0 %v3598
      %3684 = vmatprep.subr.bf16.mxu0 0
      %3685 = vmatpush1.bf16.msra.mxu0 %v3599
      %3686 = vmatprep.subr.bf16.mxu0 0
      %3687 = vmatpush1.bf16.msra.mxu0 %v3600
      %3688 = vmatprep.subr.bf16.mxu0 0
      %3689 = vmatpush1.bf16.msra.mxu0 %v3601
      %3690 = vmatprep.subr.bf16.mxu0 0
      %3691 = vmatpush1.bf16.msra.mxu0 %v3602
      %3692 = vmatprep.subr.bf16.mxu0 0
      %3693 = vmatpush1.bf16.msra.mxu0 %v3603
      %3694 = vmatprep.subr.bf16.mxu0 0
      %3695 = vmatpush1.bf16.msra.mxu0 %v3604
      %3696 = vmatprep.subr.bf16.mxu0 0
      %3697 = vmatpush1.bf16.msra.mxu0 %v3605
      %3698 = vmatprep.subr.bf16.mxu0 0
      %3699 = vmatpush1.bf16.msra.mxu0 %v3606
      %3700 = vmatprep.subr.bf16.mxu0 0
      %3701 = vmatpush1.bf16.msra.mxu0 %v3607
      %3702 = vmatprep.mubr.bf16.mxu0 %v3431
      %3703 = vmatmul.mubr.bf16.gmra.mrb[0].mxu0 %v3430
      %v3704 = vpop.f32.mrb[0].mxu0
      %v3705 = vadd.f32 %v3404, %v3704
      %v3706 = vpop.f32.mrb[0].mxu0
      %v3707 = vpop.f32.mrb[0].mxu0
      %v3708 = vadd.f32 %v3404, %v3707
      %v3709 = vpop.f32.mrb[0].mxu0
      %3710 = vmatprep.mubr.bf16.mxu0 %v3436
      %3711 = vmatmul.mubr.bf16.gmra.mrb[0].mxu0 %v3435
      %v3712 = vpop.f32.mrb[0].mxu0
      %v3713 = vadd.f32 %v3404, %v3712
      %v3714 = vpop.f32.mrb[0].mxu0
      %v3715 = vpop.f32.mrb[0].mxu0
      %v3716 = vpop.f32.mrb[0].mxu0
      %3717 = vdwg.mxu0
      %3718 = vmatprep.subr.bf16.mxu0 0
      %3719 = vmatpush1.bf16.msra.mxu0 %v3608
      %3720 = vmatprep.subr.bf16.mxu0 0
      %3721 = vmatpush1.bf16.msra.mxu0 %v3609
      %3722 = vmatprep.subr.bf16.mxu0 0
      %3723 = vmatpush1.bf16.msra.mxu0 %v3610
      %3724 = vmatprep.subr.bf16.mxu0 0
      %3725 = vmatpush1.bf16.msra.mxu0 %v3611
      %3726 = vmatprep.subr.bf16.mxu0 0
      %3727 = vmatpush1.bf16.msra.mxu0 %v3612
      %3728 = vmatprep.subr.bf16.mxu0 0
      %3729 = vmatpush1.bf16.msra.mxu0 %v3613
      %3730 = vmatprep.subr.bf16.mxu0 0
      %3731 = vmatpush1.bf16.msra.mxu0 %v3614
      %3732 = vmatprep.subr.bf16.mxu0 0
      %3733 = vmatpush1.bf16.msra.mxu0 %v3615
      %3734 = vmatprep.subr.bf16.mxu0 0
      %3735 = vmatpush1.bf16.msra.mxu0 %v3616
      %3736 = vmatprep.subr.bf16.mxu0 0
      %3737 = vmatpush1.bf16.msra.mxu0 %v3617
      %3738 = vmatprep.subr.bf16.mxu0 0
      %3739 = vmatpush1.bf16.msra.mxu0 %v3618
      %3740 = vmatprep.subr.bf16.mxu0 0
      %3741 = vmatpush1.bf16.msra.mxu0 %v3619
      %3742 = vmatprep.subr.bf16.mxu0 0
      %3743 = vmatpush1.bf16.msra.mxu0 %v3620
      %3744 = vmatprep.subr.bf16.mxu0 0
      %3745 = vmatpush1.bf16.msra.mxu0 %v3621
      %3746 = vmatprep.subr.bf16.mxu0 0
      %3747 = vmatpush1.bf16.msra.mxu0 %v3622
      %3748 = vmatprep.subr.bf16.mxu0 0
      %3749 = vmatpush1.bf16.msra.mxu0 %v3623
      %3750 = vmatprep.mubr.bf16.mxu0 %v3433
      %3751 = vmatmul.mubr.bf16.gmra.mrb[0].mxu0 %v3432
      %v3752 = vpop.f32.mrb[0].mxu0
      %v3753 = vadd.f32 %v3705, %v3752
      %v3754 = vpop.f32.mrb[0].mxu0
      %v3755 = vpop.f32.mrb[0].mxu0
      %v3756 = vadd.f32 %v3708, %v3755
      %v3757 = vpop.f32.mrb[0].mxu0
      %3758 = vmatprep.mubr.bf16.mxu0 %v3438
      %3759 = vmatmul.mubr.bf16.gmra.mrb[0].mxu0 %v3437
      %v3760 = vpop.f32.mrb[0].mxu0
      %v3761 = vadd.f32 %v3713, %v3760
      %v3762 = vpop.f32.mrb[0].mxu0
      %v3763 = vpop.f32.mrb[0].mxu0
      %v3764 = vpop.f32.mrb[0].mxu0
      %3765 = vdwg.mxu0
      %3766 = vmatprep.subr.bf16.mxu0 0
      %3767 = vmatpush1.bf16.msra.mxu0 %v3624
      %3768 = vmatprep.subr.bf16.mxu0 0
      %3769 = vmatpush1.bf16.msra.mxu0 %v3625
      %3770 = vmatprep.subr.bf16.mxu0 0
      %3771 = vmatpush1.bf16.msra.mxu0 %v3626
      %3772 = vmatprep.subr.bf16.mxu0 0
      %3773 = vmatpush1.bf16.msra.mxu0 %v3627
      %3774 = vmatprep.subr.bf16.mxu0 0
      %3775 = vmatpush1.bf16.msra.mxu0 0
      %3776 = vmatprep.subr.bf16.mxu0 0
      %3777 = vmatpush1.bf16.msra.mxu0 0
      %3778 = vmatprep.subr.bf16.mxu0 0
      %3779 = vmatpush1.bf16.msra.mxu0 0
      %3780 = vmatprep.subr.bf16.mxu0 0
      %3781 = vmatpush1.bf16.msra.mxu0 0
      %3782 = vmatprep.subr.bf16.mxu0 0
      %3783 = vmatpush1.bf16.msra.mxu0 0
      %3784 = vmatprep.subr.bf16.mxu0 0
      %3785 = vmatpush1.bf16.msra.mxu0 0
      %3786 = vmatprep.subr.bf16.mxu0 0
      %3787 = vmatpush1.bf16.msra.mxu0 0
      %3788 = vmatprep.subr.bf16.mxu0 0
      %3789 = vmatpush1.bf16.msra.mxu0 0
      %3790 = vmatprep.subr.bf16.mxu0 0
      %3791 = vmatpush1.bf16.msra.mxu0 0
      %3792 = vmatprep.subr.bf16.mxu0 0
      %3793 = vmatpush1.bf16.msra.mxu0 0
      %3794 = vmatprep.subr.bf16.mxu0 0
      %3795 = vmatpush1.bf16.msra.mxu0 0
      %3796 = vmatprep.subr.bf16.mxu0 0
      %3797 = vmatpush1.bf16.msra.mxu0 0
      %3798 = vmatprep.mubr.bf16.mxu0 0
      %3799 = vmatmul.mubr.bf16.gmra.mrb[0].mxu0 %v3665
      %v3800 = vpop.f32.mrb[0].mxu0
      %v3801 = vadd.f32 %v3753, %v3800
      %v3802 = vpop.f32.mrb[0].mxu0
      %v3803 = vpop.f32.mrb[0].mxu0
      %v3804 = vadd.f32 %v3756, %v3803
      %v3805 = vpop.f32.mrb[0].mxu0
      %3806 = vmatprep.mubr.bf16.mxu0 0
      %3807 = vmatmul.mubr.bf16.gmra.mrb[0].mxu0 %v3668
      %v3808 = vpop.f32.mrb[0].mxu0
      %v3809 = vadd.f32 %v3761, %v3808
      %v3810 = vpop.f32.mrb[0].mxu0
      %v3811 = vpop.f32.mrb[0].mxu0
      %v3812 = vpop.f32.mrb[0].mxu0
      %3813 = vdwg.mxu0
      %v3814 = vld [vmem:[#allocation4] sm:$0xff]
      %v3815 = vld [vmem:[#allocation4 + $0x8] sm:$0xff]
      %v3816 = vld [vmem:[#allocation4 + $0x10] sm:$0xff]
      %v3817 = vadd.f32 %v3801, %v3814
      %v3818 = vadd.f32 %v3804, %v3815
      %v3819 = vadd.f32 %v3809, %v3816
      %v3820 = vmax.f32 %v3817, 0.0
      %v3821 = vmax.f32 %v3818, 0.0
      %v3822 = vmax.f32 %v3819, 0.0
      %v3823 = vmul.f32 %v3820, %v1316
      %v3824 = vmul.f32 %v3821, %v1321
      %v3825 = vmul.f32 %v3822, %v1326
      %v3826 = vpack.c.bf16 %v3824, %v3823
      %v3827 = vpack.c.bf16 %v3825, %v3825
      %v3830 = vunpack.c.l.b16 %v3826
      %v3831 = vunpack.c.h.b16 %v3826
      %v3832 = vunpack.c.l.b16 %v3827
      %v3833 = vpack.c.b16 %v3830, %v3830
      %v3834 = vpack.c.b16 %v3831, %v3831
      %v3835 = vpack.c.b16 %v3832, %v3832
      %v3837 = vshll.u32 %v3833, 16
      %v3839 = vrot.slane %v3837, 5
      %v3840 = vshrl.u32 %v3833, 16
      %v3842 = vrot.slane %v3840, 4
      %v3843 = vor.u32 %v3842, %v3839
      %v3844 = vrot.slane %v3843, 4
      %v3846 = vshll.u32 %v3834, 16
      %v3848 = vrot.slane %v3846, 5
      %v3849 = vsel %vm538, %v3844, %v3848
      %v3850 = vshrl.u32 %v3834, 16
      %v3852 = vrot.slane %v3850, 4
      %v3853 = vor.u32 %v3852, %v3848
      %v3854 = vrot.slane %v3853, 4
      %v3856 = vshll.u32 %v3835, 16
      %v3858 = vrot.slane %v3856, 5
      %v3859 = vsel %vm538, %v3854, %v3858
      %v3860 = vshrl.u32 %v3835, 16
      %v3862 = vrot.slane %v3860, 4
      %v3863 = vor.u32 %v3862, %v3858
      %v3864 = vrot.slane %v3863, 4
      %v3869 = vld [vmem:[#allocation2] sm:$0x8]
      %v3870 = vsel %vm446, %v3839, %v3869
      %3871 = vst [vmem:[#allocation2] sm:$0x8] %v3870
      %3872 = vst.msk [vmem:[#allocation2 + $0x4] sm:$0xf] %vm417, %v3849
      %3873 = vst.msk [vmem:[#allocation2 + $0x8] sm:$0xf] %vm417, %v3859
      %v3874 = vld [vmem:[#allocation2 + $0xc] sm:$0xf]
      %v3875 = vsel %vm1380, %v3864, %v3874
      %3876 = vst [vmem:[#allocation2 + $0xc] sm:$0xf] %v3875
      %3877 = vst.msk [vmem:[#allocation4] sm:$0xff] %vm424, %v3823
      %3878 = vst.msk [vmem:[#allocation4 + $0x8] sm:$0xff] %vm424, %v3824
      %3879 = vst.msk [vmem:[#allocation4 + $0x10] sm:$0xff] %vm424, %v3825
      %v3880 = vld [vmem:[#allocation2] sm:$0xf]
      %v3881 = vld [vmem:[#allocation2 + $0x4] sm:$0xf]
      %v3882 = vld [vmem:[#allocation2 + $0x8] sm:$0xf]
      %3883 = vst.msk [vmem:[#allocation3] sm:$0xf] %vm417, %v3880
      %3884 = vst.msk [vmem:[#allocation3 + $0x14] sm:$0xf] %vm417, %v3881
      %3885 = vst.msk [vmem:[#allocation3 + $0x28] sm:$0xf] %vm417, %v3882
      %v3886 = vld [vmem:[#allocation2] sm:$0xf]
      %v3887 = vld [vmem:[#allocation2 + $0x4] sm:$0xf]
      %v3888 = vld [vmem:[#allocation2 + $0x8] sm:$0xf]
      %v3889 = vld [vmem:[#allocation2 + $0xc] sm:$0x1]
      %v3891 = vshrl.u32 %v3886, 16
      %v3893 = vrot.slane %v3891, 4
      %v3894 = vshll.u32 %v3886, 16
      %v3896 = vrot.slane %v3894, 5
      %v3897 = vor.u32 %v3893, %v3896
      %v3898 = vrot.slane %v3897, 4
      %v3900 = vshll.u32 %v3887, 16
      %v3902 = vrot.slane %v3900, 5
      %v3903 = vsel %vm538, %v3898, %v3902
      %v3904 = vshrl.u32 %v3887, 16
      %v3906 = vrot.slane %v3904, 4
      %v3907 = vor.u32 %v3906, %v3902
      %v3908 = vrot.slane %v3907, 4
      %v3910 = vshll.u32 %v3888, 16
      %v3912 = vrot.slane %v3910, 5
      %v3913 = vsel %vm538, %v3908, %v3912
      %v3914 = vshrl.u32 %v3888, 16
      %v3916 = vrot.slane %v3914, 4
      %v3917 = vor.u32 %v3916, %v3912
      %v3918 = vrot.slane %v3917, 4
      %v3920 = vshll.u32 %v3889, 16
      %v3922 = vrot.slane %v3920, 5
      %v3923 = vsel %vm538, %v3918, %v3922
      %3924 = vrot.lane.b32.xlu0 %v3903, 64
      %v3925 = vpop.permute.xlu0 %3924
      %3926 = vrot.lane.b32.xlu0 %v3913, 64
      %v3927 = vpop.permute.xlu0 %3926
      %3928 = vrot.lane.b32.xlu0 %v3923, 64
      %v3929 = vpop.permute.xlu0 %3928
      %3933 = vst.msk [vmem:[#allocation3] sm:$0xf] %vm582, %v3925
      %3934 = vst.msk [vmem:[#allocation3 + $0x14] sm:$0xf] %vm582, %v3927
      %3935 = vst.msk [vmem:[#allocation3 + $0x28] sm:$0xf] %vm582, %v3929
      %v3936 = vld [vmem:[#allocation2] sm:$0xe]
      %v3937 = vld [vmem:[#allocation2 + $0x4] sm:$0xf]
      %v3938 = vld [vmem:[#allocation2 + $0x8] sm:$0xf]
      %v3939 = vld [vmem:[#allocation2 + $0xc] sm:$0x1]
      %v3944 = vrot.slane %v3936, 5
      %v3945 = vrot.slane %v3944, 4
      %v3946 = vrot.slane %v3937, 5
      %v3947 = vsel %vm596, %v3945, %v3946
      %v3948 = vrot.slane %v3946, 4
      %v3949 = vrot.slane %v3938, 5
      %v3950 = vsel %vm596, %v3948, %v3949
      %v3951 = vrot.slane %v3949, 4
      %v3952 = vrot.slane %v3939, 5
      %v3953 = vsel %vm596, %v3951, %v3952
      %3957 = vst.msk [vmem:[#allocation3 + $0x4] sm:$0xf] %vm417, %v3947
      %3958 = vst.msk [vmem:[#allocation3 + $0x18] sm:$0xf] %vm417, %v3950
      %3959 = vst.msk [vmem:[#allocation3 + $0x2c] sm:$0xf] %vm417, %v3953
      %v3960 = vld [vmem:[#allocation2] sm:$0x8]
      %v3961 = vld [vmem:[#allocation2 + $0x4] sm:$0xf]
      %v3962 = vld [vmem:[#allocation2 + $0x8] sm:$0xf]
      %v3963 = vld [vmem:[#allocation2 + $0xc] sm:$0x7]
      %v3968 = vrot.slane %v3960, 7
      %v3969 = vrot.slane %v3968, 4
      %v3970 = vrot.slane %v3961, 7
      %v3971 = vsel %vm623, %v3969, %v3970
      %v3972 = vrot.slane %v3970, 4
      %v3973 = vrot.slane %v3962, 7
      %v3974 = vsel %vm623, %v3972, %v3973
      %v3975 = vrot.slane %v3973, 4
      %v3976 = vrot.slane %v3963, 7
      %v3977 = vsel %vm623, %v3975, %v3976
      %3978 = vrot.lane.b32.xlu0 %v3971, 64
      %v3979 = vpop.permute.xlu0 %3978
      %3980 = vrot.lane.b32.xlu0 %v3974, 64
      %v3981 = vpop.permute.xlu0 %3980
      %3982 = vrot.lane.b32.xlu0 %v3977, 64
      %v3983 = vpop.permute.xlu0 %3982
      %3987 = vst.msk [vmem:[#allocation3 + $0x4] sm:$0xf] %vm582, %v3979
      %3988 = vst.msk [vmem:[#allocation3 + $0x18] sm:$0xf] %vm582, %v3981
      %3989 = vst.msk [vmem:[#allocation3 + $0x2c] sm:$0xf] %vm582, %v3983
      %v3990 = vld [vmem:[#allocation2] sm:$0x8]
      %v3991 = vld [vmem:[#allocation2 + $0x4] sm:$0xf]
      %v3992 = vld [vmem:[#allocation2 + $0x8] sm:$0xf]
      %v3993 = vld [vmem:[#allocation2 + $0xc] sm:$0xf]
      %v3995 = vshrl.u32 %v3990, 16
      %v3997 = vrot.slane %v3995, 7
      %v3998 = vrot.slane %v3997, 4
      %v4000 = vshrl.u32 %v3991, 16
      %v4002 = vrot.slane %v4000, 7
      %v4003 = vshll.u32 %v3991, 16
      %v4005 = vor.u32 %v4002, %v4003
      %v4006 = vsel %vm651, %v3998, %v4005
      %v4007 = vrot.slane %v4002, 4
      %v4009 = vshrl.u32 %v3992, 16
      %v4011 = vrot.slane %v4009, 7
      %v4012 = vshll.u32 %v3992, 16
      %v4014 = vor.u32 %v4011, %v4012
      %v4015 = vsel %vm651, %v4007, %v4014
      %v4016 = vrot.slane %v4011, 4
      %v4018 = vshrl.u32 %v3993, 16
      %v4020 = vrot.slane %v4018, 7
      %v4021 = vshll.u32 %v3993, 16
      %v4023 = vor.u32 %v4020, %v4021
      %v4024 = vsel %vm651, %v4016, %v4023
      %4028 = vst.msk [vmem:[#allocation3 + $0x8] sm:$0xf] %vm417, %v4006
      %4029 = vst.msk [vmem:[#allocation3 + $0x1c] sm:$0xf] %vm417, %v4015
      %4030 = vst.msk [vmem:[#allocation3 + $0x30] sm:$0xf] %vm417, %v4024
      %v4031 = vld [vmem:[#allocation2 + $0x4] sm:$0xf]
      %v4032 = vld [vmem:[#allocation2 + $0x8] sm:$0xf]
      %v4033 = vld [vmem:[#allocation2 + $0xc] sm:$0xf]
      %4037 = vrot.lane.b32.xlu0 %v4031, 64
      %v4038 = vpop.permute.xlu0 %4037
      %4039 = vrot.lane.b32.xlu0 %v4032, 64
      %v4040 = vpop.permute.xlu0 %4039
      %4041 = vrot.lane.b32.xlu0 %v4033, 64
      %v4042 = vpop.permute.xlu0 %4041
      %4046 = vst.msk [vmem:[#allocation3 + $0x8] sm:$0xf] %vm582, %v4038
      %4047 = vst.msk [vmem:[#allocation3 + $0x1c] sm:$0xf] %vm582, %v4040
      %4048 = vst.msk [vmem:[#allocation3 + $0x30] sm:$0xf] %vm582, %v4042
      %v4049 = vld [vmem:[#allocation2 + $0x4] sm:$0xc]
      %v4050 = vld [vmem:[#allocation2 + $0x8] sm:$0xf]
      %v4051 = vld [vmem:[#allocation2 + $0xc] sm:$0xf]
      %v4052 = vld [vmem:[#allocation2 + $0x10] sm:$0x3]
      %v4057 = vrot.slane %v4049, 6
      %v4058 = vrot.slane %v4057, 4
      %v4059 = vrot.slane %v4050, 6
      %v4060 = vsel %vm717, %v4058, %v4059
      %v4061 = vrot.slane %v4059, 4
      %v4062 = vrot.slane %v4051, 6
      %v4063 = vsel %vm717, %v4061, %v4062
      %v4064 = vrot.slane %v4062, 4
      %v4065 = vrot.slane %v4052, 6
      %v4066 = vsel %vm717, %v4064, %v4065
      %4070 = vst.msk [vmem:[#allocation3 + $0xc] sm:$0xf] %vm417, %v4060
      %4071 = vst.msk [vmem:[#allocation3 + $0x20] sm:$0xf] %vm417, %v4063
      %4072 = vst.msk [vmem:[#allocation3 + $0x34] sm:$0xf] %vm417, %v4066
      %v4073 = vld [vmem:[#allocation2 + $0x4] sm:$0xc]
      %v4074 = vld [vmem:[#allocation2 + $0x8] sm:$0xf]
      %v4075 = vld [vmem:[#allocation2 + $0xc] sm:$0xf]
      %v4076 = vld [vmem:[#allocation2 + $0x10] sm:$0x7]
      %v4078 = vshrl.u32 %v4073, 16
      %v4080 = vrot.slane %v4078, 6
      %v4081 = vshll.u32 %v4073, 16
      %v4083 = vrot.slane %v4081, 7
      %v4084 = vor.u32 %v4080, %v4083
      %v4085 = vrot.slane %v4084, 4
      %v4087 = vshrl.u32 %v4074, 16
      %v4089 = vrot.slane %v4087, 6
      %v4090 = vshll.u32 %v4074, 16
      %v4092 = vrot.slane %v4090, 7
      %v4093 = vor.u32 %v4089, %v4092
      %v4094 = vsel %vm739, %v4085, %v4093
      %v4095 = vrot.slane %v4093, 4
      %v4097 = vshrl.u32 %v4075, 16
      %v4099 = vrot.slane %v4097, 6
      %v4100 = vshll.u32 %v4075, 16
      %v4102 = vrot.slane %v4100, 7
      %v4103 = vor.u32 %v4099, %v4102
      %v4104 = vsel %vm739, %v4095, %v4103
      %v4105 = vrot.slane %v4103, 4
      %v4107 = vshrl.u32 %v4076, 16
      %v4109 = vrot.slane %v4107, 6
      %v4110 = vshll.u32 %v4076, 16
      %v4112 = vrot.slane %v4110, 7
      %v4113 = vor.u32 %v4109, %v4112
      %v4114 = vsel %vm739, %v4105, %v4113
      %4115 = vrot.lane.b32.xlu0 %v4094, 64
      %v4116 = vpop.permute.xlu0 %4115
      %4117 = vrot.lane.b32.xlu0 %v4104, 64
      %v4118 = vpop.permute.xlu0 %4117
      %4119 = vrot.lane.b32.xlu0 %v4114, 64
      %v4120 = vpop.permute.xlu0 %4119
      %4124 = vst.msk [vmem:[#allocation3 + $0xc] sm:$0xf] %vm582, %v4116
      %4125 = vst.msk [vmem:[#allocation3 + $0x20] sm:$0xf] %vm582, %v4118
      %4126 = vst.msk [vmem:[#allocation3 + $0x34] sm:$0xf] %vm582, %v4120
      %v4127 = vld [vmem:[#allocation2 + $0x4] sm:$0x8]
      %v4128 = vld [vmem:[#allocation2 + $0x8] sm:$0xf]
      %v4129 = vld [vmem:[#allocation2 + $0xc] sm:$0xf]
      %v4130 = vld [vmem:[#allocation2 + $0x10] sm:$0x7]
      %v4135 = vrot.slane %v4127, 7
      %v4136 = vrot.slane %v4135, 4
      %v4137 = vrot.slane %v4128, 7
      %v4138 = vsel %vm623, %v4136, %v4137
      %v4139 = vrot.slane %v4137, 4
      %v4140 = vrot.slane %v4129, 7
      %v4141 = vsel %vm623, %v4139, %v4140
      %v4142 = vrot.slane %v4140, 4
      %v4143 = vrot.slane %v4130, 7
      %v4144 = vsel %vm623, %v4142, %v4143
      %4148 = vst.msk [vmem:[#allocation3 + $0x10] sm:$0xf] %vm417, %v4138
      %4149 = vst.msk [vmem:[#allocation3 + $0x24] sm:$0xf] %vm417, %v4141
      %4150 = vst.msk [vmem:[#allocation3 + $0x38] sm:$0xf] %vm417, %v4144
      %v4151 = vld [vmem:[#allocation3] sm:$0xff]
      %v4152 = vld [vmem:[#allocation3 + $0x8] sm:$0xff]
      %v4153 = vld [vmem:[#allocation3 + $0x10] sm:$0xf]
      %v4154 = vld [vmem:[#allocation3 + $0x14] sm:$0xff]
      %v4155 = vld [vmem:[#allocation3 + $0x1c] sm:$0xff]
      %v4156 = vld [vmem:[#allocation3 + $0x24] sm:$0xf]
      %v4157 = vld [vmem:[#allocation3 + $0x28] sm:$0xff]
      %v4158 = vld [vmem:[#allocation3 + $0x30] sm:$0xff]
      %v4159 = vld [vmem:[#allocation3 + $0x38] sm:$0xf]
      %s4160 = scalar_lea.vmem %s4, 1152
      %v4161 = vld [vmem:[%s4160] sm:$0xf]
      %v4162 = vld [vmem:[%s4160 + $0x4] sm:$0xf]
      %v4163 = vld [vmem:[%s4160 + $0x8] sm:$0xf]
      %v4164 = vld [vmem:[%s4160 + $0xc] sm:$0xf]
      %v4165 = vld [vmem:[%s4160 + $0x10] sm:$0xf]
      %v4166 = vld [vmem:[%s4160 + $0x14] sm:$0xf]
      %v4167 = vld [vmem:[%s4160 + $0x18] sm:$0xf]
      %v4168 = vld [vmem:[%s4160 + $0x1c] sm:$0xf]
      %v4169 = vld [vmem:[%s4160 + $0x20] sm:$0xf]
      %v4170 = vld [vmem:[%s4160 + $0x24] sm:$0xf]
      %v4171 = vld [vmem:[%s4160 + $0x28] sm:$0xf]
      %v4172 = vld [vmem:[%s4160 + $0x2c] sm:$0xf]
      %v4173 = vld [vmem:[%s4160 + $0x30] sm:$0xf]
      %v4174 = vld [vmem:[%s4160 + $0x34] sm:$0xf]
      %v4175 = vld [vmem:[%s4160 + $0x38] sm:$0xf]
      %v4176 = vld [vmem:[%s4160 + $0x3c] sm:$0xf]
      %v4177 = vld [vmem:[%s4160 + $0x40] sm:$0xf]
      %v4178 = vld [vmem:[%s4160 + $0x44] sm:$0xf]
      %v4179 = vld [vmem:[%s4160 + $0x48] sm:$0xf]
      %v4180 = vld [vmem:[%s4160 + $0x4c] sm:$0xf]
      %v4181 = vld [vmem:[%s4160 + $0x50] sm:$0xf]
      %v4182 = vld [vmem:[%s4160 + $0x54] sm:$0xf]
      %v4183 = vld [vmem:[%s4160 + $0x58] sm:$0xf]
      %v4184 = vld [vmem:[%s4160 + $0x5c] sm:$0xf]
      %v4185 = vld [vmem:[%s4160 + $0x60] sm:$0xf]
      %v4186 = vld [vmem:[%s4160 + $0x64] sm:$0xf]
      %v4187 = vld [vmem:[%s4160 + $0x68] sm:$0xf]
      %v4188 = vld [vmem:[%s4160 + $0x6c] sm:$0xf]
      %v4189 = vld [vmem:[%s4160 + $0x70] sm:$0xf]
      %v4190 = vld [vmem:[%s4160 + $0x74] sm:$0xf]
      %v4191 = vld [vmem:[%s4160 + $0x78] sm:$0xf]
      %v4192 = vld [vmem:[%s4160 + $0x7c] sm:$0xf]
      %v4193 = vld [vmem:[%s4160 + $0x80] sm:$0xf]
      %v4194 = vld [vmem:[%s4160 + $0x84] sm:$0xf]
      %v4195 = vld [vmem:[%s4160 + $0x88] sm:$0xf]
      %v4196 = vld [vmem:[%s4160 + $0x8c] sm:$0xf]
      %v4197 = vld [vmem:[%s4160 + $0x90] sm:$0xf]
      %v4198 = vld [vmem:[%s4160 + $0x94] sm:$0xf]
      %v4199 = vld [vmem:[%s4160 + $0x98] sm:$0xf]
      %v4200 = vld [vmem:[%s4160 + $0x9c] sm:$0xf]
      %v4201 = vld [vmem:[%s4160 + $0xa0] sm:$0xf]
      %v4202 = vld [vmem:[%s4160 + $0xa4] sm:$0xf]
      %v4203 = vld [vmem:[%s4160 + $0xa8] sm:$0xf]
      %v4204 = vld [vmem:[%s4160 + $0xac] sm:$0xf]
      %v4205 = vld [vmem:[%s4160 + $0xb0] sm:$0xf]
      %v4206 = vld [vmem:[%s4160 + $0xb4] sm:$0xf]
      %v4207 = vld [vmem:[%s4160 + $0xb8] sm:$0xf]
      %v4208 = vld [vmem:[%s4160 + $0xbc] sm:$0xf]
      %v4209 = vld [vmem:[%s4160 + $0xc0] sm:$0xf]
      %v4210 = vld [vmem:[%s4160 + $0xc4] sm:$0xf]
      %v4211 = vld [vmem:[%s4160 + $0xc8] sm:$0xf]
      %v4212 = vld [vmem:[%s4160 + $0xcc] sm:$0xf]
      %v4213 = vld [vmem:[%s4160 + $0xd0] sm:$0xf]
      %v4214 = vld [vmem:[%s4160 + $0xd4] sm:$0xf]
      %v4215 = vld [vmem:[%s4160 + $0xd8] sm:$0xf]
      %v4216 = vld [vmem:[%s4160 + $0xdc] sm:$0xf]
      %v4217 = vld [vmem:[%s4160 + $0xe0] sm:$0xf]
      %v4218 = vld [vmem:[%s4160 + $0xe4] sm:$0xf]
      %v4219 = vld [vmem:[%s4160 + $0xe8] sm:$0xf]
      %v4220 = vld [vmem:[%s4160 + $0xec] sm:$0xf]
      %v4221 = vld [vmem:[%s4160 + $0xf0] sm:$0xf]
      %v4222 = vld [vmem:[%s4160 + $0xf4] sm:$0xf]
      %v4223 = vld [vmem:[%s4160 + $0xf8] sm:$0xf]
      %v4224 = vld [vmem:[%s4160 + $0xfc] sm:$0xf]
      %v4225 = vld [vmem:[%s4160 + $0x100] sm:$0xf]
      %v4226 = vld [vmem:[%s4160 + $0x104] sm:$0xf]
      %v4227 = vld [vmem:[%s4160 + $0x108] sm:$0xf]
      %v4228 = vld [vmem:[%s4160 + $0x10c] sm:$0xf]
      %v4229 = vld [vmem:[%s4160 + $0x110] sm:$0xf]
      %v4230 = vld [vmem:[%s4160 + $0x114] sm:$0xf]
      %v4231 = vld [vmem:[%s4160 + $0x118] sm:$0xf]
      %v4232 = vld [vmem:[%s4160 + $0x11c] sm:$0xf]
      %s4233 = scalar_lea.vmem %s5, 4
      %v4234 = vld [vmem:[%s4233] sm:$0x1]
      %v4236 = vlaneseq
      %v4237 = vshrl.u32 %v4236, 7
      %v4238 = vsub.s32 0, %v4237
      %v4239 = vrot.slane %v4234, %v4238
      %v4250 = vunpack.c.l.b16 %v4151
      %v4251 = vunpack.c.h.b16 %v4151
      %v4252 = vunpack.c.l.b16 %v4152
      %v4253 = vunpack.c.h.b16 %v4152
      %v4254 = vunpack.c.l.b16 %v4153
      %v4255 = vunpack.c.l.b16 %v4154
      %v4256 = vunpack.c.h.b16 %v4154
      %v4257 = vunpack.c.l.b16 %v4155
      %v4258 = vunpack.c.h.b16 %v4155
      %v4259 = vunpack.c.l.b16 %v4156
      %v4260 = vunpack.c.l.b16 %v4157
      %v4261 = vunpack.c.h.b16 %v4157
      %v4262 = vunpack.c.l.b16 %v4158
      %v4263 = vunpack.c.h.b16 %v4158
      %v4264 = vunpack.c.l.b16 %v4159
      %v4265 = vpack.c.b16 %v4255, %v4250
      %v4266 = vpack.c.b16 %v4256, %v4251
      %v4267 = vpack.c.b16 %v4257, %v4252
      %v4268 = vpack.c.b16 %v4258, %v4253
      %v4269 = vpack.c.b16 %v4259, %v4254
      %v4270 = vpack.c.b16 %v4260, %v4260
      %v4271 = vpack.c.b16 %v4261, %v4261
      %v4272 = vpack.c.b16 %v4262, %v4262
      %v4273 = vpack.c.b16 %v4263, %v4263
      %v4274 = vpack.c.b16 %v4264, %v4264
      %v4355 = vunpack.c.l.b16 %v4161
      %v4356 = vunpack.c.l.b16 %v4162
      %v4357 = vunpack.c.l.b16 %v4163
      %v4358 = vunpack.c.l.b16 %v4164
      %v4359 = vunpack.c.l.b16 %v4165
      %v4360 = vunpack.c.l.b16 %v4166
      %v4361 = vunpack.c.l.b16 %v4167
      %v4362 = vunpack.c.l.b16 %v4168
      %v4363 = vunpack.c.l.b16 %v4169
      %v4364 = vunpack.c.l.b16 %v4170
      %v4365 = vunpack.c.l.b16 %v4171
      %v4366 = vunpack.c.l.b16 %v4172
      %v4367 = vunpack.c.l.b16 %v4173
      %v4368 = vunpack.c.l.b16 %v4174
      %v4369 = vunpack.c.l.b16 %v4175
      %v4370 = vunpack.c.l.b16 %v4176
      %v4371 = vunpack.c.l.b16 %v4177
      %v4372 = vunpack.c.l.b16 %v4178
      %v4373 = vunpack.c.l.b16 %v4179
      %v4374 = vunpack.c.l.b16 %v4180
      %v4375 = vunpack.c.l.b16 %v4181
      %v4376 = vunpack.c.l.b16 %v4182
      %v4377 = vunpack.c.l.b16 %v4183
      %v4378 = vunpack.c.l.b16 %v4184
      %v4379 = vunpack.c.l.b16 %v4185
      %v4380 = vunpack.c.l.b16 %v4186
      %v4381 = vunpack.c.l.b16 %v4187
      %v4382 = vunpack.c.l.b16 %v4188
      %v4383 = vunpack.c.l.b16 %v4189
      %v4384 = vunpack.c.l.b16 %v4190
      %v4385 = vunpack.c.l.b16 %v4191
      %v4386 = vunpack.c.l.b16 %v4192
      %v4387 = vunpack.c.l.b16 %v4193
      %v4388 = vunpack.c.l.b16 %v4194
      %v4389 = vunpack.c.l.b16 %v4195
      %v4390 = vunpack.c.l.b16 %v4196
      %v4391 = vunpack.c.l.b16 %v4197
      %v4392 = vunpack.c.l.b16 %v4198
      %v4393 = vunpack.c.l.b16 %v4199
      %v4394 = vunpack.c.l.b16 %v4200
      %v4395 = vunpack.c.l.b16 %v4201
      %v4396 = vunpack.c.l.b16 %v4202
      %v4397 = vunpack.c.l.b16 %v4203
      %v4398 = vunpack.c.l.b16 %v4204
      %v4399 = vunpack.c.l.b16 %v4205
      %v4400 = vunpack.c.l.b16 %v4206
      %v4401 = vunpack.c.l.b16 %v4207
      %v4402 = vunpack.c.l.b16 %v4208
      %v4403 = vunpack.c.l.b16 %v4209
      %v4404 = vunpack.c.l.b16 %v4210
      %v4405 = vunpack.c.l.b16 %v4211
      %v4406 = vunpack.c.l.b16 %v4212
      %v4407 = vunpack.c.l.b16 %v4213
      %v4408 = vunpack.c.l.b16 %v4214
      %v4409 = vunpack.c.l.b16 %v4215
      %v4410 = vunpack.c.l.b16 %v4216
      %v4411 = vunpack.c.l.b16 %v4217
      %v4412 = vunpack.c.l.b16 %v4218
      %v4413 = vunpack.c.l.b16 %v4219
      %v4414 = vunpack.c.l.b16 %v4220
      %v4415 = vunpack.c.l.b16 %v4221
      %v4416 = vunpack.c.l.b16 %v4222
      %v4417 = vunpack.c.l.b16 %v4223
      %v4418 = vunpack.c.l.b16 %v4224
      %v4419 = vunpack.c.l.b16 %v4225
      %v4420 = vunpack.c.l.b16 %v4226
      %v4421 = vunpack.c.l.b16 %v4227
      %v4422 = vunpack.c.l.b16 %v4228
      %v4423 = vunpack.c.l.b16 %v4229
      %v4424 = vunpack.c.l.b16 %v4230
      %v4425 = vunpack.c.l.b16 %v4231
      %v4426 = vunpack.c.l.b16 %v4232
      %v4427 = vpack.c.b16 %v4356, %v4355
      %v4428 = vpack.c.b16 %v4358, %v4357
      %v4429 = vpack.c.b16 %v4360, %v4359
      %v4430 = vpack.c.b16 %v4362, %v4361
      %v4431 = vpack.c.b16 %v4364, %v4363
      %v4432 = vpack.c.b16 %v4366, %v4365
      %v4433 = vpack.c.b16 %v4368, %v4367
      %v4434 = vpack.c.b16 %v4370, %v4369
      %v4435 = vpack.c.b16 %v4372, %v4371
      %v4436 = vpack.c.b16 %v4374, %v4373
      %v4437 = vpack.c.b16 %v4376, %v4375
      %v4438 = vpack.c.b16 %v4378, %v4377
      %v4439 = vpack.c.b16 %v4380, %v4379
      %v4440 = vpack.c.b16 %v4382, %v4381
      %v4441 = vpack.c.b16 %v4384, %v4383
      %v4442 = vpack.c.b16 %v4386, %v4385
      %v4443 = vpack.c.b16 %v4388, %v4387
      %v4444 = vpack.c.b16 %v4390, %v4389
      %v4445 = vpack.c.b16 %v4392, %v4391
      %v4446 = vpack.c.b16 %v4394, %v4393
      %v4447 = vpack.c.b16 %v4396, %v4395
      %v4448 = vpack.c.b16 %v4398, %v4397
      %v4449 = vpack.c.b16 %v4400, %v4399
      %v4450 = vpack.c.b16 %v4402, %v4401
      %v4451 = vpack.c.b16 %v4404, %v4403
      %v4452 = vpack.c.b16 %v4406, %v4405
      %v4453 = vpack.c.b16 %v4408, %v4407
      %v4454 = vpack.c.b16 %v4410, %v4409
      %v4455 = vpack.c.b16 %v4412, %v4411
      %v4456 = vpack.c.b16 %v4414, %v4413
      %v4457 = vpack.c.b16 %v4416, %v4415
      %v4458 = vpack.c.b16 %v4418, %v4417
      %v4459 = vpack.c.b16 %v4420, %v4419
      %v4460 = vpack.c.b16 %v4422, %v4421
      %v4461 = vpack.c.b16 %v4424, %v4423
      %v4462 = vpack.c.b16 %v4426, %v4425
      %v4500 = vsel %vm424, %v4269, 0
      %v4503 = vsel %vm424, %v4274, 0
      %4505 = vmatprep.subr.bf16.mxu0 0
      %4506 = vmatpush1.bf16.msra.mxu0 %v4427
      %4507 = vmatprep.subr.bf16.mxu0 0
      %4508 = vmatpush1.bf16.msra.mxu0 %v4428
      %4509 = vmatprep.subr.bf16.mxu0 0
      %4510 = vmatpush1.bf16.msra.mxu0 %v4429
      %4511 = vmatprep.subr.bf16.mxu0 0
      %4512 = vmatpush1.bf16.msra.mxu0 %v4430
      %4513 = vmatprep.subr.bf16.mxu0 0
      %4514 = vmatpush1.bf16.msra.mxu0 %v4431
      %4515 = vmatprep.subr.bf16.mxu0 0
      %4516 = vmatpush1.bf16.msra.mxu0 %v4432
      %4517 = vmatprep.subr.bf16.mxu0 0
      %4518 = vmatpush1.bf16.msra.mxu0 %v4433
      %4519 = vmatprep.subr.bf16.mxu0 0
      %4520 = vmatpush1.bf16.msra.mxu0 %v4434
      %4521 = vmatprep.subr.bf16.mxu0 0
      %4522 = vmatpush1.bf16.msra.mxu0 %v4435
      %4523 = vmatprep.subr.bf16.mxu0 0
      %4524 = vmatpush1.bf16.msra.mxu0 %v4436
      %4525 = vmatprep.subr.bf16.mxu0 0
      %4526 = vmatpush1.bf16.msra.mxu0 %v4437
      %4527 = vmatprep.subr.bf16.mxu0 0
      %4528 = vmatpush1.bf16.msra.mxu0 %v4438
      %4529 = vmatprep.subr.bf16.mxu0 0
      %4530 = vmatpush1.bf16.msra.mxu0 %v4439
      %4531 = vmatprep.subr.bf16.mxu0 0
      %4532 = vmatpush1.bf16.msra.mxu0 %v4440
      %4533 = vmatprep.subr.bf16.mxu0 0
      %4534 = vmatpush1.bf16.msra.mxu0 %v4441
      %4535 = vmatprep.subr.bf16.mxu0 0
      %4536 = vmatpush1.bf16.msra.mxu0 %v4442
      %4537 = vmatprep.mubr.bf16.mxu0 %v4266
      %4538 = vmatmul.mubr.bf16.gmra.mrb[0].mxu0 %v4265
      %v4539 = vpop.f32.mrb[0].mxu0
      %v4540 = vadd.f32 %v4239, %v4539
      %v4541 = vpop.f32.mrb[0].mxu0
      %v4542 = vpop.f32.mrb[0].mxu0
      %v4543 = vadd.f32 %v4239, %v4542
      %v4544 = vpop.f32.mrb[0].mxu0
      %4545 = vmatprep.mubr.bf16.mxu0 %v4271
      %4546 = vmatmul.mubr.bf16.gmra.mrb[0].mxu0 %v4270
      %v4547 = vpop.f32.mrb[0].mxu0
      %v4548 = vadd.f32 %v4239, %v4547
      %v4549 = vpop.f32.mrb[0].mxu0
      %v4550 = vpop.f32.mrb[0].mxu0
      %v4551 = vpop.f32.mrb[0].mxu0
      %4552 = vdwg.mxu0
      %4553 = vmatprep.subr.bf16.mxu0 0
      %4554 = vmatpush1.bf16.msra.mxu0 %v4443
      %4555 = vmatprep.subr.bf16.mxu0 0
      %4556 = vmatpush1.bf16.msra.mxu0 %v4444
      %4557 = vmatprep.subr.bf16.mxu0 0
      %4558 = vmatpush1.bf16.msra.mxu0 %v4445
      %4559 = vmatprep.subr.bf16.mxu0 0
      %4560 = vmatpush1.bf16.msra.mxu0 %v4446
      %4561 = vmatprep.subr.bf16.mxu0 0
      %4562 = vmatpush1.bf16.msra.mxu0 %v4447
      %4563 = vmatprep.subr.bf16.mxu0 0
      %4564 = vmatpush1.bf16.msra.mxu0 %v4448
      %4565 = vmatprep.subr.bf16.mxu0 0
      %4566 = vmatpush1.bf16.msra.mxu0 %v4449
      %4567 = vmatprep.subr.bf16.mxu0 0
      %4568 = vmatpush1.bf16.msra.mxu0 %v4450
      %4569 = vmatprep.subr.bf16.mxu0 0
      %4570 = vmatpush1.bf16.msra.mxu0 %v4451
      %4571 = vmatprep.subr.bf16.mxu0 0
      %4572 = vmatpush1.bf16.msra.mxu0 %v4452
      %4573 = vmatprep.subr.bf16.mxu0 0
      %4574 = vmatpush1.bf16.msra.mxu0 %v4453
      %4575 = vmatprep.subr.bf16.mxu0 0
      %4576 = vmatpush1.bf16.msra.mxu0 %v4454
      %4577 = vmatprep.subr.bf16.mxu0 0
      %4578 = vmatpush1.bf16.msra.mxu0 %v4455
      %4579 = vmatprep.subr.bf16.mxu0 0
      %4580 = vmatpush1.bf16.msra.mxu0 %v4456
      %4581 = vmatprep.subr.bf16.mxu0 0
      %4582 = vmatpush1.bf16.msra.mxu0 %v4457
      %4583 = vmatprep.subr.bf16.mxu0 0
      %4584 = vmatpush1.bf16.msra.mxu0 %v4458
      %4585 = vmatprep.mubr.bf16.mxu0 %v4268
      %4586 = vmatmul.mubr.bf16.gmra.mrb[0].mxu0 %v4267
      %v4587 = vpop.f32.mrb[0].mxu0
      %v4588 = vadd.f32 %v4540, %v4587
      %v4589 = vpop.f32.mrb[0].mxu0
      %v4590 = vpop.f32.mrb[0].mxu0
      %v4591 = vadd.f32 %v4543, %v4590
      %v4592 = vpop.f32.mrb[0].mxu0
      %4593 = vmatprep.mubr.bf16.mxu0 %v4273
      %4594 = vmatmul.mubr.bf16.gmra.mrb[0].mxu0 %v4272
      %v4595 = vpop.f32.mrb[0].mxu0
      %v4596 = vadd.f32 %v4548, %v4595
      %v4597 = vpop.f32.mrb[0].mxu0
      %v4598 = vpop.f32.mrb[0].mxu0
      %v4599 = vpop.f32.mrb[0].mxu0
      %4600 = vdwg.mxu0
      %4601 = vmatprep.subr.bf16.mxu0 0
      %4602 = vmatpush1.bf16.msra.mxu0 %v4459
      %4603 = vmatprep.subr.bf16.mxu0 0
      %4604 = vmatpush1.bf16.msra.mxu0 %v4460
      %4605 = vmatprep.subr.bf16.mxu0 0
      %4606 = vmatpush1.bf16.msra.mxu0 %v4461
      %4607 = vmatprep.subr.bf16.mxu0 0
      %4608 = vmatpush1.bf16.msra.mxu0 %v4462
      %4609 = vmatprep.subr.bf16.mxu0 0
      %4610 = vmatpush1.bf16.msra.mxu0 0
      %4611 = vmatprep.subr.bf16.mxu0 0
      %4612 = vmatpush1.bf16.msra.mxu0 0
      %4613 = vmatprep.subr.bf16.mxu0 0
      %4614 = vmatpush1.bf16.msra.mxu0 0
      %4615 = vmatprep.subr.bf16.mxu0 0
      %4616 = vmatpush1.bf16.msra.mxu0 0
      %4617 = vmatprep.subr.bf16.mxu0 0
      %4618 = vmatpush1.bf16.msra.mxu0 0
      %4619 = vmatprep.subr.bf16.mxu0 0
      %4620 = vmatpush1.bf16.msra.mxu0 0
      %4621 = vmatprep.subr.bf16.mxu0 0
      %4622 = vmatpush1.bf16.msra.mxu0 0
      %4623 = vmatprep.subr.bf16.mxu0 0
      %4624 = vmatpush1.bf16.msra.mxu0 0
      %4625 = vmatprep.subr.bf16.mxu0 0
      %4626 = vmatpush1.bf16.msra.mxu0 0
      %4627 = vmatprep.subr.bf16.mxu0 0
      %4628 = vmatpush1.bf16.msra.mxu0 0
      %4629 = vmatprep.subr.bf16.mxu0 0
      %4630 = vmatpush1.bf16.msra.mxu0 0
      %4631 = vmatprep.subr.bf16.mxu0 0
      %4632 = vmatpush1.bf16.msra.mxu0 0
      %4633 = vmatprep.mubr.bf16.mxu0 0
      %4634 = vmatmul.mubr.bf16.gmra.mrb[0].mxu0 %v4500
      %v4635 = vpop.f32.mrb[0].mxu0
      %v4636 = vadd.f32 %v4588, %v4635
      %v4637 = vpop.f32.mrb[0].mxu0
      %v4638 = vpop.f32.mrb[0].mxu0
      %v4639 = vadd.f32 %v4591, %v4638
      %v4640 = vpop.f32.mrb[0].mxu0
      %4641 = vmatprep.mubr.bf16.mxu0 0
      %4642 = vmatmul.mubr.bf16.gmra.mrb[0].mxu0 %v4503
      %v4643 = vpop.f32.mrb[0].mxu0
      %v4644 = vadd.f32 %v4596, %v4643
      %v4645 = vpop.f32.mrb[0].mxu0
      %v4646 = vpop.f32.mrb[0].mxu0
      %v4647 = vpop.f32.mrb[0].mxu0
      %4648 = vdwg.mxu0
      %v4649 = vmax.f32 %v4636, 0.0
      %v4650 = vmax.f32 %v4639, 0.0
      %v4651 = vmax.f32 %v4644, 0.0
      %v4652 = vmul.f32 %v4649, %v1316
      %v4653 = vmul.f32 %v4650, %v1321
      %v4654 = vmul.f32 %v4651, %v1326
      %v4655 = vpack.c.bf16 %v4653, %v4652
      %v4656 = vpack.c.bf16 %v4654, %v4654
      %v4659 = vunpack.c.l.b16 %v4655
      %v4660 = vunpack.c.h.b16 %v4655
      %v4661 = vunpack.c.l.b16 %v4656
      %v4662 = vpack.c.b16 %v4659, %v4659
      %v4663 = vpack.c.b16 %v4660, %v4660
      %v4664 = vpack.c.b16 %v4661, %v4661
      %v4666 = vshll.u32 %v4662, 16
      %v4668 = vrot.slane %v4666, 5
      %v4669 = vshrl.u32 %v4662, 16
      %v4671 = vrot.slane %v4669, 4
      %v4672 = vor.u32 %v4671, %v4668
      %v4673 = vrot.slane %v4672, 4
      %v4675 = vshll.u32 %v4663, 16
      %v4677 = vrot.slane %v4675, 5
      %v4678 = vsel %vm538, %v4673, %v4677
      %v4679 = vshrl.u32 %v4663, 16
      %v4681 = vrot.slane %v4679, 4
      %v4682 = vor.u32 %v4681, %v4677
      %v4683 = vrot.slane %v4682, 4
      %v4685 = vshll.u32 %v4664, 16
      %v4687 = vrot.slane %v4685, 5
      %v4688 = vsel %vm538, %v4683, %v4687
      %v4689 = vshrl.u32 %v4664, 16
      %v4691 = vrot.slane %v4689, 4
      %v4692 = vor.u32 %v4691, %v4687
      %v4693 = vrot.slane %v4692, 4
      %v4698 = vld [vmem:[#allocation2] sm:$0x8]
      %v4699 = vsel %vm446, %v4668, %v4698
      %4700 = vst [vmem:[#allocation2] sm:$0x8] %v4699
      %4701 = vst.msk [vmem:[#allocation2 + $0x4] sm:$0xf] %vm417, %v4678
      %4702 = vst.msk [vmem:[#allocation2 + $0x8] sm:$0xf] %vm417, %v4688
      %v4703 = vld [vmem:[#allocation2 + $0xc] sm:$0xf]
      %v4704 = vsel %vm1380, %v4693, %v4703
      %4705 = vst [vmem:[#allocation2 + $0xc] sm:$0xf] %v4704
      %v4706 = vld [vmem:[#allocation2] sm:$0xf]
      %v4707 = vld [vmem:[#allocation2 + $0x4] sm:$0xf]
      %v4708 = vld [vmem:[#allocation2 + $0x8] sm:$0xf]
      %4709 = vst.msk [vmem:[#allocation3] sm:$0xf] %vm417, %v4706
      %4710 = vst.msk [vmem:[#allocation3 + $0x14] sm:$0xf] %vm417, %v4707
      %4711 = vst.msk [vmem:[#allocation3 + $0x28] sm:$0xf] %vm417, %v4708
      %v4712 = vld [vmem:[#allocation2] sm:$0xf]
      %v4713 = vld [vmem:[#allocation2 + $0x4] sm:$0xf]
      %v4714 = vld [vmem:[#allocation2 + $0x8] sm:$0xf]
      %v4715 = vld [vmem:[#allocation2 + $0xc] sm:$0x1]
      %v4717 = vshrl.u32 %v4712, 16
      %v4719 = vrot.slane %v4717, 4
      %v4720 = vshll.u32 %v4712, 16
      %v4722 = vrot.slane %v4720, 5
      %v4723 = vor.u32 %v4719, %v4722
      %v4724 = vrot.slane %v4723, 4
      %v4726 = vshll.u32 %v4713, 16
      %v4728 = vrot.slane %v4726, 5
      %v4729 = vsel %vm538, %v4724, %v4728
      %v4730 = vshrl.u32 %v4713, 16
      %v4732 = vrot.slane %v4730, 4
      %v4733 = vor.u32 %v4732, %v4728
      %v4734 = vrot.slane %v4733, 4
      %v4736 = vshll.u32 %v4714, 16
      %v4738 = vrot.slane %v4736, 5
      %v4739 = vsel %vm538, %v4734, %v4738
      %v4740 = vshrl.u32 %v4714, 16
      %v4742 = vrot.slane %v4740, 4
      %v4743 = vor.u32 %v4742, %v4738
      %v4744 = vrot.slane %v4743, 4
      %v4746 = vshll.u32 %v4715, 16
      %v4748 = vrot.slane %v4746, 5
      %v4749 = vsel %vm538, %v4744, %v4748
      %4750 = vrot.lane.b32.xlu0 %v4729, 64
      %v4751 = vpop.permute.xlu0 %4750
      %4752 = vrot.lane.b32.xlu0 %v4739, 64
      %v4753 = vpop.permute.xlu0 %4752
      %4754 = vrot.lane.b32.xlu0 %v4749, 64
      %v4755 = vpop.permute.xlu0 %4754
      %4759 = vst.msk [vmem:[#allocation3] sm:$0xf] %vm582, %v4751
      %4760 = vst.msk [vmem:[#allocation3 + $0x14] sm:$0xf] %vm582, %v4753
      %4761 = vst.msk [vmem:[#allocation3 + $0x28] sm:$0xf] %vm582, %v4755
      %v4762 = vld [vmem:[#allocation2] sm:$0xe]
      %v4763 = vld [vmem:[#allocation2 + $0x4] sm:$0xf]
      %v4764 = vld [vmem:[#allocation2 + $0x8] sm:$0xf]
      %v4765 = vld [vmem:[#allocation2 + $0xc] sm:$0x1]
      %v4770 = vrot.slane %v4762, 5
      %v4771 = vrot.slane %v4770, 4
      %v4772 = vrot.slane %v4763, 5
      %v4773 = vsel %vm596, %v4771, %v4772
      %v4774 = vrot.slane %v4772, 4
      %v4775 = vrot.slane %v4764, 5
      %v4776 = vsel %vm596, %v4774, %v4775
      %v4777 = vrot.slane %v4775, 4
      %v4778 = vrot.slane %v4765, 5
      %v4779 = vsel %vm596, %v4777, %v4778
      %4783 = vst.msk [vmem:[#allocation3 + $0x4] sm:$0xf] %vm417, %v4773
      %4784 = vst.msk [vmem:[#allocation3 + $0x18] sm:$0xf] %vm417, %v4776
      %4785 = vst.msk [vmem:[#allocation3 + $0x2c] sm:$0xf] %vm417, %v4779
      %v4786 = vld [vmem:[#allocation2] sm:$0x8]
      %v4787 = vld [vmem:[#allocation2 + $0x4] sm:$0xf]
      %v4788 = vld [vmem:[#allocation2 + $0x8] sm:$0xf]
      %v4789 = vld [vmem:[#allocation2 + $0xc] sm:$0x7]
      %v4794 = vrot.slane %v4786, 7
      %v4795 = vrot.slane %v4794, 4
      %v4796 = vrot.slane %v4787, 7
      %v4797 = vsel %vm623, %v4795, %v4796
      %v4798 = vrot.slane %v4796, 4
      %v4799 = vrot.slane %v4788, 7
      %v4800 = vsel %vm623, %v4798, %v4799
      %v4801 = vrot.slane %v4799, 4
      %v4802 = vrot.slane %v4789, 7
      %v4803 = vsel %vm623, %v4801, %v4802
      %4804 = vrot.lane.b32.xlu0 %v4797, 64
      %v4805 = vpop.permute.xlu0 %4804
      %4806 = vrot.lane.b32.xlu0 %v4800, 64
      %v4807 = vpop.permute.xlu0 %4806
      %4808 = vrot.lane.b32.xlu0 %v4803, 64
      %v4809 = vpop.permute.xlu0 %4808
      %4813 = vst.msk [vmem:[#allocation3 + $0x4] sm:$0xf] %vm582, %v4805
      %4814 = vst.msk [vmem:[#allocation3 + $0x18] sm:$0xf] %vm582, %v4807
      %4815 = vst.msk [vmem:[#allocation3 + $0x2c] sm:$0xf] %vm582, %v4809
      %v4816 = vld [vmem:[#allocation2] sm:$0x8]
      %v4817 = vld [vmem:[#allocation2 + $0x4] sm:$0xf]
      %v4818 = vld [vmem:[#allocation2 + $0x8] sm:$0xf]
      %v4819 = vld [vmem:[#allocation2 + $0xc] sm:$0xf]
      %v4821 = vshrl.u32 %v4816, 16
      %v4823 = vrot.slane %v4821, 7
      %v4824 = vrot.slane %v4823, 4
      %v4826 = vshrl.u32 %v4817, 16
      %v4828 = vrot.slane %v4826, 7
      %v4829 = vshll.u32 %v4817, 16
      %v4831 = vor.u32 %v4828, %v4829
      %v4832 = vsel %vm651, %v4824, %v4831
      %v4833 = vrot.slane %v4828, 4
      %v4835 = vshrl.u32 %v4818, 16
      %v4837 = vrot.slane %v4835, 7
      %v4838 = vshll.u32 %v4818, 16
      %v4840 = vor.u32 %v4837, %v4838
      %v4841 = vsel %vm651, %v4833, %v4840
      %v4842 = vrot.slane %v4837, 4
      %v4844 = vshrl.u32 %v4819, 16
      %v4846 = vrot.slane %v4844, 7
      %v4847 = vshll.u32 %v4819, 16
      %v4849 = vor.u32 %v4846, %v4847
      %v4850 = vsel %vm651, %v4842, %v4849
      %4854 = vst.msk [vmem:[#allocation3 + $0x8] sm:$0xf] %vm417, %v4832
      %4855 = vst.msk [vmem:[#allocation3 + $0x1c] sm:$0xf] %vm417, %v4841
      %4856 = vst.msk [vmem:[#allocation3 + $0x30] sm:$0xf] %vm417, %v4850
      %v4857 = vld [vmem:[#allocation2 + $0x4] sm:$0xf]
      %v4858 = vld [vmem:[#allocation2 + $0x8] sm:$0xf]
      %v4859 = vld [vmem:[#allocation2 + $0xc] sm:$0xf]
      %4863 = vrot.lane.b32.xlu0 %v4857, 64
      %v4864 = vpop.permute.xlu0 %4863
      %4865 = vrot.lane.b32.xlu0 %v4858, 64
      %v4866 = vpop.permute.xlu0 %4865
      %4867 = vrot.lane.b32.xlu0 %v4859, 64
      %v4868 = vpop.permute.xlu0 %4867
      %4872 = vst.msk [vmem:[#allocation3 + $0x8] sm:$0xf] %vm582, %v4864
      %4873 = vst.msk [vmem:[#allocation3 + $0x1c] sm:$0xf] %vm582, %v4866
      %4874 = vst.msk [vmem:[#allocation3 + $0x30] sm:$0xf] %vm582, %v4868
      %v4875 = vld [vmem:[#allocation2 + $0x4] sm:$0xc]
      %v4876 = vld [vmem:[#allocation2 + $0x8] sm:$0xf]
      %v4877 = vld [vmem:[#allocation2 + $0xc] sm:$0xf]
      %v4878 = vld [vmem:[#allocation2 + $0x10] sm:$0x3]
      %v4883 = vrot.slane %v4875, 6
      %v4884 = vrot.slane %v4883, 4
      %v4885 = vrot.slane %v4876, 6
      %v4886 = vsel %vm717, %v4884, %v4885
      %v4887 = vrot.slane %v4885, 4
      %v4888 = vrot.slane %v4877, 6
      %v4889 = vsel %vm717, %v4887, %v4888
      %v4890 = vrot.slane %v4888, 4
      %v4891 = vrot.slane %v4878, 6
      %v4892 = vsel %vm717, %v4890, %v4891
      %4896 = vst.msk [vmem:[#allocation3 + $0xc] sm:$0xf] %vm417, %v4886
      %4897 = vst.msk [vmem:[#allocation3 + $0x20] sm:$0xf] %vm417, %v4889
      %4898 = vst.msk [vmem:[#allocation3 + $0x34] sm:$0xf] %vm417, %v4892
      %v4899 = vld [vmem:[#allocation2 + $0x4] sm:$0xc]
      %v4900 = vld [vmem:[#allocation2 + $0x8] sm:$0xf]
      %v4901 = vld [vmem:[#allocation2 + $0xc] sm:$0xf]
      %v4902 = vld [vmem:[#allocation2 + $0x10] sm:$0x7]
      %v4904 = vshrl.u32 %v4899, 16
      %v4906 = vrot.slane %v4904, 6
      %v4907 = vshll.u32 %v4899, 16
      %v4909 = vrot.slane %v4907, 7
      %v4910 = vor.u32 %v4906, %v4909
      %v4911 = vrot.slane %v4910, 4
      %v4913 = vshrl.u32 %v4900, 16
      %v4915 = vrot.slane %v4913, 6
      %v4916 = vshll.u32 %v4900, 16
      %v4918 = vrot.slane %v4916, 7
      %v4919 = vor.u32 %v4915, %v4918
      %v4920 = vsel %vm739, %v4911, %v4919
      %v4921 = vrot.slane %v4919, 4
      %v4923 = vshrl.u32 %v4901, 16
      %v4925 = vrot.slane %v4923, 6
      %v4926 = vshll.u32 %v4901, 16
      %v4928 = vrot.slane %v4926, 7
      %v4929 = vor.u32 %v4925, %v4928
      %v4930 = vsel %vm739, %v4921, %v4929
      %v4931 = vrot.slane %v4929, 4
      %v4933 = vshrl.u32 %v4902, 16
      %v4935 = vrot.slane %v4933, 6
      %v4936 = vshll.u32 %v4902, 16
      %v4938 = vrot.slane %v4936, 7
      %v4939 = vor.u32 %v4935, %v4938
      %v4940 = vsel %vm739, %v4931, %v4939
      %4941 = vrot.lane.b32.xlu0 %v4920, 64
      %v4942 = vpop.permute.xlu0 %4941
      %4943 = vrot.lane.b32.xlu0 %v4930, 64
      %v4944 = vpop.permute.xlu0 %4943
      %4945 = vrot.lane.b32.xlu0 %v4940, 64
      %v4946 = vpop.permute.xlu0 %4945
      %4950 = vst.msk [vmem:[#allocation3 + $0xc] sm:$0xf] %vm582, %v4942
      %4951 = vst.msk [vmem:[#allocation3 + $0x20] sm:$0xf] %vm582, %v4944
      %4952 = vst.msk [vmem:[#allocation3 + $0x34] sm:$0xf] %vm582, %v4946
      %v4953 = vld [vmem:[#allocation2 + $0x4] sm:$0x8]
      %v4954 = vld [vmem:[#allocation2 + $0x8] sm:$0xf]
      %v4955 = vld [vmem:[#allocation2 + $0xc] sm:$0xf]
      %v4956 = vld [vmem:[#allocation2 + $0x10] sm:$0x7]
      %v4961 = vrot.slane %v4953, 7
      %v4962 = vrot.slane %v4961, 4
      %v4963 = vrot.slane %v4954, 7
      %v4964 = vsel %vm623, %v4962, %v4963
      %v4965 = vrot.slane %v4963, 4
      %v4966 = vrot.slane %v4955, 7
      %v4967 = vsel %vm623, %v4965, %v4966
      %v4968 = vrot.slane %v4966, 4
      %v4969 = vrot.slane %v4956, 7
      %v4970 = vsel %vm623, %v4968, %v4969
      %4974 = vst.msk [vmem:[#allocation3 + $0x10] sm:$0xf] %vm417, %v4964
      %4975 = vst.msk [vmem:[#allocation3 + $0x24] sm:$0xf] %vm417, %v4967
      %4976 = vst.msk [vmem:[#allocation3 + $0x38] sm:$0xf] %vm417, %v4970
      %v4977 = vld [vmem:[#allocation3] sm:$0xff]
      %v4978 = vld [vmem:[#allocation3 + $0x8] sm:$0xff]
      %v4979 = vld [vmem:[#allocation3 + $0x10] sm:$0xf]
      %v4980 = vld [vmem:[#allocation3 + $0x14] sm:$0xff]
      %v4981 = vld [vmem:[#allocation3 + $0x1c] sm:$0xff]
      %v4982 = vld [vmem:[#allocation3 + $0x24] sm:$0xf]
      %v4983 = vld [vmem:[#allocation3 + $0x28] sm:$0xff]
      %v4984 = vld [vmem:[#allocation3 + $0x30] sm:$0xff]
      %v4985 = vld [vmem:[#allocation3 + $0x38] sm:$0xf]
      %s4986 = scalar_lea.vmem %s4, 1440
      %v4987 = vld [vmem:[%s4986] sm:$0xf]
      %v4988 = vld [vmem:[%s4986 + $0x4] sm:$0xf]
      %v4989 = vld [vmem:[%s4986 + $0x8] sm:$0xf]
      %v4990 = vld [vmem:[%s4986 + $0xc] sm:$0xf]
      %v4991 = vld [vmem:[%s4986 + $0x10] sm:$0xf]
      %v4992 = vld [vmem:[%s4986 + $0x14] sm:$0xf]
      %v4993 = vld [vmem:[%s4986 + $0x18] sm:$0xf]
      %v4994 = vld [vmem:[%s4986 + $0x1c] sm:$0xf]
      %v4995 = vld [vmem:[%s4986 + $0x20] sm:$0xf]
      %v4996 = vld [vmem:[%s4986 + $0x24] sm:$0xf]
      %v4997 = vld [vmem:[%s4986 + $0x28] sm:$0xf]
      %v4998 = vld [vmem:[%s4986 + $0x2c] sm:$0xf]
      %v4999 = vld [vmem:[%s4986 + $0x30] sm:$0xf]
      %v5000 = vld [vmem:[%s4986 + $0x34] sm:$0xf]
      %v5001 = vld [vmem:[%s4986 + $0x38] sm:$0xf]
      %v5002 = vld [vmem:[%s4986 + $0x3c] sm:$0xf]
      %v5003 = vld [vmem:[%s4986 + $0x40] sm:$0xf]
      %v5004 = vld [vmem:[%s4986 + $0x44] sm:$0xf]
      %v5005 = vld [vmem:[%s4986 + $0x48] sm:$0xf]
      %v5006 = vld [vmem:[%s4986 + $0x4c] sm:$0xf]
      %v5007 = vld [vmem:[%s4986 + $0x50] sm:$0xf]
      %v5008 = vld [vmem:[%s4986 + $0x54] sm:$0xf]
      %v5009 = vld [vmem:[%s4986 + $0x58] sm:$0xf]
      %v5010 = vld [vmem:[%s4986 + $0x5c] sm:$0xf]
      %v5011 = vld [vmem:[%s4986 + $0x60] sm:$0xf]
      %v5012 = vld [vmem:[%s4986 + $0x64] sm:$0xf]
      %v5013 = vld [vmem:[%s4986 + $0x68] sm:$0xf]
      %v5014 = vld [vmem:[%s4986 + $0x6c] sm:$0xf]
      %v5015 = vld [vmem:[%s4986 + $0x70] sm:$0xf]
      %v5016 = vld [vmem:[%s4986 + $0x74] sm:$0xf]
      %v5017 = vld [vmem:[%s4986 + $0x78] sm:$0xf]
      %v5018 = vld [vmem:[%s4986 + $0x7c] sm:$0xf]
      %v5019 = vld [vmem:[%s4986 + $0x80] sm:$0xf]
      %v5020 = vld [vmem:[%s4986 + $0x84] sm:$0xf]
      %v5021 = vld [vmem:[%s4986 + $0x88] sm:$0xf]
      %v5022 = vld [vmem:[%s4986 + $0x8c] sm:$0xf]
      %v5023 = vld [vmem:[%s4986 + $0x90] sm:$0xf]
      %v5024 = vld [vmem:[%s4986 + $0x94] sm:$0xf]
      %v5025 = vld [vmem:[%s4986 + $0x98] sm:$0xf]
      %v5026 = vld [vmem:[%s4986 + $0x9c] sm:$0xf]
      %v5027 = vld [vmem:[%s4986 + $0xa0] sm:$0xf]
      %v5028 = vld [vmem:[%s4986 + $0xa4] sm:$0xf]
      %v5029 = vld [vmem:[%s4986 + $0xa8] sm:$0xf]
      %v5030 = vld [vmem:[%s4986 + $0xac] sm:$0xf]
      %v5031 = vld [vmem:[%s4986 + $0xb0] sm:$0xf]
      %v5032 = vld [vmem:[%s4986 + $0xb4] sm:$0xf]
      %v5033 = vld [vmem:[%s4986 + $0xb8] sm:$0xf]
      %v5034 = vld [vmem:[%s4986 + $0xbc] sm:$0xf]
      %v5035 = vld [vmem:[%s4986 + $0xc0] sm:$0xf]
      %v5036 = vld [vmem:[%s4986 + $0xc4] sm:$0xf]
      %v5037 = vld [vmem:[%s4986 + $0xc8] sm:$0xf]
      %v5038 = vld [vmem:[%s4986 + $0xcc] sm:$0xf]
      %v5039 = vld [vmem:[%s4986 + $0xd0] sm:$0xf]
      %v5040 = vld [vmem:[%s4986 + $0xd4] sm:$0xf]
      %v5041 = vld [vmem:[%s4986 + $0xd8] sm:$0xf]
      %v5042 = vld [vmem:[%s4986 + $0xdc] sm:$0xf]
      %v5043 = vld [vmem:[%s4986 + $0xe0] sm:$0xf]
      %v5044 = vld [vmem:[%s4986 + $0xe4] sm:$0xf]
      %v5045 = vld [vmem:[%s4986 + $0xe8] sm:$0xf]
      %v5046 = vld [vmem:[%s4986 + $0xec] sm:$0xf]
      %v5047 = vld [vmem:[%s4986 + $0xf0] sm:$0xf]
      %v5048 = vld [vmem:[%s4986 + $0xf4] sm:$0xf]
      %v5049 = vld [vmem:[%s4986 + $0xf8] sm:$0xf]
      %v5050 = vld [vmem:[%s4986 + $0xfc] sm:$0xf]
      %v5051 = vld [vmem:[%s4986 + $0x100] sm:$0xf]
      %v5052 = vld [vmem:[%s4986 + $0x104] sm:$0xf]
      %v5053 = vld [vmem:[%s4986 + $0x108] sm:$0xf]
      %v5054 = vld [vmem:[%s4986 + $0x10c] sm:$0xf]
      %v5055 = vld [vmem:[%s4986 + $0x110] sm:$0xf]
      %v5056 = vld [vmem:[%s4986 + $0x114] sm:$0xf]
      %v5057 = vld [vmem:[%s4986 + $0x118] sm:$0xf]
      %v5058 = vld [vmem:[%s4986 + $0x11c] sm:$0xf]
      %s5059 = scalar_lea.vmem %s5, 5
      %v5060 = vld [vmem:[%s5059] sm:$0x1]
      %v5062 = vlaneseq
      %v5063 = vshrl.u32 %v5062, 7
      %v5064 = vsub.s32 0, %v5063
      %v5065 = vrot.slane %v5060, %v5064
      %v5076 = vunpack.c.l.b16 %v4977
      %v5077 = vunpack.c.h.b16 %v4977
      %v5078 = vunpack.c.l.b16 %v4978
      %v5079 = vunpack.c.h.b16 %v4978
      %v5080 = vunpack.c.l.b16 %v4979
      %v5081 = vunpack.c.l.b16 %v4980
      %v5082 = vunpack.c.h.b16 %v4980
      %v5083 = vunpack.c.l.b16 %v4981
      %v5084 = vunpack.c.h.b16 %v4981
      %v5085 = vunpack.c.l.b16 %v4982
      %v5086 = vunpack.c.l.b16 %v4983
      %v5087 = vunpack.c.h.b16 %v4983
      %v5088 = vunpack.c.l.b16 %v4984
      %v5089 = vunpack.c.h.b16 %v4984
      %v5090 = vunpack.c.l.b16 %v4985
      %v5091 = vpack.c.b16 %v5081, %v5076
      %v5092 = vpack.c.b16 %v5082, %v5077
      %v5093 = vpack.c.b16 %v5083, %v5078
      %v5094 = vpack.c.b16 %v5084, %v5079
      %v5095 = vpack.c.b16 %v5085, %v5080
      %v5096 = vpack.c.b16 %v5086, %v5086
      %v5097 = vpack.c.b16 %v5087, %v5087
      %v5098 = vpack.c.b16 %v5088, %v5088
      %v5099 = vpack.c.b16 %v5089, %v5089
      %v5100 = vpack.c.b16 %v5090, %v5090
      %v5181 = vunpack.c.l.b16 %v4987
      %v5182 = vunpack.c.l.b16 %v4988
      %v5183 = vunpack.c.l.b16 %v4989
      %v5184 = vunpack.c.l.b16 %v4990
      %v5185 = vunpack.c.l.b16 %v4991
      %v5186 = vunpack.c.l.b16 %v4992
      %v5187 = vunpack.c.l.b16 %v4993
      %v5188 = vunpack.c.l.b16 %v4994
      %v5189 = vunpack.c.l.b16 %v4995
      %v5190 = vunpack.c.l.b16 %v4996
      %v5191 = vunpack.c.l.b16 %v4997
      %v5192 = vunpack.c.l.b16 %v4998
      %v5193 = vunpack.c.l.b16 %v4999
      %v5194 = vunpack.c.l.b16 %v5000
      %v5195 = vunpack.c.l.b16 %v5001
      %v5196 = vunpack.c.l.b16 %v5002
      %v5197 = vunpack.c.l.b16 %v5003
      %v5198 = vunpack.c.l.b16 %v5004
      %v5199 = vunpack.c.l.b16 %v5005
      %v5200 = vunpack.c.l.b16 %v5006
      %v5201 = vunpack.c.l.b16 %v5007
      %v5202 = vunpack.c.l.b16 %v5008
      %v5203 = vunpack.c.l.b16 %v5009
      %v5204 = vunpack.c.l.b16 %v5010
      %v5205 = vunpack.c.l.b16 %v5011
      %v5206 = vunpack.c.l.b16 %v5012
      %v5207 = vunpack.c.l.b16 %v5013
      %v5208 = vunpack.c.l.b16 %v5014
      %v5209 = vunpack.c.l.b16 %v5015
      %v5210 = vunpack.c.l.b16 %v5016
      %v5211 = vunpack.c.l.b16 %v5017
      %v5212 = vunpack.c.l.b16 %v5018
      %v5213 = vunpack.c.l.b16 %v5019
      %v5214 = vunpack.c.l.b16 %v5020
      %v5215 = vunpack.c.l.b16 %v5021
      %v5216 = vunpack.c.l.b16 %v5022
      %v5217 = vunpack.c.l.b16 %v5023
      %v5218 = vunpack.c.l.b16 %v5024
      %v5219 = vunpack.c.l.b16 %v5025
      %v5220 = vunpack.c.l.b16 %v5026
      %v5221 = vunpack.c.l.b16 %v5027
      %v5222 = vunpack.c.l.b16 %v5028
      %v5223 = vunpack.c.l.b16 %v5029
      %v5224 = vunpack.c.l.b16 %v5030
      %v5225 = vunpack.c.l.b16 %v5031
      %v5226 = vunpack.c.l.b16 %v5032
      %v5227 = vunpack.c.l.b16 %v5033
      %v5228 = vunpack.c.l.b16 %v5034
      %v5229 = vunpack.c.l.b16 %v5035
      %v5230 = vunpack.c.l.b16 %v5036
      %v5231 = vunpack.c.l.b16 %v5037
      %v5232 = vunpack.c.l.b16 %v5038
      %v5233 = vunpack.c.l.b16 %v5039
      %v5234 = vunpack.c.l.b16 %v5040
      %v5235 = vunpack.c.l.b16 %v5041
      %v5236 = vunpack.c.l.b16 %v5042
      %v5237 = vunpack.c.l.b16 %v5043
      %v5238 = vunpack.c.l.b16 %v5044
      %v5239 = vunpack.c.l.b16 %v5045
      %v5240 = vunpack.c.l.b16 %v5046
      %v5241 = vunpack.c.l.b16 %v5047
      %v5242 = vunpack.c.l.b16 %v5048
      %v5243 = vunpack.c.l.b16 %v5049
      %v5244 = vunpack.c.l.b16 %v5050
      %v5245 = vunpack.c.l.b16 %v5051
      %v5246 = vunpack.c.l.b16 %v5052
      %v5247 = vunpack.c.l.b16 %v5053
      %v5248 = vunpack.c.l.b16 %v5054
      %v5249 = vunpack.c.l.b16 %v5055
      %v5250 = vunpack.c.l.b16 %v5056
      %v5251 = vunpack.c.l.b16 %v5057
      %v5252 = vunpack.c.l.b16 %v5058
      %v5253 = vpack.c.b16 %v5182, %v5181
      %v5254 = vpack.c.b16 %v5184, %v5183
      %v5255 = vpack.c.b16 %v5186, %v5185
      %v5256 = vpack.c.b16 %v5188, %v5187
      %v5257 = vpack.c.b16 %v5190, %v5189
      %v5258 = vpack.c.b16 %v5192, %v5191
      %v5259 = vpack.c.b16 %v5194, %v5193
      %v5260 = vpack.c.b16 %v5196, %v5195
      %v5261 = vpack.c.b16 %v5198, %v5197
      %v5262 = vpack.c.b16 %v5200, %v5199
      %v5263 = vpack.c.b16 %v5202, %v5201
      %v5264 = vpack.c.b16 %v5204, %v5203
      %v5265 = vpack.c.b16 %v5206, %v5205
      %v5266 = vpack.c.b16 %v5208, %v5207
      %v5267 = vpack.c.b16 %v5210, %v5209
      %v5268 = vpack.c.b16 %v5212, %v5211
      %v5269 = vpack.c.b16 %v5214, %v5213
      %v5270 = vpack.c.b16 %v5216, %v5215
      %v5271 = vpack.c.b16 %v5218, %v5217
      %v5272 = vpack.c.b16 %v5220, %v5219
      %v5273 = vpack.c.b16 %v5222, %v5221
      %v5274 = vpack.c.b16 %v5224, %v5223
      %v5275 = vpack.c.b16 %v5226, %v5225
      %v5276 = vpack.c.b16 %v5228, %v5227
      %v5277 = vpack.c.b16 %v5230, %v5229
      %v5278 = vpack.c.b16 %v5232, %v5231
      %v5279 = vpack.c.b16 %v5234, %v5233
      %v5280 = vpack.c.b16 %v5236, %v5235
      %v5281 = vpack.c.b16 %v5238, %v5237
      %v5282 = vpack.c.b16 %v5240, %v5239
      %v5283 = vpack.c.b16 %v5242, %v5241
      %v5284 = vpack.c.b16 %v5244, %v5243
      %v5285 = vpack.c.b16 %v5246, %v5245
      %v5286 = vpack.c.b16 %v5248, %v5247
      %v5287 = vpack.c.b16 %v5250, %v5249
      %v5288 = vpack.c.b16 %v5252, %v5251
      %v5326 = vsel %vm424, %v5095, 0
      %v5329 = vsel %vm424, %v5100, 0
      %5331 = vmatprep.subr.bf16.mxu0 0
      %5332 = vmatpush1.bf16.msra.mxu0 %v5253
      %5333 = vmatprep.subr.bf16.mxu0 0
      %5334 = vmatpush1.bf16.msra.mxu0 %v5254
      %5335 = vmatprep.subr.bf16.mxu0 0
      %5336 = vmatpush1.bf16.msra.mxu0 %v5255
      %5337 = vmatprep.subr.bf16.mxu0 0
      %5338 = vmatpush1.bf16.msra.mxu0 %v5256
      %5339 = vmatprep.subr.bf16.mxu0 0
      %5340 = vmatpush1.bf16.msra.mxu0 %v5257
      %5341 = vmatprep.subr.bf16.mxu0 0
      %5342 = vmatpush1.bf16.msra.mxu0 %v5258
      %5343 = vmatprep.subr.bf16.mxu0 0
      %5344 = vmatpush1.bf16.msra.mxu0 %v5259
      %5345 = vmatprep.subr.bf16.mxu0 0
      %5346 = vmatpush1.bf16.msra.mxu0 %v5260
      %5347 = vmatprep.subr.bf16.mxu0 0
      %5348 = vmatpush1.bf16.msra.mxu0 %v5261
      %5349 = vmatprep.subr.bf16.mxu0 0
      %5350 = vmatpush1.bf16.msra.mxu0 %v5262
      %5351 = vmatprep.subr.bf16.mxu0 0
      %5352 = vmatpush1.bf16.msra.mxu0 %v5263
      %5353 = vmatprep.subr.bf16.mxu0 0
      %5354 = vmatpush1.bf16.msra.mxu0 %v5264
      %5355 = vmatprep.subr.bf16.mxu0 0
      %5356 = vmatpush1.bf16.msra.mxu0 %v5265
      %5357 = vmatprep.subr.bf16.mxu0 0
      %5358 = vmatpush1.bf16.msra.mxu0 %v5266
      %5359 = vmatprep.subr.bf16.mxu0 0
      %5360 = vmatpush1.bf16.msra.mxu0 %v5267
      %5361 = vmatprep.subr.bf16.mxu0 0
      %5362 = vmatpush1.bf16.msra.mxu0 %v5268
      %5363 = vmatprep.mubr.bf16.mxu0 %v5092
      %5364 = vmatmul.mubr.bf16.gmra.mrb[0].mxu0 %v5091
      %v5365 = vpop.f32.mrb[0].mxu0
      %v5366 = vadd.f32 %v5065, %v5365
      %v5367 = vpop.f32.mrb[0].mxu0
      %v5368 = vpop.f32.mrb[0].mxu0
      %v5369 = vadd.f32 %v5065, %v5368
      %v5370 = vpop.f32.mrb[0].mxu0
      %5371 = vmatprep.mubr.bf16.mxu0 %v5097
      %5372 = vmatmul.mubr.bf16.gmra.mrb[0].mxu0 %v5096
      %v5373 = vpop.f32.mrb[0].mxu0
      %v5374 = vadd.f32 %v5065, %v5373
      %v5375 = vpop.f32.mrb[0].mxu0
      %v5376 = vpop.f32.mrb[0].mxu0
      %v5377 = vpop.f32.mrb[0].mxu0
      %5378 = vdwg.mxu0
      %5379 = vmatprep.subr.bf16.mxu0 0
      %5380 = vmatpush1.bf16.msra.mxu0 %v5269
      %5381 = vmatprep.subr.bf16.mxu0 0
      %5382 = vmatpush1.bf16.msra.mxu0 %v5270
      %5383 = vmatprep.subr.bf16.mxu0 0
      %5384 = vmatpush1.bf16.msra.mxu0 %v5271
      %5385 = vmatprep.subr.bf16.mxu0 0
      %5386 = vmatpush1.bf16.msra.mxu0 %v5272
      %5387 = vmatprep.subr.bf16.mxu0 0
      %5388 = vmatpush1.bf16.msra.mxu0 %v5273
      %5389 = vmatprep.subr.bf16.mxu0 0
      %5390 = vmatpush1.bf16.msra.mxu0 %v5274
      %5391 = vmatprep.subr.bf16.mxu0 0
      %5392 = vmatpush1.bf16.msra.mxu0 %v5275
      %5393 = vmatprep.subr.bf16.mxu0 0
      %5394 = vmatpush1.bf16.msra.mxu0 %v5276
      %5395 = vmatprep.subr.bf16.mxu0 0
      %5396 = vmatpush1.bf16.msra.mxu0 %v5277
      %5397 = vmatprep.subr.bf16.mxu0 0
      %5398 = vmatpush1.bf16.msra.mxu0 %v5278
      %5399 = vmatprep.subr.bf16.mxu0 0
      %5400 = vmatpush1.bf16.msra.mxu0 %v5279
      %5401 = vmatprep.subr.bf16.mxu0 0
      %5402 = vmatpush1.bf16.msra.mxu0 %v5280
      %5403 = vmatprep.subr.bf16.mxu0 0
      %5404 = vmatpush1.bf16.msra.mxu0 %v5281
      %5405 = vmatprep.subr.bf16.mxu0 0
      %5406 = vmatpush1.bf16.msra.mxu0 %v5282
      %5407 = vmatprep.subr.bf16.mxu0 0
      %5408 = vmatpush1.bf16.msra.mxu0 %v5283
      %5409 = vmatprep.subr.bf16.mxu0 0
      %5410 = vmatpush1.bf16.msra.mxu0 %v5284
      %5411 = vmatprep.mubr.bf16.mxu0 %v5094
      %5412 = vmatmul.mubr.bf16.gmra.mrb[0].mxu0 %v5093
      %v5413 = vpop.f32.mrb[0].mxu0
      %v5414 = vadd.f32 %v5366, %v5413
      %v5415 = vpop.f32.mrb[0].mxu0
      %v5416 = vpop.f32.mrb[0].mxu0
      %v5417 = vadd.f32 %v5369, %v5416
      %v5418 = vpop.f32.mrb[0].mxu0
      %5419 = vmatprep.mubr.bf16.mxu0 %v5099
      %5420 = vmatmul.mubr.bf16.gmra.mrb[0].mxu0 %v5098
      %v5421 = vpop.f32.mrb[0].mxu0
      %v5422 = vadd.f32 %v5374, %v5421
      %v5423 = vpop.f32.mrb[0].mxu0
      %v5424 = vpop.f32.mrb[0].mxu0
      %v5425 = vpop.f32.mrb[0].mxu0
      %5426 = vdwg.mxu0
      %5427 = vmatprep.subr.bf16.mxu0 0
      %5428 = vmatpush1.bf16.msra.mxu0 %v5285
      %5429 = vmatprep.subr.bf16.mxu0 0
      %5430 = vmatpush1.bf16.msra.mxu0 %v5286
      %5431 = vmatprep.subr.bf16.mxu0 0
      %5432 = vmatpush1.bf16.msra.mxu0 %v5287
      %5433 = vmatprep.subr.bf16.mxu0 0
      %5434 = vmatpush1.bf16.msra.mxu0 %v5288
      %5435 = vmatprep.subr.bf16.mxu0 0
      %5436 = vmatpush1.bf16.msra.mxu0 0
      %5437 = vmatprep.subr.bf16.mxu0 0
      %5438 = vmatpush1.bf16.msra.mxu0 0
      %5439 = vmatprep.subr.bf16.mxu0 0
      %5440 = vmatpush1.bf16.msra.mxu0 0
      %5441 = vmatprep.subr.bf16.mxu0 0
      %5442 = vmatpush1.bf16.msra.mxu0 0
      %5443 = vmatprep.subr.bf16.mxu0 0
      %5444 = vmatpush1.bf16.msra.mxu0 0
      %5445 = vmatprep.subr.bf16.mxu0 0
      %5446 = vmatpush1.bf16.msra.mxu0 0
      %5447 = vmatprep.subr.bf16.mxu0 0
      %5448 = vmatpush1.bf16.msra.mxu0 0
      %5449 = vmatprep.subr.bf16.mxu0 0
      %5450 = vmatpush1.bf16.msra.mxu0 0
      %5451 = vmatprep.subr.bf16.mxu0 0
      %5452 = vmatpush1.bf16.msra.mxu0 0
      %5453 = vmatprep.subr.bf16.mxu0 0
      %5454 = vmatpush1.bf16.msra.mxu0 0
      %5455 = vmatprep.subr.bf16.mxu0 0
      %5456 = vmatpush1.bf16.msra.mxu0 0
      %5457 = vmatprep.subr.bf16.mxu0 0
      %5458 = vmatpush1.bf16.msra.mxu0 0
      %5459 = vmatprep.mubr.bf16.mxu0 0
      %5460 = vmatmul.mubr.bf16.gmra.mrb[0].mxu0 %v5326
      %v5461 = vpop.f32.mrb[0].mxu0
      %v5462 = vadd.f32 %v5414, %v5461
      %v5463 = vpop.f32.mrb[0].mxu0
      %v5464 = vpop.f32.mrb[0].mxu0
      %v5465 = vadd.f32 %v5417, %v5464
      %v5466 = vpop.f32.mrb[0].mxu0
      %5467 = vmatprep.mubr.bf16.mxu0 0
      %5468 = vmatmul.mubr.bf16.gmra.mrb[0].mxu0 %v5329
      %v5469 = vpop.f32.mrb[0].mxu0
      %v5470 = vadd.f32 %v5422, %v5469
      %v5471 = vpop.f32.mrb[0].mxu0
      %v5472 = vpop.f32.mrb[0].mxu0
      %v5473 = vpop.f32.mrb[0].mxu0
      %5474 = vdwg.mxu0
      %v5475 = vld [vmem:[#allocation4] sm:$0xff]
      %v5476 = vld [vmem:[#allocation4 + $0x8] sm:$0xff]
      %v5477 = vld [vmem:[#allocation4 + $0x10] sm:$0xff]
      %v5478 = vadd.f32 %v5462, %v5475
      %v5479 = vadd.f32 %v5465, %v5476
      %v5480 = vadd.f32 %v5470, %v5477
      %v5481 = vmax.f32 %v5478, 0.0
      %v5482 = vmax.f32 %v5479, 0.0
      %v5483 = vmax.f32 %v5480, 0.0
      %v5484 = vmul.f32 %v5481, %v1316
      %v5485 = vmul.f32 %v5482, %v1321
      %v5486 = vmul.f32 %v5483, %v1326
      %5487 = vst.msk [vmem:[%s338] sm:$0xff] %vm424, %v5484
      %5488 = vst.msk [vmem:[%s338 + $0x8] sm:$0xff] %vm424, %v5485
      %5489 = vst.msk [vmem:[%s338 + $0x10] sm:$0xff] %vm424, %v5486
      %p5490 = scmp.lt.s32.totalorder %s18, 1
      %s5491 = scalar_select %p5490, %s18, 1
      %s5492 = smul.addr %s5491, 3
      %s5493 = smul.addr %s5492, 8
      %s5494 = scalar_lea.vmem %s7, %s5493
      // Predicated region
      $region49: #{_lambda_.4} parent=47 // pred_check
        %p5495 = pneg %p203
      $region50: #{_lambda_.4} parent=47 // pred_check_branch
        %5497 = sbr.rel (%p5495) target = $region52
      $region51: #{_lambda_.4} parent=47 // pred_region
        _
      $region52: #{_lambda_.4} parent=47 // pred_fallthru
        _
    $region48: #{_lambda_.4} parent=5 // pred_fallthru
      _
    %p5498 = scmp.le.s32.totalorder 2, %s13
    // Predicated region
    $region53: #{_lambda_.4} parent=5 // pred_check
      %p5499 = pneg %p5498
    $region54: #{_lambda_.4} parent=5 // pred_check_branch
      %5501 = sbr.rel (%p5499) target = $region56
    $region55: #{_lambda_.4} parent=5 // pred_region
      %s5502 = ssub.s32 %s13, 2
      // Predicated region
      $region57: #{_lambda_.4} parent=55 // pred_check
        %p5503 = pneg %p209
      $region58: #{_lambda_.4} parent=55 // pred_check_branch
        %5505 = sbr.rel (%p5503) target = $region60
      $region59: #{_lambda_.4} parent=55 // pred_region
        %p5506 = scmp.lt.s32.totalorder %s19, 1
        %s5507 = scalar_select %p5506, %s19, 1
        %s5508 = smul.addr %s5507, 3
        %s5509 = smul.addr %s5508, 8
        %s5510 = scalar_lea.vmem %s7, %s5509
      $region60: #{_lambda_.4} parent=55 // pred_fallthru
        _
    $region56: #{_lambda_.4} parent=5 // pred_fallthru
      _
  $region6: #{_lambda_.4} parent=0 // loop_footer
    %s17 = sadd.s32 1, %s13
  $region7: #{_lambda_.4} parent=0 // loop_footer_branch
    %12 = sbr.rel target = $region3
  $region8: #{_lambda_.4} parent=0 // loop_exit
    _

</llo_original>
